<compile_context>
chip_gen: v5e
topology: v5e:2x2
jax: 0.10.0
libtpu: 0.0.40
codegen_flags: <defaults>
</compile_context>

<pallas_src>
import jax
import jax.numpy as jnp
from jax.experimental import pallas as pl
from jax.experimental.pallas import tpu as pltpu


# ----------------------------- in-kernel helpers ---------------------------- #

def _reflect_pad1_into(ref, a, H, W):
    # ref: (H+2, W+2, C) VMEM scratch; a: (H, W, C) value.  PyTorch 'reflect', pad=1.
    ref[1:H + 1, 1:W + 1, :] = a
    ref[0:1, 1:W + 1, :] = a[1:2]
    ref[H + 1:H + 2, 1:W + 1, :] = a[H - 2:H - 1]
    ref[:, 0:1, :] = ref[:, 2:3, :]
    ref[:, W + 1:W + 2, :] = ref[:, W - 1:W, :]


def _reflect_pad3_into(ref, a, H, W):
    # ref: (H+6, W+6) VMEM scratch; a: (H, W) value.  PyTorch 'reflect', pad=3.
    ref[3:3 + H, 3:3 + W] = a
    ref[0:1, 3:3 + W] = a[3:4]
    ref[1:2, 3:3 + W] = a[2:3]
    ref[2:3, 3:3 + W] = a[1:2]
    ref[H + 3:H + 4, 3:3 + W] = a[H - 2:H - 1]
    ref[H + 4:H + 5, 3:3 + W] = a[H - 3:H - 2]
    ref[H + 5:H + 6, 3:3 + W] = a[H - 4:H - 3]
    ref[:, 0:1] = ref[:, 6:7]
    ref[:, 1:2] = ref[:, 5:6]
    ref[:, 2:3] = ref[:, 4:5]
    ref[:, W + 3:W + 4] = ref[:, W + 1:W + 2]
    ref[:, W + 4:W + 5] = ref[:, W:W + 1]
    ref[:, W + 5:W + 6] = ref[:, W - 1:W]


# ------------------------------ fused kernel -------------------------------- #

def _ralayer_kernel(x_ref, w1_ref, b1_ref, w2_ref, b2_ref, caw1t_ref, caw2_ref,
                    saw_ref, o_ref,
                    xp1_ref, p1_ref, xp2_ref, p2_ref, avgp_ref, maxp_ref, acol_ref):
    # x_ref   : (1, H, W, Cin)          one batch element, NHWC
    # w1_ref  : (9*Cin, Cmid)           conv1 weight, im2col layout
    # b1_ref  : (1, Cmid)
    # w2_ref  : (9*Cmid, Cout)          conv2 weight, im2col layout
    # b2_ref  : (1, Cout)
    # caw1t_ref/caw2_ref : (Cint, Cout) channel-attention fc1^T / fc2
    # saw_ref : (14*(W+6), W)           Toeplitz-expanded 7x7x2 SA weight
    # o_ref   : (1, H, W, Cout)
    _, H, W, Cin = x_ref.shape
    Cmid = b1_ref.shape[1]
    Cout = o_ref.shape[-1]
    Wp = W + 6

    # ---- conv1 (3x3, reflect pad) + ReLU : im2col -> one MXU matmul ----
    _reflect_pad1_into(xp1_ref, x_ref[0], H, W)
    for dy in range(3):
        for dx in range(3):
            c0 = (dy * 3 + dx) * Cin
            p1_ref[:, c0:c0 + Cin] = (
                xp1_ref[dy:dy + H, dx:dx + W, :].reshape(H * W, Cin))
    h1 = jnp.dot(p1_ref[...], w1_ref[...], preferred_element_type=jnp.float32)
    h1 = jnp.maximum(h1 + b1_ref[...], 0.0)                      # (H*W, Cmid)

    # ---- conv2 (3x3, reflect pad) : im2col -> one MXU matmul ----
    _reflect_pad1_into(xp2_ref, h1.reshape(H, W, Cmid), H, W)
    for dy in range(3):
        for dx in range(3):
            c0 = (dy * 3 + dx) * Cmid
            p2_ref[:, c0:c0 + Cmid] = (
                xp2_ref[dy:dy + H, dx:dx + W, :].reshape(H * W, Cmid))
    h2 = jnp.dot(p2_ref[...], w2_ref[...],
                 preferred_element_type=jnp.float32) + b2_ref[...]   # (H*W, Cout)

    # ---- channel attention (VPU broadcast + reduce; Cint is tiny) ----
    avg = jnp.mean(h2, axis=0, keepdims=True)                    # (1, Cout)
    mx = jnp.max(h2, axis=0, keepdims=True)                      # (1, Cout)
    w1t = caw1t_ref[...]                                         # (Cint, Cout)
    w2c = caw2_ref[...]                                          # (Cint, Cout)

    def mlp(v):                                                  # v: (1, Cout)
        hidden = jnp.maximum(jnp.sum(v * w1t, axis=1, keepdims=True), 0.0)  # (Cint, 1)
        return jnp.sum(hidden * w2c, axis=0, keepdims=True)      # (1, Cout)

    att_c = jax.nn.sigmoid(mlp(avg) + mlp(mx))                   # (1, Cout)
    h_ca = h2 * att_c                                            # (H*W, Cout)
    h_sp = h_ca.reshape(H, W, Cout)

    # ---- spatial attention: 7x7 conv of [mean_c, max_c] as one MXU matmul ----
    avg_c = jnp.mean(h_sp, axis=-1)                              # (H, W)
    max_c = jnp.max(h_sp, axis=-1)                               # (H, W)
    _reflect_pad3_into(avgp_ref, avg_c, H, W)
    _reflect_pad3_into(maxp_ref, max_c, H, W)
    for dy in range(7):
        acol_ref[:, dy * Wp:(dy + 1) * Wp] = avgp_ref[dy:dy + H, :]
        acol_ref[:, (7 + dy) * Wp:(8 + dy) * Wp] = maxp_ref[dy:dy + H, :]
    sa = jnp.dot(acol_ref[...], saw_ref[...],
                 preferred_element_type=jnp.float32)             # (H, W)
    att_s = jax.nn.sigmoid(sa)

    o_ref[0] = h_sp * att_s[:, :, None]


# ------------------------------ JAX wrapper --------------------------------- #

def _build_sa_toeplitz(sa_w, W):
    """Expand the (7,7,2) SA conv weight (last dim = [avg, max]) into a
    (14*(W+6), W) matrix M so that the 7x7 VALID conv over the two reflect-padded
    maps equals A @ M, where A[h, k*(W+6)+p] = (avg_p if k<7 else max_p)[h+k%7, p]."""
    Wp = W + 6
    p = jnp.arange(Wp)[:, None]                   # (Wp, 1)
    w = jnp.arange(W)[None, :]                    # (1, W)
    dx = p - w                                    # (Wp, W)
    valid = (dx >= 0) & (dx < 7)
    dxc = jnp.clip(dx, 0, 6)
    blocks = []
    for ch in range(2):                           # 0: avg taps, 1: max taps
        for dy in range(7):
            taps = sa_w[dy, :, ch].astype(jnp.float32)           # (7,)
            blocks.append(jnp.where(valid, taps[dxc], 0.0))      # (Wp, W)
    return jnp.concatenate(blocks, axis=0)        # (14*Wp, W)


def ralayer_forward(x_nchw, params):
    """Public API matches PyTorch: x_nchw is (B, num_channels*num_block, H, W)."""
    B, Cin, H, W = x_nchw.shape
    Cmid = params['w1'].shape[-1]
    Cout = params['w2'].shape[-1]
    Cint = params['ca_w1'].shape[-1]
    Wp = W + 6

    x = jnp.transpose(x_nchw, (0, 2, 3, 1)).astype(jnp.float32)         # NHWC

    # Weight prep (tiny, once per call, in XLA).
    w1_mat = params['w1'].reshape(9 * Cin, Cmid).astype(jnp.float32)    # HWIO -> im2col
    w2_mat = params['w2'].reshape(9 * Cmid, Cout).astype(jnp.float32)
    b1_row = params['b1'].reshape(1, Cmid).astype(jnp.float32)
    b2_row = params['b2'].reshape(1, Cout).astype(jnp.float32)
    ca_w1t = params['ca_w1'].T.astype(jnp.float32)                      # (Cint, Cout)
    ca_w2 = params['ca_w2'].astype(jnp.float32)                         # (Cint, Cout)
    sa_toep = _build_sa_toeplitz(params['sa_w'], W)                     # (14*Wp, W)

    out_nhwc = pl.pallas_call(
        _ralayer_kernel,
        out_shape=jax.ShapeDtypeStruct((B, H, W, Cout), jnp.float32),
        grid=(B,),
        in_specs=[
            pl.BlockSpec((1, H, W, Cin), lambda b: (b, 0, 0, 0)),       # x (per image)
            pl.BlockSpec((9 * Cin, Cmid), lambda b: (0, 0)),            # conv1 W
            pl.BlockSpec((1, Cmid), lambda b: (0, 0)),                  # conv1 b
            pl.BlockSpec((9 * Cmid, Cout), lambda b: (0, 0)),           # conv2 W
            pl.BlockSpec((1, Cout), lambda b: (0, 0)),                  # conv2 b
            pl.BlockSpec((Cint, Cout), lambda b: (0, 0)),               # CA fc1^T
            pl.BlockSpec((Cint, Cout), lambda b: (0, 0)),               # CA fc2
            pl.BlockSpec((14 * Wp, W), lambda b: (0, 0)),               # SA Toeplitz
        ],
        out_specs=pl.BlockSpec((1, H, W, Cout), lambda b: (b, 0, 0, 0)),
        scratch_shapes=[
            pltpu.VMEM((H + 2, W + 2, Cin), jnp.float32),   # padded conv1 input
            pltpu.VMEM((H * W, 9 * Cin), jnp.float32),      # conv1 im2col patches
            pltpu.VMEM((H + 2, W + 2, Cmid), jnp.float32),  # padded conv2 input
            pltpu.VMEM((H * W, 9 * Cmid), jnp.float32),     # conv2 im2col patches
            pltpu.VMEM((H + 6, W + 6), jnp.float32),        # padded channel-mean map
            pltpu.VMEM((H + 6, W + 6), jnp.float32),        # padded channel-max map
            pltpu.VMEM((H, 14 * Wp), jnp.float32),          # SA im2col row matrix
        ],
        compiler_params=pltpu.CompilerParams(dimension_semantics=("parallel",)),
    )(x, w1_mat, b1_row, w2_mat, b2_row, ca_w1t, ca_w2, sa_toep)

    return jnp.transpose(out_nhwc, (0, 3, 1, 2))                        # NCHW


# ------------------------- pure-JAX reference check ------------------------- #

def _ref_forward_nhwc(x, params):
    def conv(inp, w, bias, pad):
        xp = jnp.pad(inp, ((0, 0), (pad, pad), (pad, pad), (0, 0)), mode='reflect')
        y = jax.lax.conv_general_dilated(
            xp, w, (1, 1), 'VALID',
            dimension_numbers=('NHWC', 'HWIO', 'NHWC'))
        return y + bias if bias is not None else y

    h = jax.nn.relu(conv(x, params['w1'], params['b1'], 1))
    h = conv(h, params['w2'], params['b2'], 1)
    avg = jnp.mean(h, axis=(1, 2), keepdims=True)
    mx = jnp.max(h, axis=(1, 2), keepdims=True)

    def mlp(v):
        hh = jax.nn.relu(jnp.einsum('bijc,cd->bijd', v, params['ca_w1']))
        return jnp.einsum('bijd,dc->bijc', hh, params['ca_w2'])

    h = h * jax.nn.sigmoid(mlp(avg) + mlp(mx))
    s = jnp.stack([jnp.mean(h, axis=-1), jnp.max(h, axis=-1)], axis=-1)  # (B,H,W,2)
    sp = conv(s, params['sa_w'][:, :, :, None], None, 3)
    return h * jax.nn.sigmoid(sp)


# ---------------------------------- main ------------------------------------ #

if __name__ == "__main__":
    # RALayer hyper-params: conv1 in = num_channels*num_block, out = num_channels//4,
    # conv2 out = num_channels, CA inter = max(1, num_channels//reduction), SA k=7.
    num_channels, num_block = 16, 2
    reduction = 16
    B, H, W = 2, 16, 16
    Cin = num_channels * num_block          # 32
    Cmid = num_channels // 4                # 4
    Cout = num_channels                     # 16
    Cint = max(1, num_channels // reduction)  # 1

    key = jax.random.PRNGKey(0)
    ks = jax.random.split(key, 8)
    params = {
        'w1': 0.15 * jax.random.normal(ks[0], (3, 3, Cin, Cmid), jnp.float32),
        'b1': 0.05 * jax.random.normal(ks[1], (Cmid,), jnp.float32),
        'w2': 0.15 * jax.random.normal(ks[2], (3, 3, Cmid, Cout), jnp.float32),
        'b2': 0.05 * jax.random.normal(ks[3], (Cout,), jnp.float32),
        'ca_w1': 0.2 * jax.random.normal(ks[4], (Cout, Cint), jnp.float32),
        'ca_w2': 0.2 * jax.random.normal(ks[5], (Cint, Cout), jnp.float32),
        'sa_w': 0.2 * jax.random.normal(ks[6], (7, 7, 2), jnp.float32),
    }
    x = jax.random.normal(ks[7], (B, Cin, H, W), jnp.float32)   # NCHW, like PyTorch

    out = jax.jit(ralayer_forward)(x, params)
    out = jax.block_until_ready(out)
    assert out.shape == (B, Cout, H, W), out.shape

    # Sanity check against a pure-JAX reference.
    ref = _ref_forward_nhwc(jnp.transpose(x, (0, 2, 3, 1)), params)
    ref = jnp.transpose(ref, (0, 3, 1, 2))
    assert jnp.allclose(out, ref, rtol=5e-3, atol=5e-3), float(jnp.max(jnp.abs(out - ref)))

    print("KERNEL_OK")
</pallas_src>

<mosaic_0001>
module attributes {stable_mosaic.version = 11 : i64} {
  func.func @_ralayer_kernel(%arg0: i32, %arg1: memref<1x16x16x32xf32, #tpu.memory_space<vmem>>, %arg2: memref<288x4xf32, #tpu.memory_space<vmem>>, %arg3: memref<1x4xf32, #tpu.memory_space<vmem>>, %arg4: memref<36x16xf32, #tpu.memory_space<vmem>>, %arg5: memref<1x16xf32, #tpu.memory_space<vmem>>, %arg6: memref<1x16xf32, #tpu.memory_space<vmem>>, %arg7: memref<1x16xf32, #tpu.memory_space<vmem>>, %arg8: memref<308x16xf32, #tpu.memory_space<vmem>>, %arg9: memref<1x16x16x16xf32, #tpu.memory_space<vmem>>, %arg10: memref<18x18x32xf32, #tpu.memory_space<vmem>>, %arg11: memref<256x288xf32, #tpu.memory_space<vmem>>, %arg12: memref<18x18x4xf32, #tpu.memory_space<vmem>>, %arg13: memref<256x36xf32, #tpu.memory_space<vmem>>, %arg14: memref<22x22xf32, #tpu.memory_space<vmem>>, %arg15: memref<22x22xf32, #tpu.memory_space<vmem>>, %arg16: memref<16x308xf32, #tpu.memory_space<vmem>>) attributes {dimension_semantics = [#tpu.dimension_semantics<parallel>], iteration_bounds = array<i64: 2>, scalar_prefetch = 0 : i64, scratch_operands = 7 : i64, tpu.core_type = #tpu.core_type<tc>, window_params = [{transform_indices = @transform_0, window_bounds = array<i64: 1, 16, 16, 32>}, {pipeline_mode = #tpu.pipeline_mode<synchronous>, transform_indices = @transform_1, window_bounds = array<i64: 288, 4>}, {pipeline_mode = #tpu.pipeline_mode<synchronous>, transform_indices = @transform_2, window_bounds = array<i64: 1, 4>}, {pipeline_mode = #tpu.pipeline_mode<synchronous>, transform_indices = @transform_3, window_bounds = array<i64: 36, 16>}, {pipeline_mode = #tpu.pipeline_mode<synchronous>, transform_indices = @transform_4, window_bounds = array<i64: 1, 16>}, {pipeline_mode = #tpu.pipeline_mode<synchronous>, transform_indices = @transform_5, window_bounds = array<i64: 1, 16>}, {pipeline_mode = #tpu.pipeline_mode<synchronous>, transform_indices = @transform_6, window_bounds = array<i64: 1, 16>}, {pipeline_mode = #tpu.pipeline_mode<synchronous>, transform_indices = @transform_7, window_bounds = array<i64: 308, 16>}, {transform_indices = @transform_8, window_bounds = array<i64: 1, 16, 16, 16>}]} {
    %c0 = arith.constant 0 : index
    %c0_0 = arith.constant 0 : index
    %c0_1 = arith.constant 0 : index
    %c0_2 = arith.constant 0 : index
    %0 = vector.load %arg1[%c0, %c0_0, %c0_1, %c0_2] : memref<1x16x16x32xf32, #tpu.memory_space<vmem>>, vector<1x16x16x32xf32>
    %1 = vector.shape_cast %0 : vector<1x16x16x32xf32> to vector<16x16x32xf32>
    %c1 = arith.constant 1 : index
    %c1_3 = arith.constant 1 : index
    %c0_4 = arith.constant 0 : index
    %2 = vector.load %arg10[%c1, %c1_3, %c0_4] : memref<18x18x32xf32, #tpu.memory_space<vmem>>, vector<16x16x32xf32>
    tpu.vector_store %arg10[%c1, %c1_3, %c0_4], %1 {strides = array<i32>} : memref<18x18x32xf32, #tpu.memory_space<vmem>>, vector<16x16x32xf32>,
    %3 = vector.extract_strided_slice %1 {offsets = [1, 0, 0], sizes = [1, 16, 32], strides = [1, 1, 1]} : vector<16x16x32xf32> to vector<1x16x32xf32>
    %c0_5 = arith.constant 0 : index
    %c1_6 = arith.constant 1 : index
    %c0_7 = arith.constant 0 : index
    %4 = vector.load %arg10[%c0_5, %c1_6, %c0_7] : memref<18x18x32xf32, #tpu.memory_space<vmem>>, vector<1x16x32xf32>
    tpu.vector_store %arg10[%c0_5, %c1_6, %c0_7], %3 {strides = array<i32>} : memref<18x18x32xf32, #tpu.memory_space<vmem>>, vector<1x16x32xf32>,
    %5 = vector.extract_strided_slice %1 {offsets = [14, 0, 0], sizes = [1, 16, 32], strides = [1, 1, 1]} : vector<16x16x32xf32> to vector<1x16x32xf32>
    %c17 = arith.constant 17 : index
    %c1_8 = arith.constant 1 : index
    %c0_9 = arith.constant 0 : index
    %6 = vector.load %arg10[%c17, %c1_8, %c0_9] : memref<18x18x32xf32, #tpu.memory_space<vmem>>, vector<1x16x32xf32>
    tpu.vector_store %arg10[%c17, %c1_8, %c0_9], %5 {strides = array<i32>} : memref<18x18x32xf32, #tpu.memory_space<vmem>>, vector<1x16x32xf32>,
    %c0_10 = arith.constant 0 : index
    %c2 = arith.constant 2 : index
    %c0_11 = arith.constant 0 : index
    %7 = vector.load %arg10[%c0_10, %c2, %c0_11] : memref<18x18x32xf32, #tpu.memory_space<vmem>>, vector<18x1x32xf32>
    %c0_12 = arith.constant 0 : index
    %c0_13 = arith.constant 0 : index
    %c0_14 = arith.constant 0 : index
    %8 = vector.load %arg10[%c0_12, %c0_13, %c0_14] : memref<18x18x32xf32, #tpu.memory_space<vmem>>, vector<18x1x32xf32>
    tpu.vector_store %arg10[%c0_12, %c0_13, %c0_14], %7 {strides = array<i32>} : memref<18x18x32xf32, #tpu.memory_space<vmem>>, vector<18x1x32xf32>,
    %c0_15 = arith.constant 0 : index
    %c15 = arith.constant 15 : index
    %c0_16 = arith.constant 0 : index
    %9 = vector.load %arg10[%c0_15, %c15, %c0_16] : memref<18x18x32xf32, #tpu.memory_space<vmem>>, vector<18x1x32xf32>
    %c0_17 = arith.constant 0 : index
    %c17_18 = arith.constant 17 : index
    %c0_19 = arith.constant 0 : index
    %10 = vector.load %arg10[%c0_17, %c17_18, %c0_19] : memref<18x18x32xf32, #tpu.memory_space<vmem>>, vector<18x1x32xf32>
    tpu.vector_store %arg10[%c0_17, %c17_18, %c0_19], %9 {strides = array<i32>} : memref<18x18x32xf32, #tpu.memory_space<vmem>>, vector<18x1x32xf32>,
    %c0_20 = arith.constant 0 : index
    %c0_21 = arith.constant 0 : index
    %c0_22 = arith.constant 0 : index
    %11 = vector.load %arg10[%c0_20, %c0_21, %c0_22] : memref<18x18x32xf32, #tpu.memory_space<vmem>>, vector<16x16x32xf32>
    %12 = vector.shape_cast %11 : vector<16x16x32xf32> to vector<256x32xf32>
    %c0_23 = arith.constant 0 : index
    %c0_24 = arith.constant 0 : index
    %13 = vector.load %arg11[%c0_23, %c0_24] : memref<256x288xf32, #tpu.memory_space<vmem>>, vector<256x32xf32>
    tpu.vector_store %arg11[%c0_23, %c0_24], %12 {strides = array<i32>} : memref<256x288xf32, #tpu.memory_space<vmem>>, vector<256x32xf32>,
    %c0_25 = arith.constant 0 : index
    %c1_26 = arith.constant 1 : index
    %c0_27 = arith.constant 0 : index
    %14 = vector.load %arg10[%c0_25, %c1_26, %c0_27] : memref<18x18x32xf32, #tpu.memory_space<vmem>>, vector<16x16x32xf32>
    %15 = vector.shape_cast %14 : vector<16x16x32xf32> to vector<256x32xf32>
    %c0_28 = arith.constant 0 : index
    %c32 = arith.constant 32 : index
    %16 = vector.load %arg11[%c0_28, %c32] : memref<256x288xf32, #tpu.memory_space<vmem>>, vector<256x32xf32>
    tpu.vector_store %arg11[%c0_28, %c32], %15 {strides = array<i32>} : memref<256x288xf32, #tpu.memory_space<vmem>>, vector<256x32xf32>,
    %c0_29 = arith.constant 0 : index
    %c2_30 = arith.constant 2 : index
    %c0_31 = arith.constant 0 : index
    %17 = vector.load %arg10[%c0_29, %c2_30, %c0_31] : memref<18x18x32xf32, #tpu.memory_space<vmem>>, vector<16x16x32xf32>
    %18 = vector.shape_cast %17 : vector<16x16x32xf32> to vector<256x32xf32>
    %c0_32 = arith.constant 0 : index
    %c64 = arith.constant 64 : index
    %19 = vector.load %arg11[%c0_32, %c64] : memref<256x288xf32, #tpu.memory_space<vmem>>, vector<256x32xf32>
    tpu.vector_store %arg11[%c0_32, %c64], %18 {strides = array<i32>} : memref<256x288xf32, #tpu.memory_space<vmem>>, vector<256x32xf32>,
    %c1_33 = arith.constant 1 : index
    %c0_34 = arith.constant 0 : index
    %c0_35 = arith.constant 0 : index
    %20 = vector.load %arg10[%c1_33, %c0_34, %c0_35] : memref<18x18x32xf32, #tpu.memory_space<vmem>>, vector<16x16x32xf32>
    %21 = vector.shape_cast %20 : vector<16x16x32xf32> to vector<256x32xf32>
    %c0_36 = arith.constant 0 : index
    %c96 = arith.constant 96 : index
    %22 = vector.load %arg11[%c0_36, %c96] : memref<256x288xf32, #tpu.memory_space<vmem>>, vector<256x32xf32>
    tpu.vector_store %arg11[%c0_36, %c96], %21 {strides = array<i32>} : memref<256x288xf32, #tpu.memory_space<vmem>>, vector<256x32xf32>,
    %c1_37 = arith.constant 1 : index
    %c1_38 = arith.constant 1 : index
    %c0_39 = arith.constant 0 : index
    %23 = vector.load %arg10[%c1_37, %c1_38, %c0_39] : memref<18x18x32xf32, #tpu.memory_space<vmem>>, vector<16x16x32xf32>
    %24 = vector.shape_cast %23 : vector<16x16x32xf32> to vector<256x32xf32>
    %c0_40 = arith.constant 0 : index
    %c128 = arith.constant 128 : index
    %25 = vector.load %arg11[%c0_40, %c128] : memref<256x288xf32, #tpu.memory_space<vmem>>, vector<256x32xf32>
    tpu.vector_store %arg11[%c0_40, %c128], %24 {strides = array<i32>} : memref<256x288xf32, #tpu.memory_space<vmem>>, vector<256x32xf32>,
    %c1_41 = arith.constant 1 : index
    %c2_42 = arith.constant 2 : index
    %c0_43 = arith.constant 0 : index
    %26 = vector.load %arg10[%c1_41, %c2_42, %c0_43] : memref<18x18x32xf32, #tpu.memory_space<vmem>>, vector<16x16x32xf32>
    %27 = vector.shape_cast %26 : vector<16x16x32xf32> to vector<256x32xf32>
    %c0_44 = arith.constant 0 : index
    %c160 = arith.constant 160 : index
    %28 = vector.load %arg11[%c0_44, %c160] : memref<256x288xf32, #tpu.memory_space<vmem>>, vector<256x32xf32>
    tpu.vector_store %arg11[%c0_44, %c160], %27 {strides = array<i32>} : memref<256x288xf32, #tpu.memory_space<vmem>>, vector<256x32xf32>,
    %c2_45 = arith.constant 2 : index
    %c0_46 = arith.constant 0 : index
    %c0_47 = arith.constant 0 : index
    %29 = vector.load %arg10[%c2_45, %c0_46, %c0_47] : memref<18x18x32xf32, #tpu.memory_space<vmem>>, vector<16x16x32xf32>
    %30 = vector.shape_cast %29 : vector<16x16x32xf32> to vector<256x32xf32>
    %c0_48 = arith.constant 0 : index
    %c192 = arith.constant 192 : index
    %31 = vector.load %arg11[%c0_48, %c192] : memref<256x288xf32, #tpu.memory_space<vmem>>, vector<256x32xf32>
    tpu.vector_store %arg11[%c0_48, %c192], %30 {strides = array<i32>} : memref<256x288xf32, #tpu.memory_space<vmem>>, vector<256x32xf32>,
    %c2_49 = arith.constant 2 : index
    %c1_50 = arith.constant 1 : index
    %c0_51 = arith.constant 0 : index
    %32 = vector.load %arg10[%c2_49, %c1_50, %c0_51] : memref<18x18x32xf32, #tpu.memory_space<vmem>>, vector<16x16x32xf32>
    %33 = vector.shape_cast %32 : vector<16x16x32xf32> to vector<256x32xf32>
    %c0_52 = arith.constant 0 : index
    %c224 = arith.constant 224 : index
    %34 = vector.load %arg11[%c0_52, %c224] : memref<256x288xf32, #tpu.memory_space<vmem>>, vector<256x32xf32>
    tpu.vector_store %arg11[%c0_52, %c224], %33 {strides = array<i32>} : memref<256x288xf32, #tpu.memory_space<vmem>>, vector<256x32xf32>,
    %c2_53 = arith.constant 2 : index
    %c2_54 = arith.constant 2 : index
    %c0_55 = arith.constant 0 : index
    %35 = vector.load %arg10[%c2_53, %c2_54, %c0_55] : memref<18x18x32xf32, #tpu.memory_space<vmem>>, vector<16x16x32xf32>
    %36 = vector.shape_cast %35 : vector<16x16x32xf32> to vector<256x32xf32>
    %c0_56 = arith.constant 0 : index
    %c256 = arith.constant 256 : index
    %37 = vector.load %arg11[%c0_56, %c256] : memref<256x288xf32, #tpu.memory_space<vmem>>, vector<256x32xf32>
    tpu.vector_store %arg11[%c0_56, %c256], %36 {strides = array<i32>} : memref<256x288xf32, #tpu.memory_space<vmem>>, vector<256x32xf32>,
    %c0_57 = arith.constant 0 : index
    %c0_58 = arith.constant 0 : index
    %38 = vector.load %arg11[%c0_57, %c0_58] : memref<256x288xf32, #tpu.memory_space<vmem>>, vector<256x288xf32>
    %c0_59 = arith.constant 0 : index
    %c0_60 = arith.constant 0 : index
    %39 = vector.load %arg2[%c0_59, %c0_60] : memref<288x4xf32, #tpu.memory_space<vmem>>, vector<288x4xf32>
    %cst = arith.constant dense<0.000000e+00> : vector<256x4xf32>
    %40 = tpu.matmul %38, %39, %cst {dimension_numbers = #tpu.dot_dimension_numbers<[1], [0], [0], [1], [0, 0, 1, 1], [], []>} : vector<256x288xf32>, vector<288x4xf32>, vector<256x4xf32> -> vector<256x4xf32>
    %c0_61 = arith.constant 0 : index
    %c0_62 = arith.constant 0 : index
    %41 = vector.load %arg3[%c0_61, %c0_62] : memref<1x4xf32, #tpu.memory_space<vmem>>, vector<1x4xf32>
    %42 = vector.broadcast %41 : vector<1x4xf32> to vector<256x4xf32>
    %43 = arith.addf %40, %42 : vector<256x4xf32>
    %cst_63 = arith.constant 0.000000e+00 : f32
    %44 = vector.broadcast %cst_63 : f32 to vector<256x4xf32>
    %45 = arith.maximumf %43, %44 : vector<256x4xf32>
    %46 = vector.shape_cast %45 : vector<256x4xf32> to vector<16x16x4xf32>
    %c1_64 = arith.constant 1 : index
    %c1_65 = arith.constant 1 : index
    %c0_66 = arith.constant 0 : index
    %47 = vector.load %arg12[%c1_64, %c1_65, %c0_66] : memref<18x18x4xf32, #tpu.memory_space<vmem>>, vector<16x16x4xf32>
    tpu.vector_store %arg12[%c1_64, %c1_65, %c0_66], %46 {strides = array<i32>} : memref<18x18x4xf32, #tpu.memory_space<vmem>>, vector<16x16x4xf32>,
    %48 = vector.extract_strided_slice %46 {offsets = [1, 0, 0], sizes = [1, 16, 4], strides = [1, 1, 1]} : vector<16x16x4xf32> to vector<1x16x4xf32>
    %c0_67 = arith.constant 0 : index
    %c1_68 = arith.constant 1 : index
    %c0_69 = arith.constant 0 : index
    %49 = vector.load %arg12[%c0_67, %c1_68, %c0_69] : memref<18x18x4xf32, #tpu.memory_space<vmem>>, vector<1x16x4xf32>
    tpu.vector_store %arg12[%c0_67, %c1_68, %c0_69], %48 {strides = array<i32>} : memref<18x18x4xf32, #tpu.memory_space<vmem>>, vector<1x16x4xf32>,
    %50 = vector.extract_strided_slice %46 {offsets = [14, 0, 0], sizes = [1, 16, 4], strides = [1, 1, 1]} : vector<16x16x4xf32> to vector<1x16x4xf32>
    %c17_70 = arith.constant 17 : index
    %c1_71 = arith.constant 1 : index
    %c0_72 = arith.constant 0 : index
    %51 = vector.load %arg12[%c17_70, %c1_71, %c0_72] : memref<18x18x4xf32, #tpu.memory_space<vmem>>, vector<1x16x4xf32>
    tpu.vector_store %arg12[%c17_70, %c1_71, %c0_72], %50 {strides = array<i32>} : memref<18x18x4xf32, #tpu.memory_space<vmem>>, vector<1x16x4xf32>,
    %c0_73 = arith.constant 0 : index
    %c2_74 = arith.constant 2 : index
    %c0_75 = arith.constant 0 : index
    %52 = vector.load %arg12[%c0_73, %c2_74, %c0_75] : memref<18x18x4xf32, #tpu.memory_space<vmem>>, vector<18x1x4xf32>
    %c0_76 = arith.constant 0 : index
    %c0_77 = arith.constant 0 : index
    %c0_78 = arith.constant 0 : index
    %53 = vector.load %arg12[%c0_76, %c0_77, %c0_78] : memref<18x18x4xf32, #tpu.memory_space<vmem>>, vector<18x1x4xf32>
    tpu.vector_store %arg12[%c0_76, %c0_77, %c0_78], %52 {strides = array<i32>} : memref<18x18x4xf32, #tpu.memory_space<vmem>>, vector<18x1x4xf32>,
    %c0_79 = arith.constant 0 : index
    %c15_80 = arith.constant 15 : index
    %c0_81 = arith.constant 0 : index
    %54 = vector.load %arg12[%c0_79, %c15_80, %c0_81] : memref<18x18x4xf32, #tpu.memory_space<vmem>>, vector<18x1x4xf32>
    %c0_82 = arith.constant 0 : index
    %c17_83 = arith.constant 17 : index
    %c0_84 = arith.constant 0 : index
    %55 = vector.load %arg12[%c0_82, %c17_83, %c0_84] : memref<18x18x4xf32, #tpu.memory_space<vmem>>, vector<18x1x4xf32>
    tpu.vector_store %arg12[%c0_82, %c17_83, %c0_84], %54 {strides = array<i32>} : memref<18x18x4xf32, #tpu.memory_space<vmem>>, vector<18x1x4xf32>,
    %c0_85 = arith.constant 0 : index
    %c0_86 = arith.constant 0 : index
    %c0_87 = arith.constant 0 : index
    %56 = vector.load %arg12[%c0_85, %c0_86, %c0_87] : memref<18x18x4xf32, #tpu.memory_space<vmem>>, vector<16x16x4xf32>
    %57 = vector.shape_cast %56 : vector<16x16x4xf32> to vector<256x4xf32>
    %c0_88 = arith.constant 0 : index
    %c0_89 = arith.constant 0 : index
    %58 = vector.load %arg13[%c0_88, %c0_89] : memref<256x36xf32, #tpu.memory_space<vmem>>, vector<256x4xf32>
    tpu.vector_store %arg13[%c0_88, %c0_89], %57 {strides = array<i32>} : memref<256x36xf32, #tpu.memory_space<vmem>>, vector<256x4xf32>,
    %c0_90 = arith.constant 0 : index
    %c1_91 = arith.constant 1 : index
    %c0_92 = arith.constant 0 : index
    %59 = vector.load %arg12[%c0_90, %c1_91, %c0_92] : memref<18x18x4xf32, #tpu.memory_space<vmem>>, vector<16x16x4xf32>
    %60 = vector.shape_cast %59 : vector<16x16x4xf32> to vector<256x4xf32>
    %c0_93 = arith.constant 0 : index
    %c4 = arith.constant 4 : index
    %61 = vector.load %arg13[%c0_93, %c4] : memref<256x36xf32, #tpu.memory_space<vmem>>, vector<256x4xf32>
    tpu.vector_store %arg13[%c0_93, %c4], %60 {strides = array<i32>} : memref<256x36xf32, #tpu.memory_space<vmem>>, vector<256x4xf32>,
    %c0_94 = arith.constant 0 : index
    %c2_95 = arith.constant 2 : index
    %c0_96 = arith.constant 0 : index
    %62 = vector.load %arg12[%c0_94, %c2_95, %c0_96] : memref<18x18x4xf32, #tpu.memory_space<vmem>>, vector<16x16x4xf32>
    %63 = vector.shape_cast %62 : vector<16x16x4xf32> to vector<256x4xf32>
    %c0_97 = arith.constant 0 : index
    %c8 = arith.constant 8 : index
    %64 = vector.load %arg13[%c0_97, %c8] : memref<256x36xf32, #tpu.memory_space<vmem>>, vector<256x4xf32>
    tpu.vector_store %arg13[%c0_97, %c8], %63 {strides = array<i32>} : memref<256x36xf32, #tpu.memory_space<vmem>>, vector<256x4xf32>,
    %c1_98 = arith.constant 1 : index
    %c0_99 = arith.constant 0 : index
    %c0_100 = arith.constant 0 : index
    %65 = vector.load %arg12[%c1_98, %c0_99, %c0_100] : memref<18x18x4xf32, #tpu.memory_space<vmem>>, vector<16x16x4xf32>
    %66 = vector.shape_cast %65 : vector<16x16x4xf32> to vector<256x4xf32>
    %c0_101 = arith.constant 0 : index
    %c12 = arith.constant 12 : index
    %67 = vector.load %arg13[%c0_101, %c12] : memref<256x36xf32, #tpu.memory_space<vmem>>, vector<256x4xf32>
    tpu.vector_store %arg13[%c0_101, %c12], %66 {strides = array<i32>} : memref<256x36xf32, #tpu.memory_space<vmem>>, vector<256x4xf32>,
    %c1_102 = arith.constant 1 : index
    %c1_103 = arith.constant 1 : index
    %c0_104 = arith.constant 0 : index
    %68 = vector.load %arg12[%c1_102, %c1_103, %c0_104] : memref<18x18x4xf32, #tpu.memory_space<vmem>>, vector<16x16x4xf32>
    %69 = vector.shape_cast %68 : vector<16x16x4xf32> to vector<256x4xf32>
    %c0_105 = arith.constant 0 : index
    %c16 = arith.constant 16 : index
    %70 = vector.load %arg13[%c0_105, %c16] : memref<256x36xf32, #tpu.memory_space<vmem>>, vector<256x4xf32>
    tpu.vector_store %arg13[%c0_105, %c16], %69 {strides = array<i32>} : memref<256x36xf32, #tpu.memory_space<vmem>>, vector<256x4xf32>,
    %c1_106 = arith.constant 1 : index
    %c2_107 = arith.constant 2 : index
    %c0_108 = arith.constant 0 : index
    %71 = vector.load %arg12[%c1_106, %c2_107, %c0_108] : memref<18x18x4xf32, #tpu.memory_space<vmem>>, vector<16x16x4xf32>
    %72 = vector.shape_cast %71 : vector<16x16x4xf32> to vector<256x4xf32>
    %c0_109 = arith.constant 0 : index
    %c20 = arith.constant 20 : index
    %73 = vector.load %arg13[%c0_109, %c20] : memref<256x36xf32, #tpu.memory_space<vmem>>, vector<256x4xf32>
    tpu.vector_store %arg13[%c0_109, %c20], %72 {strides = array<i32>} : memref<256x36xf32, #tpu.memory_space<vmem>>, vector<256x4xf32>,
    %c2_110 = arith.constant 2 : index
    %c0_111 = arith.constant 0 : index
    %c0_112 = arith.constant 0 : index
    %74 = vector.load %arg12[%c2_110, %c0_111, %c0_112] : memref<18x18x4xf32, #tpu.memory_space<vmem>>, vector<16x16x4xf32>
    %75 = vector.shape_cast %74 : vector<16x16x4xf32> to vector<256x4xf32>
    %c0_113 = arith.constant 0 : index
    %c24 = arith.constant 24 : index
    %76 = vector.load %arg13[%c0_113, %c24] : memref<256x36xf32, #tpu.memory_space<vmem>>, vector<256x4xf32>
    tpu.vector_store %arg13[%c0_113, %c24], %75 {strides = array<i32>} : memref<256x36xf32, #tpu.memory_space<vmem>>, vector<256x4xf32>,
    %c2_114 = arith.constant 2 : index
    %c1_115 = arith.constant 1 : index
    %c0_116 = arith.constant 0 : index
    %77 = vector.load %arg12[%c2_114, %c1_115, %c0_116] : memref<18x18x4xf32, #tpu.memory_space<vmem>>, vector<16x16x4xf32>
    %78 = vector.shape_cast %77 : vector<16x16x4xf32> to vector<256x4xf32>
    %c0_117 = arith.constant 0 : index
    %c28 = arith.constant 28 : index
    %79 = vector.load %arg13[%c0_117, %c28] : memref<256x36xf32, #tpu.memory_space<vmem>>, vector<256x4xf32>
    tpu.vector_store %arg13[%c0_117, %c28], %78 {strides = array<i32>} : memref<256x36xf32, #tpu.memory_space<vmem>>, vector<256x4xf32>,
    %c2_118 = arith.constant 2 : index
    %c2_119 = arith.constant 2 : index
    %c0_120 = arith.constant 0 : index
    %80 = vector.load %arg12[%c2_118, %c2_119, %c0_120] : memref<18x18x4xf32, #tpu.memory_space<vmem>>, vector<16x16x4xf32>
    %81 = vector.shape_cast %80 : vector<16x16x4xf32> to vector<256x4xf32>
    %c0_121 = arith.constant 0 : index
    %c32_122 = arith.constant 32 : index
    %82 = vector.load %arg13[%c0_121, %c32_122] : memref<256x36xf32, #tpu.memory_space<vmem>>, vector<256x4xf32>
    tpu.vector_store %arg13[%c0_121, %c32_122], %81 {strides = array<i32>} : memref<256x36xf32, #tpu.memory_space<vmem>>, vector<256x4xf32>,
    %c0_123 = arith.constant 0 : index
    %c0_124 = arith.constant 0 : index
    %83 = vector.load %arg13[%c0_123, %c0_124] : memref<256x36xf32, #tpu.memory_space<vmem>>, vector<256x36xf32>
    %c0_125 = arith.constant 0 : index
    %c0_126 = arith.constant 0 : index
    %84 = vector.load %arg4[%c0_125, %c0_126] : memref<36x16xf32, #tpu.memory_space<vmem>>, vector<36x16xf32>
    %cst_127 = arith.constant dense<0.000000e+00> : vector<256x16xf32>
    %85 = tpu.matmul %83, %84, %cst_127 {dimension_numbers = #tpu.dot_dimension_numbers<[1], [0], [0], [1], [0, 0, 1, 1], [], []>} : vector<256x36xf32>, vector<36x16xf32>, vector<256x16xf32> -> vector<256x16xf32>
    %c0_128 = arith.constant 0 : index
    %c0_129 = arith.constant 0 : index
    %86 = vector.load %arg5[%c0_128, %c0_129] : memref<1x16xf32, #tpu.memory_space<vmem>>, vector<1x16xf32>
    %87 = vector.broadcast %86 : vector<1x16xf32> to vector<256x16xf32>
    %88 = arith.addf %85, %87 : vector<256x16xf32>
    %cst_130 = arith.constant dense<0.000000e+00> : vector<16xf32>
    %89 = vector.multi_reduction <add>, %88, %cst_130 [0] : vector<256x16xf32> to vector<16xf32>
    %90 = vector.shape_cast %89 : vector<16xf32> to vector<1x16xf32>
    %cst_131 = arith.constant 2.560000e+02 : f32
    %91 = vector.broadcast %cst_131 : f32 to vector<1x16xf32>
    %92 = arith.divf %90, %91 : vector<1x16xf32>
    %cst_132 = arith.constant dense<0xFF800000> : vector<16xf32>
    %93 = vector.multi_reduction <maximumf>, %88, %cst_132 [0] : vector<256x16xf32> to vector<16xf32>
    %94 = vector.shape_cast %93 : vector<16xf32> to vector<1x16xf32>
    %c0_133 = arith.constant 0 : index
    %c0_134 = arith.constant 0 : index
    %95 = vector.load %arg6[%c0_133, %c0_134] : memref<1x16xf32, #tpu.memory_space<vmem>>, vector<1x16xf32>
    %c0_135 = arith.constant 0 : index
    %c0_136 = arith.constant 0 : index
    %96 = vector.load %arg7[%c0_135, %c0_136] : memref<1x16xf32, #tpu.memory_space<vmem>>, vector<1x16xf32>
    %97 = arith.mulf %92, %95 : vector<1x16xf32>
    %cst_137 = arith.constant dense<0.000000e+00> : vector<1xf32>
    %98 = vector.multi_reduction <add>, %97, %cst_137 [1] : vector<1x16xf32> to vector<1xf32>
    %99 = vector.shape_cast %98 : vector<1xf32> to vector<1x1xf32>
    %cst_138 = arith.constant 0.000000e+00 : f32
    %100 = vector.broadcast %cst_138 : f32 to vector<1x1xf32>
    %101 = arith.maximumf %99, %100 : vector<1x1xf32>
    %102 = vector.broadcast %101 : vector<1x1xf32> to vector<1x16xf32>
    %103 = arith.mulf %102, %96 : vector<1x16xf32>
    %cst_139 = arith.constant dense<0.000000e+00> : vector<16xf32>
    %104 = vector.multi_reduction <add>, %103, %cst_139 [0] : vector<1x16xf32> to vector<16xf32>
    %105 = vector.shape_cast %104 : vector<16xf32> to vector<1x16xf32>
    %106 = arith.mulf %94, %95 : vector<1x16xf32>
    %cst_140 = arith.constant dense<0.000000e+00> : vector<1xf32>
    %107 = vector.multi_reduction <add>, %106, %cst_140 [1] : vector<1x16xf32> to vector<1xf32>
    %108 = vector.shape_cast %107 : vector<1xf32> to vector<1x1xf32>
    %cst_141 = arith.constant 0.000000e+00 : f32
    %109 = vector.broadcast %cst_141 : f32 to vector<1x1xf32>
    %110 = arith.maximumf %108, %109 : vector<1x1xf32>
    %111 = vector.broadcast %110 : vector<1x1xf32> to vector<1x16xf32>
    %112 = arith.mulf %111, %96 : vector<1x16xf32>
    %cst_142 = arith.constant dense<0.000000e+00> : vector<16xf32>
    %113 = vector.multi_reduction <add>, %112, %cst_142 [0] : vector<1x16xf32> to vector<16xf32>
    %114 = vector.shape_cast %113 : vector<16xf32> to vector<1x16xf32>
    %115 = arith.addf %105, %114 : vector<1x16xf32>
    %116 = arith.negf %115 : vector<1x16xf32>
    %117 = math.exp %116 : vector<1x16xf32>
    %cst_143 = arith.constant 1.000000e+00 : f32
    %118 = vector.broadcast %cst_143 : f32 to vector<1x16xf32>
    %119 = arith.addf %118, %117 : vector<1x16xf32>
    %120 = arith.divf %118, %119 : vector<1x16xf32>
    %121 = vector.broadcast %120 : vector<1x16xf32> to vector<256x16xf32>
    %122 = arith.mulf %88, %121 : vector<256x16xf32>
    %123 = vector.shape_cast %122 : vector<256x16xf32> to vector<16x16x16xf32>
    %cst_144 = arith.constant dense<0.000000e+00> : vector<16x16xf32>
    %124 = vector.multi_reduction <add>, %123, %cst_144 [2] : vector<16x16x16xf32> to vector<16x16xf32>
    %cst_145 = arith.constant 1.600000e+01 : f32
    %125 = vector.broadcast %cst_145 : f32 to vector<16x16xf32>
    %126 = arith.divf %124, %125 : vector<16x16xf32>
    %cst_146 = arith.constant dense<0xFF800000> : vector<16x16xf32>
    %127 = vector.multi_reduction <maximumf>, %123, %cst_146 [2] : vector<16x16x16xf32> to vector<16x16xf32>
    %c3 = arith.constant 3 : index
    %c3_147 = arith.constant 3 : index
    %128 = vector.load %arg14[%c3, %c3_147] : memref<22x22xf32, #tpu.memory_space<vmem>>, vector<16x16xf32>
    tpu.vector_store %arg14[%c3, %c3_147], %126 {strides = array<i32>} : memref<22x22xf32, #tpu.memory_space<vmem>>, vector<16x16xf32>,
    %129 = vector.extract_strided_slice %126 {offsets = [3, 0], sizes = [1, 16], strides = [1, 1]} : vector<16x16xf32> to vector<1x16xf32>
    %c0_148 = arith.constant 0 : index
    %c3_149 = arith.constant 3 : index
    %130 = vector.load %arg14[%c0_148, %c3_149] : memref<22x22xf32, #tpu.memory_space<vmem>>, vector<1x16xf32>
    tpu.vector_store %arg14[%c0_148, %c3_149], %129 {strides = array<i32>} : memref<22x22xf32, #tpu.memory_space<vmem>>, vector<1x16xf32>,
    %131 = vector.extract_strided_slice %126 {offsets = [2, 0], sizes = [1, 16], strides = [1, 1]} : vector<16x16xf32> to vector<1x16xf32>
    %c1_150 = arith.constant 1 : index
    %c3_151 = arith.constant 3 : index
    %132 = vector.load %arg14[%c1_150, %c3_151] : memref<22x22xf32, #tpu.memory_space<vmem>>, vector<1x16xf32>
    tpu.vector_store %arg14[%c1_150, %c3_151], %131 {strides = array<i32>} : memref<22x22xf32, #tpu.memory_space<vmem>>, vector<1x16xf32>,
    %133 = vector.extract_strided_slice %126 {offsets = [1, 0], sizes = [1, 16], strides = [1, 1]} : vector<16x16xf32> to vector<1x16xf32>
    %c2_152 = arith.constant 2 : index
    %c3_153 = arith.constant 3 : index
    %134 = vector.load %arg14[%c2_152, %c3_153] : memref<22x22xf32, #tpu.memory_space<vmem>>, vector<1x16xf32>
    tpu.vector_store %arg14[%c2_152, %c3_153], %133 {strides = array<i32>} : memref<22x22xf32, #tpu.memory_space<vmem>>, vector<1x16xf32>,
    %135 = vector.extract_strided_slice %126 {offsets = [14, 0], sizes = [1, 16], strides = [1, 1]} : vector<16x16xf32> to vector<1x16xf32>
    %c19 = arith.constant 19 : index
    %c3_154 = arith.constant 3 : index
    %136 = vector.load %arg14[%c19, %c3_154] : memref<22x22xf32, #tpu.memory_space<vmem>>, vector<1x16xf32>
    tpu.vector_store %arg14[%c19, %c3_154], %135 {strides = array<i32>} : memref<22x22xf32, #tpu.memory_space<vmem>>, vector<1x16xf32>,
    %137 = vector.extract_strided_slice %126 {offsets = [13, 0], sizes = [1, 16], strides = [1, 1]} : vector<16x16xf32> to vector<1x16xf32>
    %c20_155 = arith.constant 20 : index
    %c3_156 = arith.constant 3 : index
    %138 = vector.load %arg14[%c20_155, %c3_156] : memref<22x22xf32, #tpu.memory_space<vmem>>, vector<1x16xf32>
    tpu.vector_store %arg14[%c20_155, %c3_156], %137 {strides = array<i32>} : memref<22x22xf32, #tpu.memory_space<vmem>>, vector<1x16xf32>,
    %139 = vector.extract_strided_slice %126 {offsets = [12, 0], sizes = [1, 16], strides = [1, 1]} : vector<16x16xf32> to vector<1x16xf32>
    %c21 = arith.constant 21 : index
    %c3_157 = arith.constant 3 : index
    %140 = vector.load %arg14[%c21, %c3_157] : memref<22x22xf32, #tpu.memory_space<vmem>>, vector<1x16xf32>
    tpu.vector_store %arg14[%c21, %c3_157], %139 {strides = array<i32>} : memref<22x22xf32, #tpu.memory_space<vmem>>, vector<1x16xf32>,
    %c0_158 = arith.constant 0 : index
    %c6 = arith.constant 6 : index
    %141 = vector.load %arg14[%c0_158, %c6] : memref<22x22xf32, #tpu.memory_space<vmem>>, vector<22x1xf32>
    %c0_159 = arith.constant 0 : index
    %c0_160 = arith.constant 0 : index
    %142 = vector.load %arg14[%c0_159, %c0_160] : memref<22x22xf32, #tpu.memory_space<vmem>>, vector<22x1xf32>
    tpu.vector_store %arg14[%c0_159, %c0_160], %141 {strides = array<i32>} : memref<22x22xf32, #tpu.memory_space<vmem>>, vector<22x1xf32>,
    %c0_161 = arith.constant 0 : index
    %c5 = arith.constant 5 : index
    %143 = vector.load %arg14[%c0_161, %c5] : memref<22x22xf32, #tpu.memory_space<vmem>>, vector<22x1xf32>
    %c0_162 = arith.constant 0 : index
    %c1_163 = arith.constant 1 : index
    %144 = vector.load %arg14[%c0_162, %c1_163] : memref<22x22xf32, #tpu.memory_space<vmem>>, vector<22x1xf32>
    tpu.vector_store %arg14[%c0_162, %c1_163], %143 {strides = array<i32>} : memref<22x22xf32, #tpu.memory_space<vmem>>, vector<22x1xf32>,
    %c0_164 = arith.constant 0 : index
    %c4_165 = arith.constant 4 : index
    %145 = vector.load %arg14[%c0_164, %c4_165] : memref<22x22xf32, #tpu.memory_space<vmem>>, vector<22x1xf32>
    %c0_166 = arith.constant 0 : index
    %c2_167 = arith.constant 2 : index
    %146 = vector.load %arg14[%c0_166, %c2_167] : memref<22x22xf32, #tpu.memory_space<vmem>>, vector<22x1xf32>
    tpu.vector_store %arg14[%c0_166, %c2_167], %145 {strides = array<i32>} : memref<22x22xf32, #tpu.memory_space<vmem>>, vector<22x1xf32>,
    %c0_168 = arith.constant 0 : index
    %c17_169 = arith.constant 17 : index
    %147 = vector.load %arg14[%c0_168, %c17_169] : memref<22x22xf32, #tpu.memory_space<vmem>>, vector<22x1xf32>
    %c0_170 = arith.constant 0 : index
    %c19_171 = arith.constant 19 : index
    %148 = vector.load %arg14[%c0_170, %c19_171] : memref<22x22xf32, #tpu.memory_space<vmem>>, vector<22x1xf32>
    tpu.vector_store %arg14[%c0_170, %c19_171], %147 {strides = array<i32>} : memref<22x22xf32, #tpu.memory_space<vmem>>, vector<22x1xf32>,
    %c0_172 = arith.constant 0 : index
    %c16_173 = arith.constant 16 : index
    %149 = vector.load %arg14[%c0_172, %c16_173] : memref<22x22xf32, #tpu.memory_space<vmem>>, vector<22x1xf32>
    %c0_174 = arith.constant 0 : index
    %c20_175 = arith.constant 20 : index
    %150 = vector.load %arg14[%c0_174, %c20_175] : memref<22x22xf32, #tpu.memory_space<vmem>>, vector<22x1xf32>
    tpu.vector_store %arg14[%c0_174, %c20_175], %149 {strides = array<i32>} : memref<22x22xf32, #tpu.memory_space<vmem>>, vector<22x1xf32>,
    %c0_176 = arith.constant 0 : index
    %c15_177 = arith.constant 15 : index
    %151 = vector.load %arg14[%c0_176, %c15_177] : memref<22x22xf32, #tpu.memory_space<vmem>>, vector<22x1xf32>
    %c0_178 = arith.constant 0 : index
    %c21_179 = arith.constant 21 : index
    %152 = vector.load %arg14[%c0_178, %c21_179] : memref<22x22xf32, #tpu.memory_space<vmem>>, vector<22x1xf32>
    tpu.vector_store %arg14[%c0_178, %c21_179], %151 {strides = array<i32>} : memref<22x22xf32, #tpu.memory_space<vmem>>, vector<22x1xf32>,
    %c3_180 = arith.constant 3 : index
    %c3_181 = arith.constant 3 : index
    %153 = vector.load %arg15[%c3_180, %c3_181] : memref<22x22xf32, #tpu.memory_space<vmem>>, vector<16x16xf32>
    tpu.vector_store %arg15[%c3_180, %c3_181], %127 {strides = array<i32>} : memref<22x22xf32, #tpu.memory_space<vmem>>, vector<16x16xf32>,
    %154 = vector.extract_strided_slice %127 {offsets = [3, 0], sizes = [1, 16], strides = [1, 1]} : vector<16x16xf32> to vector<1x16xf32>
    %c0_182 = arith.constant 0 : index
    %c3_183 = arith.constant 3 : index
    %155 = vector.load %arg15[%c0_182, %c3_183] : memref<22x22xf32, #tpu.memory_space<vmem>>, vector<1x16xf32>
    tpu.vector_store %arg15[%c0_182, %c3_183], %154 {strides = array<i32>} : memref<22x22xf32, #tpu.memory_space<vmem>>, vector<1x16xf32>,
    %156 = vector.extract_strided_slice %127 {offsets = [2, 0], sizes = [1, 16], strides = [1, 1]} : vector<16x16xf32> to vector<1x16xf32>
    %c1_184 = arith.constant 1 : index
    %c3_185 = arith.constant 3 : index
    %157 = vector.load %arg15[%c1_184, %c3_185] : memref<22x22xf32, #tpu.memory_space<vmem>>, vector<1x16xf32>
    tpu.vector_store %arg15[%c1_184, %c3_185], %156 {strides = array<i32>} : memref<22x22xf32, #tpu.memory_space<vmem>>, vector<1x16xf32>,
    %158 = vector.extract_strided_slice %127 {offsets = [1, 0], sizes = [1, 16], strides = [1, 1]} : vector<16x16xf32> to vector<1x16xf32>
    %c2_186 = arith.constant 2 : index
    %c3_187 = arith.constant 3 : index
    %159 = vector.load %arg15[%c2_186, %c3_187] : memref<22x22xf32, #tpu.memory_space<vmem>>, vector<1x16xf32>
    tpu.vector_store %arg15[%c2_186, %c3_187], %158 {strides = array<i32>} : memref<22x22xf32, #tpu.memory_space<vmem>>, vector<1x16xf32>,
    %160 = vector.extract_strided_slice %127 {offsets = [14, 0], sizes = [1, 16], strides = [1, 1]} : vector<16x16xf32> to vector<1x16xf32>
    %c19_188 = arith.constant 19 : index
    %c3_189 = arith.constant 3 : index
    %161 = vector.load %arg15[%c19_188, %c3_189] : memref<22x22xf32, #tpu.memory_space<vmem>>, vector<1x16xf32>
    tpu.vector_store %arg15[%c19_188, %c3_189], %160 {strides = array<i32>} : memref<22x22xf32, #tpu.memory_space<vmem>>, vector<1x16xf32>,
    %162 = vector.extract_strided_slice %127 {offsets = [13, 0], sizes = [1, 16], strides = [1, 1]} : vector<16x16xf32> to vector<1x16xf32>
    %c20_190 = arith.constant 20 : index
    %c3_191 = arith.constant 3 : index
    %163 = vector.load %arg15[%c20_190, %c3_191] : memref<22x22xf32, #tpu.memory_space<vmem>>, vector<1x16xf32>
    tpu.vector_store %arg15[%c20_190, %c3_191], %162 {strides = array<i32>} : memref<22x22xf32, #tpu.memory_space<vmem>>, vector<1x16xf32>,
    %164 = vector.extract_strided_slice %127 {offsets = [12, 0], sizes = [1, 16], strides = [1, 1]} : vector<16x16xf32> to vector<1x16xf32>
    %c21_192 = arith.constant 21 : index
    %c3_193 = arith.constant 3 : index
    %165 = vector.load %arg15[%c21_192, %c3_193] : memref<22x22xf32, #tpu.memory_space<vmem>>, vector<1x16xf32>
    tpu.vector_store %arg15[%c21_192, %c3_193], %164 {strides = array<i32>} : memref<22x22xf32, #tpu.memory_space<vmem>>, vector<1x16xf32>,
    %c0_194 = arith.constant 0 : index
    %c6_195 = arith.constant 6 : index
    %166 = vector.load %arg15[%c0_194, %c6_195] : memref<22x22xf32, #tpu.memory_space<vmem>>, vector<22x1xf32>
    %c0_196 = arith.constant 0 : index
    %c0_197 = arith.constant 0 : index
    %167 = vector.load %arg15[%c0_196, %c0_197] : memref<22x22xf32, #tpu.memory_space<vmem>>, vector<22x1xf32>
    tpu.vector_store %arg15[%c0_196, %c0_197], %166 {strides = array<i32>} : memref<22x22xf32, #tpu.memory_space<vmem>>, vector<22x1xf32>,
    %c0_198 = arith.constant 0 : index
    %c5_199 = arith.constant 5 : index
    %168 = vector.load %arg15[%c0_198, %c5_199] : memref<22x22xf32, #tpu.memory_space<vmem>>, vector<22x1xf32>
    %c0_200 = arith.constant 0 : index
    %c1_201 = arith.constant 1 : index
    %169 = vector.load %arg15[%c0_200, %c1_201] : memref<22x22xf32, #tpu.memory_space<vmem>>, vector<22x1xf32>
    tpu.vector_store %arg15[%c0_200, %c1_201], %168 {strides = array<i32>} : memref<22x22xf32, #tpu.memory_space<vmem>>, vector<22x1xf32>,
    %c0_202 = arith.constant 0 : index
    %c4_203 = arith.constant 4 : index
    %170 = vector.load %arg15[%c0_202, %c4_203] : memref<22x22xf32, #tpu.memory_space<vmem>>, vector<22x1xf32>
    %c0_204 = arith.constant 0 : index
    %c2_205 = arith.constant 2 : index
    %171 = vector.load %arg15[%c0_204, %c2_205] : memref<22x22xf32, #tpu.memory_space<vmem>>, vector<22x1xf32>
    tpu.vector_store %arg15[%c0_204, %c2_205], %170 {strides = array<i32>} : memref<22x22xf32, #tpu.memory_space<vmem>>, vector<22x1xf32>,
    %c0_206 = arith.constant 0 : index
    %c17_207 = arith.constant 17 : index
    %172 = vector.load %arg15[%c0_206, %c17_207] : memref<22x22xf32, #tpu.memory_space<vmem>>, vector<22x1xf32>
    %c0_208 = arith.constant 0 : index
    %c19_209 = arith.constant 19 : index
    %173 = vector.load %arg15[%c0_208, %c19_209] : memref<22x22xf32, #tpu.memory_space<vmem>>, vector<22x1xf32>
    tpu.vector_store %arg15[%c0_208, %c19_209], %172 {strides = array<i32>} : memref<22x22xf32, #tpu.memory_space<vmem>>, vector<22x1xf32>,
    %c0_210 = arith.constant 0 : index
    %c16_211 = arith.constant 16 : index
    %174 = vector.load %arg15[%c0_210, %c16_211] : memref<22x22xf32, #tpu.memory_space<vmem>>, vector<22x1xf32>
    %c0_212 = arith.constant 0 : index
    %c20_213 = arith.constant 20 : index
    %175 = vector.load %arg15[%c0_212, %c20_213] : memref<22x22xf32, #tpu.memory_space<vmem>>, vector<22x1xf32>
    tpu.vector_store %arg15[%c0_212, %c20_213], %174 {strides = array<i32>} : memref<22x22xf32, #tpu.memory_space<vmem>>, vector<22x1xf32>,
    %c0_214 = arith.constant 0 : index
    %c15_215 = arith.constant 15 : index
    %176 = vector.load %arg15[%c0_214, %c15_215] : memref<22x22xf32, #tpu.memory_space<vmem>>, vector<22x1xf32>
    %c0_216 = arith.constant 0 : index
    %c21_217 = arith.constant 21 : index
    %177 = vector.load %arg15[%c0_216, %c21_217] : memref<22x22xf32, #tpu.memory_space<vmem>>, vector<22x1xf32>
    tpu.vector_store %arg15[%c0_216, %c21_217], %176 {strides = array<i32>} : memref<22x22xf32, #tpu.memory_space<vmem>>, vector<22x1xf32>,
    %c0_218 = arith.constant 0 : index
    %c0_219 = arith.constant 0 : index
    %178 = vector.load %arg14[%c0_218, %c0_219] : memref<22x22xf32, #tpu.memory_space<vmem>>, vector<16x22xf32>
    %c0_220 = arith.constant 0 : index
    %c0_221 = arith.constant 0 : index
    %179 = vector.load %arg16[%c0_220, %c0_221] : memref<16x308xf32, #tpu.memory_space<vmem>>, vector<16x22xf32>
    tpu.vector_store %arg16[%c0_220, %c0_221], %178 {strides = array<i32>} : memref<16x308xf32, #tpu.memory_space<vmem>>, vector<16x22xf32>,
    %c0_222 = arith.constant 0 : index
    %c0_223 = arith.constant 0 : index
    %180 = vector.load %arg15[%c0_222, %c0_223] : memref<22x22xf32, #tpu.memory_space<vmem>>, vector<16x22xf32>
    %c0_224 = arith.constant 0 : index
    %c154 = arith.constant 154 : index
    %181 = vector.load %arg16[%c0_224, %c154] : memref<16x308xf32, #tpu.memory_space<vmem>>, vector<16x22xf32>
    tpu.vector_store %arg16[%c0_224, %c154], %180 {strides = array<i32>} : memref<16x308xf32, #tpu.memory_space<vmem>>, vector<16x22xf32>,
    %c1_225 = arith.constant 1 : index
    %c0_226 = arith.constant 0 : index
    %182 = vector.load %arg14[%c1_225, %c0_226] : memref<22x22xf32, #tpu.memory_space<vmem>>, vector<16x22xf32>
    %c0_227 = arith.constant 0 : index
    %c22 = arith.constant 22 : index
    %183 = vector.load %arg16[%c0_227, %c22] : memref<16x308xf32, #tpu.memory_space<vmem>>, vector<16x22xf32>
    tpu.vector_store %arg16[%c0_227, %c22], %182 {strides = array<i32>} : memref<16x308xf32, #tpu.memory_space<vmem>>, vector<16x22xf32>,
    %c1_228 = arith.constant 1 : index
    %c0_229 = arith.constant 0 : index
    %184 = vector.load %arg15[%c1_228, %c0_229] : memref<22x22xf32, #tpu.memory_space<vmem>>, vector<16x22xf32>
    %c0_230 = arith.constant 0 : index
    %c176 = arith.constant 176 : index
    %185 = vector.load %arg16[%c0_230, %c176] : memref<16x308xf32, #tpu.memory_space<vmem>>, vector<16x22xf32>
    tpu.vector_store %arg16[%c0_230, %c176], %184 {strides = array<i32>} : memref<16x308xf32, #tpu.memory_space<vmem>>, vector<16x22xf32>,
    %c2_231 = arith.constant 2 : index
    %c0_232 = arith.constant 0 : index
    %186 = vector.load %arg14[%c2_231, %c0_232] : memref<22x22xf32, #tpu.memory_space<vmem>>, vector<16x22xf32>
    %c0_233 = arith.constant 0 : index
    %c44 = arith.constant 44 : index
    %187 = vector.load %arg16[%c0_233, %c44] : memref<16x308xf32, #tpu.memory_space<vmem>>, vector<16x22xf32>
    tpu.vector_store %arg16[%c0_233, %c44], %186 {strides = array<i32>} : memref<16x308xf32, #tpu.memory_space<vmem>>, vector<16x22xf32>,
    %c2_234 = arith.constant 2 : index
    %c0_235 = arith.constant 0 : index
    %188 = vector.load %arg15[%c2_234, %c0_235] : memref<22x22xf32, #tpu.memory_space<vmem>>, vector<16x22xf32>
    %c0_236 = arith.constant 0 : index
    %c198 = arith.constant 198 : index
    %189 = vector.load %arg16[%c0_236, %c198] : memref<16x308xf32, #tpu.memory_space<vmem>>, vector<16x22xf32>
    tpu.vector_store %arg16[%c0_236, %c198], %188 {strides = array<i32>} : memref<16x308xf32, #tpu.memory_space<vmem>>, vector<16x22xf32>,
    %c3_237 = arith.constant 3 : index
    %c0_238 = arith.constant 0 : index
    %190 = vector.load %arg14[%c3_237, %c0_238] : memref<22x22xf32, #tpu.memory_space<vmem>>, vector<16x22xf32>
    %c0_239 = arith.constant 0 : index
    %c66 = arith.constant 66 : index
    %191 = vector.load %arg16[%c0_239, %c66] : memref<16x308xf32, #tpu.memory_space<vmem>>, vector<16x22xf32>
    tpu.vector_store %arg16[%c0_239, %c66], %190 {strides = array<i32>} : memref<16x308xf32, #tpu.memory_space<vmem>>, vector<16x22xf32>,
    %c3_240 = arith.constant 3 : index
    %c0_241 = arith.constant 0 : index
    %192 = vector.load %arg15[%c3_240, %c0_241] : memref<22x22xf32, #tpu.memory_space<vmem>>, vector<16x22xf32>
    %c0_242 = arith.constant 0 : index
    %c220 = arith.constant 220 : index
    %193 = vector.load %arg16[%c0_242, %c220] : memref<16x308xf32, #tpu.memory_space<vmem>>, vector<16x22xf32>
    tpu.vector_store %arg16[%c0_242, %c220], %192 {strides = array<i32>} : memref<16x308xf32, #tpu.memory_space<vmem>>, vector<16x22xf32>,
    %c4_243 = arith.constant 4 : index
    %c0_244 = arith.constant 0 : index
    %194 = vector.load %arg14[%c4_243, %c0_244] : memref<22x22xf32, #tpu.memory_space<vmem>>, vector<16x22xf32>
    %c0_245 = arith.constant 0 : index
    %c88 = arith.constant 88 : index
    %195 = vector.load %arg16[%c0_245, %c88] : memref<16x308xf32, #tpu.memory_space<vmem>>, vector<16x22xf32>
    tpu.vector_store %arg16[%c0_245, %c88], %194 {strides = array<i32>} : memref<16x308xf32, #tpu.memory_space<vmem>>, vector<16x22xf32>,
    %c4_246 = arith.constant 4 : index
    %c0_247 = arith.constant 0 : index
    %196 = vector.load %arg15[%c4_246, %c0_247] : memref<22x22xf32, #tpu.memory_space<vmem>>, vector<16x22xf32>
    %c0_248 = arith.constant 0 : index
    %c242 = arith.constant 242 : index
    %197 = vector.load %arg16[%c0_248, %c242] : memref<16x308xf32, #tpu.memory_space<vmem>>, vector<16x22xf32>
    tpu.vector_store %arg16[%c0_248, %c242], %196 {strides = array<i32>} : memref<16x308xf32, #tpu.memory_space<vmem>>, vector<16x22xf32>,
    %c5_249 = arith.constant 5 : index
    %c0_250 = arith.constant 0 : index
    %198 = vector.load %arg14[%c5_249, %c0_250] : memref<22x22xf32, #tpu.memory_space<vmem>>, vector<16x22xf32>
    %c0_251 = arith.constant 0 : index
    %c110 = arith.constant 110 : index
    %199 = vector.load %arg16[%c0_251, %c110] : memref<16x308xf32, #tpu.memory_space<vmem>>, vector<16x22xf32>
    tpu.vector_store %arg16[%c0_251, %c110], %198 {strides = array<i32>} : memref<16x308xf32, #tpu.memory_space<vmem>>, vector<16x22xf32>,
    %c5_252 = arith.constant 5 : index
    %c0_253 = arith.constant 0 : index
    %200 = vector.load %arg15[%c5_252, %c0_253] : memref<22x22xf32, #tpu.memory_space<vmem>>, vector<16x22xf32>
    %c0_254 = arith.constant 0 : index
    %c264 = arith.constant 264 : index
    %201 = vector.load %arg16[%c0_254, %c264] : memref<16x308xf32, #tpu.memory_space<vmem>>, vector<16x22xf32>
    tpu.vector_store %arg16[%c0_254, %c264], %200 {strides = array<i32>} : memref<16x308xf32, #tpu.memory_space<vmem>>, vector<16x22xf32>,
    %c6_255 = arith.constant 6 : index
    %c0_256 = arith.constant 0 : index
    %202 = vector.load %arg14[%c6_255, %c0_256] : memref<22x22xf32, #tpu.memory_space<vmem>>, vector<16x22xf32>
    %c0_257 = arith.constant 0 : index
    %c132 = arith.constant 132 : index
    %203 = vector.load %arg16[%c0_257, %c132] : memref<16x308xf32, #tpu.memory_space<vmem>>, vector<16x22xf32>
    tpu.vector_store %arg16[%c0_257, %c132], %202 {strides = array<i32>} : memref<16x308xf32, #tpu.memory_space<vmem>>, vector<16x22xf32>,
    %c6_258 = arith.constant 6 : index
    %c0_259 = arith.constant 0 : index
    %204 = vector.load %arg15[%c6_258, %c0_259] : memref<22x22xf32, #tpu.memory_space<vmem>>, vector<16x22xf32>
    %c0_260 = arith.constant 0 : index
    %c286 = arith.constant 286 : index
    %205 = vector.load %arg16[%c0_260, %c286] : memref<16x308xf32, #tpu.memory_space<vmem>>, vector<16x22xf32>
    tpu.vector_store %arg16[%c0_260, %c286], %204 {strides = array<i32>} : memref<16x308xf32, #tpu.memory_space<vmem>>, vector<16x22xf32>,
    %c0_261 = arith.constant 0 : index
    %c0_262 = arith.constant 0 : index
    %206 = vector.load %arg16[%c0_261, %c0_262] : memref<16x308xf32, #tpu.memory_space<vmem>>, vector<16x308xf32>
    %c0_263 = arith.constant 0 : index
    %c0_264 = arith.constant 0 : index
    %207 = vector.load %arg8[%c0_263, %c0_264] : memref<308x16xf32, #tpu.memory_space<vmem>>, vector<308x16xf32>
    %cst_265 = arith.constant dense<0.000000e+00> : vector<16x16xf32>
    %208 = tpu.matmul %206, %207, %cst_265 {dimension_numbers = #tpu.dot_dimension_numbers<[1], [0], [0], [1], [0, 0, 1, 1], [], []>} : vector<16x308xf32>, vector<308x16xf32>, vector<16x16xf32> -> vector<16x16xf32>
    %209 = arith.negf %208 : vector<16x16xf32>
    %210 = math.exp %209 : vector<16x16xf32>
    %cst_266 = arith.constant 1.000000e+00 : f32
    %211 = vector.broadcast %cst_266 : f32 to vector<16x16xf32>
    %212 = arith.addf %211, %210 : vector<16x16xf32>
    %213 = arith.divf %211, %212 : vector<16x16xf32>
    %214 = vector.shape_cast %213 : vector<16x16xf32> to vector<16x16x1xf32>
    %215 = vector.broadcast %214 : vector<16x16x1xf32> to vector<16x16x16xf32>
    %216 = arith.mulf %123, %215 : vector<16x16x16xf32>
    %c0_267 = arith.constant 0 : index
    %c0_268 = arith.constant 0 : index
    %c0_269 = arith.constant 0 : index
    %c0_270 = arith.constant 0 : index
    %217 = vector.load %arg9[%c0_267, %c0_268, %c0_269, %c0_270] : memref<1x16x16x16xf32, #tpu.memory_space<vmem>>, vector<1x16x16x16xf32>
    %218 = vector.shape_cast %217 : vector<1x16x16x16xf32> to vector<16x16x16xf32>
    %219 = vector.shape_cast %216 : vector<16x16x16xf32> to vector<1x16x16x16xf32>
    tpu.vector_store %arg9[%c0_267, %c0_268, %c0_269, %c0_270], %219 {strides = array<i32>} : memref<1x16x16x16xf32, #tpu.memory_space<vmem>>, vector<1x16x16x16xf32>,
    return
  }
  func.func @transform_0(%arg0: i32) -> (i32, i32, i32, i32) {
    %c0_i32 = arith.constant 0 : i32
    %c0_i32_0 = arith.constant 0 : i32
    %c0_i32_1 = arith.constant 0 : i32
    %c0_i32_2 = arith.constant 0 : i32
    return %arg0, %c0_i32, %c0_i32_0, %c0_i32_1 : i32, i32, i32, i32
  }
  func.func @transform_1(%arg0: i32) -> (i32, i32) {
    %c0_i32 = arith.constant 0 : i32
    %c0_i32_0 = arith.constant 0 : i32
    %c0_i32_1 = arith.constant 0 : i32
    return %c0_i32, %c0_i32_0 : i32, i32
  }
  func.func @transform_2(%arg0: i32) -> (i32, i32) {
    %c0_i32 = arith.constant 0 : i32
    %c0_i32_0 = arith.constant 0 : i32
    %c0_i32_1 = arith.constant 0 : i32
    return %c0_i32, %c0_i32_0 : i32, i32
  }
  func.func @transform_3(%arg0: i32) -> (i32, i32) {
    %c0_i32 = arith.constant 0 : i32
    %c0_i32_0 = arith.constant 0 : i32
    %c0_i32_1 = arith.constant 0 : i32
    return %c0_i32, %c0_i32_0 : i32, i32
  }
  func.func @transform_4(%arg0: i32) -> (i32, i32) {
    %c0_i32 = arith.constant 0 : i32
    %c0_i32_0 = arith.constant 0 : i32
    %c0_i32_1 = arith.constant 0 : i32
    return %c0_i32, %c0_i32_0 : i32, i32
  }
  func.func @transform_5(%arg0: i32) -> (i32, i32) {
    %c0_i32 = arith.constant 0 : i32
    %c0_i32_0 = arith.constant 0 : i32
    %c0_i32_1 = arith.constant 0 : i32
    return %c0_i32, %c0_i32_0 : i32, i32
  }
  func.func @transform_6(%arg0: i32) -> (i32, i32) {
    %c0_i32 = arith.constant 0 : i32
    %c0_i32_0 = arith.constant 0 : i32
    %c0_i32_1 = arith.constant 0 : i32
    return %c0_i32, %c0_i32_0 : i32, i32
  }
  func.func @transform_7(%arg0: i32) -> (i32, i32) {
    %c0_i32 = arith.constant 0 : i32
    %c0_i32_0 = arith.constant 0 : i32
    %c0_i32_1 = arith.constant 0 : i32
    return %c0_i32, %c0_i32_0 : i32, i32
  }
  func.func @transform_8(%arg0: i32) -> (i32, i32, i32, i32) {
    %c0_i32 = arith.constant 0 : i32
    %c0_i32_0 = arith.constant 0 : i32
    %c0_i32_1 = arith.constant 0 : i32
    %c0_i32_2 = arith.constant 0 : i32
    return %arg0, %c0_i32, %c0_i32_0, %c0_i32_1 : i32, i32, i32, i32
  }
}

</mosaic_0001>

<llo_original>
// kernel: ralayer_forward.1
$region0: #{ralayer_forward.1}
  #allocation0 [shape = 'u32[]', space=smem, size = 0x4, offset = 0x4, fixed_abs, tag = 'smem constant byte address 0x4 - core index']
  #allocation1 [shape = 'u32[72,128]{1,0:T(1,128)}', space=vmem, size = 0x9000, scoped, tag = 'internal scratch']
  #allocation2 [shape = 'f32[18,18,32]{2,1,0:T(8,128)}', space=vmem, size = 0x36000, scoped, tag = 'scratch operand']
  #allocation3 [shape = 'f32[256,288]{1,0:T(8,128)}', space=vmem, size = 0x60000, scoped, tag = 'scratch operand']
  #allocation4 [shape = 'f32[18,18,4]{2,1,0:T(8,128)}', space=vmem, size = 0x36000, scoped, tag = 'scratch operand']
  #allocation5 [shape = 'f32[256,36]{1,0:T(8,128)}', space=vmem, size = 0x20000, scoped, tag = 'scratch operand']
  #allocation6 [shape = 'f32[22,22]{1,0:T(8,128)}', space=vmem, size = 0x3000, scoped, tag = 'scratch operand']
  #allocation7 [shape = 'f32[22,22]{1,0:T(8,128)}', space=vmem, size = 0x3000, scoped, tag = 'scratch operand']
  #allocation8 [shape = 'f32[16,308]{1,0:T(8,128)}', space=vmem, size = 0x6000, scoped, tag = 'scratch operand']
  %s0 = inlined_call_operand.vmem [shape: f32[2,16,16,32], index: 0, kind: input, shape index: {}]
  %s1 = inlined_call_operand.vmem [shape: f32[288,4], index: 1, kind: input, shape index: {}]
  %s2 = inlined_call_operand.vmem [shape: f32[1,4], index: 2, kind: input, shape index: {}]
  %s3 = inlined_call_operand.vmem [shape: f32[36,16], index: 3, kind: input, shape index: {}]
  %s4 = inlined_call_operand.vmem [shape: f32[1,16], index: 4, kind: input, shape index: {}]
  %s5 = inlined_call_operand.vmem [shape: f32[1,16], index: 5, kind: input, shape index: {}]
  %s6 = inlined_call_operand.vmem [shape: f32[1,16], index: 6, kind: input, shape index: {}]
  %s7 = inlined_call_operand.vmem [shape: f32[308,16], index: 7, kind: input, shape index: {}]
  %s8 = inlined_call_operand.vmem [shape: f32[2,16,16,16], index: 8, kind: output, shape index: {}]
  %s9 = sld [smem:[#allocation0]]
  $region65: #{ralayer_forward.1} parent=0
    _
  %s11 = ssub.s32 1, %s9
  %s12 = scalar_select 0, %s11, %s9
  loop: start=0, step=1, limit=4
  $region2: #{ralayer_forward.1} parent=0 // loop_pre_header
    _
  $region3: #{ralayer_forward.1} parent=0 // loop_header
    %s14 = sphi 0, %s18
    %p15 = scmp.ge.s32.totalorder %s14, 4
    %s24 = sphi 0, %s26
    %s27 = sphi 0, %s24
    %s28 = sphi 0, %s27
    %s44 = sphi 0, %s28
    %s48 = sphi 0, %s48
    %s50 = sphi 0, %s48
    %s51 = sphi 0, %s50
    %s65 = sphi 0, %s51
    %s69 = sphi 0, %s69
    %s71 = sphi 0, %s69
    %s72 = sphi 0, %s71
    %s86 = sphi 0, %s72
    %s90 = sphi 0, %s90
    %s92 = sphi 0, %s90
    %s93 = sphi 0, %s92
    %s107 = sphi 0, %s93
    %s111 = sphi 0, %s111
    %s113 = sphi 0, %s111
    %s114 = sphi 0, %s113
    %s128 = sphi 0, %s114
    %s132 = sphi 0, %s132
    %s134 = sphi 0, %s132
    %s135 = sphi 0, %s134
    %s149 = sphi 0, %s135
    %s153 = sphi 0, %s153
    %s155 = sphi 0, %s153
    %s156 = sphi 0, %s155
    %s170 = sphi 0, %s156
    %s174 = sphi 0, %s174
    %s176 = sphi 0, %s174
    %s177 = sphi 0, %s176
    %s191 = sphi 0, %s177
    %s197 = sphi 0, %s199
    %s200 = sphi 0, %s197
    %s201 = sphi 0, %s200
    %s217 = sphi 0, %s201
  $region4: #{ralayer_forward.1} parent=0 // loop_header_branch
    %17 = sbr.rel (%p15) target = $region8
  $region5: #{ralayer_forward.1} parent=0 // loop_body
    %s19 = ssub.s32 %s14, 1
    %s20 = ssub.s32 %s14, 2
    %s21 = sadd.s32 %s14, 1
    %s22 = ssub.s32 %s14, %s21
    %p23 = scmp.eq.s32.totalorder %s22, 0
    %s25 = sadd.s32 %s24, 1
    %s26 = scalar_select %p23, %s24, %s25
    %p29 = pneg %p23
    %p30 = scmp.eq.s32.totalorder %s14, 1
    %p31 = por %p29, %p30
    %p32 = scmp.ne.s32.totalorder %s24, %s27
    %p33 = scmp.eq.s32.totalorder %s14, 0
    %p34 = por %p32, %p33
    %p35 = scmp.ne.s32.totalorder %s24, %s27
    %p36 = scmp.eq.s32.totalorder %s19, 1
    %p37 = por %p35, %p36
    %p38 = scmp.ne.s32.totalorder %s27, %s28
    %p39 = scmp.eq.s32.totalorder %s19, 0
    %p40 = por %p38, %p39
    %p41 = scmp.ne.s32.totalorder %s27, %s28
    %p42 = scmp.eq.s32.totalorder %s20, 1
    %p43 = por %p41, %p42
    %p45 = scmp.ne.s32.totalorder %s28, %s44
    %p46 = scmp.eq.s32.totalorder %s20, 0
    %p47 = por %p45, %p46
    %s49 = sadd.s32 %s48, 1
    %p52 = scmp.eq.s32.totalorder %s14, 1
    %p53 = scmp.ne.s32.totalorder %s48, %s50
    %p54 = scmp.eq.s32.totalorder %s14, 0
    %p55 = por %p53, %p54
    %p56 = scmp.ne.s32.totalorder %s48, %s50
    %p57 = scmp.eq.s32.totalorder %s19, 1
    %p58 = por %p56, %p57
    %p59 = scmp.ne.s32.totalorder %s50, %s51
    %p60 = scmp.eq.s32.totalorder %s19, 0
    %p61 = por %p59, %p60
    %p62 = scmp.ne.s32.totalorder %s50, %s51
    %p63 = scmp.eq.s32.totalorder %s20, 1
    %p64 = por %p62, %p63
    %p66 = scmp.ne.s32.totalorder %s51, %s65
    %p67 = scmp.eq.s32.totalorder %s20, 0
    %p68 = por %p66, %p67
    %s70 = sadd.s32 %s69, 1
    %p73 = scmp.eq.s32.totalorder %s14, 1
    %p74 = scmp.ne.s32.totalorder %s69, %s71
    %p75 = scmp.eq.s32.totalorder %s14, 0
    %p76 = por %p74, %p75
    %p77 = scmp.ne.s32.totalorder %s69, %s71
    %p78 = scmp.eq.s32.totalorder %s19, 1
    %p79 = por %p77, %p78
    %p80 = scmp.ne.s32.totalorder %s71, %s72
    %p81 = scmp.eq.s32.totalorder %s19, 0
    %p82 = por %p80, %p81
    %p83 = scmp.ne.s32.totalorder %s71, %s72
    %p84 = scmp.eq.s32.totalorder %s20, 1
    %p85 = por %p83, %p84
    %p87 = scmp.ne.s32.totalorder %s72, %s86
    %p88 = scmp.eq.s32.totalorder %s20, 0
    %p89 = por %p87, %p88
    %s91 = sadd.s32 %s90, 1
    %p94 = scmp.eq.s32.totalorder %s14, 1
    %p95 = scmp.ne.s32.totalorder %s90, %s92
    %p96 = scmp.eq.s32.totalorder %s14, 0
    %p97 = por %p95, %p96
    %p98 = scmp.ne.s32.totalorder %s90, %s92
    %p99 = scmp.eq.s32.totalorder %s19, 1
    %p100 = por %p98, %p99
    %p101 = scmp.ne.s32.totalorder %s92, %s93
    %p102 = scmp.eq.s32.totalorder %s19, 0
    %p103 = por %p101, %p102
    %p104 = scmp.ne.s32.totalorder %s92, %s93
    %p105 = scmp.eq.s32.totalorder %s20, 1
    %p106 = por %p104, %p105
    %p108 = scmp.ne.s32.totalorder %s93, %s107
    %p109 = scmp.eq.s32.totalorder %s20, 0
    %p110 = por %p108, %p109
    %s112 = sadd.s32 %s111, 1
    %p115 = scmp.eq.s32.totalorder %s14, 1
    %p116 = scmp.ne.s32.totalorder %s111, %s113
    %p117 = scmp.eq.s32.totalorder %s14, 0
    %p118 = por %p116, %p117
    %p119 = scmp.ne.s32.totalorder %s111, %s113
    %p120 = scmp.eq.s32.totalorder %s19, 1
    %p121 = por %p119, %p120
    %p122 = scmp.ne.s32.totalorder %s113, %s114
    %p123 = scmp.eq.s32.totalorder %s19, 0
    %p124 = por %p122, %p123
    %p125 = scmp.ne.s32.totalorder %s113, %s114
    %p126 = scmp.eq.s32.totalorder %s20, 1
    %p127 = por %p125, %p126
    %p129 = scmp.ne.s32.totalorder %s114, %s128
    %p130 = scmp.eq.s32.totalorder %s20, 0
    %p131 = por %p129, %p130
    %s133 = sadd.s32 %s132, 1
    %p136 = scmp.eq.s32.totalorder %s14, 1
    %p137 = scmp.ne.s32.totalorder %s132, %s134
    %p138 = scmp.eq.s32.totalorder %s14, 0
    %p139 = por %p137, %p138
    %p140 = scmp.ne.s32.totalorder %s132, %s134
    %p141 = scmp.eq.s32.totalorder %s19, 1
    %p142 = por %p140, %p141
    %p143 = scmp.ne.s32.totalorder %s134, %s135
    %p144 = scmp.eq.s32.totalorder %s19, 0
    %p145 = por %p143, %p144
    %p146 = scmp.ne.s32.totalorder %s134, %s135
    %p147 = scmp.eq.s32.totalorder %s20, 1
    %p148 = por %p146, %p147
    %p150 = scmp.ne.s32.totalorder %s135, %s149
    %p151 = scmp.eq.s32.totalorder %s20, 0
    %p152 = por %p150, %p151
    %s154 = sadd.s32 %s153, 1
    %p157 = scmp.eq.s32.totalorder %s14, 1
    %p158 = scmp.ne.s32.totalorder %s153, %s155
    %p159 = scmp.eq.s32.totalorder %s14, 0
    %p160 = por %p158, %p159
    %p161 = scmp.ne.s32.totalorder %s153, %s155
    %p162 = scmp.eq.s32.totalorder %s19, 1
    %p163 = por %p161, %p162
    %p164 = scmp.ne.s32.totalorder %s155, %s156
    %p165 = scmp.eq.s32.totalorder %s19, 0
    %p166 = por %p164, %p165
    %p167 = scmp.ne.s32.totalorder %s155, %s156
    %p168 = scmp.eq.s32.totalorder %s20, 1
    %p169 = por %p167, %p168
    %p171 = scmp.ne.s32.totalorder %s156, %s170
    %p172 = scmp.eq.s32.totalorder %s20, 0
    %p173 = por %p171, %p172
    %s175 = sadd.s32 %s174, 1
    %p178 = scmp.eq.s32.totalorder %s14, 1
    %p179 = scmp.ne.s32.totalorder %s174, %s176
    %p180 = scmp.eq.s32.totalorder %s14, 0
    %p181 = por %p179, %p180
    %p182 = scmp.ne.s32.totalorder %s174, %s176
    %p183 = scmp.eq.s32.totalorder %s19, 1
    %p184 = por %p182, %p183
    %p185 = scmp.ne.s32.totalorder %s176, %s177
    %p186 = scmp.eq.s32.totalorder %s19, 0
    %p187 = por %p185, %p186
    %p188 = scmp.ne.s32.totalorder %s176, %s177
    %p189 = scmp.eq.s32.totalorder %s20, 1
    %p190 = por %p188, %p189
    %p192 = scmp.ne.s32.totalorder %s177, %s191
    %p193 = scmp.eq.s32.totalorder %s20, 0
    %p194 = por %p192, %p193
    %s195 = ssub.s32 %s14, %s21
    %p196 = scmp.eq.s32.totalorder %s195, 0
    %s198 = sadd.s32 %s197, 1
    %s199 = scalar_select %p196, %s197, %s198
    %p202 = pneg %p196
    %p203 = scmp.eq.s32.totalorder %s14, 1
    %p204 = por %p202, %p203
    %p205 = scmp.ne.s32.totalorder %s197, %s200
    %p206 = scmp.eq.s32.totalorder %s14, 0
    %p207 = por %p205, %p206
    %p208 = scmp.ne.s32.totalorder %s197, %s200
    %p209 = scmp.eq.s32.totalorder %s19, 1
    %p210 = por %p208, %p209
    %p211 = scmp.ne.s32.totalorder %s200, %s201
    %p212 = scmp.eq.s32.totalorder %s19, 0
    %p213 = por %p211, %p212
    %p214 = scmp.ne.s32.totalorder %s200, %s201
    %p215 = scmp.eq.s32.totalorder %s20, 1
    %p216 = por %p214, %p215
    %p218 = scmp.ne.s32.totalorder %s201, %s217
    %p219 = scmp.eq.s32.totalorder %s20, 0
    %p220 = por %p218, %p219
    %p221 = scmp.le.s32.totalorder 1, %s14
    %p222 = scmp.lt.s32.totalorder %s14, 3
    %p223 = pnand %p221, %p222
    %p224 = pneg %p223
    // Predicated region
    $region9: #{ralayer_forward.1} parent=5 // pred_check
      _
    $region10: #{ralayer_forward.1} parent=5 // pred_check_branch
      %226 = sbr.rel (%p223) target = $region12
    $region11: #{ralayer_forward.1} parent=5 // pred_region
      %s227 = ssub.s32 %s14, 1
      // Predicated region
      $region13: #{ralayer_forward.1} parent=11 // pred_check
        %p228 = pneg %p61
      $region14: #{ralayer_forward.1} parent=11 // pred_check_branch
        %230 = sbr.rel (%p228) target = $region16
      $region15: #{ralayer_forward.1} parent=11 // pred_region
        _
      $region16: #{ralayer_forward.1} parent=11 // pred_fallthru
        _
      // Predicated region
      $region17: #{ralayer_forward.1} parent=11 // pred_check
        %p231 = pneg %p82
      $region18: #{ralayer_forward.1} parent=11 // pred_check_branch
        %233 = sbr.rel (%p231) target = $region20
      $region19: #{ralayer_forward.1} parent=11 // pred_region
        _
      $region20: #{ralayer_forward.1} parent=11 // pred_fallthru
        _
      // Predicated region
      $region21: #{ralayer_forward.1} parent=11 // pred_check
        %p234 = pneg %p103
      $region22: #{ralayer_forward.1} parent=11 // pred_check_branch
        %236 = sbr.rel (%p234) target = $region24
      $region23: #{ralayer_forward.1} parent=11 // pred_region
        _
      $region24: #{ralayer_forward.1} parent=11 // pred_fallthru
        _
      // Predicated region
      $region25: #{ralayer_forward.1} parent=11 // pred_check
        %p237 = pneg %p124
      $region26: #{ralayer_forward.1} parent=11 // pred_check_branch
        %239 = sbr.rel (%p237) target = $region28
      $region27: #{ralayer_forward.1} parent=11 // pred_region
        _
      $region28: #{ralayer_forward.1} parent=11 // pred_fallthru
        _
      // Predicated region
      $region29: #{ralayer_forward.1} parent=11 // pred_check
        %p240 = pneg %p145
      $region30: #{ralayer_forward.1} parent=11 // pred_check_branch
        %242 = sbr.rel (%p240) target = $region32
      $region31: #{ralayer_forward.1} parent=11 // pred_region
        _
      $region32: #{ralayer_forward.1} parent=11 // pred_fallthru
        _
      // Predicated region
      $region33: #{ralayer_forward.1} parent=11 // pred_check
        %p243 = pneg %p166
      $region34: #{ralayer_forward.1} parent=11 // pred_check_branch
        %245 = sbr.rel (%p243) target = $region36
      $region35: #{ralayer_forward.1} parent=11 // pred_region
        _
      $region36: #{ralayer_forward.1} parent=11 // pred_fallthru
        _
      // Predicated region
      $region37: #{ralayer_forward.1} parent=11 // pred_check
        %p246 = pneg %p187
      $region38: #{ralayer_forward.1} parent=11 // pred_check_branch
        %248 = sbr.rel (%p246) target = $region40
      $region39: #{ralayer_forward.1} parent=11 // pred_region
        _
      $region40: #{ralayer_forward.1} parent=11 // pred_fallthru
        _
    $region12: #{ralayer_forward.1} parent=5 // pred_fallthru
      _
    %p249 = scmp.lt.s32.totalorder %s14, 2
    // Predicated region
    $region41: #{ralayer_forward.1} parent=5 // pred_check
      %p250 = pneg %p249
    $region42: #{ralayer_forward.1} parent=5 // pred_check_branch
      %252 = sbr.rel (%p250) target = $region44
    $region43: #{ralayer_forward.1} parent=5 // pred_region
      // Predicated region
      $region45: #{ralayer_forward.1} parent=43 // pred_check
        %p253 = pneg %p34
      $region46: #{ralayer_forward.1} parent=43 // pred_check_branch
        %255 = sbr.rel (%p253) target = $region48
      $region47: #{ralayer_forward.1} parent=43 // pred_region
        %p256 = scmp.lt.s32.totalorder %s14, 1
        %s257 = scalar_select %p256, %s14, 1
        %s258 = smul.addr %s257, 32
        %s259 = smul.addr %s258, 8
        %s260 = scalar_lea.vmem %s0, %s259
      $region48: #{ralayer_forward.1} parent=43 // pred_fallthru
        _
    $region44: #{ralayer_forward.1} parent=5 // pred_fallthru
      _
    %p261 = scmp.le.s32.totalorder 1, %s14
    %p262 = scmp.lt.s32.totalorder %s14, 3
    %p263 = pnand %p261, %p262
    %p264 = pneg %p263
    // Predicated region
    $region49: #{ralayer_forward.1} parent=5 // pred_check
      _
    $region50: #{ralayer_forward.1} parent=5 // pred_check_branch
      %266 = sbr.rel (%p263) target = $region52
    $region51: #{ralayer_forward.1} parent=5 // pred_region
      %s267 = ssub.s32 %s14, 1
      %p268 = scmp.lt.s32.totalorder %s19, 1
      %s269 = scalar_select %p268, %s19, 1
      %s270 = smul.addr %s269, 32
      %s271 = smul.addr %s270, 8
      %s272 = scalar_lea.vmem %s0, %s271
      %p273 = pneg %p40
      %p274 = pneg %p37
      %p275 = pneg %p61
      %p276 = pneg %p58
      %p277 = pneg %p82
      %p278 = pneg %p79
      %p279 = pneg %p103
      %p280 = pneg %p100
      %p281 = pneg %p124
      %p282 = pneg %p121
      %p283 = pneg %p145
      %p284 = pneg %p142
      %p285 = pneg %p166
      %p286 = pneg %p163
      %p287 = pneg %p187
      %p288 = pneg %p184
      %p289 = pneg %p213
      %p290 = pneg %p210
      %p291 = scmp.lt.s32.totalorder %s19, 1
      %s292 = scalar_select %p291, %s19, 1
      %s293 = smul.addr %s292, 32
      %s294 = smul.addr %s293, 8
      %s295 = scalar_lea.vmem %s8, %s294
      %p296 = scmp.lt.s32.totalorder %s19, 1
      %s297 = scalar_select %p296, %s19, 1
      %s298 = smul.addr %s297, 32
      %s299 = smul.addr %s298, 8
      %s300 = scalar_lea.vmem %s0, %s299
      %p301 = scmp.lt.s32.totalorder %s19, 1
      %s302 = scalar_select %p301, %s19, 1
      %s303 = smul.addr %s302, 32
      %s304 = smul.addr %s303, 8
      %s305 = scalar_lea.vmem %s8, %s304
      %v306 = vld [vmem:[%s300] sm:$0xff]
      %v307 = vld [vmem:[%s300 + $0x8] sm:$0xff]
      %v308 = vld [vmem:[%s300 + $0x10] sm:$0xff]
      %v309 = vld [vmem:[%s300 + $0x18] sm:$0xff]
      %v310 = vld [vmem:[%s300 + $0x20] sm:$0xff]
      %v311 = vld [vmem:[%s300 + $0x28] sm:$0xff]
      %v312 = vld [vmem:[%s300 + $0x30] sm:$0xff]
      %v313 = vld [vmem:[%s300 + $0x38] sm:$0xff]
      %v314 = vld [vmem:[%s300 + $0x40] sm:$0xff]
      %v315 = vld [vmem:[%s300 + $0x48] sm:$0xff]
      %v316 = vld [vmem:[%s300 + $0x50] sm:$0xff]
      %v317 = vld [vmem:[%s300 + $0x58] sm:$0xff]
      %v318 = vld [vmem:[%s300 + $0x60] sm:$0xff]
      %v319 = vld [vmem:[%s300 + $0x68] sm:$0xff]
      %v320 = vld [vmem:[%s300 + $0x70] sm:$0xff]
      %v321 = vld [vmem:[%s300 + $0x78] sm:$0xff]
      %v322 = vld [vmem:[%s300 + $0x80] sm:$0xff]
      %v323 = vld [vmem:[%s300 + $0x88] sm:$0xff]
      %v324 = vld [vmem:[%s300 + $0x90] sm:$0xff]
      %v325 = vld [vmem:[%s300 + $0x98] sm:$0xff]
      %v326 = vld [vmem:[%s300 + $0xa0] sm:$0xff]
      %v327 = vld [vmem:[%s300 + $0xa8] sm:$0xff]
      %v328 = vld [vmem:[%s300 + $0xb0] sm:$0xff]
      %v329 = vld [vmem:[%s300 + $0xb8] sm:$0xff]
      %v330 = vld [vmem:[%s300 + $0xc0] sm:$0xff]
      %v331 = vld [vmem:[%s300 + $0xc8] sm:$0xff]
      %v332 = vld [vmem:[%s300 + $0xd0] sm:$0xff]
      %v333 = vld [vmem:[%s300 + $0xd8] sm:$0xff]
      %v334 = vld [vmem:[%s300 + $0xe0] sm:$0xff]
      %v335 = vld [vmem:[%s300 + $0xe8] sm:$0xff]
      %v336 = vld [vmem:[%s300 + $0xf0] sm:$0xff]
      %v337 = vld [vmem:[%s300 + $0xf8] sm:$0xff]
      %s338 = scalar_lea.vmem [#allocation2], 24
      %vm339 = vcmask 261120
      %340 = vst.msk [vmem:[%s338 + $0x1] sm:$0xff] %vm339, %v306
      %341 = vst.msk [vmem:[%s338 + $0x9] sm:$0xff] %vm339, %v307
      %342 = vst.msk [vmem:[%s338 + $0x19] sm:$0xff] %vm339, %v308
      %343 = vst.msk [vmem:[%s338 + $0x21] sm:$0xff] %vm339, %v309
      %344 = vst.msk [vmem:[%s338 + $0x31] sm:$0xff] %vm339, %v310
      %345 = vst.msk [vmem:[%s338 + $0x39] sm:$0xff] %vm339, %v311
      %346 = vst.msk [vmem:[%s338 + $0x49] sm:$0xff] %vm339, %v312
      %347 = vst.msk [vmem:[%s338 + $0x51] sm:$0xff] %vm339, %v313
      %348 = vst.msk [vmem:[%s338 + $0x61] sm:$0xff] %vm339, %v314
      %349 = vst.msk [vmem:[%s338 + $0x69] sm:$0xff] %vm339, %v315
      %350 = vst.msk [vmem:[%s338 + $0x79] sm:$0xff] %vm339, %v316
      %351 = vst.msk [vmem:[%s338 + $0x81] sm:$0xff] %vm339, %v317
      %352 = vst.msk [vmem:[%s338 + $0x91] sm:$0xff] %vm339, %v318
      %353 = vst.msk [vmem:[%s338 + $0x99] sm:$0xff] %vm339, %v319
      %354 = vst.msk [vmem:[%s338 + $0xa9] sm:$0xff] %vm339, %v320
      %355 = vst.msk [vmem:[%s338 + $0xb1] sm:$0xff] %vm339, %v321
      %356 = vst.msk [vmem:[%s338 + $0xc1] sm:$0xff] %vm339, %v322
      %357 = vst.msk [vmem:[%s338 + $0xc9] sm:$0xff] %vm339, %v323
      %358 = vst.msk [vmem:[%s338 + $0xd9] sm:$0xff] %vm339, %v324
      %359 = vst.msk [vmem:[%s338 + $0xe1] sm:$0xff] %vm339, %v325
      %360 = vst.msk [vmem:[%s338 + $0xf1] sm:$0xff] %vm339, %v326
      %361 = vst.msk [vmem:[%s338 + $0xf9] sm:$0xff] %vm339, %v327
      %362 = vst.msk [vmem:[%s338 + $0x109] sm:$0xff] %vm339, %v328
      %363 = vst.msk [vmem:[%s338 + $0x111] sm:$0xff] %vm339, %v329
      %364 = vst.msk [vmem:[%s338 + $0x121] sm:$0xff] %vm339, %v330
      %365 = vst.msk [vmem:[%s338 + $0x129] sm:$0xff] %vm339, %v331
      %366 = vst.msk [vmem:[%s338 + $0x139] sm:$0xff] %vm339, %v332
      %367 = vst.msk [vmem:[%s338 + $0x141] sm:$0xff] %vm339, %v333
      %368 = vst.msk [vmem:[%s338 + $0x151] sm:$0xff] %vm339, %v334
      %369 = vst.msk [vmem:[%s338 + $0x159] sm:$0xff] %vm339, %v335
      %370 = vst.msk [vmem:[%s338 + $0x169] sm:$0xff] %vm339, %v336
      %371 = vst.msk [vmem:[%s338 + $0x171] sm:$0xff] %vm339, %v337
      %372 = vst.msk [vmem:[#allocation2 + $0x1] sm:$0xff] %vm339, %v308
      %373 = vst.msk [vmem:[#allocation2 + $0x9] sm:$0xff] %vm339, %v309
      %s374 = scalar_lea.vmem [#allocation2], 408
      %375 = vst.msk [vmem:[%s374 + $0x1] sm:$0xff] %vm339, %v334
      %376 = vst.msk [vmem:[%s374 + $0x9] sm:$0xff] %vm339, %v335
      %v377 = vld [vmem:[#allocation2 + $0x2] sm:$0x1]
      %v378 = vld [vmem:[#allocation2 + $0x1a] sm:$0x1]
      %v379 = vld [vmem:[#allocation2 + $0x32] sm:$0x1]
      %v380 = vld [vmem:[#allocation2 + $0x4a] sm:$0x1]
      %v381 = vld [vmem:[#allocation2 + $0x62] sm:$0x1]
      %v382 = vld [vmem:[#allocation2 + $0x7a] sm:$0x1]
      %v383 = vld [vmem:[#allocation2 + $0x92] sm:$0x1]
      %v384 = vld [vmem:[#allocation2 + $0xaa] sm:$0x1]
      %v385 = vld [vmem:[#allocation2 + $0xc2] sm:$0x1]
      %v386 = vld [vmem:[#allocation2 + $0xda] sm:$0x1]
      %v387 = vld [vmem:[#allocation2 + $0xf2] sm:$0x1]
      %v388 = vld [vmem:[#allocation2 + $0x10a] sm:$0x1]
      %v389 = vld [vmem:[#allocation2 + $0x122] sm:$0x1]
      %v390 = vld [vmem:[#allocation2 + $0x13a] sm:$0x1]
      %v391 = vld [vmem:[#allocation2 + $0x152] sm:$0x1]
      %v392 = vld [vmem:[#allocation2 + $0x16a] sm:$0x1]
      %v393 = vld [vmem:[#allocation2 + $0x182] sm:$0x1]
      %v394 = vld [vmem:[#allocation2 + $0x19a] sm:$0x1]
      %vm395 = vcmask 253952
      %396 = vst.msk [vmem:[#allocation2] sm:$0x1] %vm395, %v377
      %397 = vst.msk [vmem:[#allocation2 + $0x18] sm:$0x1] %vm395, %v378
      %398 = vst.msk [vmem:[#allocation2 + $0x30] sm:$0x1] %vm395, %v379
      %399 = vst.msk [vmem:[#allocation2 + $0x48] sm:$0x1] %vm395, %v380
      %400 = vst.msk [vmem:[#allocation2 + $0x60] sm:$0x1] %vm395, %v381
      %401 = vst.msk [vmem:[#allocation2 + $0x78] sm:$0x1] %vm395, %v382
      %402 = vst.msk [vmem:[#allocation2 + $0x90] sm:$0x1] %vm395, %v383
      %403 = vst.msk [vmem:[#allocation2 + $0xa8] sm:$0x1] %vm395, %v384
      %404 = vst.msk [vmem:[#allocation2 + $0xc0] sm:$0x1] %vm395, %v385
      %405 = vst.msk [vmem:[#allocation2 + $0xd8] sm:$0x1] %vm395, %v386
      %406 = vst.msk [vmem:[#allocation2 + $0xf0] sm:$0x1] %vm395, %v387
      %407 = vst.msk [vmem:[#allocation2 + $0x108] sm:$0x1] %vm395, %v388
      %408 = vst.msk [vmem:[#allocation2 + $0x120] sm:$0x1] %vm395, %v389
      %409 = vst.msk [vmem:[#allocation2 + $0x138] sm:$0x1] %vm395, %v390
      %410 = vst.msk [vmem:[#allocation2 + $0x150] sm:$0x1] %vm395, %v391
      %411 = vst.msk [vmem:[#allocation2 + $0x168] sm:$0x1] %vm395, %v392
      %412 = vst.msk [vmem:[#allocation2 + $0x180] sm:$0x1] %vm395, %v393
      %413 = vst.msk [vmem:[#allocation2 + $0x198] sm:$0x1] %vm395, %v394
      %v414 = vld [vmem:[#allocation2 + $0xf] sm:$0x1]
      %v415 = vld [vmem:[#allocation2 + $0x27] sm:$0x1]
      %v416 = vld [vmem:[#allocation2 + $0x3f] sm:$0x1]
      %v417 = vld [vmem:[#allocation2 + $0x57] sm:$0x1]
      %v418 = vld [vmem:[#allocation2 + $0x6f] sm:$0x1]
      %v419 = vld [vmem:[#allocation2 + $0x87] sm:$0x1]
      %v420 = vld [vmem:[#allocation2 + $0x9f] sm:$0x1]
      %v421 = vld [vmem:[#allocation2 + $0xb7] sm:$0x1]
      %v422 = vld [vmem:[#allocation2 + $0xcf] sm:$0x1]
      %v423 = vld [vmem:[#allocation2 + $0xe7] sm:$0x1]
      %v424 = vld [vmem:[#allocation2 + $0xff] sm:$0x1]
      %v425 = vld [vmem:[#allocation2 + $0x117] sm:$0x1]
      %v426 = vld [vmem:[#allocation2 + $0x12f] sm:$0x1]
      %v427 = vld [vmem:[#allocation2 + $0x147] sm:$0x1]
      %v428 = vld [vmem:[#allocation2 + $0x15f] sm:$0x1]
      %v429 = vld [vmem:[#allocation2 + $0x177] sm:$0x1]
      %v430 = vld [vmem:[#allocation2 + $0x18f] sm:$0x1]
      %v431 = vld [vmem:[#allocation2 + $0x1a7] sm:$0x1]
      %432 = vst.msk [vmem:[#allocation2 + $0x11] sm:$0x1] %vm395, %v414
      %433 = vst.msk [vmem:[#allocation2 + $0x29] sm:$0x1] %vm395, %v415
      %434 = vst.msk [vmem:[#allocation2 + $0x41] sm:$0x1] %vm395, %v416
      %435 = vst.msk [vmem:[#allocation2 + $0x59] sm:$0x1] %vm395, %v417
      %436 = vst.msk [vmem:[#allocation2 + $0x71] sm:$0x1] %vm395, %v418
      %437 = vst.msk [vmem:[#allocation2 + $0x89] sm:$0x1] %vm395, %v419
      %438 = vst.msk [vmem:[#allocation2 + $0xa1] sm:$0x1] %vm395, %v420
      %439 = vst.msk [vmem:[#allocation2 + $0xb9] sm:$0x1] %vm395, %v421
      %440 = vst.msk [vmem:[#allocation2 + $0xd1] sm:$0x1] %vm395, %v422
      %441 = vst.msk [vmem:[#allocation2 + $0xe9] sm:$0x1] %vm395, %v423
      %442 = vst.msk [vmem:[#allocation2 + $0x101] sm:$0x1] %vm395, %v424
      %443 = vst.msk [vmem:[#allocation2 + $0x119] sm:$0x1] %vm395, %v425
      %444 = vst.msk [vmem:[#allocation2 + $0x131] sm:$0x1] %vm395, %v426
      %445 = vst.msk [vmem:[#allocation2 + $0x149] sm:$0x1] %vm395, %v427
      %446 = vst.msk [vmem:[#allocation2 + $0x161] sm:$0x1] %vm395, %v428
      %447 = vst.msk [vmem:[#allocation2 + $0x179] sm:$0x1] %vm395, %v429
      %448 = vst.msk [vmem:[#allocation2 + $0x191] sm:$0x1] %vm395, %v430
      %449 = vst.msk [vmem:[#allocation2 + $0x1a9] sm:$0x1] %vm395, %v431
      %v450 = vld [vmem:[#allocation2] sm:$0xff]
      %v451 = vld [vmem:[#allocation2 + $0x8] sm:$0xff]
      %v452 = vld [vmem:[#allocation2 + $0x18] sm:$0xff]
      %v453 = vld [vmem:[#allocation2 + $0x20] sm:$0xff]
      %v454 = vld [vmem:[#allocation2 + $0x30] sm:$0xff]
      %v455 = vld [vmem:[#allocation2 + $0x38] sm:$0xff]
      %v456 = vld [vmem:[#allocation2 + $0x48] sm:$0xff]
      %v457 = vld [vmem:[#allocation2 + $0x50] sm:$0xff]
      %v458 = vld [vmem:[#allocation2 + $0x60] sm:$0xff]
      %v459 = vld [vmem:[#allocation2 + $0x68] sm:$0xff]
      %v460 = vld [vmem:[#allocation2 + $0x78] sm:$0xff]
      %v461 = vld [vmem:[#allocation2 + $0x80] sm:$0xff]
      %v462 = vld [vmem:[#allocation2 + $0x90] sm:$0xff]
      %v463 = vld [vmem:[#allocation2 + $0x98] sm:$0xff]
      %v464 = vld [vmem:[#allocation2 + $0xa8] sm:$0xff]
      %v465 = vld [vmem:[#allocation2 + $0xb0] sm:$0xff]
      %v466 = vld [vmem:[#allocation2 + $0xc0] sm:$0xff]
      %v467 = vld [vmem:[#allocation2 + $0xc8] sm:$0xff]
      %v468 = vld [vmem:[#allocation2 + $0xd8] sm:$0xff]
      %v469 = vld [vmem:[#allocation2 + $0xe0] sm:$0xff]
      %v470 = vld [vmem:[#allocation2 + $0xf0] sm:$0xff]
      %v471 = vld [vmem:[#allocation2 + $0xf8] sm:$0xff]
      %v472 = vld [vmem:[#allocation2 + $0x108] sm:$0xff]
      %v473 = vld [vmem:[#allocation2 + $0x110] sm:$0xff]
      %v474 = vld [vmem:[#allocation2 + $0x120] sm:$0xff]
      %v475 = vld [vmem:[#allocation2 + $0x128] sm:$0xff]
      %v476 = vld [vmem:[#allocation2 + $0x138] sm:$0xff]
      %v477 = vld [vmem:[#allocation2 + $0x140] sm:$0xff]
      %v478 = vld [vmem:[#allocation2 + $0x150] sm:$0xff]
      %v479 = vld [vmem:[#allocation2 + $0x158] sm:$0xff]
      %v480 = vld [vmem:[#allocation2 + $0x168] sm:$0xff]
      %v481 = vld [vmem:[#allocation2 + $0x170] sm:$0xff]
      %482 = vst.msk [vmem:[#allocation3] sm:$0xff] %vm339, %v450
      %483 = vst.msk [vmem:[#allocation3 + $0x18] sm:$0xff] %vm339, %v451
      %484 = vst.msk [vmem:[#allocation3 + $0x30] sm:$0xff] %vm339, %v452
      %485 = vst.msk [vmem:[#allocation3 + $0x48] sm:$0xff] %vm339, %v453
      %486 = vst.msk [vmem:[#allocation3 + $0x60] sm:$0xff] %vm339, %v454
      %487 = vst.msk [vmem:[#allocation3 + $0x78] sm:$0xff] %vm339, %v455
      %488 = vst.msk [vmem:[#allocation3 + $0x90] sm:$0xff] %vm339, %v456
      %489 = vst.msk [vmem:[#allocation3 + $0xa8] sm:$0xff] %vm339, %v457
      %490 = vst.msk [vmem:[#allocation3 + $0xc0] sm:$0xff] %vm339, %v458
      %491 = vst.msk [vmem:[#allocation3 + $0xd8] sm:$0xff] %vm339, %v459
      %492 = vst.msk [vmem:[#allocation3 + $0xf0] sm:$0xff] %vm339, %v460
      %493 = vst.msk [vmem:[#allocation3 + $0x108] sm:$0xff] %vm339, %v461
      %494 = vst.msk [vmem:[#allocation3 + $0x120] sm:$0xff] %vm339, %v462
      %495 = vst.msk [vmem:[#allocation3 + $0x138] sm:$0xff] %vm339, %v463
      %496 = vst.msk [vmem:[#allocation3 + $0x150] sm:$0xff] %vm339, %v464
      %497 = vst.msk [vmem:[#allocation3 + $0x168] sm:$0xff] %vm339, %v465
      %498 = vst.msk [vmem:[#allocation3 + $0x180] sm:$0xff] %vm339, %v466
      %499 = vst.msk [vmem:[#allocation3 + $0x198] sm:$0xff] %vm339, %v467
      %500 = vst.msk [vmem:[#allocation3 + $0x1b0] sm:$0xff] %vm339, %v468
      %501 = vst.msk [vmem:[#allocation3 + $0x1c8] sm:$0xff] %vm339, %v469
      %502 = vst.msk [vmem:[#allocation3 + $0x1e0] sm:$0xff] %vm339, %v470
      %503 = vst.msk [vmem:[#allocation3 + $0x1f8] sm:$0xff] %vm339, %v471
      %504 = vst.msk [vmem:[#allocation3 + $0x210] sm:$0xff] %vm339, %v472
      %505 = vst.msk [vmem:[#allocation3 + $0x228] sm:$0xff] %vm339, %v473
      %506 = vst.msk [vmem:[#allocation3 + $0x240] sm:$0xff] %vm339, %v474
      %507 = vst.msk [vmem:[#allocation3 + $0x258] sm:$0xff] %vm339, %v475
      %508 = vst.msk [vmem:[#allocation3 + $0x270] sm:$0xff] %vm339, %v476
      %509 = vst.msk [vmem:[#allocation3 + $0x288] sm:$0xff] %vm339, %v477
      %510 = vst.msk [vmem:[#allocation3 + $0x2a0] sm:$0xff] %vm339, %v478
      %511 = vst.msk [vmem:[#allocation3 + $0x2b8] sm:$0xff] %vm339, %v479
      %512 = vst.msk [vmem:[#allocation3 + $0x2d0] sm:$0xff] %vm339, %v480
      %513 = vst.msk [vmem:[#allocation3 + $0x2e8] sm:$0xff] %vm339, %v481
      %v514 = vld [vmem:[#allocation2 + $0x1] sm:$0xff]
      %v515 = vld [vmem:[#allocation2 + $0x9] sm:$0xff]
      %v516 = vld [vmem:[#allocation2 + $0x19] sm:$0xff]
      %v517 = vld [vmem:[#allocation2 + $0x21] sm:$0xff]
      %v518 = vld [vmem:[#allocation2 + $0x31] sm:$0xff]
      %v519 = vld [vmem:[#allocation2 + $0x39] sm:$0xff]
      %v520 = vld [vmem:[#allocation2 + $0x49] sm:$0xff]
      %v521 = vld [vmem:[#allocation2 + $0x51] sm:$0xff]
      %v522 = vld [vmem:[#allocation2 + $0x61] sm:$0xff]
      %v523 = vld [vmem:[#allocation2 + $0x69] sm:$0xff]
      %v524 = vld [vmem:[#allocation2 + $0x79] sm:$0xff]
      %v525 = vld [vmem:[#allocation2 + $0x81] sm:$0xff]
      %v526 = vld [vmem:[#allocation2 + $0x91] sm:$0xff]
      %v527 = vld [vmem:[#allocation2 + $0x99] sm:$0xff]
      %v528 = vld [vmem:[#allocation2 + $0xa9] sm:$0xff]
      %v529 = vld [vmem:[#allocation2 + $0xb1] sm:$0xff]
      %v530 = vld [vmem:[#allocation2 + $0xc1] sm:$0xff]
      %v531 = vld [vmem:[#allocation2 + $0xc9] sm:$0xff]
      %v532 = vld [vmem:[#allocation2 + $0xd9] sm:$0xff]
      %v533 = vld [vmem:[#allocation2 + $0xe1] sm:$0xff]
      %v534 = vld [vmem:[#allocation2 + $0xf1] sm:$0xff]
      %v535 = vld [vmem:[#allocation2 + $0xf9] sm:$0xff]
      %v536 = vld [vmem:[#allocation2 + $0x109] sm:$0xff]
      %v537 = vld [vmem:[#allocation2 + $0x111] sm:$0xff]
      %v538 = vld [vmem:[#allocation2 + $0x121] sm:$0xff]
      %v539 = vld [vmem:[#allocation2 + $0x129] sm:$0xff]
      %v540 = vld [vmem:[#allocation2 + $0x139] sm:$0xff]
      %v541 = vld [vmem:[#allocation2 + $0x141] sm:$0xff]
      %v542 = vld [vmem:[#allocation2 + $0x151] sm:$0xff]
      %v543 = vld [vmem:[#allocation2 + $0x159] sm:$0xff]
      %v544 = vld [vmem:[#allocation2 + $0x169] sm:$0xff]
      %v545 = vld [vmem:[#allocation2 + $0x171] sm:$0xff]
      %578 = vrot.lane.b32.xlu0 %v514, 32
      %v579 = vpop.permute.xlu0 %578
      %580 = vrot.lane.b32.xlu0 %v515, 32
      %v581 = vpop.permute.xlu0 %580
      %582 = vrot.lane.b32.xlu0 %v516, 32
      %v583 = vpop.permute.xlu0 %582
      %584 = vrot.lane.b32.xlu0 %v517, 32
      %v585 = vpop.permute.xlu0 %584
      %586 = vrot.lane.b32.xlu0 %v518, 32
      %v587 = vpop.permute.xlu0 %586
      %588 = vrot.lane.b32.xlu0 %v519, 32
      %v589 = vpop.permute.xlu0 %588
      %590 = vrot.lane.b32.xlu0 %v520, 32
      %v591 = vpop.permute.xlu0 %590
      %592 = vrot.lane.b32.xlu0 %v521, 32
      %v593 = vpop.permute.xlu0 %592
      %594 = vrot.lane.b32.xlu0 %v522, 32
      %v595 = vpop.permute.xlu0 %594
      %596 = vrot.lane.b32.xlu0 %v523, 32
      %v597 = vpop.permute.xlu0 %596
      %598 = vrot.lane.b32.xlu0 %v524, 32
      %v599 = vpop.permute.xlu0 %598
      %600 = vrot.lane.b32.xlu0 %v525, 32
      %v601 = vpop.permute.xlu0 %600
      %602 = vrot.lane.b32.xlu0 %v526, 32
      %v603 = vpop.permute.xlu0 %602
      %604 = vrot.lane.b32.xlu0 %v527, 32
      %v605 = vpop.permute.xlu0 %604
      %606 = vrot.lane.b32.xlu0 %v528, 32
      %v607 = vpop.permute.xlu0 %606
      %608 = vrot.lane.b32.xlu0 %v529, 32
      %v609 = vpop.permute.xlu0 %608
      %610 = vrot.lane.b32.xlu0 %v530, 32
      %v611 = vpop.permute.xlu0 %610
      %612 = vrot.lane.b32.xlu0 %v531, 32
      %v613 = vpop.permute.xlu0 %612
      %614 = vrot.lane.b32.xlu0 %v532, 32
      %v615 = vpop.permute.xlu0 %614
      %616 = vrot.lane.b32.xlu0 %v533, 32
      %v617 = vpop.permute.xlu0 %616
      %618 = vrot.lane.b32.xlu0 %v534, 32
      %v619 = vpop.permute.xlu0 %618
      %620 = vrot.lane.b32.xlu0 %v535, 32
      %v621 = vpop.permute.xlu0 %620
      %622 = vrot.lane.b32.xlu0 %v536, 32
      %v623 = vpop.permute.xlu0 %622
      %624 = vrot.lane.b32.xlu0 %v537, 32
      %v625 = vpop.permute.xlu0 %624
      %626 = vrot.lane.b32.xlu0 %v538, 32
      %v627 = vpop.permute.xlu0 %626
      %628 = vrot.lane.b32.xlu0 %v539, 32
      %v629 = vpop.permute.xlu0 %628
      %630 = vrot.lane.b32.xlu0 %v540, 32
      %v631 = vpop.permute.xlu0 %630
      %632 = vrot.lane.b32.xlu0 %v541, 32
      %v633 = vpop.permute.xlu0 %632
      %634 = vrot.lane.b32.xlu0 %v542, 32
      %v635 = vpop.permute.xlu0 %634
      %636 = vrot.lane.b32.xlu0 %v543, 32
      %v637 = vpop.permute.xlu0 %636
      %638 = vrot.lane.b32.xlu0 %v544, 32
      %v639 = vpop.permute.xlu0 %638
      %640 = vrot.lane.b32.xlu0 %v545, 32
      %v641 = vpop.permute.xlu0 %640
      %vm674 = vcmask 523520
      %675 = vst.msk [vmem:[#allocation3] sm:$0xff] %vm674, %v579
      %676 = vst.msk [vmem:[#allocation3 + $0x18] sm:$0xff] %vm674, %v581
      %677 = vst.msk [vmem:[#allocation3 + $0x30] sm:$0xff] %vm674, %v583
      %678 = vst.msk [vmem:[#allocation3 + $0x48] sm:$0xff] %vm674, %v585
      %679 = vst.msk [vmem:[#allocation3 + $0x60] sm:$0xff] %vm674, %v587
      %680 = vst.msk [vmem:[#allocation3 + $0x78] sm:$0xff] %vm674, %v589
      %681 = vst.msk [vmem:[#allocation3 + $0x90] sm:$0xff] %vm674, %v591
      %682 = vst.msk [vmem:[#allocation3 + $0xa8] sm:$0xff] %vm674, %v593
      %683 = vst.msk [vmem:[#allocation3 + $0xc0] sm:$0xff] %vm674, %v595
      %684 = vst.msk [vmem:[#allocation3 + $0xd8] sm:$0xff] %vm674, %v597
      %685 = vst.msk [vmem:[#allocation3 + $0xf0] sm:$0xff] %vm674, %v599
      %686 = vst.msk [vmem:[#allocation3 + $0x108] sm:$0xff] %vm674, %v601
      %687 = vst.msk [vmem:[#allocation3 + $0x120] sm:$0xff] %vm674, %v603
      %688 = vst.msk [vmem:[#allocation3 + $0x138] sm:$0xff] %vm674, %v605
      %689 = vst.msk [vmem:[#allocation3 + $0x150] sm:$0xff] %vm674, %v607
      %690 = vst.msk [vmem:[#allocation3 + $0x168] sm:$0xff] %vm674, %v609
      %691 = vst.msk [vmem:[#allocation3 + $0x180] sm:$0xff] %vm674, %v611
      %692 = vst.msk [vmem:[#allocation3 + $0x198] sm:$0xff] %vm674, %v613
      %693 = vst.msk [vmem:[#allocation3 + $0x1b0] sm:$0xff] %vm674, %v615
      %694 = vst.msk [vmem:[#allocation3 + $0x1c8] sm:$0xff] %vm674, %v617
      %695 = vst.msk [vmem:[#allocation3 + $0x1e0] sm:$0xff] %vm674, %v619
      %696 = vst.msk [vmem:[#allocation3 + $0x1f8] sm:$0xff] %vm674, %v621
      %697 = vst.msk [vmem:[#allocation3 + $0x210] sm:$0xff] %vm674, %v623
      %698 = vst.msk [vmem:[#allocation3 + $0x228] sm:$0xff] %vm674, %v625
      %699 = vst.msk [vmem:[#allocation3 + $0x240] sm:$0xff] %vm674, %v627
      %700 = vst.msk [vmem:[#allocation3 + $0x258] sm:$0xff] %vm674, %v629
      %701 = vst.msk [vmem:[#allocation3 + $0x270] sm:$0xff] %vm674, %v631
      %702 = vst.msk [vmem:[#allocation3 + $0x288] sm:$0xff] %vm674, %v633
      %703 = vst.msk [vmem:[#allocation3 + $0x2a0] sm:$0xff] %vm674, %v635
      %704 = vst.msk [vmem:[#allocation3 + $0x2b8] sm:$0xff] %vm674, %v637
      %705 = vst.msk [vmem:[#allocation3 + $0x2d0] sm:$0xff] %vm674, %v639
      %706 = vst.msk [vmem:[#allocation3 + $0x2e8] sm:$0xff] %vm674, %v641
      %v707 = vld [vmem:[#allocation2 + $0x2] sm:$0xff]
      %v708 = vld [vmem:[#allocation2 + $0xa] sm:$0xff]
      %v709 = vld [vmem:[#allocation2 + $0x1a] sm:$0xff]
      %v710 = vld [vmem:[#allocation2 + $0x22] sm:$0xff]
      %v711 = vld [vmem:[#allocation2 + $0x32] sm:$0xff]
      %v712 = vld [vmem:[#allocation2 + $0x3a] sm:$0xff]
      %v713 = vld [vmem:[#allocation2 + $0x4a] sm:$0xff]
      %v714 = vld [vmem:[#allocation2 + $0x52] sm:$0xff]
      %v715 = vld [vmem:[#allocation2 + $0x62] sm:$0xff]
      %v716 = vld [vmem:[#allocation2 + $0x6a] sm:$0xff]
      %v717 = vld [vmem:[#allocation2 + $0x7a] sm:$0xff]
      %v718 = vld [vmem:[#allocation2 + $0x82] sm:$0xff]
      %v719 = vld [vmem:[#allocation2 + $0x92] sm:$0xff]
      %v720 = vld [vmem:[#allocation2 + $0x9a] sm:$0xff]
      %v721 = vld [vmem:[#allocation2 + $0xaa] sm:$0xff]
      %v722 = vld [vmem:[#allocation2 + $0xb2] sm:$0xff]
      %v723 = vld [vmem:[#allocation2 + $0xc2] sm:$0xff]
      %v724 = vld [vmem:[#allocation2 + $0xca] sm:$0xff]
      %v725 = vld [vmem:[#allocation2 + $0xda] sm:$0xff]
      %v726 = vld [vmem:[#allocation2 + $0xe2] sm:$0xff]
      %v727 = vld [vmem:[#allocation2 + $0xf2] sm:$0xff]
      %v728 = vld [vmem:[#allocation2 + $0xfa] sm:$0xff]
      %v729 = vld [vmem:[#allocation2 + $0x10a] sm:$0xff]
      %v730 = vld [vmem:[#allocation2 + $0x112] sm:$0xff]
      %v731 = vld [vmem:[#allocation2 + $0x122] sm:$0xff]
      %v732 = vld [vmem:[#allocation2 + $0x12a] sm:$0xff]
      %v733 = vld [vmem:[#allocation2 + $0x13a] sm:$0xff]
      %v734 = vld [vmem:[#allocation2 + $0x142] sm:$0xff]
      %v735 = vld [vmem:[#allocation2 + $0x152] sm:$0xff]
      %v736 = vld [vmem:[#allocation2 + $0x15a] sm:$0xff]
      %v737 = vld [vmem:[#allocation2 + $0x16a] sm:$0xff]
      %v738 = vld [vmem:[#allocation2 + $0x172] sm:$0xff]
      %771 = vrot.lane.b32.xlu0 %v707, 64
      %v772 = vpop.permute.xlu0 %771
      %773 = vrot.lane.b32.xlu0 %v708, 64
      %v774 = vpop.permute.xlu0 %773
      %775 = vrot.lane.b32.xlu0 %v709, 64
      %v776 = vpop.permute.xlu0 %775
      %777 = vrot.lane.b32.xlu0 %v710, 64
      %v778 = vpop.permute.xlu0 %777
      %779 = vrot.lane.b32.xlu0 %v711, 64
      %v780 = vpop.permute.xlu0 %779
      %781 = vrot.lane.b32.xlu0 %v712, 64
      %v782 = vpop.permute.xlu0 %781
      %783 = vrot.lane.b32.xlu0 %v713, 64
      %v784 = vpop.permute.xlu0 %783
      %785 = vrot.lane.b32.xlu0 %v714, 64
      %v786 = vpop.permute.xlu0 %785
      %787 = vrot.lane.b32.xlu0 %v715, 64
      %v788 = vpop.permute.xlu0 %787
      %789 = vrot.lane.b32.xlu0 %v716, 64
      %v790 = vpop.permute.xlu0 %789
      %791 = vrot.lane.b32.xlu0 %v717, 64
      %v792 = vpop.permute.xlu0 %791
      %793 = vrot.lane.b32.xlu0 %v718, 64
      %v794 = vpop.permute.xlu0 %793
      %795 = vrot.lane.b32.xlu0 %v719, 64
      %v796 = vpop.permute.xlu0 %795
      %797 = vrot.lane.b32.xlu0 %v720, 64
      %v798 = vpop.permute.xlu0 %797
      %799 = vrot.lane.b32.xlu0 %v721, 64
      %v800 = vpop.permute.xlu0 %799
      %801 = vrot.lane.b32.xlu0 %v722, 64
      %v802 = vpop.permute.xlu0 %801
      %803 = vrot.lane.b32.xlu0 %v723, 64
      %v804 = vpop.permute.xlu0 %803
      %805 = vrot.lane.b32.xlu0 %v724, 64
      %v806 = vpop.permute.xlu0 %805
      %807 = vrot.lane.b32.xlu0 %v725, 64
      %v808 = vpop.permute.xlu0 %807
      %809 = vrot.lane.b32.xlu0 %v726, 64
      %v810 = vpop.permute.xlu0 %809
      %811 = vrot.lane.b32.xlu0 %v727, 64
      %v812 = vpop.permute.xlu0 %811
      %813 = vrot.lane.b32.xlu0 %v728, 64
      %v814 = vpop.permute.xlu0 %813
      %815 = vrot.lane.b32.xlu0 %v729, 64
      %v816 = vpop.permute.xlu0 %815
      %817 = vrot.lane.b32.xlu0 %v730, 64
      %v818 = vpop.permute.xlu0 %817
      %819 = vrot.lane.b32.xlu0 %v731, 64
      %v820 = vpop.permute.xlu0 %819
      %821 = vrot.lane.b32.xlu0 %v732, 64
      %v822 = vpop.permute.xlu0 %821
      %823 = vrot.lane.b32.xlu0 %v733, 64
      %v824 = vpop.permute.xlu0 %823
      %825 = vrot.lane.b32.xlu0 %v734, 64
      %v826 = vpop.permute.xlu0 %825
      %827 = vrot.lane.b32.xlu0 %v735, 64
      %v828 = vpop.permute.xlu0 %827
      %829 = vrot.lane.b32.xlu0 %v736, 64
      %v830 = vpop.permute.xlu0 %829
      %831 = vrot.lane.b32.xlu0 %v737, 64
      %v832 = vpop.permute.xlu0 %831
      %833 = vrot.lane.b32.xlu0 %v738, 64
      %v834 = vpop.permute.xlu0 %833
      %vm867 = vcmask 785920
      %868 = vst.msk [vmem:[#allocation3] sm:$0xff] %vm867, %v772
      %869 = vst.msk [vmem:[#allocation3 + $0x18] sm:$0xff] %vm867, %v774
      %870 = vst.msk [vmem:[#allocation3 + $0x30] sm:$0xff] %vm867, %v776
      %871 = vst.msk [vmem:[#allocation3 + $0x48] sm:$0xff] %vm867, %v778
      %872 = vst.msk [vmem:[#allocation3 + $0x60] sm:$0xff] %vm867, %v780
      %873 = vst.msk [vmem:[#allocation3 + $0x78] sm:$0xff] %vm867, %v782
      %874 = vst.msk [vmem:[#allocation3 + $0x90] sm:$0xff] %vm867, %v784
      %875 = vst.msk [vmem:[#allocation3 + $0xa8] sm:$0xff] %vm867, %v786
      %876 = vst.msk [vmem:[#allocation3 + $0xc0] sm:$0xff] %vm867, %v788
      %877 = vst.msk [vmem:[#allocation3 + $0xd8] sm:$0xff] %vm867, %v790
      %878 = vst.msk [vmem:[#allocation3 + $0xf0] sm:$0xff] %vm867, %v792
      %879 = vst.msk [vmem:[#allocation3 + $0x108] sm:$0xff] %vm867, %v794
      %880 = vst.msk [vmem:[#allocation3 + $0x120] sm:$0xff] %vm867, %v796
      %881 = vst.msk [vmem:[#allocation3 + $0x138] sm:$0xff] %vm867, %v798
      %882 = vst.msk [vmem:[#allocation3 + $0x150] sm:$0xff] %vm867, %v800
      %883 = vst.msk [vmem:[#allocation3 + $0x168] sm:$0xff] %vm867, %v802
      %884 = vst.msk [vmem:[#allocation3 + $0x180] sm:$0xff] %vm867, %v804
      %885 = vst.msk [vmem:[#allocation3 + $0x198] sm:$0xff] %vm867, %v806
      %886 = vst.msk [vmem:[#allocation3 + $0x1b0] sm:$0xff] %vm867, %v808
      %887 = vst.msk [vmem:[#allocation3 + $0x1c8] sm:$0xff] %vm867, %v810
      %888 = vst.msk [vmem:[#allocation3 + $0x1e0] sm:$0xff] %vm867, %v812
      %889 = vst.msk [vmem:[#allocation3 + $0x1f8] sm:$0xff] %vm867, %v814
      %890 = vst.msk [vmem:[#allocation3 + $0x210] sm:$0xff] %vm867, %v816
      %891 = vst.msk [vmem:[#allocation3 + $0x228] sm:$0xff] %vm867, %v818
      %892 = vst.msk [vmem:[#allocation3 + $0x240] sm:$0xff] %vm867, %v820
      %893 = vst.msk [vmem:[#allocation3 + $0x258] sm:$0xff] %vm867, %v822
      %894 = vst.msk [vmem:[#allocation3 + $0x270] sm:$0xff] %vm867, %v824
      %895 = vst.msk [vmem:[#allocation3 + $0x288] sm:$0xff] %vm867, %v826
      %896 = vst.msk [vmem:[#allocation3 + $0x2a0] sm:$0xff] %vm867, %v828
      %897 = vst.msk [vmem:[#allocation3 + $0x2b8] sm:$0xff] %vm867, %v830
      %898 = vst.msk [vmem:[#allocation3 + $0x2d0] sm:$0xff] %vm867, %v832
      %899 = vst.msk [vmem:[#allocation3 + $0x2e8] sm:$0xff] %vm867, %v834
      %v900 = vld [vmem:[%s338] sm:$0xff]
      %v901 = vld [vmem:[%s338 + $0x8] sm:$0xff]
      %v902 = vld [vmem:[%s338 + $0x18] sm:$0xff]
      %v903 = vld [vmem:[%s338 + $0x20] sm:$0xff]
      %v904 = vld [vmem:[%s338 + $0x30] sm:$0xff]
      %v905 = vld [vmem:[%s338 + $0x38] sm:$0xff]
      %v906 = vld [vmem:[%s338 + $0x48] sm:$0xff]
      %v907 = vld [vmem:[%s338 + $0x50] sm:$0xff]
      %v908 = vld [vmem:[%s338 + $0x60] sm:$0xff]
      %v909 = vld [vmem:[%s338 + $0x68] sm:$0xff]
      %v910 = vld [vmem:[%s338 + $0x78] sm:$0xff]
      %v911 = vld [vmem:[%s338 + $0x80] sm:$0xff]
      %v912 = vld [vmem:[%s338 + $0x90] sm:$0xff]
      %v913 = vld [vmem:[%s338 + $0x98] sm:$0xff]
      %v914 = vld [vmem:[%s338 + $0xa8] sm:$0xff]
      %v915 = vld [vmem:[%s338 + $0xb0] sm:$0xff]
      %v916 = vld [vmem:[%s338 + $0xc0] sm:$0xff]
      %v917 = vld [vmem:[%s338 + $0xc8] sm:$0xff]
      %v918 = vld [vmem:[%s338 + $0xd8] sm:$0xff]
      %v919 = vld [vmem:[%s338 + $0xe0] sm:$0xff]
      %v920 = vld [vmem:[%s338 + $0xf0] sm:$0xff]
      %v921 = vld [vmem:[%s338 + $0xf8] sm:$0xff]
      %v922 = vld [vmem:[%s338 + $0x108] sm:$0xff]
      %v923 = vld [vmem:[%s338 + $0x110] sm:$0xff]
      %v924 = vld [vmem:[%s338 + $0x120] sm:$0xff]
      %v925 = vld [vmem:[%s338 + $0x128] sm:$0xff]
      %v926 = vld [vmem:[%s338 + $0x138] sm:$0xff]
      %v927 = vld [vmem:[%s338 + $0x140] sm:$0xff]
      %v928 = vld [vmem:[%s338 + $0x150] sm:$0xff]
      %v929 = vld [vmem:[%s338 + $0x158] sm:$0xff]
      %v930 = vld [vmem:[%s338 + $0x168] sm:$0xff]
      %v931 = vld [vmem:[%s338 + $0x170] sm:$0xff]
      %964 = vrot.lane.b32.xlu0 %v900, 96
      %v965 = vpop.permute.xlu0 %964
      %966 = vrot.lane.b32.xlu0 %v901, 96
      %v967 = vpop.permute.xlu0 %966
      %968 = vrot.lane.b32.xlu0 %v902, 96
      %v969 = vpop.permute.xlu0 %968
      %970 = vrot.lane.b32.xlu0 %v903, 96
      %v971 = vpop.permute.xlu0 %970
      %972 = vrot.lane.b32.xlu0 %v904, 96
      %v973 = vpop.permute.xlu0 %972
      %974 = vrot.lane.b32.xlu0 %v905, 96
      %v975 = vpop.permute.xlu0 %974
      %976 = vrot.lane.b32.xlu0 %v906, 96
      %v977 = vpop.permute.xlu0 %976
      %978 = vrot.lane.b32.xlu0 %v907, 96
      %v979 = vpop.permute.xlu0 %978
      %980 = vrot.lane.b32.xlu0 %v908, 96
      %v981 = vpop.permute.xlu0 %980
      %982 = vrot.lane.b32.xlu0 %v909, 96
      %v983 = vpop.permute.xlu0 %982
      %984 = vrot.lane.b32.xlu0 %v910, 96
      %v985 = vpop.permute.xlu0 %984
      %986 = vrot.lane.b32.xlu0 %v911, 96
      %v987 = vpop.permute.xlu0 %986
      %988 = vrot.lane.b32.xlu0 %v912, 96
      %v989 = vpop.permute.xlu0 %988
      %990 = vrot.lane.b32.xlu0 %v913, 96
      %v991 = vpop.permute.xlu0 %990
      %992 = vrot.lane.b32.xlu0 %v914, 96
      %v993 = vpop.permute.xlu0 %992
      %994 = vrot.lane.b32.xlu0 %v915, 96
      %v995 = vpop.permute.xlu0 %994
      %996 = vrot.lane.b32.xlu0 %v916, 96
      %v997 = vpop.permute.xlu0 %996
      %998 = vrot.lane.b32.xlu0 %v917, 96
      %v999 = vpop.permute.xlu0 %998
      %1000 = vrot.lane.b32.xlu0 %v918, 96
      %v1001 = vpop.permute.xlu0 %1000
      %1002 = vrot.lane.b32.xlu0 %v919, 96
      %v1003 = vpop.permute.xlu0 %1002
      %1004 = vrot.lane.b32.xlu0 %v920, 96
      %v1005 = vpop.permute.xlu0 %1004
      %1006 = vrot.lane.b32.xlu0 %v921, 96
      %v1007 = vpop.permute.xlu0 %1006
      %1008 = vrot.lane.b32.xlu0 %v922, 96
      %v1009 = vpop.permute.xlu0 %1008
      %1010 = vrot.lane.b32.xlu0 %v923, 96
      %v1011 = vpop.permute.xlu0 %1010
      %1012 = vrot.lane.b32.xlu0 %v924, 96
      %v1013 = vpop.permute.xlu0 %1012
      %1014 = vrot.lane.b32.xlu0 %v925, 96
      %v1015 = vpop.permute.xlu0 %1014
      %1016 = vrot.lane.b32.xlu0 %v926, 96
      %v1017 = vpop.permute.xlu0 %1016
      %1018 = vrot.lane.b32.xlu0 %v927, 96
      %v1019 = vpop.permute.xlu0 %1018
      %1020 = vrot.lane.b32.xlu0 %v928, 96
      %v1021 = vpop.permute.xlu0 %1020
      %1022 = vrot.lane.b32.xlu0 %v929, 96
      %v1023 = vpop.permute.xlu0 %1022
      %1024 = vrot.lane.b32.xlu0 %v930, 96
      %v1025 = vpop.permute.xlu0 %1024
      %1026 = vrot.lane.b32.xlu0 %v931, 96
      %v1027 = vpop.permute.xlu0 %1026
      %vm1060 = vcmask 1048320
      %1061 = vst.msk [vmem:[#allocation3] sm:$0xff] %vm1060, %v965
      %1062 = vst.msk [vmem:[#allocation3 + $0x18] sm:$0xff] %vm1060, %v967
      %1063 = vst.msk [vmem:[#allocation3 + $0x30] sm:$0xff] %vm1060, %v969
      %1064 = vst.msk [vmem:[#allocation3 + $0x48] sm:$0xff] %vm1060, %v971
      %1065 = vst.msk [vmem:[#allocation3 + $0x60] sm:$0xff] %vm1060, %v973
      %1066 = vst.msk [vmem:[#allocation3 + $0x78] sm:$0xff] %vm1060, %v975
      %1067 = vst.msk [vmem:[#allocation3 + $0x90] sm:$0xff] %vm1060, %v977
      %1068 = vst.msk [vmem:[#allocation3 + $0xa8] sm:$0xff] %vm1060, %v979
      %1069 = vst.msk [vmem:[#allocation3 + $0xc0] sm:$0xff] %vm1060, %v981
      %1070 = vst.msk [vmem:[#allocation3 + $0xd8] sm:$0xff] %vm1060, %v983
      %1071 = vst.msk [vmem:[#allocation3 + $0xf0] sm:$0xff] %vm1060, %v985
      %1072 = vst.msk [vmem:[#allocation3 + $0x108] sm:$0xff] %vm1060, %v987
      %1073 = vst.msk [vmem:[#allocation3 + $0x120] sm:$0xff] %vm1060, %v989
      %1074 = vst.msk [vmem:[#allocation3 + $0x138] sm:$0xff] %vm1060, %v991
      %1075 = vst.msk [vmem:[#allocation3 + $0x150] sm:$0xff] %vm1060, %v993
      %1076 = vst.msk [vmem:[#allocation3 + $0x168] sm:$0xff] %vm1060, %v995
      %1077 = vst.msk [vmem:[#allocation3 + $0x180] sm:$0xff] %vm1060, %v997
      %1078 = vst.msk [vmem:[#allocation3 + $0x198] sm:$0xff] %vm1060, %v999
      %1079 = vst.msk [vmem:[#allocation3 + $0x1b0] sm:$0xff] %vm1060, %v1001
      %1080 = vst.msk [vmem:[#allocation3 + $0x1c8] sm:$0xff] %vm1060, %v1003
      %1081 = vst.msk [vmem:[#allocation3 + $0x1e0] sm:$0xff] %vm1060, %v1005
      %1082 = vst.msk [vmem:[#allocation3 + $0x1f8] sm:$0xff] %vm1060, %v1007
      %1083 = vst.msk [vmem:[#allocation3 + $0x210] sm:$0xff] %vm1060, %v1009
      %1084 = vst.msk [vmem:[#allocation3 + $0x228] sm:$0xff] %vm1060, %v1011
      %1085 = vst.msk [vmem:[#allocation3 + $0x240] sm:$0xff] %vm1060, %v1013
      %1086 = vst.msk [vmem:[#allocation3 + $0x258] sm:$0xff] %vm1060, %v1015
      %1087 = vst.msk [vmem:[#allocation3 + $0x270] sm:$0xff] %vm1060, %v1017
      %1088 = vst.msk [vmem:[#allocation3 + $0x288] sm:$0xff] %vm1060, %v1019
      %1089 = vst.msk [vmem:[#allocation3 + $0x2a0] sm:$0xff] %vm1060, %v1021
      %1090 = vst.msk [vmem:[#allocation3 + $0x2b8] sm:$0xff] %vm1060, %v1023
      %1091 = vst.msk [vmem:[#allocation3 + $0x2d0] sm:$0xff] %vm1060, %v1025
      %1092 = vst.msk [vmem:[#allocation3 + $0x2e8] sm:$0xff] %vm1060, %v1027
      %v1093 = vld [vmem:[%s338 + $0x1] sm:$0xff]
      %v1094 = vld [vmem:[%s338 + $0x9] sm:$0xff]
      %v1095 = vld [vmem:[%s338 + $0x19] sm:$0xff]
      %v1096 = vld [vmem:[%s338 + $0x21] sm:$0xff]
      %v1097 = vld [vmem:[%s338 + $0x31] sm:$0xff]
      %v1098 = vld [vmem:[%s338 + $0x39] sm:$0xff]
      %v1099 = vld [vmem:[%s338 + $0x49] sm:$0xff]
      %v1100 = vld [vmem:[%s338 + $0x51] sm:$0xff]
      %v1101 = vld [vmem:[%s338 + $0x61] sm:$0xff]
      %v1102 = vld [vmem:[%s338 + $0x69] sm:$0xff]
      %v1103 = vld [vmem:[%s338 + $0x79] sm:$0xff]
      %v1104 = vld [vmem:[%s338 + $0x81] sm:$0xff]
      %v1105 = vld [vmem:[%s338 + $0x91] sm:$0xff]
      %v1106 = vld [vmem:[%s338 + $0x99] sm:$0xff]
      %v1107 = vld [vmem:[%s338 + $0xa9] sm:$0xff]
      %v1108 = vld [vmem:[%s338 + $0xb1] sm:$0xff]
      %v1109 = vld [vmem:[%s338 + $0xc1] sm:$0xff]
      %v1110 = vld [vmem:[%s338 + $0xc9] sm:$0xff]
      %v1111 = vld [vmem:[%s338 + $0xd9] sm:$0xff]
      %v1112 = vld [vmem:[%s338 + $0xe1] sm:$0xff]
      %v1113 = vld [vmem:[%s338 + $0xf1] sm:$0xff]
      %v1114 = vld [vmem:[%s338 + $0xf9] sm:$0xff]
      %v1115 = vld [vmem:[%s338 + $0x109] sm:$0xff]
      %v1116 = vld [vmem:[%s338 + $0x111] sm:$0xff]
      %v1117 = vld [vmem:[%s338 + $0x121] sm:$0xff]
      %v1118 = vld [vmem:[%s338 + $0x129] sm:$0xff]
      %v1119 = vld [vmem:[%s338 + $0x139] sm:$0xff]
      %v1120 = vld [vmem:[%s338 + $0x141] sm:$0xff]
      %v1121 = vld [vmem:[%s338 + $0x151] sm:$0xff]
      %v1122 = vld [vmem:[%s338 + $0x159] sm:$0xff]
      %v1123 = vld [vmem:[%s338 + $0x169] sm:$0xff]
      %v1124 = vld [vmem:[%s338 + $0x171] sm:$0xff]
      %1125 = vst.msk [vmem:[#allocation3 + $0x8] sm:$0xff] %vm339, %v1093
      %1126 = vst.msk [vmem:[#allocation3 + $0x20] sm:$0xff] %vm339, %v1094
      %1127 = vst.msk [vmem:[#allocation3 + $0x38] sm:$0xff] %vm339, %v1095
      %1128 = vst.msk [vmem:[#allocation3 + $0x50] sm:$0xff] %vm339, %v1096
      %1129 = vst.msk [vmem:[#allocation3 + $0x68] sm:$0xff] %vm339, %v1097
      %1130 = vst.msk [vmem:[#allocation3 + $0x80] sm:$0xff] %vm339, %v1098
      %1131 = vst.msk [vmem:[#allocation3 + $0x98] sm:$0xff] %vm339, %v1099
      %1132 = vst.msk [vmem:[#allocation3 + $0xb0] sm:$0xff] %vm339, %v1100
      %1133 = vst.msk [vmem:[#allocation3 + $0xc8] sm:$0xff] %vm339, %v1101
      %1134 = vst.msk [vmem:[#allocation3 + $0xe0] sm:$0xff] %vm339, %v1102
      %1135 = vst.msk [vmem:[#allocation3 + $0xf8] sm:$0xff] %vm339, %v1103
      %1136 = vst.msk [vmem:[#allocation3 + $0x110] sm:$0xff] %vm339, %v1104
      %1137 = vst.msk [vmem:[#allocation3 + $0x128] sm:$0xff] %vm339, %v1105
      %1138 = vst.msk [vmem:[#allocation3 + $0x140] sm:$0xff] %vm339, %v1106
      %1139 = vst.msk [vmem:[#allocation3 + $0x158] sm:$0xff] %vm339, %v1107
      %1140 = vst.msk [vmem:[#allocation3 + $0x170] sm:$0xff] %vm339, %v1108
      %1141 = vst.msk [vmem:[#allocation3 + $0x188] sm:$0xff] %vm339, %v1109
      %1142 = vst.msk [vmem:[#allocation3 + $0x1a0] sm:$0xff] %vm339, %v1110
      %1143 = vst.msk [vmem:[#allocation3 + $0x1b8] sm:$0xff] %vm339, %v1111
      %1144 = vst.msk [vmem:[#allocation3 + $0x1d0] sm:$0xff] %vm339, %v1112
      %1145 = vst.msk [vmem:[#allocation3 + $0x1e8] sm:$0xff] %vm339, %v1113
      %1146 = vst.msk [vmem:[#allocation3 + $0x200] sm:$0xff] %vm339, %v1114
      %1147 = vst.msk [vmem:[#allocation3 + $0x218] sm:$0xff] %vm339, %v1115
      %1148 = vst.msk [vmem:[#allocation3 + $0x230] sm:$0xff] %vm339, %v1116
      %1149 = vst.msk [vmem:[#allocation3 + $0x248] sm:$0xff] %vm339, %v1117
      %1150 = vst.msk [vmem:[#allocation3 + $0x260] sm:$0xff] %vm339, %v1118
      %1151 = vst.msk [vmem:[#allocation3 + $0x278] sm:$0xff] %vm339, %v1119
      %1152 = vst.msk [vmem:[#allocation3 + $0x290] sm:$0xff] %vm339, %v1120
      %1153 = vst.msk [vmem:[#allocation3 + $0x2a8] sm:$0xff] %vm339, %v1121
      %1154 = vst.msk [vmem:[#allocation3 + $0x2c0] sm:$0xff] %vm339, %v1122
      %1155 = vst.msk [vmem:[#allocation3 + $0x2d8] sm:$0xff] %vm339, %v1123
      %1156 = vst.msk [vmem:[#allocation3 + $0x2f0] sm:$0xff] %vm339, %v1124
      %v1157 = vld [vmem:[%s338 + $0x2] sm:$0xff]
      %v1158 = vld [vmem:[%s338 + $0xa] sm:$0xff]
      %v1159 = vld [vmem:[%s338 + $0x1a] sm:$0xff]
      %v1160 = vld [vmem:[%s338 + $0x22] sm:$0xff]
      %v1161 = vld [vmem:[%s338 + $0x32] sm:$0xff]
      %v1162 = vld [vmem:[%s338 + $0x3a] sm:$0xff]
      %v1163 = vld [vmem:[%s338 + $0x4a] sm:$0xff]
      %v1164 = vld [vmem:[%s338 + $0x52] sm:$0xff]
      %v1165 = vld [vmem:[%s338 + $0x62] sm:$0xff]
      %v1166 = vld [vmem:[%s338 + $0x6a] sm:$0xff]
      %v1167 = vld [vmem:[%s338 + $0x7a] sm:$0xff]
      %v1168 = vld [vmem:[%s338 + $0x82] sm:$0xff]
      %v1169 = vld [vmem:[%s338 + $0x92] sm:$0xff]
      %v1170 = vld [vmem:[%s338 + $0x9a] sm:$0xff]
      %v1171 = vld [vmem:[%s338 + $0xaa] sm:$0xff]
      %v1172 = vld [vmem:[%s338 + $0xb2] sm:$0xff]
      %v1173 = vld [vmem:[%s338 + $0xc2] sm:$0xff]
      %v1174 = vld [vmem:[%s338 + $0xca] sm:$0xff]
      %v1175 = vld [vmem:[%s338 + $0xda] sm:$0xff]
      %v1176 = vld [vmem:[%s338 + $0xe2] sm:$0xff]
      %v1177 = vld [vmem:[%s338 + $0xf2] sm:$0xff]
      %v1178 = vld [vmem:[%s338 + $0xfa] sm:$0xff]
      %v1179 = vld [vmem:[%s338 + $0x10a] sm:$0xff]
      %v1180 = vld [vmem:[%s338 + $0x112] sm:$0xff]
      %v1181 = vld [vmem:[%s338 + $0x122] sm:$0xff]
      %v1182 = vld [vmem:[%s338 + $0x12a] sm:$0xff]
      %v1183 = vld [vmem:[%s338 + $0x13a] sm:$0xff]
      %v1184 = vld [vmem:[%s338 + $0x142] sm:$0xff]
      %v1185 = vld [vmem:[%s338 + $0x152] sm:$0xff]
      %v1186 = vld [vmem:[%s338 + $0x15a] sm:$0xff]
      %v1187 = vld [vmem:[%s338 + $0x16a] sm:$0xff]
      %v1188 = vld [vmem:[%s338 + $0x172] sm:$0xff]
      %1221 = vrot.lane.b32.xlu0 %v1157, 32
      %v1222 = vpop.permute.xlu0 %1221
      %1223 = vrot.lane.b32.xlu0 %v1158, 32
      %v1224 = vpop.permute.xlu0 %1223
      %1225 = vrot.lane.b32.xlu0 %v1159, 32
      %v1226 = vpop.permute.xlu0 %1225
      %1227 = vrot.lane.b32.xlu0 %v1160, 32
      %v1228 = vpop.permute.xlu0 %1227
      %1229 = vrot.lane.b32.xlu0 %v1161, 32
      %v1230 = vpop.permute.xlu0 %1229
      %1231 = vrot.lane.b32.xlu0 %v1162, 32
      %v1232 = vpop.permute.xlu0 %1231
      %1233 = vrot.lane.b32.xlu0 %v1163, 32
      %v1234 = vpop.permute.xlu0 %1233
      %1235 = vrot.lane.b32.xlu0 %v1164, 32
      %v1236 = vpop.permute.xlu0 %1235
      %1237 = vrot.lane.b32.xlu0 %v1165, 32
      %v1238 = vpop.permute.xlu0 %1237
      %1239 = vrot.lane.b32.xlu0 %v1166, 32
      %v1240 = vpop.permute.xlu0 %1239
      %1241 = vrot.lane.b32.xlu0 %v1167, 32
      %v1242 = vpop.permute.xlu0 %1241
      %1243 = vrot.lane.b32.xlu0 %v1168, 32
      %v1244 = vpop.permute.xlu0 %1243
      %1245 = vrot.lane.b32.xlu0 %v1169, 32
      %v1246 = vpop.permute.xlu0 %1245
      %1247 = vrot.lane.b32.xlu0 %v1170, 32
      %v1248 = vpop.permute.xlu0 %1247
      %1249 = vrot.lane.b32.xlu0 %v1171, 32
      %v1250 = vpop.permute.xlu0 %1249
      %1251 = vrot.lane.b32.xlu0 %v1172, 32
      %v1252 = vpop.permute.xlu0 %1251
      %1253 = vrot.lane.b32.xlu0 %v1173, 32
      %v1254 = vpop.permute.xlu0 %1253
      %1255 = vrot.lane.b32.xlu0 %v1174, 32
      %v1256 = vpop.permute.xlu0 %1255
      %1257 = vrot.lane.b32.xlu0 %v1175, 32
      %v1258 = vpop.permute.xlu0 %1257
      %1259 = vrot.lane.b32.xlu0 %v1176, 32
      %v1260 = vpop.permute.xlu0 %1259
      %1261 = vrot.lane.b32.xlu0 %v1177, 32
      %v1262 = vpop.permute.xlu0 %1261
      %1263 = vrot.lane.b32.xlu0 %v1178, 32
      %v1264 = vpop.permute.xlu0 %1263
      %1265 = vrot.lane.b32.xlu0 %v1179, 32
      %v1266 = vpop.permute.xlu0 %1265
      %1267 = vrot.lane.b32.xlu0 %v1180, 32
      %v1268 = vpop.permute.xlu0 %1267
      %1269 = vrot.lane.b32.xlu0 %v1181, 32
      %v1270 = vpop.permute.xlu0 %1269
      %1271 = vrot.lane.b32.xlu0 %v1182, 32
      %v1272 = vpop.permute.xlu0 %1271
      %1273 = vrot.lane.b32.xlu0 %v1183, 32
      %v1274 = vpop.permute.xlu0 %1273
      %1275 = vrot.lane.b32.xlu0 %v1184, 32
      %v1276 = vpop.permute.xlu0 %1275
      %1277 = vrot.lane.b32.xlu0 %v1185, 32
      %v1278 = vpop.permute.xlu0 %1277
      %1279 = vrot.lane.b32.xlu0 %v1186, 32
      %v1280 = vpop.permute.xlu0 %1279
      %1281 = vrot.lane.b32.xlu0 %v1187, 32
      %v1282 = vpop.permute.xlu0 %1281
      %1283 = vrot.lane.b32.xlu0 %v1188, 32
      %v1284 = vpop.permute.xlu0 %1283
      %1317 = vst.msk [vmem:[#allocation3 + $0x8] sm:$0xff] %vm674, %v1222
      %1318 = vst.msk [vmem:[#allocation3 + $0x20] sm:$0xff] %vm674, %v1224
      %1319 = vst.msk [vmem:[#allocation3 + $0x38] sm:$0xff] %vm674, %v1226
      %1320 = vst.msk [vmem:[#allocation3 + $0x50] sm:$0xff] %vm674, %v1228
      %1321 = vst.msk [vmem:[#allocation3 + $0x68] sm:$0xff] %vm674, %v1230
      %1322 = vst.msk [vmem:[#allocation3 + $0x80] sm:$0xff] %vm674, %v1232
      %1323 = vst.msk [vmem:[#allocation3 + $0x98] sm:$0xff] %vm674, %v1234
      %1324 = vst.msk [vmem:[#allocation3 + $0xb0] sm:$0xff] %vm674, %v1236
      %1325 = vst.msk [vmem:[#allocation3 + $0xc8] sm:$0xff] %vm674, %v1238
      %1326 = vst.msk [vmem:[#allocation3 + $0xe0] sm:$0xff] %vm674, %v1240
      %1327 = vst.msk [vmem:[#allocation3 + $0xf8] sm:$0xff] %vm674, %v1242
      %1328 = vst.msk [vmem:[#allocation3 + $0x110] sm:$0xff] %vm674, %v1244
      %1329 = vst.msk [vmem:[#allocation3 + $0x128] sm:$0xff] %vm674, %v1246
      %1330 = vst.msk [vmem:[#allocation3 + $0x140] sm:$0xff] %vm674, %v1248
      %1331 = vst.msk [vmem:[#allocation3 + $0x158] sm:$0xff] %vm674, %v1250
      %1332 = vst.msk [vmem:[#allocation3 + $0x170] sm:$0xff] %vm674, %v1252
      %1333 = vst.msk [vmem:[#allocation3 + $0x188] sm:$0xff] %vm674, %v1254
      %1334 = vst.msk [vmem:[#allocation3 + $0x1a0] sm:$0xff] %vm674, %v1256
      %1335 = vst.msk [vmem:[#allocation3 + $0x1b8] sm:$0xff] %vm674, %v1258
      %1336 = vst.msk [vmem:[#allocation3 + $0x1d0] sm:$0xff] %vm674, %v1260
      %1337 = vst.msk [vmem:[#allocation3 + $0x1e8] sm:$0xff] %vm674, %v1262
      %1338 = vst.msk [vmem:[#allocation3 + $0x200] sm:$0xff] %vm674, %v1264
      %1339 = vst.msk [vmem:[#allocation3 + $0x218] sm:$0xff] %vm674, %v1266
      %1340 = vst.msk [vmem:[#allocation3 + $0x230] sm:$0xff] %vm674, %v1268
      %1341 = vst.msk [vmem:[#allocation3 + $0x248] sm:$0xff] %vm674, %v1270
      %1342 = vst.msk [vmem:[#allocation3 + $0x260] sm:$0xff] %vm674, %v1272
      %1343 = vst.msk [vmem:[#allocation3 + $0x278] sm:$0xff] %vm674, %v1274
      %1344 = vst.msk [vmem:[#allocation3 + $0x290] sm:$0xff] %vm674, %v1276
      %1345 = vst.msk [vmem:[#allocation3 + $0x2a8] sm:$0xff] %vm674, %v1278
      %1346 = vst.msk [vmem:[#allocation3 + $0x2c0] sm:$0xff] %vm674, %v1280
      %1347 = vst.msk [vmem:[#allocation3 + $0x2d8] sm:$0xff] %vm674, %v1282
      %1348 = vst.msk [vmem:[#allocation3 + $0x2f0] sm:$0xff] %vm674, %v1284
      %s1349 = scalar_lea.vmem [#allocation2], 48
      %v1350 = vld [vmem:[%s1349] sm:$0xff]
      %v1351 = vld [vmem:[%s1349 + $0x8] sm:$0xff]
      %v1352 = vld [vmem:[%s1349 + $0x18] sm:$0xff]
      %v1353 = vld [vmem:[%s1349 + $0x20] sm:$0xff]
      %v1354 = vld [vmem:[%s1349 + $0x30] sm:$0xff]
      %v1355 = vld [vmem:[%s1349 + $0x38] sm:$0xff]
      %v1356 = vld [vmem:[%s1349 + $0x48] sm:$0xff]
      %v1357 = vld [vmem:[%s1349 + $0x50] sm:$0xff]
      %v1358 = vld [vmem:[%s1349 + $0x60] sm:$0xff]
      %v1359 = vld [vmem:[%s1349 + $0x68] sm:$0xff]
      %v1360 = vld [vmem:[%s1349 + $0x78] sm:$0xff]
      %v1361 = vld [vmem:[%s1349 + $0x80] sm:$0xff]
      %v1362 = vld [vmem:[%s1349 + $0x90] sm:$0xff]
      %v1363 = vld [vmem:[%s1349 + $0x98] sm:$0xff]
      %v1364 = vld [vmem:[%s1349 + $0xa8] sm:$0xff]
      %v1365 = vld [vmem:[%s1349 + $0xb0] sm:$0xff]
      %v1366 = vld [vmem:[%s1349 + $0xc0] sm:$0xff]
      %v1367 = vld [vmem:[%s1349 + $0xc8] sm:$0xff]
      %v1368 = vld [vmem:[%s1349 + $0xd8] sm:$0xff]
      %v1369 = vld [vmem:[%s1349 + $0xe0] sm:$0xff]
      %v1370 = vld [vmem:[%s1349 + $0xf0] sm:$0xff]
      %v1371 = vld [vmem:[%s1349 + $0xf8] sm:$0xff]
      %v1372 = vld [vmem:[%s1349 + $0x108] sm:$0xff]
      %v1373 = vld [vmem:[%s1349 + $0x110] sm:$0xff]
      %v1374 = vld [vmem:[%s1349 + $0x120] sm:$0xff]
      %v1375 = vld [vmem:[%s1349 + $0x128] sm:$0xff]
      %v1376 = vld [vmem:[%s1349 + $0x138] sm:$0xff]
      %v1377 = vld [vmem:[%s1349 + $0x140] sm:$0xff]
      %v1378 = vld [vmem:[%s1349 + $0x150] sm:$0xff]
      %v1379 = vld [vmem:[%s1349 + $0x158] sm:$0xff]
      %v1380 = vld [vmem:[%s1349 + $0x168] sm:$0xff]
      %v1381 = vld [vmem:[%s1349 + $0x170] sm:$0xff]
      %1414 = vrot.lane.b32.xlu0 %v1350, 64
      %v1415 = vpop.permute.xlu0 %1414
      %1416 = vrot.lane.b32.xlu0 %v1351, 64
      %v1417 = vpop.permute.xlu0 %1416
      %1418 = vrot.lane.b32.xlu0 %v1352, 64
      %v1419 = vpop.permute.xlu0 %1418
      %1420 = vrot.lane.b32.xlu0 %v1353, 64
      %v1421 = vpop.permute.xlu0 %1420
      %1422 = vrot.lane.b32.xlu0 %v1354, 64
      %v1423 = vpop.permute.xlu0 %1422
      %1424 = vrot.lane.b32.xlu0 %v1355, 64
      %v1425 = vpop.permute.xlu0 %1424
      %1426 = vrot.lane.b32.xlu0 %v1356, 64
      %v1427 = vpop.permute.xlu0 %1426
      %1428 = vrot.lane.b32.xlu0 %v1357, 64
      %v1429 = vpop.permute.xlu0 %1428
      %1430 = vrot.lane.b32.xlu0 %v1358, 64
      %v1431 = vpop.permute.xlu0 %1430
      %1432 = vrot.lane.b32.xlu0 %v1359, 64
      %v1433 = vpop.permute.xlu0 %1432
      %1434 = vrot.lane.b32.xlu0 %v1360, 64
      %v1435 = vpop.permute.xlu0 %1434
      %1436 = vrot.lane.b32.xlu0 %v1361, 64
      %v1437 = vpop.permute.xlu0 %1436
      %1438 = vrot.lane.b32.xlu0 %v1362, 64
      %v1439 = vpop.permute.xlu0 %1438
      %1440 = vrot.lane.b32.xlu0 %v1363, 64
      %v1441 = vpop.permute.xlu0 %1440
      %1442 = vrot.lane.b32.xlu0 %v1364, 64
      %v1443 = vpop.permute.xlu0 %1442
      %1444 = vrot.lane.b32.xlu0 %v1365, 64
      %v1445 = vpop.permute.xlu0 %1444
      %1446 = vrot.lane.b32.xlu0 %v1366, 64
      %v1447 = vpop.permute.xlu0 %1446
      %1448 = vrot.lane.b32.xlu0 %v1367, 64
      %v1449 = vpop.permute.xlu0 %1448
      %1450 = vrot.lane.b32.xlu0 %v1368, 64
      %v1451 = vpop.permute.xlu0 %1450
      %1452 = vrot.lane.b32.xlu0 %v1369, 64
      %v1453 = vpop.permute.xlu0 %1452
      %1454 = vrot.lane.b32.xlu0 %v1370, 64
      %v1455 = vpop.permute.xlu0 %1454
      %1456 = vrot.lane.b32.xlu0 %v1371, 64
      %v1457 = vpop.permute.xlu0 %1456
      %1458 = vrot.lane.b32.xlu0 %v1372, 64
      %v1459 = vpop.permute.xlu0 %1458
      %1460 = vrot.lane.b32.xlu0 %v1373, 64
      %v1461 = vpop.permute.xlu0 %1460
      %1462 = vrot.lane.b32.xlu0 %v1374, 64
      %v1463 = vpop.permute.xlu0 %1462
      %1464 = vrot.lane.b32.xlu0 %v1375, 64
      %v1465 = vpop.permute.xlu0 %1464
      %1466 = vrot.lane.b32.xlu0 %v1376, 64
      %v1467 = vpop.permute.xlu0 %1466
      %1468 = vrot.lane.b32.xlu0 %v1377, 64
      %v1469 = vpop.permute.xlu0 %1468
      %1470 = vrot.lane.b32.xlu0 %v1378, 64
      %v1471 = vpop.permute.xlu0 %1470
      %1472 = vrot.lane.b32.xlu0 %v1379, 64
      %v1473 = vpop.permute.xlu0 %1472
      %1474 = vrot.lane.b32.xlu0 %v1380, 64
      %v1475 = vpop.permute.xlu0 %1474
      %1476 = vrot.lane.b32.xlu0 %v1381, 64
      %v1477 = vpop.permute.xlu0 %1476
      %1510 = vst.msk [vmem:[#allocation3 + $0x8] sm:$0xff] %vm867, %v1415
      %1511 = vst.msk [vmem:[#allocation3 + $0x20] sm:$0xff] %vm867, %v1417
      %1512 = vst.msk [vmem:[#allocation3 + $0x38] sm:$0xff] %vm867, %v1419
      %1513 = vst.msk [vmem:[#allocation3 + $0x50] sm:$0xff] %vm867, %v1421
      %1514 = vst.msk [vmem:[#allocation3 + $0x68] sm:$0xff] %vm867, %v1423
      %1515 = vst.msk [vmem:[#allocation3 + $0x80] sm:$0xff] %vm867, %v1425
      %1516 = vst.msk [vmem:[#allocation3 + $0x98] sm:$0xff] %vm867, %v1427
      %1517 = vst.msk [vmem:[#allocation3 + $0xb0] sm:$0xff] %vm867, %v1429
      %1518 = vst.msk [vmem:[#allocation3 + $0xc8] sm:$0xff] %vm867, %v1431
      %1519 = vst.msk [vmem:[#allocation3 + $0xe0] sm:$0xff] %vm867, %v1433
      %1520 = vst.msk [vmem:[#allocation3 + $0xf8] sm:$0xff] %vm867, %v1435
      %1521 = vst.msk [vmem:[#allocation3 + $0x110] sm:$0xff] %vm867, %v1437
      %1522 = vst.msk [vmem:[#allocation3 + $0x128] sm:$0xff] %vm867, %v1439
      %1523 = vst.msk [vmem:[#allocation3 + $0x140] sm:$0xff] %vm867, %v1441
      %1524 = vst.msk [vmem:[#allocation3 + $0x158] sm:$0xff] %vm867, %v1443
      %1525 = vst.msk [vmem:[#allocation3 + $0x170] sm:$0xff] %vm867, %v1445
      %1526 = vst.msk [vmem:[#allocation3 + $0x188] sm:$0xff] %vm867, %v1447
      %1527 = vst.msk [vmem:[#allocation3 + $0x1a0] sm:$0xff] %vm867, %v1449
      %1528 = vst.msk [vmem:[#allocation3 + $0x1b8] sm:$0xff] %vm867, %v1451
      %1529 = vst.msk [vmem:[#allocation3 + $0x1d0] sm:$0xff] %vm867, %v1453
      %1530 = vst.msk [vmem:[#allocation3 + $0x1e8] sm:$0xff] %vm867, %v1455
      %1531 = vst.msk [vmem:[#allocation3 + $0x200] sm:$0xff] %vm867, %v1457
      %1532 = vst.msk [vmem:[#allocation3 + $0x218] sm:$0xff] %vm867, %v1459
      %1533 = vst.msk [vmem:[#allocation3 + $0x230] sm:$0xff] %vm867, %v1461
      %1534 = vst.msk [vmem:[#allocation3 + $0x248] sm:$0xff] %vm867, %v1463
      %1535 = vst.msk [vmem:[#allocation3 + $0x260] sm:$0xff] %vm867, %v1465
      %1536 = vst.msk [vmem:[#allocation3 + $0x278] sm:$0xff] %vm867, %v1467
      %1537 = vst.msk [vmem:[#allocation3 + $0x290] sm:$0xff] %vm867, %v1469
      %1538 = vst.msk [vmem:[#allocation3 + $0x2a8] sm:$0xff] %vm867, %v1471
      %1539 = vst.msk [vmem:[#allocation3 + $0x2c0] sm:$0xff] %vm867, %v1473
      %1540 = vst.msk [vmem:[#allocation3 + $0x2d8] sm:$0xff] %vm867, %v1475
      %1541 = vst.msk [vmem:[#allocation3 + $0x2f0] sm:$0xff] %vm867, %v1477
      %v1542 = vld [vmem:[%s1349 + $0x1] sm:$0xff]
      %v1543 = vld [vmem:[%s1349 + $0x9] sm:$0xff]
      %v1544 = vld [vmem:[%s1349 + $0x19] sm:$0xff]
      %v1545 = vld [vmem:[%s1349 + $0x21] sm:$0xff]
      %v1546 = vld [vmem:[%s1349 + $0x31] sm:$0xff]
      %v1547 = vld [vmem:[%s1349 + $0x39] sm:$0xff]
      %v1548 = vld [vmem:[%s1349 + $0x49] sm:$0xff]
      %v1549 = vld [vmem:[%s1349 + $0x51] sm:$0xff]
      %v1550 = vld [vmem:[%s1349 + $0x61] sm:$0xff]
      %v1551 = vld [vmem:[%s1349 + $0x69] sm:$0xff]
      %v1552 = vld [vmem:[%s1349 + $0x79] sm:$0xff]
      %v1553 = vld [vmem:[%s1349 + $0x81] sm:$0xff]
      %v1554 = vld [vmem:[%s1349 + $0x91] sm:$0xff]
      %v1555 = vld [vmem:[%s1349 + $0x99] sm:$0xff]
      %v1556 = vld [vmem:[%s1349 + $0xa9] sm:$0xff]
      %v1557 = vld [vmem:[%s1349 + $0xb1] sm:$0xff]
      %v1558 = vld [vmem:[%s1349 + $0xc1] sm:$0xff]
      %v1559 = vld [vmem:[%s1349 + $0xc9] sm:$0xff]
      %v1560 = vld [vmem:[%s1349 + $0xd9] sm:$0xff]
      %v1561 = vld [vmem:[%s1349 + $0xe1] sm:$0xff]
      %v1562 = vld [vmem:[%s1349 + $0xf1] sm:$0xff]
      %v1563 = vld [vmem:[%s1349 + $0xf9] sm:$0xff]
      %v1564 = vld [vmem:[%s1349 + $0x109] sm:$0xff]
      %v1565 = vld [vmem:[%s1349 + $0x111] sm:$0xff]
      %v1566 = vld [vmem:[%s1349 + $0x121] sm:$0xff]
      %v1567 = vld [vmem:[%s1349 + $0x129] sm:$0xff]
      %v1568 = vld [vmem:[%s1349 + $0x139] sm:$0xff]
      %v1569 = vld [vmem:[%s1349 + $0x141] sm:$0xff]
      %v1570 = vld [vmem:[%s1349 + $0x151] sm:$0xff]
      %v1571 = vld [vmem:[%s1349 + $0x159] sm:$0xff]
      %v1572 = vld [vmem:[%s1349 + $0x169] sm:$0xff]
      %v1573 = vld [vmem:[%s1349 + $0x171] sm:$0xff]
      %1606 = vrot.lane.b32.xlu0 %v1542, 96
      %v1607 = vpop.permute.xlu0 %1606
      %1608 = vrot.lane.b32.xlu0 %v1543, 96
      %v1609 = vpop.permute.xlu0 %1608
      %1610 = vrot.lane.b32.xlu0 %v1544, 96
      %v1611 = vpop.permute.xlu0 %1610
      %1612 = vrot.lane.b32.xlu0 %v1545, 96
      %v1613 = vpop.permute.xlu0 %1612
      %1614 = vrot.lane.b32.xlu0 %v1546, 96
      %v1615 = vpop.permute.xlu0 %1614
      %1616 = vrot.lane.b32.xlu0 %v1547, 96
      %v1617 = vpop.permute.xlu0 %1616
      %1618 = vrot.lane.b32.xlu0 %v1548, 96
      %v1619 = vpop.permute.xlu0 %1618
      %1620 = vrot.lane.b32.xlu0 %v1549, 96
      %v1621 = vpop.permute.xlu0 %1620
      %1622 = vrot.lane.b32.xlu0 %v1550, 96
      %v1623 = vpop.permute.xlu0 %1622
      %1624 = vrot.lane.b32.xlu0 %v1551, 96
      %v1625 = vpop.permute.xlu0 %1624
      %1626 = vrot.lane.b32.xlu0 %v1552, 96
      %v1627 = vpop.permute.xlu0 %1626
      %1628 = vrot.lane.b32.xlu0 %v1553, 96
      %v1629 = vpop.permute.xlu0 %1628
      %1630 = vrot.lane.b32.xlu0 %v1554, 96
      %v1631 = vpop.permute.xlu0 %1630
      %1632 = vrot.lane.b32.xlu0 %v1555, 96
      %v1633 = vpop.permute.xlu0 %1632
      %1634 = vrot.lane.b32.xlu0 %v1556, 96
      %v1635 = vpop.permute.xlu0 %1634
      %1636 = vrot.lane.b32.xlu0 %v1557, 96
      %v1637 = vpop.permute.xlu0 %1636
      %1638 = vrot.lane.b32.xlu0 %v1558, 96
      %v1639 = vpop.permute.xlu0 %1638
      %1640 = vrot.lane.b32.xlu0 %v1559, 96
      %v1641 = vpop.permute.xlu0 %1640
      %1642 = vrot.lane.b32.xlu0 %v1560, 96
      %v1643 = vpop.permute.xlu0 %1642
      %1644 = vrot.lane.b32.xlu0 %v1561, 96
      %v1645 = vpop.permute.xlu0 %1644
      %1646 = vrot.lane.b32.xlu0 %v1562, 96
      %v1647 = vpop.permute.xlu0 %1646
      %1648 = vrot.lane.b32.xlu0 %v1563, 96
      %v1649 = vpop.permute.xlu0 %1648
      %1650 = vrot.lane.b32.xlu0 %v1564, 96
      %v1651 = vpop.permute.xlu0 %1650
      %1652 = vrot.lane.b32.xlu0 %v1565, 96
      %v1653 = vpop.permute.xlu0 %1652
      %1654 = vrot.lane.b32.xlu0 %v1566, 96
      %v1655 = vpop.permute.xlu0 %1654
      %1656 = vrot.lane.b32.xlu0 %v1567, 96
      %v1657 = vpop.permute.xlu0 %1656
      %1658 = vrot.lane.b32.xlu0 %v1568, 96
      %v1659 = vpop.permute.xlu0 %1658
      %1660 = vrot.lane.b32.xlu0 %v1569, 96
      %v1661 = vpop.permute.xlu0 %1660
      %1662 = vrot.lane.b32.xlu0 %v1570, 96
      %v1663 = vpop.permute.xlu0 %1662
      %1664 = vrot.lane.b32.xlu0 %v1571, 96
      %v1665 = vpop.permute.xlu0 %1664
      %1666 = vrot.lane.b32.xlu0 %v1572, 96
      %v1667 = vpop.permute.xlu0 %1666
      %1668 = vrot.lane.b32.xlu0 %v1573, 96
      %v1669 = vpop.permute.xlu0 %1668
      %1702 = vst.msk [vmem:[#allocation3 + $0x8] sm:$0xff] %vm1060, %v1607
      %1703 = vst.msk [vmem:[#allocation3 + $0x20] sm:$0xff] %vm1060, %v1609
      %1704 = vst.msk [vmem:[#allocation3 + $0x38] sm:$0xff] %vm1060, %v1611
      %1705 = vst.msk [vmem:[#allocation3 + $0x50] sm:$0xff] %vm1060, %v1613
      %1706 = vst.msk [vmem:[#allocation3 + $0x68] sm:$0xff] %vm1060, %v1615
      %1707 = vst.msk [vmem:[#allocation3 + $0x80] sm:$0xff] %vm1060, %v1617
      %1708 = vst.msk [vmem:[#allocation3 + $0x98] sm:$0xff] %vm1060, %v1619
      %1709 = vst.msk [vmem:[#allocation3 + $0xb0] sm:$0xff] %vm1060, %v1621
      %1710 = vst.msk [vmem:[#allocation3 + $0xc8] sm:$0xff] %vm1060, %v1623
      %1711 = vst.msk [vmem:[#allocation3 + $0xe0] sm:$0xff] %vm1060, %v1625
      %1712 = vst.msk [vmem:[#allocation3 + $0xf8] sm:$0xff] %vm1060, %v1627
      %1713 = vst.msk [vmem:[#allocation3 + $0x110] sm:$0xff] %vm1060, %v1629
      %1714 = vst.msk [vmem:[#allocation3 + $0x128] sm:$0xff] %vm1060, %v1631
      %1715 = vst.msk [vmem:[#allocation3 + $0x140] sm:$0xff] %vm1060, %v1633
      %1716 = vst.msk [vmem:[#allocation3 + $0x158] sm:$0xff] %vm1060, %v1635
      %1717 = vst.msk [vmem:[#allocation3 + $0x170] sm:$0xff] %vm1060, %v1637
      %1718 = vst.msk [vmem:[#allocation3 + $0x188] sm:$0xff] %vm1060, %v1639
      %1719 = vst.msk [vmem:[#allocation3 + $0x1a0] sm:$0xff] %vm1060, %v1641
      %1720 = vst.msk [vmem:[#allocation3 + $0x1b8] sm:$0xff] %vm1060, %v1643
      %1721 = vst.msk [vmem:[#allocation3 + $0x1d0] sm:$0xff] %vm1060, %v1645
      %1722 = vst.msk [vmem:[#allocation3 + $0x1e8] sm:$0xff] %vm1060, %v1647
      %1723 = vst.msk [vmem:[#allocation3 + $0x200] sm:$0xff] %vm1060, %v1649
      %1724 = vst.msk [vmem:[#allocation3 + $0x218] sm:$0xff] %vm1060, %v1651
      %1725 = vst.msk [vmem:[#allocation3 + $0x230] sm:$0xff] %vm1060, %v1653
      %1726 = vst.msk [vmem:[#allocation3 + $0x248] sm:$0xff] %vm1060, %v1655
      %1727 = vst.msk [vmem:[#allocation3 + $0x260] sm:$0xff] %vm1060, %v1657
      %1728 = vst.msk [vmem:[#allocation3 + $0x278] sm:$0xff] %vm1060, %v1659
      %1729 = vst.msk [vmem:[#allocation3 + $0x290] sm:$0xff] %vm1060, %v1661
      %1730 = vst.msk [vmem:[#allocation3 + $0x2a8] sm:$0xff] %vm1060, %v1663
      %1731 = vst.msk [vmem:[#allocation3 + $0x2c0] sm:$0xff] %vm1060, %v1665
      %1732 = vst.msk [vmem:[#allocation3 + $0x2d8] sm:$0xff] %vm1060, %v1667
      %1733 = vst.msk [vmem:[#allocation3 + $0x2f0] sm:$0xff] %vm1060, %v1669
      %v1734 = vld [vmem:[%s1349 + $0x2] sm:$0xff]
      %v1735 = vld [vmem:[%s1349 + $0xa] sm:$0xff]
      %v1736 = vld [vmem:[%s1349 + $0x1a] sm:$0xff]
      %v1737 = vld [vmem:[%s1349 + $0x22] sm:$0xff]
      %v1738 = vld [vmem:[%s1349 + $0x32] sm:$0xff]
      %v1739 = vld [vmem:[%s1349 + $0x3a] sm:$0xff]
      %v1740 = vld [vmem:[%s1349 + $0x4a] sm:$0xff]
      %v1741 = vld [vmem:[%s1349 + $0x52] sm:$0xff]
      %v1742 = vld [vmem:[%s1349 + $0x62] sm:$0xff]
      %v1743 = vld [vmem:[%s1349 + $0x6a] sm:$0xff]
      %v1744 = vld [vmem:[%s1349 + $0x7a] sm:$0xff]
      %v1745 = vld [vmem:[%s1349 + $0x82] sm:$0xff]
      %v1746 = vld [vmem:[%s1349 + $0x92] sm:$0xff]
      %v1747 = vld [vmem:[%s1349 + $0x9a] sm:$0xff]
      %v1748 = vld [vmem:[%s1349 + $0xaa] sm:$0xff]
      %v1749 = vld [vmem:[%s1349 + $0xb2] sm:$0xff]
      %v1750 = vld [vmem:[%s1349 + $0xc2] sm:$0xff]
      %v1751 = vld [vmem:[%s1349 + $0xca] sm:$0xff]
      %v1752 = vld [vmem:[%s1349 + $0xda] sm:$0xff]
      %v1753 = vld [vmem:[%s1349 + $0xe2] sm:$0xff]
      %v1754 = vld [vmem:[%s1349 + $0xf2] sm:$0xff]
      %v1755 = vld [vmem:[%s1349 + $0xfa] sm:$0xff]
      %v1756 = vld [vmem:[%s1349 + $0x10a] sm:$0xff]
      %v1757 = vld [vmem:[%s1349 + $0x112] sm:$0xff]
      %v1758 = vld [vmem:[%s1349 + $0x122] sm:$0xff]
      %v1759 = vld [vmem:[%s1349 + $0x12a] sm:$0xff]
      %v1760 = vld [vmem:[%s1349 + $0x13a] sm:$0xff]
      %v1761 = vld [vmem:[%s1349 + $0x142] sm:$0xff]
      %v1762 = vld [vmem:[%s1349 + $0x152] sm:$0xff]
      %v1763 = vld [vmem:[%s1349 + $0x15a] sm:$0xff]
      %v1764 = vld [vmem:[%s1349 + $0x16a] sm:$0xff]
      %v1765 = vld [vmem:[%s1349 + $0x172] sm:$0xff]
      %1766 = vst.msk [vmem:[#allocation3 + $0x10] sm:$0xff] %vm339, %v1734
      %1767 = vst.msk [vmem:[#allocation3 + $0x28] sm:$0xff] %vm339, %v1735
      %1768 = vst.msk [vmem:[#allocation3 + $0x40] sm:$0xff] %vm339, %v1736
      %1769 = vst.msk [vmem:[#allocation3 + $0x58] sm:$0xff] %vm339, %v1737
      %1770 = vst.msk [vmem:[#allocation3 + $0x70] sm:$0xff] %vm339, %v1738
      %1771 = vst.msk [vmem:[#allocation3 + $0x88] sm:$0xff] %vm339, %v1739
      %1772 = vst.msk [vmem:[#allocation3 + $0xa0] sm:$0xff] %vm339, %v1740
      %1773 = vst.msk [vmem:[#allocation3 + $0xb8] sm:$0xff] %vm339, %v1741
      %1774 = vst.msk [vmem:[#allocation3 + $0xd0] sm:$0xff] %vm339, %v1742
      %1775 = vst.msk [vmem:[#allocation3 + $0xe8] sm:$0xff] %vm339, %v1743
      %1776 = vst.msk [vmem:[#allocation3 + $0x100] sm:$0xff] %vm339, %v1744
      %1777 = vst.msk [vmem:[#allocation3 + $0x118] sm:$0xff] %vm339, %v1745
      %1778 = vst.msk [vmem:[#allocation3 + $0x130] sm:$0xff] %vm339, %v1746
      %1779 = vst.msk [vmem:[#allocation3 + $0x148] sm:$0xff] %vm339, %v1747
      %1780 = vst.msk [vmem:[#allocation3 + $0x160] sm:$0xff] %vm339, %v1748
      %1781 = vst.msk [vmem:[#allocation3 + $0x178] sm:$0xff] %vm339, %v1749
      %1782 = vst.msk [vmem:[#allocation3 + $0x190] sm:$0xff] %vm339, %v1750
      %1783 = vst.msk [vmem:[#allocation3 + $0x1a8] sm:$0xff] %vm339, %v1751
      %1784 = vst.msk [vmem:[#allocation3 + $0x1c0] sm:$0xff] %vm339, %v1752
      %1785 = vst.msk [vmem:[#allocation3 + $0x1d8] sm:$0xff] %vm339, %v1753
      %1786 = vst.msk [vmem:[#allocation3 + $0x1f0] sm:$0xff] %vm339, %v1754
      %1787 = vst.msk [vmem:[#allocation3 + $0x208] sm:$0xff] %vm339, %v1755
      %1788 = vst.msk [vmem:[#allocation3 + $0x220] sm:$0xff] %vm339, %v1756
      %1789 = vst.msk [vmem:[#allocation3 + $0x238] sm:$0xff] %vm339, %v1757
      %1790 = vst.msk [vmem:[#allocation3 + $0x250] sm:$0xff] %vm339, %v1758
      %1791 = vst.msk [vmem:[#allocation3 + $0x268] sm:$0xff] %vm339, %v1759
      %1792 = vst.msk [vmem:[#allocation3 + $0x280] sm:$0xff] %vm339, %v1760
      %1793 = vst.msk [vmem:[#allocation3 + $0x298] sm:$0xff] %vm339, %v1761
      %1794 = vst.msk [vmem:[#allocation3 + $0x2b0] sm:$0xff] %vm339, %v1762
      %1795 = vst.msk [vmem:[#allocation3 + $0x2c8] sm:$0xff] %vm339, %v1763
      %1796 = vst.msk [vmem:[#allocation3 + $0x2e0] sm:$0xff] %vm339, %v1764
      %1797 = vst.msk [vmem:[#allocation3 + $0x2f8] sm:$0xff] %vm339, %v1765
      %v1798 = vld [vmem:[#allocation3] sm:$0xff]
      %v1799 = vld [vmem:[#allocation3 + $0x8] sm:$0xff]
      %v1800 = vld [vmem:[#allocation3 + $0x10] sm:$0xff]
      %v1801 = vld [vmem:[#allocation3 + $0x18] sm:$0xff]
      %v1802 = vld [vmem:[#allocation3 + $0x20] sm:$0xff]
      %v1803 = vld [vmem:[#allocation3 + $0x28] sm:$0xff]
      %v1804 = vld [vmem:[#allocation3 + $0x30] sm:$0xff]
      %v1805 = vld [vmem:[#allocation3 + $0x38] sm:$0xff]
      %v1806 = vld [vmem:[#allocation3 + $0x40] sm:$0xff]
      %v1807 = vld [vmem:[#allocation3 + $0x48] sm:$0xff]
      %v1808 = vld [vmem:[#allocation3 + $0x50] sm:$0xff]
      %v1809 = vld [vmem:[#allocation3 + $0x58] sm:$0xff]
      %v1810 = vld [vmem:[#allocation3 + $0x60] sm:$0xff]
      %v1811 = vld [vmem:[#allocation3 + $0x68] sm:$0xff]
      %v1812 = vld [vmem:[#allocation3 + $0x70] sm:$0xff]
      %v1813 = vld [vmem:[#allocation3 + $0x78] sm:$0xff]
      %v1814 = vld [vmem:[#allocation3 + $0x80] sm:$0xff]
      %v1815 = vld [vmem:[#allocation3 + $0x88] sm:$0xff]
      %v1816 = vld [vmem:[#allocation3 + $0x90] sm:$0xff]
      %v1817 = vld [vmem:[#allocation3 + $0x98] sm:$0xff]
      %v1818 = vld [vmem:[#allocation3 + $0xa0] sm:$0xff]
      %v1819 = vld [vmem:[#allocation3 + $0xa8] sm:$0xff]
      %v1820 = vld [vmem:[#allocation3 + $0xb0] sm:$0xff]
      %v1821 = vld [vmem:[#allocation3 + $0xb8] sm:$0xff]
      %v1822 = vld [vmem:[#allocation3 + $0xc0] sm:$0xff]
      %v1823 = vld [vmem:[#allocation3 + $0xc8] sm:$0xff]
      %v1824 = vld [vmem:[#allocation3 + $0xd0] sm:$0xff]
      %v1825 = vld [vmem:[#allocation3 + $0xd8] sm:$0xff]
      %v1826 = vld [vmem:[#allocation3 + $0xe0] sm:$0xff]
      %v1827 = vld [vmem:[#allocation3 + $0xe8] sm:$0xff]
      %v1828 = vld [vmem:[#allocation3 + $0xf0] sm:$0xff]
      %v1829 = vld [vmem:[#allocation3 + $0xf8] sm:$0xff]
      %v1830 = vld [vmem:[#allocation3 + $0x100] sm:$0xff]
      %v1831 = vld [vmem:[#allocation3 + $0x108] sm:$0xff]
      %v1832 = vld [vmem:[#allocation3 + $0x110] sm:$0xff]
      %v1833 = vld [vmem:[#allocation3 + $0x118] sm:$0xff]
      %v1834 = vld [vmem:[#allocation3 + $0x120] sm:$0xff]
      %v1835 = vld [vmem:[#allocation3 + $0x128] sm:$0xff]
      %v1836 = vld [vmem:[#allocation3 + $0x130] sm:$0xff]
      %v1837 = vld [vmem:[#allocation3 + $0x138] sm:$0xff]
      %v1838 = vld [vmem:[#allocation3 + $0x140] sm:$0xff]
      %v1839 = vld [vmem:[#allocation3 + $0x148] sm:$0xff]
      %v1840 = vld [vmem:[#allocation3 + $0x150] sm:$0xff]
      %v1841 = vld [vmem:[#allocation3 + $0x158] sm:$0xff]
      %v1842 = vld [vmem:[#allocation3 + $0x160] sm:$0xff]
      %v1843 = vld [vmem:[#allocation3 + $0x168] sm:$0xff]
      %v1844 = vld [vmem:[#allocation3 + $0x170] sm:$0xff]
      %v1845 = vld [vmem:[#allocation3 + $0x178] sm:$0xff]
      %v1846 = vld [vmem:[#allocation3 + $0x180] sm:$0xff]
      %v1847 = vld [vmem:[#allocation3 + $0x188] sm:$0xff]
      %v1848 = vld [vmem:[#allocation3 + $0x190] sm:$0xff]
      %v1849 = vld [vmem:[#allocation3 + $0x198] sm:$0xff]
      %v1850 = vld [vmem:[#allocation3 + $0x1a0] sm:$0xff]
      %v1851 = vld [vmem:[#allocation3 + $0x1a8] sm:$0xff]
      %v1852 = vld [vmem:[#allocation3 + $0x1b0] sm:$0xff]
      %v1853 = vld [vmem:[#allocation3 + $0x1b8] sm:$0xff]
      %v1854 = vld [vmem:[#allocation3 + $0x1c0] sm:$0xff]
      %v1855 = vld [vmem:[#allocation3 + $0x1c8] sm:$0xff]
      %v1856 = vld [vmem:[#allocation3 + $0x1d0] sm:$0xff]
      %v1857 = vld [vmem:[#allocation3 + $0x1d8] sm:$0xff]
      %v1858 = vld [vmem:[#allocation3 + $0x1e0] sm:$0xff]
      %v1859 = vld [vmem:[#allocation3 + $0x1e8] sm:$0xff]
      %v1860 = vld [vmem:[#allocation3 + $0x1f0] sm:$0xff]
      %v1861 = vld [vmem:[#allocation3 + $0x1f8] sm:$0xff]
      %v1862 = vld [vmem:[#allocation3 + $0x200] sm:$0xff]
      %v1863 = vld [vmem:[#allocation3 + $0x208] sm:$0xff]
      %v1864 = vld [vmem:[#allocation3 + $0x210] sm:$0xff]
      %v1865 = vld [vmem:[#allocation3 + $0x218] sm:$0xff]
      %v1866 = vld [vmem:[#allocation3 + $0x220] sm:$0xff]
      %v1867 = vld [vmem:[#allocation3 + $0x228] sm:$0xff]
      %v1868 = vld [vmem:[#allocation3 + $0x230] sm:$0xff]
      %v1869 = vld [vmem:[#allocation3 + $0x238] sm:$0xff]
      %v1870 = vld [vmem:[#allocation3 + $0x240] sm:$0xff]
      %v1871 = vld [vmem:[#allocation3 + $0x248] sm:$0xff]
      %v1872 = vld [vmem:[#allocation3 + $0x250] sm:$0xff]
      %v1873 = vld [vmem:[#allocation3 + $0x258] sm:$0xff]
      %v1874 = vld [vmem:[#allocation3 + $0x260] sm:$0xff]
      %v1875 = vld [vmem:[#allocation3 + $0x268] sm:$0xff]
      %v1876 = vld [vmem:[#allocation3 + $0x270] sm:$0xff]
      %v1877 = vld [vmem:[#allocation3 + $0x278] sm:$0xff]
      %v1878 = vld [vmem:[#allocation3 + $0x280] sm:$0xff]
      %v1879 = vld [vmem:[#allocation3 + $0x288] sm:$0xff]
      %v1880 = vld [vmem:[#allocation3 + $0x290] sm:$0xff]
      %v1881 = vld [vmem:[#allocation3 + $0x298] sm:$0xff]
      %v1882 = vld [vmem:[#allocation3 + $0x2a0] sm:$0xff]
      %v1883 = vld [vmem:[#allocation3 + $0x2a8] sm:$0xff]
      %v1884 = vld [vmem:[#allocation3 + $0x2b0] sm:$0xff]
      %v1885 = vld [vmem:[#allocation3 + $0x2b8] sm:$0xff]
      %v1886 = vld [vmem:[#allocation3 + $0x2c0] sm:$0xff]
      %v1887 = vld [vmem:[#allocation3 + $0x2c8] sm:$0xff]
      %v1888 = vld [vmem:[#allocation3 + $0x2d0] sm:$0xff]
      %v1889 = vld [vmem:[#allocation3 + $0x2d8] sm:$0xff]
      %v1890 = vld [vmem:[#allocation3 + $0x2e0] sm:$0xff]
      %v1891 = vld [vmem:[#allocation3 + $0x2e8] sm:$0xff]
      %v1892 = vld [vmem:[#allocation3 + $0x2f0] sm:$0xff]
      %v1893 = vld [vmem:[#allocation3 + $0x2f8] sm:$0xff]
      %v1894 = vld [vmem:[%s1] sm:$0xff]
      %v1895 = vld [vmem:[%s1 + $0x8] sm:$0xff]
      %v1896 = vld [vmem:[%s1 + $0x10] sm:$0xff]
      %v1897 = vld [vmem:[%s1 + $0x18] sm:$0xff]
      %v1898 = vld [vmem:[%s1 + $0x20] sm:$0xff]
      %v1899 = vld [vmem:[%s1 + $0x28] sm:$0xff]
      %v1900 = vld [vmem:[%s1 + $0x30] sm:$0xff]
      %v1901 = vld [vmem:[%s1 + $0x38] sm:$0xff]
      %v1902 = vld [vmem:[%s1 + $0x40] sm:$0xff]
      %v1903 = vld [vmem:[%s1 + $0x48] sm:$0xff]
      %v1904 = vld [vmem:[%s1 + $0x50] sm:$0xff]
      %v1905 = vld [vmem:[%s1 + $0x58] sm:$0xff]
      %v1906 = vld [vmem:[%s1 + $0x60] sm:$0xff]
      %v1907 = vld [vmem:[%s1 + $0x68] sm:$0xff]
      %v1908 = vld [vmem:[%s1 + $0x70] sm:$0xff]
      %v1909 = vld [vmem:[%s1 + $0x78] sm:$0xff]
      %v1910 = vld [vmem:[%s1 + $0x80] sm:$0xff]
      %v1911 = vld [vmem:[%s1 + $0x88] sm:$0xff]
      %v1912 = vld [vmem:[%s1 + $0x90] sm:$0xff]
      %v1913 = vld [vmem:[%s1 + $0x98] sm:$0xff]
      %v1914 = vld [vmem:[%s1 + $0xa0] sm:$0xff]
      %v1915 = vld [vmem:[%s1 + $0xa8] sm:$0xff]
      %v1916 = vld [vmem:[%s1 + $0xb0] sm:$0xff]
      %v1917 = vld [vmem:[%s1 + $0xb8] sm:$0xff]
      %v1918 = vld [vmem:[%s1 + $0xc0] sm:$0xff]
      %v1919 = vld [vmem:[%s1 + $0xc8] sm:$0xff]
      %v1920 = vld [vmem:[%s1 + $0xd0] sm:$0xff]
      %v1921 = vld [vmem:[%s1 + $0xd8] sm:$0xff]
      %v1922 = vld [vmem:[%s1 + $0xe0] sm:$0xff]
      %v1923 = vld [vmem:[%s1 + $0xe8] sm:$0xff]
      %v1924 = vld [vmem:[%s1 + $0xf0] sm:$0xff]
      %v1925 = vld [vmem:[%s1 + $0xf8] sm:$0xff]
      %v1926 = vld [vmem:[%s1 + $0x100] sm:$0xff]
      %v1927 = vld [vmem:[%s1 + $0x108] sm:$0xff]
      %v1928 = vld [vmem:[%s1 + $0x110] sm:$0xff]
      %v1929 = vld [vmem:[%s1 + $0x118] sm:$0xff]
      %v1930 = vld [vmem:[%s2] sm:$0x1]
      %v1932 = vperm.slane %v1930, 0
      %v1935 = vsel %vm339, %v1800, 0
      %v1938 = vsel %vm339, %v1803, 0
      %v1941 = vsel %vm339, %v1806, 0
      %v1944 = vsel %vm339, %v1809, 0
      %v1947 = vsel %vm339, %v1812, 0
      %v1950 = vsel %vm339, %v1815, 0
      %v1953 = vsel %vm339, %v1818, 0
      %v1956 = vsel %vm339, %v1821, 0
      %v1959 = vsel %vm339, %v1824, 0
      %v1962 = vsel %vm339, %v1827, 0
      %v1965 = vsel %vm339, %v1830, 0
      %v1968 = vsel %vm339, %v1833, 0
      %v1971 = vsel %vm339, %v1836, 0
      %v1974 = vsel %vm339, %v1839, 0
      %v1977 = vsel %vm339, %v1842, 0
      %v1980 = vsel %vm339, %v1845, 0
      %v1983 = vsel %vm339, %v1848, 0
      %v1986 = vsel %vm339, %v1851, 0
      %v1989 = vsel %vm339, %v1854, 0
      %v1992 = vsel %vm339, %v1857, 0
      %v1995 = vsel %vm339, %v1860, 0
      %v1998 = vsel %vm339, %v1863, 0
      %v2001 = vsel %vm339, %v1866, 0
      %v2004 = vsel %vm339, %v1869, 0
      %v2007 = vsel %vm339, %v1872, 0
      %v2010 = vsel %vm339, %v1875, 0
      %v2013 = vsel %vm339, %v1878, 0
      %v2016 = vsel %vm339, %v1881, 0
      %v2019 = vsel %vm339, %v1884, 0
      %v2022 = vsel %vm339, %v1887, 0
      %v2025 = vsel %vm339, %v1890, 0
      %v2028 = vsel %vm339, %v1893, 0
      %2030 = vmatpush.msra.mxu0 %v1909
      %2031 = vmatpush.msra.mxu0 %v1908
      %2032 = vmatpush.msra.mxu0 %v1907
      %2033 = vmatpush.msra.mxu0 %v1906
      %2034 = vmatpush.msra.mxu0 %v1905
      %2035 = vmatpush.msra.mxu0 %v1904
      %2036 = vmatpush.msra.mxu0 %v1903
      %2037 = vmatpush.msra.mxu0 %v1902
      %2038 = vmatpush.msra.mxu0 %v1901
      %2039 = vmatpush.msra.mxu0 %v1900
      %2040 = vmatpush.msra.mxu0 %v1899
      %2041 = vmatpush.msra.mxu0 %v1898
      %2042 = vmatpush.msra.mxu0 %v1897
      %2043 = vmatpush.msra.mxu0 %v1896
      %2044 = vmatpush.msra.mxu0 %v1895
      %2045 = vmatpush.msra.mxu0 %v1894
      %2046 = vmatmul.f32.gmra.mxu0 %v1798
      %v2047 = vpop.f32.mrf.mxu0
      %v2048 = vadd.f32 %v1932, %v2047
      %2049 = vmatmul.f32.gmra.mxu0 %v1801
      %v2050 = vpop.f32.mrf.mxu0
      %v2051 = vadd.f32 %v1932, %v2050
      %2052 = vmatmul.f32.gmra.mxu0 %v1804
      %v2053 = vpop.f32.mrf.mxu0
      %v2054 = vadd.f32 %v1932, %v2053
      %2055 = vmatmul.f32.gmra.mxu0 %v1807
      %v2056 = vpop.f32.mrf.mxu0
      %v2057 = vadd.f32 %v1932, %v2056
      %2058 = vmatmul.f32.gmra.mxu0 %v1810
      %v2059 = vpop.f32.mrf.mxu0
      %v2060 = vadd.f32 %v1932, %v2059
      %2061 = vmatmul.f32.gmra.mxu0 %v1813
      %v2062 = vpop.f32.mrf.mxu0
      %v2063 = vadd.f32 %v1932, %v2062
      %2064 = vmatmul.f32.gmra.mxu0 %v1816
      %v2065 = vpop.f32.mrf.mxu0
      %v2066 = vadd.f32 %v1932, %v2065
      %2067 = vmatmul.f32.gmra.mxu0 %v1819
      %v2068 = vpop.f32.mrf.mxu0
      %v2069 = vadd.f32 %v1932, %v2068
      %2070 = vmatmul.f32.gmra.mxu0 %v1822
      %v2071 = vpop.f32.mrf.mxu0
      %v2072 = vadd.f32 %v1932, %v2071
      %2073 = vmatmul.f32.gmra.mxu0 %v1825
      %v2074 = vpop.f32.mrf.mxu0
      %v2075 = vadd.f32 %v1932, %v2074
      %2076 = vmatmul.f32.gmra.mxu0 %v1828
      %v2077 = vpop.f32.mrf.mxu0
      %v2078 = vadd.f32 %v1932, %v2077
      %2079 = vmatmul.f32.gmra.mxu0 %v1831
      %v2080 = vpop.f32.mrf.mxu0
      %v2081 = vadd.f32 %v1932, %v2080
      %2082 = vmatmul.f32.gmra.mxu0 %v1834
      %v2083 = vpop.f32.mrf.mxu0
      %v2084 = vadd.f32 %v1932, %v2083
      %2085 = vmatmul.f32.gmra.mxu0 %v1837
      %v2086 = vpop.f32.mrf.mxu0
      %v2087 = vadd.f32 %v1932, %v2086
      %2088 = vmatmul.f32.gmra.mxu0 %v1840
      %v2089 = vpop.f32.mrf.mxu0
      %v2090 = vadd.f32 %v1932, %v2089
      %2091 = vmatmul.f32.gmra.mxu0 %v1843
      %v2092 = vpop.f32.mrf.mxu0
      %v2093 = vadd.f32 %v1932, %v2092
      %2094 = vmatmul.f32.gmra.mxu0 %v1846
      %v2095 = vpop.f32.mrf.mxu0
      %v2096 = vadd.f32 %v1932, %v2095
      %2097 = vmatmul.f32.gmra.mxu0 %v1849
      %v2098 = vpop.f32.mrf.mxu0
      %v2099 = vadd.f32 %v1932, %v2098
      %2100 = vmatmul.f32.gmra.mxu0 %v1852
      %v2101 = vpop.f32.mrf.mxu0
      %v2102 = vadd.f32 %v1932, %v2101
      %2103 = vmatmul.f32.gmra.mxu0 %v1855
      %v2104 = vpop.f32.mrf.mxu0
      %v2105 = vadd.f32 %v1932, %v2104
      %2106 = vmatmul.f32.gmra.mxu0 %v1858
      %v2107 = vpop.f32.mrf.mxu0
      %v2108 = vadd.f32 %v1932, %v2107
      %2109 = vmatmul.f32.gmra.mxu0 %v1861
      %v2110 = vpop.f32.mrf.mxu0
      %v2111 = vadd.f32 %v1932, %v2110
      %2112 = vmatmul.f32.gmra.mxu0 %v1864
      %v2113 = vpop.f32.mrf.mxu0
      %v2114 = vadd.f32 %v1932, %v2113
      %2115 = vmatmul.f32.gmra.mxu0 %v1867
      %v2116 = vpop.f32.mrf.mxu0
      %v2117 = vadd.f32 %v1932, %v2116
      %2118 = vmatmul.f32.gmra.mxu0 %v1870
      %v2119 = vpop.f32.mrf.mxu0
      %v2120 = vadd.f32 %v1932, %v2119
      %2121 = vmatmul.f32.gmra.mxu0 %v1873
      %v2122 = vpop.f32.mrf.mxu0
      %v2123 = vadd.f32 %v1932, %v2122
      %2124 = vmatmul.f32.gmra.mxu0 %v1876
      %v2125 = vpop.f32.mrf.mxu0
      %v2126 = vadd.f32 %v1932, %v2125
      %2127 = vmatmul.f32.gmra.mxu0 %v1879
      %v2128 = vpop.f32.mrf.mxu0
      %v2129 = vadd.f32 %v1932, %v2128
      %2130 = vmatmul.f32.gmra.mxu0 %v1882
      %v2131 = vpop.f32.mrf.mxu0
      %v2132 = vadd.f32 %v1932, %v2131
      %2133 = vmatmul.f32.gmra.mxu0 %v1885
      %v2134 = vpop.f32.mrf.mxu0
      %v2135 = vadd.f32 %v1932, %v2134
      %2136 = vmatmul.f32.gmra.mxu0 %v1888
      %v2137 = vpop.f32.mrf.mxu0
      %v2138 = vadd.f32 %v1932, %v2137
      %2139 = vmatmul.f32.gmra.mxu0 %v1891
      %v2140 = vpop.f32.mrf.mxu0
      %v2141 = vadd.f32 %v1932, %v2140
      %2142 = vdwg.mxu0
      %2143 = vmatpush.msra.mxu0 %v1925
      %2144 = vmatpush.msra.mxu0 %v1924
      %2145 = vmatpush.msra.mxu0 %v1923
      %2146 = vmatpush.msra.mxu0 %v1922
      %2147 = vmatpush.msra.mxu0 %v1921
      %2148 = vmatpush.msra.mxu0 %v1920
      %2149 = vmatpush.msra.mxu0 %v1919
      %2150 = vmatpush.msra.mxu0 %v1918
      %2151 = vmatpush.msra.mxu0 %v1917
      %2152 = vmatpush.msra.mxu0 %v1916
      %2153 = vmatpush.msra.mxu0 %v1915
      %2154 = vmatpush.msra.mxu0 %v1914
      %2155 = vmatpush.msra.mxu0 %v1913
      %2156 = vmatpush.msra.mxu0 %v1912
      %2157 = vmatpush.msra.mxu0 %v1911
      %2158 = vmatpush.msra.mxu0 %v1910
      %2159 = vmatmul.f32.gmra.mxu0 %v1799
      %v2160 = vpop.f32.mrf.mxu0
      %v2161 = vadd.f32 %v2048, %v2160
      %2162 = vmatmul.f32.gmra.mxu0 %v1802
      %v2163 = vpop.f32.mrf.mxu0
      %v2164 = vadd.f32 %v2051, %v2163
      %2165 = vmatmul.f32.gmra.mxu0 %v1805
      %v2166 = vpop.f32.mrf.mxu0
      %v2167 = vadd.f32 %v2054, %v2166
      %2168 = vmatmul.f32.gmra.mxu0 %v1808
      %v2169 = vpop.f32.mrf.mxu0
      %v2170 = vadd.f32 %v2057, %v2169
      %2171 = vmatmul.f32.gmra.mxu0 %v1811
      %v2172 = vpop.f32.mrf.mxu0
      %v2173 = vadd.f32 %v2060, %v2172
      %2174 = vmatmul.f32.gmra.mxu0 %v1814
      %v2175 = vpop.f32.mrf.mxu0
      %v2176 = vadd.f32 %v2063, %v2175
      %2177 = vmatmul.f32.gmra.mxu0 %v1817
      %v2178 = vpop.f32.mrf.mxu0
      %v2179 = vadd.f32 %v2066, %v2178
      %2180 = vmatmul.f32.gmra.mxu0 %v1820
      %v2181 = vpop.f32.mrf.mxu0
      %v2182 = vadd.f32 %v2069, %v2181
      %2183 = vmatmul.f32.gmra.mxu0 %v1823
      %v2184 = vpop.f32.mrf.mxu0
      %v2185 = vadd.f32 %v2072, %v2184
      %2186 = vmatmul.f32.gmra.mxu0 %v1826
      %v2187 = vpop.f32.mrf.mxu0
      %v2188 = vadd.f32 %v2075, %v2187
      %2189 = vmatmul.f32.gmra.mxu0 %v1829
      %v2190 = vpop.f32.mrf.mxu0
      %v2191 = vadd.f32 %v2078, %v2190
      %2192 = vmatmul.f32.gmra.mxu0 %v1832
      %v2193 = vpop.f32.mrf.mxu0
      %v2194 = vadd.f32 %v2081, %v2193
      %2195 = vmatmul.f32.gmra.mxu0 %v1835
      %v2196 = vpop.f32.mrf.mxu0
      %v2197 = vadd.f32 %v2084, %v2196
      %2198 = vmatmul.f32.gmra.mxu0 %v1838
      %v2199 = vpop.f32.mrf.mxu0
      %v2200 = vadd.f32 %v2087, %v2199
      %2201 = vmatmul.f32.gmra.mxu0 %v1841
      %v2202 = vpop.f32.mrf.mxu0
      %v2203 = vadd.f32 %v2090, %v2202
      %2204 = vmatmul.f32.gmra.mxu0 %v1844
      %v2205 = vpop.f32.mrf.mxu0
      %v2206 = vadd.f32 %v2093, %v2205
      %2207 = vmatmul.f32.gmra.mxu0 %v1847
      %v2208 = vpop.f32.mrf.mxu0
      %v2209 = vadd.f32 %v2096, %v2208
      %2210 = vmatmul.f32.gmra.mxu0 %v1850
      %v2211 = vpop.f32.mrf.mxu0
      %v2212 = vadd.f32 %v2099, %v2211
      %2213 = vmatmul.f32.gmra.mxu0 %v1853
      %v2214 = vpop.f32.mrf.mxu0
      %v2215 = vadd.f32 %v2102, %v2214
      %2216 = vmatmul.f32.gmra.mxu0 %v1856
      %v2217 = vpop.f32.mrf.mxu0
      %v2218 = vadd.f32 %v2105, %v2217
      %2219 = vmatmul.f32.gmra.mxu0 %v1859
      %v2220 = vpop.f32.mrf.mxu0
      %v2221 = vadd.f32 %v2108, %v2220
      %2222 = vmatmul.f32.gmra.mxu0 %v1862
      %v2223 = vpop.f32.mrf.mxu0
      %v2224 = vadd.f32 %v2111, %v2223
      %2225 = vmatmul.f32.gmra.mxu0 %v1865
      %v2226 = vpop.f32.mrf.mxu0
      %v2227 = vadd.f32 %v2114, %v2226
      %2228 = vmatmul.f32.gmra.mxu0 %v1868
      %v2229 = vpop.f32.mrf.mxu0
      %v2230 = vadd.f32 %v2117, %v2229
      %2231 = vmatmul.f32.gmra.mxu0 %v1871
      %v2232 = vpop.f32.mrf.mxu0
      %v2233 = vadd.f32 %v2120, %v2232
      %2234 = vmatmul.f32.gmra.mxu0 %v1874
      %v2235 = vpop.f32.mrf.mxu0
      %v2236 = vadd.f32 %v2123, %v2235
      %2237 = vmatmul.f32.gmra.mxu0 %v1877
      %v2238 = vpop.f32.mrf.mxu0
      %v2239 = vadd.f32 %v2126, %v2238
      %2240 = vmatmul.f32.gmra.mxu0 %v1880
      %v2241 = vpop.f32.mrf.mxu0
      %v2242 = vadd.f32 %v2129, %v2241
      %2243 = vmatmul.f32.gmra.mxu0 %v1883
      %v2244 = vpop.f32.mrf.mxu0
      %v2245 = vadd.f32 %v2132, %v2244
      %2246 = vmatmul.f32.gmra.mxu0 %v1886
      %v2247 = vpop.f32.mrf.mxu0
      %v2248 = vadd.f32 %v2135, %v2247
      %2249 = vmatmul.f32.gmra.mxu0 %v1889
      %v2250 = vpop.f32.mrf.mxu0
      %v2251 = vadd.f32 %v2138, %v2250
      %2252 = vmatmul.f32.gmra.mxu0 %v1892
      %v2253 = vpop.f32.mrf.mxu0
      %v2254 = vadd.f32 %v2141, %v2253
      %2255 = vdwg.mxu0
      %2256 = vmatpush.msra.mxu0 0.0
      %2257 = vmatpush.msra.mxu0 0.0
      %2258 = vmatpush.msra.mxu0 0.0
      %2259 = vmatpush.msra.mxu0 0.0
      %2260 = vmatpush.msra.mxu0 0.0
      %2261 = vmatpush.msra.mxu0 0.0
      %2262 = vmatpush.msra.mxu0 0.0
      %2263 = vmatpush.msra.mxu0 0.0
      %2264 = vmatpush.msra.mxu0 0.0
      %2265 = vmatpush.msra.mxu0 0.0
      %2266 = vmatpush.msra.mxu0 0.0
      %2267 = vmatpush.msra.mxu0 0.0
      %2268 = vmatpush.msra.mxu0 %v1929
      %2269 = vmatpush.msra.mxu0 %v1928
      %2270 = vmatpush.msra.mxu0 %v1927
      %2271 = vmatpush.msra.mxu0 %v1926
      %2272 = vmatmul.f32.gmra.mxu0 %v1935
      %v2273 = vpop.f32.mrf.mxu0
      %v2274 = vadd.f32 %v2161, %v2273
      %2275 = vmatmul.f32.gmra.mxu0 %v1938
      %v2276 = vpop.f32.mrf.mxu0
      %v2277 = vadd.f32 %v2164, %v2276
      %2278 = vmatmul.f32.gmra.mxu0 %v1941
      %v2279 = vpop.f32.mrf.mxu0
      %v2280 = vadd.f32 %v2167, %v2279
      %2281 = vmatmul.f32.gmra.mxu0 %v1944
      %v2282 = vpop.f32.mrf.mxu0
      %v2283 = vadd.f32 %v2170, %v2282
      %2284 = vmatmul.f32.gmra.mxu0 %v1947
      %v2285 = vpop.f32.mrf.mxu0
      %v2286 = vadd.f32 %v2173, %v2285
      %2287 = vmatmul.f32.gmra.mxu0 %v1950
      %v2288 = vpop.f32.mrf.mxu0
      %v2289 = vadd.f32 %v2176, %v2288
      %2290 = vmatmul.f32.gmra.mxu0 %v1953
      %v2291 = vpop.f32.mrf.mxu0
      %v2292 = vadd.f32 %v2179, %v2291
      %2293 = vmatmul.f32.gmra.mxu0 %v1956
      %v2294 = vpop.f32.mrf.mxu0
      %v2295 = vadd.f32 %v2182, %v2294
      %2296 = vmatmul.f32.gmra.mxu0 %v1959
      %v2297 = vpop.f32.mrf.mxu0
      %v2298 = vadd.f32 %v2185, %v2297
      %2299 = vmatmul.f32.gmra.mxu0 %v1962
      %v2300 = vpop.f32.mrf.mxu0
      %v2301 = vadd.f32 %v2188, %v2300
      %2302 = vmatmul.f32.gmra.mxu0 %v1965
      %v2303 = vpop.f32.mrf.mxu0
      %v2304 = vadd.f32 %v2191, %v2303
      %2305 = vmatmul.f32.gmra.mxu0 %v1968
      %v2306 = vpop.f32.mrf.mxu0
      %v2307 = vadd.f32 %v2194, %v2306
      %2308 = vmatmul.f32.gmra.mxu0 %v1971
      %v2309 = vpop.f32.mrf.mxu0
      %v2310 = vadd.f32 %v2197, %v2309
      %2311 = vmatmul.f32.gmra.mxu0 %v1974
      %v2312 = vpop.f32.mrf.mxu0
      %v2313 = vadd.f32 %v2200, %v2312
      %2314 = vmatmul.f32.gmra.mxu0 %v1977
      %v2315 = vpop.f32.mrf.mxu0
      %v2316 = vadd.f32 %v2203, %v2315
      %2317 = vmatmul.f32.gmra.mxu0 %v1980
      %v2318 = vpop.f32.mrf.mxu0
      %v2319 = vadd.f32 %v2206, %v2318
      %2320 = vmatmul.f32.gmra.mxu0 %v1983
      %v2321 = vpop.f32.mrf.mxu0
      %v2322 = vadd.f32 %v2209, %v2321
      %2323 = vmatmul.f32.gmra.mxu0 %v1986
      %v2324 = vpop.f32.mrf.mxu0
      %v2325 = vadd.f32 %v2212, %v2324
      %2326 = vmatmul.f32.gmra.mxu0 %v1989
      %v2327 = vpop.f32.mrf.mxu0
      %v2328 = vadd.f32 %v2215, %v2327
      %2329 = vmatmul.f32.gmra.mxu0 %v1992
      %v2330 = vpop.f32.mrf.mxu0
      %v2331 = vadd.f32 %v2218, %v2330
      %2332 = vmatmul.f32.gmra.mxu0 %v1995
      %v2333 = vpop.f32.mrf.mxu0
      %v2334 = vadd.f32 %v2221, %v2333
      %2335 = vmatmul.f32.gmra.mxu0 %v1998
      %v2336 = vpop.f32.mrf.mxu0
      %v2337 = vadd.f32 %v2224, %v2336
      %2338 = vmatmul.f32.gmra.mxu0 %v2001
      %v2339 = vpop.f32.mrf.mxu0
      %v2340 = vadd.f32 %v2227, %v2339
      %2341 = vmatmul.f32.gmra.mxu0 %v2004
      %v2342 = vpop.f32.mrf.mxu0
      %v2343 = vadd.f32 %v2230, %v2342
      %2344 = vmatmul.f32.gmra.mxu0 %v2007
      %v2345 = vpop.f32.mrf.mxu0
      %v2346 = vadd.f32 %v2233, %v2345
      %2347 = vmatmul.f32.gmra.mxu0 %v2010
      %v2348 = vpop.f32.mrf.mxu0
      %v2349 = vadd.f32 %v2236, %v2348
      %2350 = vmatmul.f32.gmra.mxu0 %v2013
      %v2351 = vpop.f32.mrf.mxu0
      %v2352 = vadd.f32 %v2239, %v2351
      %2353 = vmatmul.f32.gmra.mxu0 %v2016
      %v2354 = vpop.f32.mrf.mxu0
      %v2355 = vadd.f32 %v2242, %v2354
      %2356 = vmatmul.f32.gmra.mxu0 %v2019
      %v2357 = vpop.f32.mrf.mxu0
      %v2358 = vadd.f32 %v2245, %v2357
      %2359 = vmatmul.f32.gmra.mxu0 %v2022
      %v2360 = vpop.f32.mrf.mxu0
      %v2361 = vadd.f32 %v2248, %v2360
      %2362 = vmatmul.f32.gmra.mxu0 %v2025
      %v2363 = vpop.f32.mrf.mxu0
      %v2364 = vadd.f32 %v2251, %v2363
      %2365 = vmatmul.f32.gmra.mxu0 %v2028
      %v2366 = vpop.f32.mrf.mxu0
      %v2367 = vadd.f32 %v2254, %v2366
      %2368 = vdwg.mxu0
      %v2369 = vmax.f32 %v2274, 0.0
      %v2370 = vmax.f32 %v2277, 0.0
      %v2371 = vmax.f32 %v2280, 0.0
      %v2372 = vmax.f32 %v2283, 0.0
      %v2373 = vmax.f32 %v2286, 0.0
      %v2374 = vmax.f32 %v2289, 0.0
      %v2375 = vmax.f32 %v2292, 0.0
      %v2376 = vmax.f32 %v2295, 0.0
      %v2377 = vmax.f32 %v2298, 0.0
      %v2378 = vmax.f32 %v2301, 0.0
      %v2379 = vmax.f32 %v2304, 0.0
      %v2380 = vmax.f32 %v2307, 0.0
      %v2381 = vmax.f32 %v2310, 0.0
      %v2382 = vmax.f32 %v2313, 0.0
      %v2383 = vmax.f32 %v2316, 0.0
      %v2384 = vmax.f32 %v2319, 0.0
      %v2385 = vmax.f32 %v2322, 0.0
      %v2386 = vmax.f32 %v2325, 0.0
      %v2387 = vmax.f32 %v2328, 0.0
      %v2388 = vmax.f32 %v2331, 0.0
      %v2389 = vmax.f32 %v2334, 0.0
      %v2390 = vmax.f32 %v2337, 0.0
      %v2391 = vmax.f32 %v2340, 0.0
      %v2392 = vmax.f32 %v2343, 0.0
      %v2393 = vmax.f32 %v2346, 0.0
      %v2394 = vmax.f32 %v2349, 0.0
      %v2395 = vmax.f32 %v2352, 0.0
      %v2396 = vmax.f32 %v2355, 0.0
      %v2397 = vmax.f32 %v2358, 0.0
      %v2398 = vmax.f32 %v2361, 0.0
      %v2399 = vmax.f32 %v2364, 0.0
      %v2400 = vmax.f32 %v2367, 0.0
      %s2401 = scalar_lea.vmem [#allocation4], 24
      %vm2402 = vcmask 31744
      %2403 = vst.msk [vmem:[%s2401 + $0x1] sm:$0xff] %vm2402, %v2369
      %2404 = vst.msk [vmem:[%s2401 + $0x9] sm:$0xff] %vm2402, %v2370
      %2405 = vst.msk [vmem:[%s2401 + $0x19] sm:$0xff] %vm2402, %v2371
      %2406 = vst.msk [vmem:[%s2401 + $0x21] sm:$0xff] %vm2402, %v2372
      %2407 = vst.msk [vmem:[%s2401 + $0x31] sm:$0xff] %vm2402, %v2373
      %2408 = vst.msk [vmem:[%s2401 + $0x39] sm:$0xff] %vm2402, %v2374
      %2409 = vst.msk [vmem:[%s2401 + $0x49] sm:$0xff] %vm2402, %v2375
      %2410 = vst.msk [vmem:[%s2401 + $0x51] sm:$0xff] %vm2402, %v2376
      %2411 = vst.msk [vmem:[%s2401 + $0x61] sm:$0xff] %vm2402, %v2377
      %2412 = vst.msk [vmem:[%s2401 + $0x69] sm:$0xff] %vm2402, %v2378
      %2413 = vst.msk [vmem:[%s2401 + $0x79] sm:$0xff] %vm2402, %v2379
      %2414 = vst.msk [vmem:[%s2401 + $0x81] sm:$0xff] %vm2402, %v2380
      %2415 = vst.msk [vmem:[%s2401 + $0x91] sm:$0xff] %vm2402, %v2381
      %2416 = vst.msk [vmem:[%s2401 + $0x99] sm:$0xff] %vm2402, %v2382
      %2417 = vst.msk [vmem:[%s2401 + $0xa9] sm:$0xff] %vm2402, %v2383
      %2418 = vst.msk [vmem:[%s2401 + $0xb1] sm:$0xff] %vm2402, %v2384
      %2419 = vst.msk [vmem:[%s2401 + $0xc1] sm:$0xff] %vm2402, %v2385
      %2420 = vst.msk [vmem:[%s2401 + $0xc9] sm:$0xff] %vm2402, %v2386
      %2421 = vst.msk [vmem:[%s2401 + $0xd9] sm:$0xff] %vm2402, %v2387
      %2422 = vst.msk [vmem:[%s2401 + $0xe1] sm:$0xff] %vm2402, %v2388
      %2423 = vst.msk [vmem:[%s2401 + $0xf1] sm:$0xff] %vm2402, %v2389
      %2424 = vst.msk [vmem:[%s2401 + $0xf9] sm:$0xff] %vm2402, %v2390
      %2425 = vst.msk [vmem:[%s2401 + $0x109] sm:$0xff] %vm2402, %v2391
      %2426 = vst.msk [vmem:[%s2401 + $0x111] sm:$0xff] %vm2402, %v2392
      %2427 = vst.msk [vmem:[%s2401 + $0x121] sm:$0xff] %vm2402, %v2393
      %2428 = vst.msk [vmem:[%s2401 + $0x129] sm:$0xff] %vm2402, %v2394
      %2429 = vst.msk [vmem:[%s2401 + $0x139] sm:$0xff] %vm2402, %v2395
      %2430 = vst.msk [vmem:[%s2401 + $0x141] sm:$0xff] %vm2402, %v2396
      %2431 = vst.msk [vmem:[%s2401 + $0x151] sm:$0xff] %vm2402, %v2397
      %2432 = vst.msk [vmem:[%s2401 + $0x159] sm:$0xff] %vm2402, %v2398
      %2433 = vst.msk [vmem:[%s2401 + $0x169] sm:$0xff] %vm2402, %v2399
      %2434 = vst.msk [vmem:[%s2401 + $0x171] sm:$0xff] %vm2402, %v2400
      %2435 = vst.msk [vmem:[#allocation4 + $0x1] sm:$0xff] %vm2402, %v2371
      %2436 = vst.msk [vmem:[#allocation4 + $0x9] sm:$0xff] %vm2402, %v2372
      %s2437 = scalar_lea.vmem [#allocation4], 408
      %2438 = vst.msk [vmem:[%s2437 + $0x1] sm:$0xff] %vm2402, %v2397
      %2439 = vst.msk [vmem:[%s2437 + $0x9] sm:$0xff] %vm2402, %v2398
      %v2440 = vld [vmem:[#allocation4 + $0x2] sm:$0x1]
      %v2441 = vld [vmem:[#allocation4 + $0x1a] sm:$0x1]
      %v2442 = vld [vmem:[#allocation4 + $0x32] sm:$0x1]
      %v2443 = vld [vmem:[#allocation4 + $0x4a] sm:$0x1]
      %v2444 = vld [vmem:[#allocation4 + $0x62] sm:$0x1]
      %v2445 = vld [vmem:[#allocation4 + $0x7a] sm:$0x1]
      %v2446 = vld [vmem:[#allocation4 + $0x92] sm:$0x1]
      %v2447 = vld [vmem:[#allocation4 + $0xaa] sm:$0x1]
      %v2448 = vld [vmem:[#allocation4 + $0xc2] sm:$0x1]
      %v2449 = vld [vmem:[#allocation4 + $0xda] sm:$0x1]
      %v2450 = vld [vmem:[#allocation4 + $0xf2] sm:$0x1]
      %v2451 = vld [vmem:[#allocation4 + $0x10a] sm:$0x1]
      %v2452 = vld [vmem:[#allocation4 + $0x122] sm:$0x1]
      %v2453 = vld [vmem:[#allocation4 + $0x13a] sm:$0x1]
      %v2454 = vld [vmem:[#allocation4 + $0x152] sm:$0x1]
      %v2455 = vld [vmem:[#allocation4 + $0x16a] sm:$0x1]
      %v2456 = vld [vmem:[#allocation4 + $0x182] sm:$0x1]
      %v2457 = vld [vmem:[#allocation4 + $0x19a] sm:$0x1]
      %vm2458 = vcmask 24576
      %2459 = vst.msk [vmem:[#allocation4] sm:$0x1] %vm2458, %v2440
      %2460 = vst.msk [vmem:[#allocation4 + $0x18] sm:$0x1] %vm2458, %v2441
      %2461 = vst.msk [vmem:[#allocation4 + $0x30] sm:$0x1] %vm2458, %v2442
      %2462 = vst.msk [vmem:[#allocation4 + $0x48] sm:$0x1] %vm2458, %v2443
      %2463 = vst.msk [vmem:[#allocation4 + $0x60] sm:$0x1] %vm2458, %v2444
      %2464 = vst.msk [vmem:[#allocation4 + $0x78] sm:$0x1] %vm2458, %v2445
      %2465 = vst.msk [vmem:[#allocation4 + $0x90] sm:$0x1] %vm2458, %v2446
      %2466 = vst.msk [vmem:[#allocation4 + $0xa8] sm:$0x1] %vm2458, %v2447
      %2467 = vst.msk [vmem:[#allocation4 + $0xc0] sm:$0x1] %vm2458, %v2448
      %2468 = vst.msk [vmem:[#allocation4 + $0xd8] sm:$0x1] %vm2458, %v2449
      %2469 = vst.msk [vmem:[#allocation4 + $0xf0] sm:$0x1] %vm2458, %v2450
      %2470 = vst.msk [vmem:[#allocation4 + $0x108] sm:$0x1] %vm2458, %v2451
      %2471 = vst.msk [vmem:[#allocation4 + $0x120] sm:$0x1] %vm2458, %v2452
      %2472 = vst.msk [vmem:[#allocation4 + $0x138] sm:$0x1] %vm2458, %v2453
      %2473 = vst.msk [vmem:[#allocation4 + $0x150] sm:$0x1] %vm2458, %v2454
      %2474 = vst.msk [vmem:[#allocation4 + $0x168] sm:$0x1] %vm2458, %v2455
      %2475 = vst.msk [vmem:[#allocation4 + $0x180] sm:$0x1] %vm2458, %v2456
      %2476 = vst.msk [vmem:[#allocation4 + $0x198] sm:$0x1] %vm2458, %v2457
      %v2477 = vld [vmem:[#allocation4 + $0xf] sm:$0x1]
      %v2478 = vld [vmem:[#allocation4 + $0x27] sm:$0x1]
      %v2479 = vld [vmem:[#allocation4 + $0x3f] sm:$0x1]
      %v2480 = vld [vmem:[#allocation4 + $0x57] sm:$0x1]
      %v2481 = vld [vmem:[#allocation4 + $0x6f] sm:$0x1]
      %v2482 = vld [vmem:[#allocation4 + $0x87] sm:$0x1]
      %v2483 = vld [vmem:[#allocation4 + $0x9f] sm:$0x1]
      %v2484 = vld [vmem:[#allocation4 + $0xb7] sm:$0x1]
      %v2485 = vld [vmem:[#allocation4 + $0xcf] sm:$0x1]
      %v2486 = vld [vmem:[#allocation4 + $0xe7] sm:$0x1]
      %v2487 = vld [vmem:[#allocation4 + $0xff] sm:$0x1]
      %v2488 = vld [vmem:[#allocation4 + $0x117] sm:$0x1]
      %v2489 = vld [vmem:[#allocation4 + $0x12f] sm:$0x1]
      %v2490 = vld [vmem:[#allocation4 + $0x147] sm:$0x1]
      %v2491 = vld [vmem:[#allocation4 + $0x15f] sm:$0x1]
      %v2492 = vld [vmem:[#allocation4 + $0x177] sm:$0x1]
      %v2493 = vld [vmem:[#allocation4 + $0x18f] sm:$0x1]
      %v2494 = vld [vmem:[#allocation4 + $0x1a7] sm:$0x1]
      %2495 = vst.msk [vmem:[#allocation4 + $0x11] sm:$0x1] %vm2458, %v2477
      %2496 = vst.msk [vmem:[#allocation4 + $0x29] sm:$0x1] %vm2458, %v2478
      %2497 = vst.msk [vmem:[#allocation4 + $0x41] sm:$0x1] %vm2458, %v2479
      %2498 = vst.msk [vmem:[#allocation4 + $0x59] sm:$0x1] %vm2458, %v2480
      %2499 = vst.msk [vmem:[#allocation4 + $0x71] sm:$0x1] %vm2458, %v2481
      %2500 = vst.msk [vmem:[#allocation4 + $0x89] sm:$0x1] %vm2458, %v2482
      %2501 = vst.msk [vmem:[#allocation4 + $0xa1] sm:$0x1] %vm2458, %v2483
      %2502 = vst.msk [vmem:[#allocation4 + $0xb9] sm:$0x1] %vm2458, %v2484
      %2503 = vst.msk [vmem:[#allocation4 + $0xd1] sm:$0x1] %vm2458, %v2485
      %2504 = vst.msk [vmem:[#allocation4 + $0xe9] sm:$0x1] %vm2458, %v2486
      %2505 = vst.msk [vmem:[#allocation4 + $0x101] sm:$0x1] %vm2458, %v2487
      %2506 = vst.msk [vmem:[#allocation4 + $0x119] sm:$0x1] %vm2458, %v2488
      %2507 = vst.msk [vmem:[#allocation4 + $0x131] sm:$0x1] %vm2458, %v2489
      %2508 = vst.msk [vmem:[#allocation4 + $0x149] sm:$0x1] %vm2458, %v2490
      %2509 = vst.msk [vmem:[#allocation4 + $0x161] sm:$0x1] %vm2458, %v2491
      %2510 = vst.msk [vmem:[#allocation4 + $0x179] sm:$0x1] %vm2458, %v2492
      %2511 = vst.msk [vmem:[#allocation4 + $0x191] sm:$0x1] %vm2458, %v2493
      %2512 = vst.msk [vmem:[#allocation4 + $0x1a9] sm:$0x1] %vm2458, %v2494
      %v2513 = vld [vmem:[#allocation4] sm:$0xff]
      %v2514 = vld [vmem:[#allocation4 + $0x8] sm:$0xff]
      %v2515 = vld [vmem:[#allocation4 + $0x18] sm:$0xff]
      %v2516 = vld [vmem:[#allocation4 + $0x20] sm:$0xff]
      %v2517 = vld [vmem:[#allocation4 + $0x30] sm:$0xff]
      %v2518 = vld [vmem:[#allocation4 + $0x38] sm:$0xff]
      %v2519 = vld [vmem:[#allocation4 + $0x48] sm:$0xff]
      %v2520 = vld [vmem:[#allocation4 + $0x50] sm:$0xff]
      %v2521 = vld [vmem:[#allocation4 + $0x60] sm:$0xff]
      %v2522 = vld [vmem:[#allocation4 + $0x68] sm:$0xff]
      %v2523 = vld [vmem:[#allocation4 + $0x78] sm:$0xff]
      %v2524 = vld [vmem:[#allocation4 + $0x80] sm:$0xff]
      %v2525 = vld [vmem:[#allocation4 + $0x90] sm:$0xff]
      %v2526 = vld [vmem:[#allocation4 + $0x98] sm:$0xff]
      %v2527 = vld [vmem:[#allocation4 + $0xa8] sm:$0xff]
      %v2528 = vld [vmem:[#allocation4 + $0xb0] sm:$0xff]
      %v2529 = vld [vmem:[#allocation4 + $0xc0] sm:$0xff]
      %v2530 = vld [vmem:[#allocation4 + $0xc8] sm:$0xff]
      %v2531 = vld [vmem:[#allocation4 + $0xd8] sm:$0xff]
      %v2532 = vld [vmem:[#allocation4 + $0xe0] sm:$0xff]
      %v2533 = vld [vmem:[#allocation4 + $0xf0] sm:$0xff]
      %v2534 = vld [vmem:[#allocation4 + $0xf8] sm:$0xff]
      %v2535 = vld [vmem:[#allocation4 + $0x108] sm:$0xff]
      %v2536 = vld [vmem:[#allocation4 + $0x110] sm:$0xff]
      %v2537 = vld [vmem:[#allocation4 + $0x120] sm:$0xff]
      %v2538 = vld [vmem:[#allocation4 + $0x128] sm:$0xff]
      %v2539 = vld [vmem:[#allocation4 + $0x138] sm:$0xff]
      %v2540 = vld [vmem:[#allocation4 + $0x140] sm:$0xff]
      %v2541 = vld [vmem:[#allocation4 + $0x150] sm:$0xff]
      %v2542 = vld [vmem:[#allocation4 + $0x158] sm:$0xff]
      %v2543 = vld [vmem:[#allocation4 + $0x168] sm:$0xff]
      %v2544 = vld [vmem:[#allocation4 + $0x170] sm:$0xff]
      %2545 = vst.msk [vmem:[#allocation5] sm:$0xff] %vm2402, %v2513
      %2546 = vst.msk [vmem:[#allocation5 + $0x8] sm:$0xff] %vm2402, %v2514
      %2547 = vst.msk [vmem:[#allocation5 + $0x10] sm:$0xff] %vm2402, %v2515
      %2548 = vst.msk [vmem:[#allocation5 + $0x18] sm:$0xff] %vm2402, %v2516
      %2549 = vst.msk [vmem:[#allocation5 + $0x20] sm:$0xff] %vm2402, %v2517
      %2550 = vst.msk [vmem:[#allocation5 + $0x28] sm:$0xff] %vm2402, %v2518
      %2551 = vst.msk [vmem:[#allocation5 + $0x30] sm:$0xff] %vm2402, %v2519
      %2552 = vst.msk [vmem:[#allocation5 + $0x38] sm:$0xff] %vm2402, %v2520
      %2553 = vst.msk [vmem:[#allocation5 + $0x40] sm:$0xff] %vm2402, %v2521
      %2554 = vst.msk [vmem:[#allocation5 + $0x48] sm:$0xff] %vm2402, %v2522
      %2555 = vst.msk [vmem:[#allocation5 + $0x50] sm:$0xff] %vm2402, %v2523
      %2556 = vst.msk [vmem:[#allocation5 + $0x58] sm:$0xff] %vm2402, %v2524
      %2557 = vst.msk [vmem:[#allocation5 + $0x60] sm:$0xff] %vm2402, %v2525
      %2558 = vst.msk [vmem:[#allocation5 + $0x68] sm:$0xff] %vm2402, %v2526
      %2559 = vst.msk [vmem:[#allocation5 + $0x70] sm:$0xff] %vm2402, %v2527
      %2560 = vst.msk [vmem:[#allocation5 + $0x78] sm:$0xff] %vm2402, %v2528
      %2561 = vst.msk [vmem:[#allocation5 + $0x80] sm:$0xff] %vm2402, %v2529
      %2562 = vst.msk [vmem:[#allocation5 + $0x88] sm:$0xff] %vm2402, %v2530
      %2563 = vst.msk [vmem:[#allocation5 + $0x90] sm:$0xff] %vm2402, %v2531
      %2564 = vst.msk [vmem:[#allocation5 + $0x98] sm:$0xff] %vm2402, %v2532
      %2565 = vst.msk [vmem:[#allocation5 + $0xa0] sm:$0xff] %vm2402, %v2533
      %2566 = vst.msk [vmem:[#allocation5 + $0xa8] sm:$0xff] %vm2402, %v2534
      %2567 = vst.msk [vmem:[#allocation5 + $0xb0] sm:$0xff] %vm2402, %v2535
      %2568 = vst.msk [vmem:[#allocation5 + $0xb8] sm:$0xff] %vm2402, %v2536
      %2569 = vst.msk [vmem:[#allocation5 + $0xc0] sm:$0xff] %vm2402, %v2537
      %2570 = vst.msk [vmem:[#allocation5 + $0xc8] sm:$0xff] %vm2402, %v2538
      %2571 = vst.msk [vmem:[#allocation5 + $0xd0] sm:$0xff] %vm2402, %v2539
      %2572 = vst.msk [vmem:[#allocation5 + $0xd8] sm:$0xff] %vm2402, %v2540
      %2573 = vst.msk [vmem:[#allocation5 + $0xe0] sm:$0xff] %vm2402, %v2541
      %2574 = vst.msk [vmem:[#allocation5 + $0xe8] sm:$0xff] %vm2402, %v2542
      %2575 = vst.msk [vmem:[#allocation5 + $0xf0] sm:$0xff] %vm2402, %v2543
      %2576 = vst.msk [vmem:[#allocation5 + $0xf8] sm:$0xff] %vm2402, %v2544
      %v2577 = vld [vmem:[#allocation4 + $0x1] sm:$0xff]
      %v2578 = vld [vmem:[#allocation4 + $0x9] sm:$0xff]
      %v2579 = vld [vmem:[#allocation4 + $0x19] sm:$0xff]
      %v2580 = vld [vmem:[#allocation4 + $0x21] sm:$0xff]
      %v2581 = vld [vmem:[#allocation4 + $0x31] sm:$0xff]
      %v2582 = vld [vmem:[#allocation4 + $0x39] sm:$0xff]
      %v2583 = vld [vmem:[#allocation4 + $0x49] sm:$0xff]
      %v2584 = vld [vmem:[#allocation4 + $0x51] sm:$0xff]
      %v2585 = vld [vmem:[#allocation4 + $0x61] sm:$0xff]
      %v2586 = vld [vmem:[#allocation4 + $0x69] sm:$0xff]
      %v2587 = vld [vmem:[#allocation4 + $0x79] sm:$0xff]
      %v2588 = vld [vmem:[#allocation4 + $0x81] sm:$0xff]
      %v2589 = vld [vmem:[#allocation4 + $0x91] sm:$0xff]
      %v2590 = vld [vmem:[#allocation4 + $0x99] sm:$0xff]
      %v2591 = vld [vmem:[#allocation4 + $0xa9] sm:$0xff]
      %v2592 = vld [vmem:[#allocation4 + $0xb1] sm:$0xff]
      %v2593 = vld [vmem:[#allocation4 + $0xc1] sm:$0xff]
      %v2594 = vld [vmem:[#allocation4 + $0xc9] sm:$0xff]
      %v2595 = vld [vmem:[#allocation4 + $0xd9] sm:$0xff]
      %v2596 = vld [vmem:[#allocation4 + $0xe1] sm:$0xff]
      %v2597 = vld [vmem:[#allocation4 + $0xf1] sm:$0xff]
      %v2598 = vld [vmem:[#allocation4 + $0xf9] sm:$0xff]
      %v2599 = vld [vmem:[#allocation4 + $0x109] sm:$0xff]
      %v2600 = vld [vmem:[#allocation4 + $0x111] sm:$0xff]
      %v2601 = vld [vmem:[#allocation4 + $0x121] sm:$0xff]
      %v2602 = vld [vmem:[#allocation4 + $0x129] sm:$0xff]
      %v2603 = vld [vmem:[#allocation4 + $0x139] sm:$0xff]
      %v2604 = vld [vmem:[#allocation4 + $0x141] sm:$0xff]
      %v2605 = vld [vmem:[#allocation4 + $0x151] sm:$0xff]
      %v2606 = vld [vmem:[#allocation4 + $0x159] sm:$0xff]
      %v2607 = vld [vmem:[#allocation4 + $0x169] sm:$0xff]
      %v2608 = vld [vmem:[#allocation4 + $0x171] sm:$0xff]
      %2641 = vrot.lane.b32.xlu0 %v2577, 4
      %v2642 = vpop.permute.xlu0 %2641
      %2643 = vrot.lane.b32.xlu0 %v2578, 4
      %v2644 = vpop.permute.xlu0 %2643
      %2645 = vrot.lane.b32.xlu0 %v2579, 4
      %v2646 = vpop.permute.xlu0 %2645
      %2647 = vrot.lane.b32.xlu0 %v2580, 4
      %v2648 = vpop.permute.xlu0 %2647
      %2649 = vrot.lane.b32.xlu0 %v2581, 4
      %v2650 = vpop.permute.xlu0 %2649
      %2651 = vrot.lane.b32.xlu0 %v2582, 4
      %v2652 = vpop.permute.xlu0 %2651
      %2653 = vrot.lane.b32.xlu0 %v2583, 4
      %v2654 = vpop.permute.xlu0 %2653
      %2655 = vrot.lane.b32.xlu0 %v2584, 4
      %v2656 = vpop.permute.xlu0 %2655
      %2657 = vrot.lane.b32.xlu0 %v2585, 4
      %v2658 = vpop.permute.xlu0 %2657
      %2659 = vrot.lane.b32.xlu0 %v2586, 4
      %v2660 = vpop.permute.xlu0 %2659
      %2661 = vrot.lane.b32.xlu0 %v2587, 4
      %v2662 = vpop.permute.xlu0 %2661
      %2663 = vrot.lane.b32.xlu0 %v2588, 4
      %v2664 = vpop.permute.xlu0 %2663
      %2665 = vrot.lane.b32.xlu0 %v2589, 4
      %v2666 = vpop.permute.xlu0 %2665
      %2667 = vrot.lane.b32.xlu0 %v2590, 4
      %v2668 = vpop.permute.xlu0 %2667
      %2669 = vrot.lane.b32.xlu0 %v2591, 4
      %v2670 = vpop.permute.xlu0 %2669
      %2671 = vrot.lane.b32.xlu0 %v2592, 4
      %v2672 = vpop.permute.xlu0 %2671
      %2673 = vrot.lane.b32.xlu0 %v2593, 4
      %v2674 = vpop.permute.xlu0 %2673
      %2675 = vrot.lane.b32.xlu0 %v2594, 4
      %v2676 = vpop.permute.xlu0 %2675
      %2677 = vrot.lane.b32.xlu0 %v2595, 4
      %v2678 = vpop.permute.xlu0 %2677
      %2679 = vrot.lane.b32.xlu0 %v2596, 4
      %v2680 = vpop.permute.xlu0 %2679
      %2681 = vrot.lane.b32.xlu0 %v2597, 4
      %v2682 = vpop.permute.xlu0 %2681
      %2683 = vrot.lane.b32.xlu0 %v2598, 4
      %v2684 = vpop.permute.xlu0 %2683
      %2685 = vrot.lane.b32.xlu0 %v2599, 4
      %v2686 = vpop.permute.xlu0 %2685
      %2687 = vrot.lane.b32.xlu0 %v2600, 4
      %v2688 = vpop.permute.xlu0 %2687
      %2689 = vrot.lane.b32.xlu0 %v2601, 4
      %v2690 = vpop.permute.xlu0 %2689
      %2691 = vrot.lane.b32.xlu0 %v2602, 4
      %v2692 = vpop.permute.xlu0 %2691
      %2693 = vrot.lane.b32.xlu0 %v2603, 4
      %v2694 = vpop.permute.xlu0 %2693
      %2695 = vrot.lane.b32.xlu0 %v2604, 4
      %v2696 = vpop.permute.xlu0 %2695
      %2697 = vrot.lane.b32.xlu0 %v2605, 4
      %v2698 = vpop.permute.xlu0 %2697
      %2699 = vrot.lane.b32.xlu0 %v2606, 4
      %v2700 = vpop.permute.xlu0 %2699
      %2701 = vrot.lane.b32.xlu0 %v2607, 4
      %v2702 = vpop.permute.xlu0 %2701
      %2703 = vrot.lane.b32.xlu0 %v2608, 4
      %v2704 = vpop.permute.xlu0 %2703
      %vm2737 = vcmask 64544
      %2738 = vst.msk [vmem:[#allocation5] sm:$0xff] %vm2737, %v2642
      %2739 = vst.msk [vmem:[#allocation5 + $0x8] sm:$0xff] %vm2737, %v2644
      %2740 = vst.msk [vmem:[#allocation5 + $0x10] sm:$0xff] %vm2737, %v2646
      %2741 = vst.msk [vmem:[#allocation5 + $0x18] sm:$0xff] %vm2737, %v2648
      %2742 = vst.msk [vmem:[#allocation5 + $0x20] sm:$0xff] %vm2737, %v2650
      %2743 = vst.msk [vmem:[#allocation5 + $0x28] sm:$0xff] %vm2737, %v2652
      %2744 = vst.msk [vmem:[#allocation5 + $0x30] sm:$0xff] %vm2737, %v2654
      %2745 = vst.msk [vmem:[#allocation5 + $0x38] sm:$0xff] %vm2737, %v2656
      %2746 = vst.msk [vmem:[#allocation5 + $0x40] sm:$0xff] %vm2737, %v2658
      %2747 = vst.msk [vmem:[#allocation5 + $0x48] sm:$0xff] %vm2737, %v2660
      %2748 = vst.msk [vmem:[#allocation5 + $0x50] sm:$0xff] %vm2737, %v2662
      %2749 = vst.msk [vmem:[#allocation5 + $0x58] sm:$0xff] %vm2737, %v2664
      %2750 = vst.msk [vmem:[#allocation5 + $0x60] sm:$0xff] %vm2737, %v2666
      %2751 = vst.msk [vmem:[#allocation5 + $0x68] sm:$0xff] %vm2737, %v2668
      %2752 = vst.msk [vmem:[#allocation5 + $0x70] sm:$0xff] %vm2737, %v2670
      %2753 = vst.msk [vmem:[#allocation5 + $0x78] sm:$0xff] %vm2737, %v2672
      %2754 = vst.msk [vmem:[#allocation5 + $0x80] sm:$0xff] %vm2737, %v2674
      %2755 = vst.msk [vmem:[#allocation5 + $0x88] sm:$0xff] %vm2737, %v2676
      %2756 = vst.msk [vmem:[#allocation5 + $0x90] sm:$0xff] %vm2737, %v2678
      %2757 = vst.msk [vmem:[#allocation5 + $0x98] sm:$0xff] %vm2737, %v2680
      %2758 = vst.msk [vmem:[#allocation5 + $0xa0] sm:$0xff] %vm2737, %v2682
      %2759 = vst.msk [vmem:[#allocation5 + $0xa8] sm:$0xff] %vm2737, %v2684
      %2760 = vst.msk [vmem:[#allocation5 + $0xb0] sm:$0xff] %vm2737, %v2686
      %2761 = vst.msk [vmem:[#allocation5 + $0xb8] sm:$0xff] %vm2737, %v2688
      %2762 = vst.msk [vmem:[#allocation5 + $0xc0] sm:$0xff] %vm2737, %v2690
      %2763 = vst.msk [vmem:[#allocation5 + $0xc8] sm:$0xff] %vm2737, %v2692
      %2764 = vst.msk [vmem:[#allocation5 + $0xd0] sm:$0xff] %vm2737, %v2694
      %2765 = vst.msk [vmem:[#allocation5 + $0xd8] sm:$0xff] %vm2737, %v2696
      %2766 = vst.msk [vmem:[#allocation5 + $0xe0] sm:$0xff] %vm2737, %v2698
      %2767 = vst.msk [vmem:[#allocation5 + $0xe8] sm:$0xff] %vm2737, %v2700
      %2768 = vst.msk [vmem:[#allocation5 + $0xf0] sm:$0xff] %vm2737, %v2702
      %2769 = vst.msk [vmem:[#allocation5 + $0xf8] sm:$0xff] %vm2737, %v2704
      %v2770 = vld [vmem:[#allocation4 + $0x2] sm:$0xff]
      %v2771 = vld [vmem:[#allocation4 + $0xa] sm:$0xff]
      %v2772 = vld [vmem:[#allocation4 + $0x1a] sm:$0xff]
      %v2773 = vld [vmem:[#allocation4 + $0x22] sm:$0xff]
      %v2774 = vld [vmem:[#allocation4 + $0x32] sm:$0xff]
      %v2775 = vld [vmem:[#allocation4 + $0x3a] sm:$0xff]
      %v2776 = vld [vmem:[#allocation4 + $0x4a] sm:$0xff]
      %v2777 = vld [vmem:[#allocation4 + $0x52] sm:$0xff]
      %v2778 = vld [vmem:[#allocation4 + $0x62] sm:$0xff]
      %v2779 = vld [vmem:[#allocation4 + $0x6a] sm:$0xff]
      %v2780 = vld [vmem:[#allocation4 + $0x7a] sm:$0xff]
      %v2781 = vld [vmem:[#allocation4 + $0x82] sm:$0xff]
      %v2782 = vld [vmem:[#allocation4 + $0x92] sm:$0xff]
      %v2783 = vld [vmem:[#allocation4 + $0x9a] sm:$0xff]
      %v2784 = vld [vmem:[#allocation4 + $0xaa] sm:$0xff]
      %v2785 = vld [vmem:[#allocation4 + $0xb2] sm:$0xff]
      %v2786 = vld [vmem:[#allocation4 + $0xc2] sm:$0xff]
      %v2787 = vld [vmem:[#allocation4 + $0xca] sm:$0xff]
      %v2788 = vld [vmem:[#allocation4 + $0xda] sm:$0xff]
      %v2789 = vld [vmem:[#allocation4 + $0xe2] sm:$0xff]
      %v2790 = vld [vmem:[#allocation4 + $0xf2] sm:$0xff]
      %v2791 = vld [vmem:[#allocation4 + $0xfa] sm:$0xff]
      %v2792 = vld [vmem:[#allocation4 + $0x10a] sm:$0xff]
      %v2793 = vld [vmem:[#allocation4 + $0x112] sm:$0xff]
      %v2794 = vld [vmem:[#allocation4 + $0x122] sm:$0xff]
      %v2795 = vld [vmem:[#allocation4 + $0x12a] sm:$0xff]
      %v2796 = vld [vmem:[#allocation4 + $0x13a] sm:$0xff]
      %v2797 = vld [vmem:[#allocation4 + $0x142] sm:$0xff]
      %v2798 = vld [vmem:[#allocation4 + $0x152] sm:$0xff]
      %v2799 = vld [vmem:[#allocation4 + $0x15a] sm:$0xff]
      %v2800 = vld [vmem:[#allocation4 + $0x16a] sm:$0xff]
      %v2801 = vld [vmem:[#allocation4 + $0x172] sm:$0xff]
      %2834 = vrot.lane.b32.xlu0 %v2770, 8
      %v2835 = vpop.permute.xlu0 %2834
      %2836 = vrot.lane.b32.xlu0 %v2771, 8
      %v2837 = vpop.permute.xlu0 %2836
      %2838 = vrot.lane.b32.xlu0 %v2772, 8
      %v2839 = vpop.permute.xlu0 %2838
      %2840 = vrot.lane.b32.xlu0 %v2773, 8
      %v2841 = vpop.permute.xlu0 %2840
      %2842 = vrot.lane.b32.xlu0 %v2774, 8
      %v2843 = vpop.permute.xlu0 %2842
      %2844 = vrot.lane.b32.xlu0 %v2775, 8
      %v2845 = vpop.permute.xlu0 %2844
      %2846 = vrot.lane.b32.xlu0 %v2776, 8
      %v2847 = vpop.permute.xlu0 %2846
      %2848 = vrot.lane.b32.xlu0 %v2777, 8
      %v2849 = vpop.permute.xlu0 %2848
      %2850 = vrot.lane.b32.xlu0 %v2778, 8
      %v2851 = vpop.permute.xlu0 %2850
      %2852 = vrot.lane.b32.xlu0 %v2779, 8
      %v2853 = vpop.permute.xlu0 %2852
      %2854 = vrot.lane.b32.xlu0 %v2780, 8
      %v2855 = vpop.permute.xlu0 %2854
      %2856 = vrot.lane.b32.xlu0 %v2781, 8
      %v2857 = vpop.permute.xlu0 %2856
      %2858 = vrot.lane.b32.xlu0 %v2782, 8
      %v2859 = vpop.permute.xlu0 %2858
      %2860 = vrot.lane.b32.xlu0 %v2783, 8
      %v2861 = vpop.permute.xlu0 %2860
      %2862 = vrot.lane.b32.xlu0 %v2784, 8
      %v2863 = vpop.permute.xlu0 %2862
      %2864 = vrot.lane.b32.xlu0 %v2785, 8
      %v2865 = vpop.permute.xlu0 %2864
      %2866 = vrot.lane.b32.xlu0 %v2786, 8
      %v2867 = vpop.permute.xlu0 %2866
      %2868 = vrot.lane.b32.xlu0 %v2787, 8
      %v2869 = vpop.permute.xlu0 %2868
      %2870 = vrot.lane.b32.xlu0 %v2788, 8
      %v2871 = vpop.permute.xlu0 %2870
      %2872 = vrot.lane.b32.xlu0 %v2789, 8
      %v2873 = vpop.permute.xlu0 %2872
      %2874 = vrot.lane.b32.xlu0 %v2790, 8
      %v2875 = vpop.permute.xlu0 %2874
      %2876 = vrot.lane.b32.xlu0 %v2791, 8
      %v2877 = vpop.permute.xlu0 %2876
      %2878 = vrot.lane.b32.xlu0 %v2792, 8
      %v2879 = vpop.permute.xlu0 %2878
      %2880 = vrot.lane.b32.xlu0 %v2793, 8
      %v2881 = vpop.permute.xlu0 %2880
      %2882 = vrot.lane.b32.xlu0 %v2794, 8
      %v2883 = vpop.permute.xlu0 %2882
      %2884 = vrot.lane.b32.xlu0 %v2795, 8
      %v2885 = vpop.permute.xlu0 %2884
      %2886 = vrot.lane.b32.xlu0 %v2796, 8
      %v2887 = vpop.permute.xlu0 %2886
      %2888 = vrot.lane.b32.xlu0 %v2797, 8
      %v2889 = vpop.permute.xlu0 %2888
      %2890 = vrot.lane.b32.xlu0 %v2798, 8
      %v2891 = vpop.permute.xlu0 %2890
      %2892 = vrot.lane.b32.xlu0 %v2799, 8
      %v2893 = vpop.permute.xlu0 %2892
      %2894 = vrot.lane.b32.xlu0 %v2800, 8
      %v2895 = vpop.permute.xlu0 %2894
      %2896 = vrot.lane.b32.xlu0 %v2801, 8
      %v2897 = vpop.permute.xlu0 %2896
      %vm2930 = vcmask 97344
      %2931 = vst.msk [vmem:[#allocation5] sm:$0xff] %vm2930, %v2835
      %2932 = vst.msk [vmem:[#allocation5 + $0x8] sm:$0xff] %vm2930, %v2837
      %2933 = vst.msk [vmem:[#allocation5 + $0x10] sm:$0xff] %vm2930, %v2839
      %2934 = vst.msk [vmem:[#allocation5 + $0x18] sm:$0xff] %vm2930, %v2841
      %2935 = vst.msk [vmem:[#allocation5 + $0x20] sm:$0xff] %vm2930, %v2843
      %2936 = vst.msk [vmem:[#allocation5 + $0x28] sm:$0xff] %vm2930, %v2845
      %2937 = vst.msk [vmem:[#allocation5 + $0x30] sm:$0xff] %vm2930, %v2847
      %2938 = vst.msk [vmem:[#allocation5 + $0x38] sm:$0xff] %vm2930, %v2849
      %2939 = vst.msk [vmem:[#allocation5 + $0x40] sm:$0xff] %vm2930, %v2851
      %2940 = vst.msk [vmem:[#allocation5 + $0x48] sm:$0xff] %vm2930, %v2853
      %2941 = vst.msk [vmem:[#allocation5 + $0x50] sm:$0xff] %vm2930, %v2855
      %2942 = vst.msk [vmem:[#allocation5 + $0x58] sm:$0xff] %vm2930, %v2857
      %2943 = vst.msk [vmem:[#allocation5 + $0x60] sm:$0xff] %vm2930, %v2859
      %2944 = vst.msk [vmem:[#allocation5 + $0x68] sm:$0xff] %vm2930, %v2861
      %2945 = vst.msk [vmem:[#allocation5 + $0x70] sm:$0xff] %vm2930, %v2863
      %2946 = vst.msk [vmem:[#allocation5 + $0x78] sm:$0xff] %vm2930, %v2865
      %2947 = vst.msk [vmem:[#allocation5 + $0x80] sm:$0xff] %vm2930, %v2867
      %2948 = vst.msk [vmem:[#allocation5 + $0x88] sm:$0xff] %vm2930, %v2869
      %2949 = vst.msk [vmem:[#allocation5 + $0x90] sm:$0xff] %vm2930, %v2871
      %2950 = vst.msk [vmem:[#allocation5 + $0x98] sm:$0xff] %vm2930, %v2873
      %2951 = vst.msk [vmem:[#allocation5 + $0xa0] sm:$0xff] %vm2930, %v2875
      %2952 = vst.msk [vmem:[#allocation5 + $0xa8] sm:$0xff] %vm2930, %v2877
      %2953 = vst.msk [vmem:[#allocation5 + $0xb0] sm:$0xff] %vm2930, %v2879
      %2954 = vst.msk [vmem:[#allocation5 + $0xb8] sm:$0xff] %vm2930, %v2881
      %2955 = vst.msk [vmem:[#allocation5 + $0xc0] sm:$0xff] %vm2930, %v2883
      %2956 = vst.msk [vmem:[#allocation5 + $0xc8] sm:$0xff] %vm2930, %v2885
      %2957 = vst.msk [vmem:[#allocation5 + $0xd0] sm:$0xff] %vm2930, %v2887
      %2958 = vst.msk [vmem:[#allocation5 + $0xd8] sm:$0xff] %vm2930, %v2889
      %2959 = vst.msk [vmem:[#allocation5 + $0xe0] sm:$0xff] %vm2930, %v2891
      %2960 = vst.msk [vmem:[#allocation5 + $0xe8] sm:$0xff] %vm2930, %v2893
      %2961 = vst.msk [vmem:[#allocation5 + $0xf0] sm:$0xff] %vm2930, %v2895
      %2962 = vst.msk [vmem:[#allocation5 + $0xf8] sm:$0xff] %vm2930, %v2897
      %v2963 = vld [vmem:[%s2401] sm:$0xff]
      %v2964 = vld [vmem:[%s2401 + $0x8] sm:$0xff]
      %v2965 = vld [vmem:[%s2401 + $0x18] sm:$0xff]
      %v2966 = vld [vmem:[%s2401 + $0x20] sm:$0xff]
      %v2967 = vld [vmem:[%s2401 + $0x30] sm:$0xff]
      %v2968 = vld [vmem:[%s2401 + $0x38] sm:$0xff]
      %v2969 = vld [vmem:[%s2401 + $0x48] sm:$0xff]
      %v2970 = vld [vmem:[%s2401 + $0x50] sm:$0xff]
      %v2971 = vld [vmem:[%s2401 + $0x60] sm:$0xff]
      %v2972 = vld [vmem:[%s2401 + $0x68] sm:$0xff]
      %v2973 = vld [vmem:[%s2401 + $0x78] sm:$0xff]
      %v2974 = vld [vmem:[%s2401 + $0x80] sm:$0xff]
      %v2975 = vld [vmem:[%s2401 + $0x90] sm:$0xff]
      %v2976 = vld [vmem:[%s2401 + $0x98] sm:$0xff]
      %v2977 = vld [vmem:[%s2401 + $0xa8] sm:$0xff]
      %v2978 = vld [vmem:[%s2401 + $0xb0] sm:$0xff]
      %v2979 = vld [vmem:[%s2401 + $0xc0] sm:$0xff]
      %v2980 = vld [vmem:[%s2401 + $0xc8] sm:$0xff]
      %v2981 = vld [vmem:[%s2401 + $0xd8] sm:$0xff]
      %v2982 = vld [vmem:[%s2401 + $0xe0] sm:$0xff]
      %v2983 = vld [vmem:[%s2401 + $0xf0] sm:$0xff]
      %v2984 = vld [vmem:[%s2401 + $0xf8] sm:$0xff]
      %v2985 = vld [vmem:[%s2401 + $0x108] sm:$0xff]
      %v2986 = vld [vmem:[%s2401 + $0x110] sm:$0xff]
      %v2987 = vld [vmem:[%s2401 + $0x120] sm:$0xff]
      %v2988 = vld [vmem:[%s2401 + $0x128] sm:$0xff]
      %v2989 = vld [vmem:[%s2401 + $0x138] sm:$0xff]
      %v2990 = vld [vmem:[%s2401 + $0x140] sm:$0xff]
      %v2991 = vld [vmem:[%s2401 + $0x150] sm:$0xff]
      %v2992 = vld [vmem:[%s2401 + $0x158] sm:$0xff]
      %v2993 = vld [vmem:[%s2401 + $0x168] sm:$0xff]
      %v2994 = vld [vmem:[%s2401 + $0x170] sm:$0xff]
      %3027 = vrot.lane.b32.xlu0 %v2963, 12
      %v3028 = vpop.permute.xlu0 %3027
      %3029 = vrot.lane.b32.xlu0 %v2964, 12
      %v3030 = vpop.permute.xlu0 %3029
      %3031 = vrot.lane.b32.xlu0 %v2965, 12
      %v3032 = vpop.permute.xlu0 %3031
      %3033 = vrot.lane.b32.xlu0 %v2966, 12
      %v3034 = vpop.permute.xlu0 %3033
      %3035 = vrot.lane.b32.xlu0 %v2967, 12
      %v3036 = vpop.permute.xlu0 %3035
      %3037 = vrot.lane.b32.xlu0 %v2968, 12
      %v3038 = vpop.permute.xlu0 %3037
      %3039 = vrot.lane.b32.xlu0 %v2969, 12
      %v3040 = vpop.permute.xlu0 %3039
      %3041 = vrot.lane.b32.xlu0 %v2970, 12
      %v3042 = vpop.permute.xlu0 %3041
      %3043 = vrot.lane.b32.xlu0 %v2971, 12
      %v3044 = vpop.permute.xlu0 %3043
      %3045 = vrot.lane.b32.xlu0 %v2972, 12
      %v3046 = vpop.permute.xlu0 %3045
      %3047 = vrot.lane.b32.xlu0 %v2973, 12
      %v3048 = vpop.permute.xlu0 %3047
      %3049 = vrot.lane.b32.xlu0 %v2974, 12
      %v3050 = vpop.permute.xlu0 %3049
      %3051 = vrot.lane.b32.xlu0 %v2975, 12
      %v3052 = vpop.permute.xlu0 %3051
      %3053 = vrot.lane.b32.xlu0 %v2976, 12
      %v3054 = vpop.permute.xlu0 %3053
      %3055 = vrot.lane.b32.xlu0 %v2977, 12
      %v3056 = vpop.permute.xlu0 %3055
      %3057 = vrot.lane.b32.xlu0 %v2978, 12
      %v3058 = vpop.permute.xlu0 %3057
      %3059 = vrot.lane.b32.xlu0 %v2979, 12
      %v3060 = vpop.permute.xlu0 %3059
      %3061 = vrot.lane.b32.xlu0 %v2980, 12
      %v3062 = vpop.permute.xlu0 %3061
      %3063 = vrot.lane.b32.xlu0 %v2981, 12
      %v3064 = vpop.permute.xlu0 %3063
      %3065 = vrot.lane.b32.xlu0 %v2982, 12
      %v3066 = vpop.permute.xlu0 %3065
      %3067 = vrot.lane.b32.xlu0 %v2983, 12
      %v3068 = vpop.permute.xlu0 %3067
      %3069 = vrot.lane.b32.xlu0 %v2984, 12
      %v3070 = vpop.permute.xlu0 %3069
      %3071 = vrot.lane.b32.xlu0 %v2985, 12
      %v3072 = vpop.permute.xlu0 %3071
      %3073 = vrot.lane.b32.xlu0 %v2986, 12
      %v3074 = vpop.permute.xlu0 %3073
      %3075 = vrot.lane.b32.xlu0 %v2987, 12
      %v3076 = vpop.permute.xlu0 %3075
      %3077 = vrot.lane.b32.xlu0 %v2988, 12
      %v3078 = vpop.permute.xlu0 %3077
      %3079 = vrot.lane.b32.xlu0 %v2989, 12
      %v3080 = vpop.permute.xlu0 %3079
      %3081 = vrot.lane.b32.xlu0 %v2990, 12
      %v3082 = vpop.permute.xlu0 %3081
      %3083 = vrot.lane.b32.xlu0 %v2991, 12
      %v3084 = vpop.permute.xlu0 %3083
      %3085 = vrot.lane.b32.xlu0 %v2992, 12
      %v3086 = vpop.permute.xlu0 %3085
      %3087 = vrot.lane.b32.xlu0 %v2993, 12
      %v3088 = vpop.permute.xlu0 %3087
      %3089 = vrot.lane.b32.xlu0 %v2994, 12
      %v3090 = vpop.permute.xlu0 %3089
      %vm3123 = vcmask 130144
      %3124 = vst.msk [vmem:[#allocation5] sm:$0xff] %vm3123, %v3028
      %3125 = vst.msk [vmem:[#allocation5 + $0x8] sm:$0xff] %vm3123, %v3030
      %3126 = vst.msk [vmem:[#allocation5 + $0x10] sm:$0xff] %vm3123, %v3032
      %3127 = vst.msk [vmem:[#allocation5 + $0x18] sm:$0xff] %vm3123, %v3034
      %3128 = vst.msk [vmem:[#allocation5 + $0x20] sm:$0xff] %vm3123, %v3036
      %3129 = vst.msk [vmem:[#allocation5 + $0x28] sm:$0xff] %vm3123, %v3038
      %3130 = vst.msk [vmem:[#allocation5 + $0x30] sm:$0xff] %vm3123, %v3040
      %3131 = vst.msk [vmem:[#allocation5 + $0x38] sm:$0xff] %vm3123, %v3042
      %3132 = vst.msk [vmem:[#allocation5 + $0x40] sm:$0xff] %vm3123, %v3044
      %3133 = vst.msk [vmem:[#allocation5 + $0x48] sm:$0xff] %vm3123, %v3046
      %3134 = vst.msk [vmem:[#allocation5 + $0x50] sm:$0xff] %vm3123, %v3048
      %3135 = vst.msk [vmem:[#allocation5 + $0x58] sm:$0xff] %vm3123, %v3050
      %3136 = vst.msk [vmem:[#allocation5 + $0x60] sm:$0xff] %vm3123, %v3052
      %3137 = vst.msk [vmem:[#allocation5 + $0x68] sm:$0xff] %vm3123, %v3054
      %3138 = vst.msk [vmem:[#allocation5 + $0x70] sm:$0xff] %vm3123, %v3056
      %3139 = vst.msk [vmem:[#allocation5 + $0x78] sm:$0xff] %vm3123, %v3058
      %3140 = vst.msk [vmem:[#allocation5 + $0x80] sm:$0xff] %vm3123, %v3060
      %3141 = vst.msk [vmem:[#allocation5 + $0x88] sm:$0xff] %vm3123, %v3062
      %3142 = vst.msk [vmem:[#allocation5 + $0x90] sm:$0xff] %vm3123, %v3064
      %3143 = vst.msk [vmem:[#allocation5 + $0x98] sm:$0xff] %vm3123, %v3066
      %3144 = vst.msk [vmem:[#allocation5 + $0xa0] sm:$0xff] %vm3123, %v3068
      %3145 = vst.msk [vmem:[#allocation5 + $0xa8] sm:$0xff] %vm3123, %v3070
      %3146 = vst.msk [vmem:[#allocation5 + $0xb0] sm:$0xff] %vm3123, %v3072
      %3147 = vst.msk [vmem:[#allocation5 + $0xb8] sm:$0xff] %vm3123, %v3074
      %3148 = vst.msk [vmem:[#allocation5 + $0xc0] sm:$0xff] %vm3123, %v3076
      %3149 = vst.msk [vmem:[#allocation5 + $0xc8] sm:$0xff] %vm3123, %v3078
      %3150 = vst.msk [vmem:[#allocation5 + $0xd0] sm:$0xff] %vm3123, %v3080
      %3151 = vst.msk [vmem:[#allocation5 + $0xd8] sm:$0xff] %vm3123, %v3082
      %3152 = vst.msk [vmem:[#allocation5 + $0xe0] sm:$0xff] %vm3123, %v3084
      %3153 = vst.msk [vmem:[#allocation5 + $0xe8] sm:$0xff] %vm3123, %v3086
      %3154 = vst.msk [vmem:[#allocation5 + $0xf0] sm:$0xff] %vm3123, %v3088
      %3155 = vst.msk [vmem:[#allocation5 + $0xf8] sm:$0xff] %vm3123, %v3090
      %v3156 = vld [vmem:[%s2401 + $0x1] sm:$0xff]
      %v3157 = vld [vmem:[%s2401 + $0x9] sm:$0xff]
      %v3158 = vld [vmem:[%s2401 + $0x19] sm:$0xff]
      %v3159 = vld [vmem:[%s2401 + $0x21] sm:$0xff]
      %v3160 = vld [vmem:[%s2401 + $0x31] sm:$0xff]
      %v3161 = vld [vmem:[%s2401 + $0x39] sm:$0xff]
      %v3162 = vld [vmem:[%s2401 + $0x49] sm:$0xff]
      %v3163 = vld [vmem:[%s2401 + $0x51] sm:$0xff]
      %v3164 = vld [vmem:[%s2401 + $0x61] sm:$0xff]
      %v3165 = vld [vmem:[%s2401 + $0x69] sm:$0xff]
      %v3166 = vld [vmem:[%s2401 + $0x79] sm:$0xff]
      %v3167 = vld [vmem:[%s2401 + $0x81] sm:$0xff]
      %v3168 = vld [vmem:[%s2401 + $0x91] sm:$0xff]
      %v3169 = vld [vmem:[%s2401 + $0x99] sm:$0xff]
      %v3170 = vld [vmem:[%s2401 + $0xa9] sm:$0xff]
      %v3171 = vld [vmem:[%s2401 + $0xb1] sm:$0xff]
      %v3172 = vld [vmem:[%s2401 + $0xc1] sm:$0xff]
      %v3173 = vld [vmem:[%s2401 + $0xc9] sm:$0xff]
      %v3174 = vld [vmem:[%s2401 + $0xd9] sm:$0xff]
      %v3175 = vld [vmem:[%s2401 + $0xe1] sm:$0xff]
      %v3176 = vld [vmem:[%s2401 + $0xf1] sm:$0xff]
      %v3177 = vld [vmem:[%s2401 + $0xf9] sm:$0xff]
      %v3178 = vld [vmem:[%s2401 + $0x109] sm:$0xff]
      %v3179 = vld [vmem:[%s2401 + $0x111] sm:$0xff]
      %v3180 = vld [vmem:[%s2401 + $0x121] sm:$0xff]
      %v3181 = vld [vmem:[%s2401 + $0x129] sm:$0xff]
      %v3182 = vld [vmem:[%s2401 + $0x139] sm:$0xff]
      %v3183 = vld [vmem:[%s2401 + $0x141] sm:$0xff]
      %v3184 = vld [vmem:[%s2401 + $0x151] sm:$0xff]
      %v3185 = vld [vmem:[%s2401 + $0x159] sm:$0xff]
      %v3186 = vld [vmem:[%s2401 + $0x169] sm:$0xff]
      %v3187 = vld [vmem:[%s2401 + $0x171] sm:$0xff]
      %3220 = vrot.lane.b32.xlu0 %v3156, 16
      %v3221 = vpop.permute.xlu0 %3220
      %3222 = vrot.lane.b32.xlu0 %v3157, 16
      %v3223 = vpop.permute.xlu0 %3222
      %3224 = vrot.lane.b32.xlu0 %v3158, 16
      %v3225 = vpop.permute.xlu0 %3224
      %3226 = vrot.lane.b32.xlu0 %v3159, 16
      %v3227 = vpop.permute.xlu0 %3226
      %3228 = vrot.lane.b32.xlu0 %v3160, 16
      %v3229 = vpop.permute.xlu0 %3228
      %3230 = vrot.lane.b32.xlu0 %v3161, 16
      %v3231 = vpop.permute.xlu0 %3230
      %3232 = vrot.lane.b32.xlu0 %v3162, 16
      %v3233 = vpop.permute.xlu0 %3232
      %3234 = vrot.lane.b32.xlu0 %v3163, 16
      %v3235 = vpop.permute.xlu0 %3234
      %3236 = vrot.lane.b32.xlu0 %v3164, 16
      %v3237 = vpop.permute.xlu0 %3236
      %3238 = vrot.lane.b32.xlu0 %v3165, 16
      %v3239 = vpop.permute.xlu0 %3238
      %3240 = vrot.lane.b32.xlu0 %v3166, 16
      %v3241 = vpop.permute.xlu0 %3240
      %3242 = vrot.lane.b32.xlu0 %v3167, 16
      %v3243 = vpop.permute.xlu0 %3242
      %3244 = vrot.lane.b32.xlu0 %v3168, 16
      %v3245 = vpop.permute.xlu0 %3244
      %3246 = vrot.lane.b32.xlu0 %v3169, 16
      %v3247 = vpop.permute.xlu0 %3246
      %3248 = vrot.lane.b32.xlu0 %v3170, 16
      %v3249 = vpop.permute.xlu0 %3248
      %3250 = vrot.lane.b32.xlu0 %v3171, 16
      %v3251 = vpop.permute.xlu0 %3250
      %3252 = vrot.lane.b32.xlu0 %v3172, 16
      %v3253 = vpop.permute.xlu0 %3252
      %3254 = vrot.lane.b32.xlu0 %v3173, 16
      %v3255 = vpop.permute.xlu0 %3254
      %3256 = vrot.lane.b32.xlu0 %v3174, 16
      %v3257 = vpop.permute.xlu0 %3256
      %3258 = vrot.lane.b32.xlu0 %v3175, 16
      %v3259 = vpop.permute.xlu0 %3258
      %3260 = vrot.lane.b32.xlu0 %v3176, 16
      %v3261 = vpop.permute.xlu0 %3260
      %3262 = vrot.lane.b32.xlu0 %v3177, 16
      %v3263 = vpop.permute.xlu0 %3262
      %3264 = vrot.lane.b32.xlu0 %v3178, 16
      %v3265 = vpop.permute.xlu0 %3264
      %3266 = vrot.lane.b32.xlu0 %v3179, 16
      %v3267 = vpop.permute.xlu0 %3266
      %3268 = vrot.lane.b32.xlu0 %v3180, 16
      %v3269 = vpop.permute.xlu0 %3268
      %3270 = vrot.lane.b32.xlu0 %v3181, 16
      %v3271 = vpop.permute.xlu0 %3270
      %3272 = vrot.lane.b32.xlu0 %v3182, 16
      %v3273 = vpop.permute.xlu0 %3272
      %3274 = vrot.lane.b32.xlu0 %v3183, 16
      %v3275 = vpop.permute.xlu0 %3274
      %3276 = vrot.lane.b32.xlu0 %v3184, 16
      %v3277 = vpop.permute.xlu0 %3276
      %3278 = vrot.lane.b32.xlu0 %v3185, 16
      %v3279 = vpop.permute.xlu0 %3278
      %3280 = vrot.lane.b32.xlu0 %v3186, 16
      %v3281 = vpop.permute.xlu0 %3280
      %3282 = vrot.lane.b32.xlu0 %v3187, 16
      %v3283 = vpop.permute.xlu0 %3282
      %vm3316 = vcmask 162944
      %3317 = vst.msk [vmem:[#allocation5] sm:$0xff] %vm3316, %v3221
      %3318 = vst.msk [vmem:[#allocation5 + $0x8] sm:$0xff] %vm3316, %v3223
      %3319 = vst.msk [vmem:[#allocation5 + $0x10] sm:$0xff] %vm3316, %v3225
      %3320 = vst.msk [vmem:[#allocation5 + $0x18] sm:$0xff] %vm3316, %v3227
      %3321 = vst.msk [vmem:[#allocation5 + $0x20] sm:$0xff] %vm3316, %v3229
      %3322 = vst.msk [vmem:[#allocation5 + $0x28] sm:$0xff] %vm3316, %v3231
      %3323 = vst.msk [vmem:[#allocation5 + $0x30] sm:$0xff] %vm3316, %v3233
      %3324 = vst.msk [vmem:[#allocation5 + $0x38] sm:$0xff] %vm3316, %v3235
      %3325 = vst.msk [vmem:[#allocation5 + $0x40] sm:$0xff] %vm3316, %v3237
      %3326 = vst.msk [vmem:[#allocation5 + $0x48] sm:$0xff] %vm3316, %v3239
      %3327 = vst.msk [vmem:[#allocation5 + $0x50] sm:$0xff] %vm3316, %v3241
      %3328 = vst.msk [vmem:[#allocation5 + $0x58] sm:$0xff] %vm3316, %v3243
      %3329 = vst.msk [vmem:[#allocation5 + $0x60] sm:$0xff] %vm3316, %v3245
      %3330 = vst.msk [vmem:[#allocation5 + $0x68] sm:$0xff] %vm3316, %v3247
      %3331 = vst.msk [vmem:[#allocation5 + $0x70] sm:$0xff] %vm3316, %v3249
      %3332 = vst.msk [vmem:[#allocation5 + $0x78] sm:$0xff] %vm3316, %v3251
      %3333 = vst.msk [vmem:[#allocation5 + $0x80] sm:$0xff] %vm3316, %v3253
      %3334 = vst.msk [vmem:[#allocation5 + $0x88] sm:$0xff] %vm3316, %v3255
      %3335 = vst.msk [vmem:[#allocation5 + $0x90] sm:$0xff] %vm3316, %v3257
      %3336 = vst.msk [vmem:[#allocation5 + $0x98] sm:$0xff] %vm3316, %v3259
      %3337 = vst.msk [vmem:[#allocation5 + $0xa0] sm:$0xff] %vm3316, %v3261
      %3338 = vst.msk [vmem:[#allocation5 + $0xa8] sm:$0xff] %vm3316, %v3263
      %3339 = vst.msk [vmem:[#allocation5 + $0xb0] sm:$0xff] %vm3316, %v3265
      %3340 = vst.msk [vmem:[#allocation5 + $0xb8] sm:$0xff] %vm3316, %v3267
      %3341 = vst.msk [vmem:[#allocation5 + $0xc0] sm:$0xff] %vm3316, %v3269
      %3342 = vst.msk [vmem:[#allocation5 + $0xc8] sm:$0xff] %vm3316, %v3271
      %3343 = vst.msk [vmem:[#allocation5 + $0xd0] sm:$0xff] %vm3316, %v3273
      %3344 = vst.msk [vmem:[#allocation5 + $0xd8] sm:$0xff] %vm3316, %v3275
      %3345 = vst.msk [vmem:[#allocation5 + $0xe0] sm:$0xff] %vm3316, %v3277
      %3346 = vst.msk [vmem:[#allocation5 + $0xe8] sm:$0xff] %vm3316, %v3279
      %3347 = vst.msk [vmem:[#allocation5 + $0xf0] sm:$0xff] %vm3316, %v3281
      %3348 = vst.msk [vmem:[#allocation5 + $0xf8] sm:$0xff] %vm3316, %v3283
      %v3349 = vld [vmem:[%s2401 + $0x2] sm:$0xff]
      %v3350 = vld [vmem:[%s2401 + $0xa] sm:$0xff]
      %v3351 = vld [vmem:[%s2401 + $0x1a] sm:$0xff]
      %v3352 = vld [vmem:[%s2401 + $0x22] sm:$0xff]
      %v3353 = vld [vmem:[%s2401 + $0x32] sm:$0xff]
      %v3354 = vld [vmem:[%s2401 + $0x3a] sm:$0xff]
      %v3355 = vld [vmem:[%s2401 + $0x4a] sm:$0xff]
      %v3356 = vld [vmem:[%s2401 + $0x52] sm:$0xff]
      %v3357 = vld [vmem:[%s2401 + $0x62] sm:$0xff]
      %v3358 = vld [vmem:[%s2401 + $0x6a] sm:$0xff]
      %v3359 = vld [vmem:[%s2401 + $0x7a] sm:$0xff]
      %v3360 = vld [vmem:[%s2401 + $0x82] sm:$0xff]
      %v3361 = vld [vmem:[%s2401 + $0x92] sm:$0xff]
      %v3362 = vld [vmem:[%s2401 + $0x9a] sm:$0xff]
      %v3363 = vld [vmem:[%s2401 + $0xaa] sm:$0xff]
      %v3364 = vld [vmem:[%s2401 + $0xb2] sm:$0xff]
      %v3365 = vld [vmem:[%s2401 + $0xc2] sm:$0xff]
      %v3366 = vld [vmem:[%s2401 + $0xca] sm:$0xff]
      %v3367 = vld [vmem:[%s2401 + $0xda] sm:$0xff]
      %v3368 = vld [vmem:[%s2401 + $0xe2] sm:$0xff]
      %v3369 = vld [vmem:[%s2401 + $0xf2] sm:$0xff]
      %v3370 = vld [vmem:[%s2401 + $0xfa] sm:$0xff]
      %v3371 = vld [vmem:[%s2401 + $0x10a] sm:$0xff]
      %v3372 = vld [vmem:[%s2401 + $0x112] sm:$0xff]
      %v3373 = vld [vmem:[%s2401 + $0x122] sm:$0xff]
      %v3374 = vld [vmem:[%s2401 + $0x12a] sm:$0xff]
      %v3375 = vld [vmem:[%s2401 + $0x13a] sm:$0xff]
      %v3376 = vld [vmem:[%s2401 + $0x142] sm:$0xff]
      %v3377 = vld [vmem:[%s2401 + $0x152] sm:$0xff]
      %v3378 = vld [vmem:[%s2401 + $0x15a] sm:$0xff]
      %v3379 = vld [vmem:[%s2401 + $0x16a] sm:$0xff]
      %v3380 = vld [vmem:[%s2401 + $0x172] sm:$0xff]
      %3413 = vrot.lane.b32.xlu0 %v3349, 20
      %v3414 = vpop.permute.xlu0 %3413
      %3415 = vrot.lane.b32.xlu0 %v3350, 20
      %v3416 = vpop.permute.xlu0 %3415
      %3417 = vrot.lane.b32.xlu0 %v3351, 20
      %v3418 = vpop.permute.xlu0 %3417
      %3419 = vrot.lane.b32.xlu0 %v3352, 20
      %v3420 = vpop.permute.xlu0 %3419
      %3421 = vrot.lane.b32.xlu0 %v3353, 20
      %v3422 = vpop.permute.xlu0 %3421
      %3423 = vrot.lane.b32.xlu0 %v3354, 20
      %v3424 = vpop.permute.xlu0 %3423
      %3425 = vrot.lane.b32.xlu0 %v3355, 20
      %v3426 = vpop.permute.xlu0 %3425
      %3427 = vrot.lane.b32.xlu0 %v3356, 20
      %v3428 = vpop.permute.xlu0 %3427
      %3429 = vrot.lane.b32.xlu0 %v3357, 20
      %v3430 = vpop.permute.xlu0 %3429
      %3431 = vrot.lane.b32.xlu0 %v3358, 20
      %v3432 = vpop.permute.xlu0 %3431
      %3433 = vrot.lane.b32.xlu0 %v3359, 20
      %v3434 = vpop.permute.xlu0 %3433
      %3435 = vrot.lane.b32.xlu0 %v3360, 20
      %v3436 = vpop.permute.xlu0 %3435
      %3437 = vrot.lane.b32.xlu0 %v3361, 20
      %v3438 = vpop.permute.xlu0 %3437
      %3439 = vrot.lane.b32.xlu0 %v3362, 20
      %v3440 = vpop.permute.xlu0 %3439
      %3441 = vrot.lane.b32.xlu0 %v3363, 20
      %v3442 = vpop.permute.xlu0 %3441
      %3443 = vrot.lane.b32.xlu0 %v3364, 20
      %v3444 = vpop.permute.xlu0 %3443
      %3445 = vrot.lane.b32.xlu0 %v3365, 20
      %v3446 = vpop.permute.xlu0 %3445
      %3447 = vrot.lane.b32.xlu0 %v3366, 20
      %v3448 = vpop.permute.xlu0 %3447
      %3449 = vrot.lane.b32.xlu0 %v3367, 20
      %v3450 = vpop.permute.xlu0 %3449
      %3451 = vrot.lane.b32.xlu0 %v3368, 20
      %v3452 = vpop.permute.xlu0 %3451
      %3453 = vrot.lane.b32.xlu0 %v3369, 20
      %v3454 = vpop.permute.xlu0 %3453
      %3455 = vrot.lane.b32.xlu0 %v3370, 20
      %v3456 = vpop.permute.xlu0 %3455
      %3457 = vrot.lane.b32.xlu0 %v3371, 20
      %v3458 = vpop.permute.xlu0 %3457
      %3459 = vrot.lane.b32.xlu0 %v3372, 20
      %v3460 = vpop.permute.xlu0 %3459
      %3461 = vrot.lane.b32.xlu0 %v3373, 20
      %v3462 = vpop.permute.xlu0 %3461
      %3463 = vrot.lane.b32.xlu0 %v3374, 20
      %v3464 = vpop.permute.xlu0 %3463
      %3465 = vrot.lane.b32.xlu0 %v3375, 20
      %v3466 = vpop.permute.xlu0 %3465
      %3467 = vrot.lane.b32.xlu0 %v3376, 20
      %v3468 = vpop.permute.xlu0 %3467
      %3469 = vrot.lane.b32.xlu0 %v3377, 20
      %v3470 = vpop.permute.xlu0 %3469
      %3471 = vrot.lane.b32.xlu0 %v3378, 20
      %v3472 = vpop.permute.xlu0 %3471
      %3473 = vrot.lane.b32.xlu0 %v3379, 20
      %v3474 = vpop.permute.xlu0 %3473
      %3475 = vrot.lane.b32.xlu0 %v3380, 20
      %v3476 = vpop.permute.xlu0 %3475
      %vm3509 = vcmask 195744
      %3510 = vst.msk [vmem:[#allocation5] sm:$0xff] %vm3509, %v3414
      %3511 = vst.msk [vmem:[#allocation5 + $0x8] sm:$0xff] %vm3509, %v3416
      %3512 = vst.msk [vmem:[#allocation5 + $0x10] sm:$0xff] %vm3509, %v3418
      %3513 = vst.msk [vmem:[#allocation5 + $0x18] sm:$0xff] %vm3509, %v3420
      %3514 = vst.msk [vmem:[#allocation5 + $0x20] sm:$0xff] %vm3509, %v3422
      %3515 = vst.msk [vmem:[#allocation5 + $0x28] sm:$0xff] %vm3509, %v3424
      %3516 = vst.msk [vmem:[#allocation5 + $0x30] sm:$0xff] %vm3509, %v3426
      %3517 = vst.msk [vmem:[#allocation5 + $0x38] sm:$0xff] %vm3509, %v3428
      %3518 = vst.msk [vmem:[#allocation5 + $0x40] sm:$0xff] %vm3509, %v3430
      %3519 = vst.msk [vmem:[#allocation5 + $0x48] sm:$0xff] %vm3509, %v3432
      %3520 = vst.msk [vmem:[#allocation5 + $0x50] sm:$0xff] %vm3509, %v3434
      %3521 = vst.msk [vmem:[#allocation5 + $0x58] sm:$0xff] %vm3509, %v3436
      %3522 = vst.msk [vmem:[#allocation5 + $0x60] sm:$0xff] %vm3509, %v3438
      %3523 = vst.msk [vmem:[#allocation5 + $0x68] sm:$0xff] %vm3509, %v3440
      %3524 = vst.msk [vmem:[#allocation5 + $0x70] sm:$0xff] %vm3509, %v3442
      %3525 = vst.msk [vmem:[#allocation5 + $0x78] sm:$0xff] %vm3509, %v3444
      %3526 = vst.msk [vmem:[#allocation5 + $0x80] sm:$0xff] %vm3509, %v3446
      %3527 = vst.msk [vmem:[#allocation5 + $0x88] sm:$0xff] %vm3509, %v3448
      %3528 = vst.msk [vmem:[#allocation5 + $0x90] sm:$0xff] %vm3509, %v3450
      %3529 = vst.msk [vmem:[#allocation5 + $0x98] sm:$0xff] %vm3509, %v3452
      %3530 = vst.msk [vmem:[#allocation5 + $0xa0] sm:$0xff] %vm3509, %v3454
      %3531 = vst.msk [vmem:[#allocation5 + $0xa8] sm:$0xff] %vm3509, %v3456
      %3532 = vst.msk [vmem:[#allocation5 + $0xb0] sm:$0xff] %vm3509, %v3458
      %3533 = vst.msk [vmem:[#allocation5 + $0xb8] sm:$0xff] %vm3509, %v3460
      %3534 = vst.msk [vmem:[#allocation5 + $0xc0] sm:$0xff] %vm3509, %v3462
      %3535 = vst.msk [vmem:[#allocation5 + $0xc8] sm:$0xff] %vm3509, %v3464
      %3536 = vst.msk [vmem:[#allocation5 + $0xd0] sm:$0xff] %vm3509, %v3466
      %3537 = vst.msk [vmem:[#allocation5 + $0xd8] sm:$0xff] %vm3509, %v3468
      %3538 = vst.msk [vmem:[#allocation5 + $0xe0] sm:$0xff] %vm3509, %v3470
      %3539 = vst.msk [vmem:[#allocation5 + $0xe8] sm:$0xff] %vm3509, %v3472
      %3540 = vst.msk [vmem:[#allocation5 + $0xf0] sm:$0xff] %vm3509, %v3474
      %3541 = vst.msk [vmem:[#allocation5 + $0xf8] sm:$0xff] %vm3509, %v3476
      %s3542 = scalar_lea.vmem [#allocation4], 48
      %v3543 = vld [vmem:[%s3542] sm:$0xff]
      %v3544 = vld [vmem:[%s3542 + $0x8] sm:$0xff]
      %v3545 = vld [vmem:[%s3542 + $0x18] sm:$0xff]
      %v3546 = vld [vmem:[%s3542 + $0x20] sm:$0xff]
      %v3547 = vld [vmem:[%s3542 + $0x30] sm:$0xff]
      %v3548 = vld [vmem:[%s3542 + $0x38] sm:$0xff]
      %v3549 = vld [vmem:[%s3542 + $0x48] sm:$0xff]
      %v3550 = vld [vmem:[%s3542 + $0x50] sm:$0xff]
      %v3551 = vld [vmem:[%s3542 + $0x60] sm:$0xff]
      %v3552 = vld [vmem:[%s3542 + $0x68] sm:$0xff]
      %v3553 = vld [vmem:[%s3542 + $0x78] sm:$0xff]
      %v3554 = vld [vmem:[%s3542 + $0x80] sm:$0xff]
      %v3555 = vld [vmem:[%s3542 + $0x90] sm:$0xff]
      %v3556 = vld [vmem:[%s3542 + $0x98] sm:$0xff]
      %v3557 = vld [vmem:[%s3542 + $0xa8] sm:$0xff]
      %v3558 = vld [vmem:[%s3542 + $0xb0] sm:$0xff]
      %v3559 = vld [vmem:[%s3542 + $0xc0] sm:$0xff]
      %v3560 = vld [vmem:[%s3542 + $0xc8] sm:$0xff]
      %v3561 = vld [vmem:[%s3542 + $0xd8] sm:$0xff]
      %v3562 = vld [vmem:[%s3542 + $0xe0] sm:$0xff]
      %v3563 = vld [vmem:[%s3542 + $0xf0] sm:$0xff]
      %v3564 = vld [vmem:[%s3542 + $0xf8] sm:$0xff]
      %v3565 = vld [vmem:[%s3542 + $0x108] sm:$0xff]
      %v3566 = vld [vmem:[%s3542 + $0x110] sm:$0xff]
      %v3567 = vld [vmem:[%s3542 + $0x120] sm:$0xff]
      %v3568 = vld [vmem:[%s3542 + $0x128] sm:$0xff]
      %v3569 = vld [vmem:[%s3542 + $0x138] sm:$0xff]
      %v3570 = vld [vmem:[%s3542 + $0x140] sm:$0xff]
      %v3571 = vld [vmem:[%s3542 + $0x150] sm:$0xff]
      %v3572 = vld [vmem:[%s3542 + $0x158] sm:$0xff]
      %v3573 = vld [vmem:[%s3542 + $0x168] sm:$0xff]
      %v3574 = vld [vmem:[%s3542 + $0x170] sm:$0xff]
      %3607 = vrot.lane.b32.xlu0 %v3543, 24
      %v3608 = vpop.permute.xlu0 %3607
      %3609 = vrot.lane.b32.xlu0 %v3544, 24
      %v3610 = vpop.permute.xlu0 %3609
      %3611 = vrot.lane.b32.xlu0 %v3545, 24
      %v3612 = vpop.permute.xlu0 %3611
      %3613 = vrot.lane.b32.xlu0 %v3546, 24
      %v3614 = vpop.permute.xlu0 %3613
      %3615 = vrot.lane.b32.xlu0 %v3547, 24
      %v3616 = vpop.permute.xlu0 %3615
      %3617 = vrot.lane.b32.xlu0 %v3548, 24
      %v3618 = vpop.permute.xlu0 %3617
      %3619 = vrot.lane.b32.xlu0 %v3549, 24
      %v3620 = vpop.permute.xlu0 %3619
      %3621 = vrot.lane.b32.xlu0 %v3550, 24
      %v3622 = vpop.permute.xlu0 %3621
      %3623 = vrot.lane.b32.xlu0 %v3551, 24
      %v3624 = vpop.permute.xlu0 %3623
      %3625 = vrot.lane.b32.xlu0 %v3552, 24
      %v3626 = vpop.permute.xlu0 %3625
      %3627 = vrot.lane.b32.xlu0 %v3553, 24
      %v3628 = vpop.permute.xlu0 %3627
      %3629 = vrot.lane.b32.xlu0 %v3554, 24
      %v3630 = vpop.permute.xlu0 %3629
      %3631 = vrot.lane.b32.xlu0 %v3555, 24
      %v3632 = vpop.permute.xlu0 %3631
      %3633 = vrot.lane.b32.xlu0 %v3556, 24
      %v3634 = vpop.permute.xlu0 %3633
      %3635 = vrot.lane.b32.xlu0 %v3557, 24
      %v3636 = vpop.permute.xlu0 %3635
      %3637 = vrot.lane.b32.xlu0 %v3558, 24
      %v3638 = vpop.permute.xlu0 %3637
      %3639 = vrot.lane.b32.xlu0 %v3559, 24
      %v3640 = vpop.permute.xlu0 %3639
      %3641 = vrot.lane.b32.xlu0 %v3560, 24
      %v3642 = vpop.permute.xlu0 %3641
      %3643 = vrot.lane.b32.xlu0 %v3561, 24
      %v3644 = vpop.permute.xlu0 %3643
      %3645 = vrot.lane.b32.xlu0 %v3562, 24
      %v3646 = vpop.permute.xlu0 %3645
      %3647 = vrot.lane.b32.xlu0 %v3563, 24
      %v3648 = vpop.permute.xlu0 %3647
      %3649 = vrot.lane.b32.xlu0 %v3564, 24
      %v3650 = vpop.permute.xlu0 %3649
      %3651 = vrot.lane.b32.xlu0 %v3565, 24
      %v3652 = vpop.permute.xlu0 %3651
      %3653 = vrot.lane.b32.xlu0 %v3566, 24
      %v3654 = vpop.permute.xlu0 %3653
      %3655 = vrot.lane.b32.xlu0 %v3567, 24
      %v3656 = vpop.permute.xlu0 %3655
      %3657 = vrot.lane.b32.xlu0 %v3568, 24
      %v3658 = vpop.permute.xlu0 %3657
      %3659 = vrot.lane.b32.xlu0 %v3569, 24
      %v3660 = vpop.permute.xlu0 %3659
      %3661 = vrot.lane.b32.xlu0 %v3570, 24
      %v3662 = vpop.permute.xlu0 %3661
      %3663 = vrot.lane.b32.xlu0 %v3571, 24
      %v3664 = vpop.permute.xlu0 %3663
      %3665 = vrot.lane.b32.xlu0 %v3572, 24
      %v3666 = vpop.permute.xlu0 %3665
      %3667 = vrot.lane.b32.xlu0 %v3573, 24
      %v3668 = vpop.permute.xlu0 %3667
      %3669 = vrot.lane.b32.xlu0 %v3574, 24
      %v3670 = vpop.permute.xlu0 %3669
      %vm3703 = vcmask 228544
      %3704 = vst.msk [vmem:[#allocation5] sm:$0xff] %vm3703, %v3608
      %3705 = vst.msk [vmem:[#allocation5 + $0x8] sm:$0xff] %vm3703, %v3610
      %3706 = vst.msk [vmem:[#allocation5 + $0x10] sm:$0xff] %vm3703, %v3612
      %3707 = vst.msk [vmem:[#allocation5 + $0x18] sm:$0xff] %vm3703, %v3614
      %3708 = vst.msk [vmem:[#allocation5 + $0x20] sm:$0xff] %vm3703, %v3616
      %3709 = vst.msk [vmem:[#allocation5 + $0x28] sm:$0xff] %vm3703, %v3618
      %3710 = vst.msk [vmem:[#allocation5 + $0x30] sm:$0xff] %vm3703, %v3620
      %3711 = vst.msk [vmem:[#allocation5 + $0x38] sm:$0xff] %vm3703, %v3622
      %3712 = vst.msk [vmem:[#allocation5 + $0x40] sm:$0xff] %vm3703, %v3624
      %3713 = vst.msk [vmem:[#allocation5 + $0x48] sm:$0xff] %vm3703, %v3626
      %3714 = vst.msk [vmem:[#allocation5 + $0x50] sm:$0xff] %vm3703, %v3628
      %3715 = vst.msk [vmem:[#allocation5 + $0x58] sm:$0xff] %vm3703, %v3630
      %3716 = vst.msk [vmem:[#allocation5 + $0x60] sm:$0xff] %vm3703, %v3632
      %3717 = vst.msk [vmem:[#allocation5 + $0x68] sm:$0xff] %vm3703, %v3634
      %3718 = vst.msk [vmem:[#allocation5 + $0x70] sm:$0xff] %vm3703, %v3636
      %3719 = vst.msk [vmem:[#allocation5 + $0x78] sm:$0xff] %vm3703, %v3638
      %3720 = vst.msk [vmem:[#allocation5 + $0x80] sm:$0xff] %vm3703, %v3640
      %3721 = vst.msk [vmem:[#allocation5 + $0x88] sm:$0xff] %vm3703, %v3642
      %3722 = vst.msk [vmem:[#allocation5 + $0x90] sm:$0xff] %vm3703, %v3644
      %3723 = vst.msk [vmem:[#allocation5 + $0x98] sm:$0xff] %vm3703, %v3646
      %3724 = vst.msk [vmem:[#allocation5 + $0xa0] sm:$0xff] %vm3703, %v3648
      %3725 = vst.msk [vmem:[#allocation5 + $0xa8] sm:$0xff] %vm3703, %v3650
      %3726 = vst.msk [vmem:[#allocation5 + $0xb0] sm:$0xff] %vm3703, %v3652
      %3727 = vst.msk [vmem:[#allocation5 + $0xb8] sm:$0xff] %vm3703, %v3654
      %3728 = vst.msk [vmem:[#allocation5 + $0xc0] sm:$0xff] %vm3703, %v3656
      %3729 = vst.msk [vmem:[#allocation5 + $0xc8] sm:$0xff] %vm3703, %v3658
      %3730 = vst.msk [vmem:[#allocation5 + $0xd0] sm:$0xff] %vm3703, %v3660
      %3731 = vst.msk [vmem:[#allocation5 + $0xd8] sm:$0xff] %vm3703, %v3662
      %3732 = vst.msk [vmem:[#allocation5 + $0xe0] sm:$0xff] %vm3703, %v3664
      %3733 = vst.msk [vmem:[#allocation5 + $0xe8] sm:$0xff] %vm3703, %v3666
      %3734 = vst.msk [vmem:[#allocation5 + $0xf0] sm:$0xff] %vm3703, %v3668
      %3735 = vst.msk [vmem:[#allocation5 + $0xf8] sm:$0xff] %vm3703, %v3670
      %v3736 = vld [vmem:[%s3542 + $0x1] sm:$0xff]
      %v3737 = vld [vmem:[%s3542 + $0x9] sm:$0xff]
      %v3738 = vld [vmem:[%s3542 + $0x19] sm:$0xff]
      %v3739 = vld [vmem:[%s3542 + $0x21] sm:$0xff]
      %v3740 = vld [vmem:[%s3542 + $0x31] sm:$0xff]
      %v3741 = vld [vmem:[%s3542 + $0x39] sm:$0xff]
      %v3742 = vld [vmem:[%s3542 + $0x49] sm:$0xff]
      %v3743 = vld [vmem:[%s3542 + $0x51] sm:$0xff]
      %v3744 = vld [vmem:[%s3542 + $0x61] sm:$0xff]
      %v3745 = vld [vmem:[%s3542 + $0x69] sm:$0xff]
      %v3746 = vld [vmem:[%s3542 + $0x79] sm:$0xff]
      %v3747 = vld [vmem:[%s3542 + $0x81] sm:$0xff]
      %v3748 = vld [vmem:[%s3542 + $0x91] sm:$0xff]
      %v3749 = vld [vmem:[%s3542 + $0x99] sm:$0xff]
      %v3750 = vld [vmem:[%s3542 + $0xa9] sm:$0xff]
      %v3751 = vld [vmem:[%s3542 + $0xb1] sm:$0xff]
      %v3752 = vld [vmem:[%s3542 + $0xc1] sm:$0xff]
      %v3753 = vld [vmem:[%s3542 + $0xc9] sm:$0xff]
      %v3754 = vld [vmem:[%s3542 + $0xd9] sm:$0xff]
      %v3755 = vld [vmem:[%s3542 + $0xe1] sm:$0xff]
      %v3756 = vld [vmem:[%s3542 + $0xf1] sm:$0xff]
      %v3757 = vld [vmem:[%s3542 + $0xf9] sm:$0xff]
      %v3758 = vld [vmem:[%s3542 + $0x109] sm:$0xff]
      %v3759 = vld [vmem:[%s3542 + $0x111] sm:$0xff]
      %v3760 = vld [vmem:[%s3542 + $0x121] sm:$0xff]
      %v3761 = vld [vmem:[%s3542 + $0x129] sm:$0xff]
      %v3762 = vld [vmem:[%s3542 + $0x139] sm:$0xff]
      %v3763 = vld [vmem:[%s3542 + $0x141] sm:$0xff]
      %v3764 = vld [vmem:[%s3542 + $0x151] sm:$0xff]
      %v3765 = vld [vmem:[%s3542 + $0x159] sm:$0xff]
      %v3766 = vld [vmem:[%s3542 + $0x169] sm:$0xff]
      %v3767 = vld [vmem:[%s3542 + $0x171] sm:$0xff]
      %3800 = vrot.lane.b32.xlu0 %v3736, 28
      %v3801 = vpop.permute.xlu0 %3800
      %3802 = vrot.lane.b32.xlu0 %v3737, 28
      %v3803 = vpop.permute.xlu0 %3802
      %3804 = vrot.lane.b32.xlu0 %v3738, 28
      %v3805 = vpop.permute.xlu0 %3804
      %3806 = vrot.lane.b32.xlu0 %v3739, 28
      %v3807 = vpop.permute.xlu0 %3806
      %3808 = vrot.lane.b32.xlu0 %v3740, 28
      %v3809 = vpop.permute.xlu0 %3808
      %3810 = vrot.lane.b32.xlu0 %v3741, 28
      %v3811 = vpop.permute.xlu0 %3810
      %3812 = vrot.lane.b32.xlu0 %v3742, 28
      %v3813 = vpop.permute.xlu0 %3812
      %3814 = vrot.lane.b32.xlu0 %v3743, 28
      %v3815 = vpop.permute.xlu0 %3814
      %3816 = vrot.lane.b32.xlu0 %v3744, 28
      %v3817 = vpop.permute.xlu0 %3816
      %3818 = vrot.lane.b32.xlu0 %v3745, 28
      %v3819 = vpop.permute.xlu0 %3818
      %3820 = vrot.lane.b32.xlu0 %v3746, 28
      %v3821 = vpop.permute.xlu0 %3820
      %3822 = vrot.lane.b32.xlu0 %v3747, 28
      %v3823 = vpop.permute.xlu0 %3822
      %3824 = vrot.lane.b32.xlu0 %v3748, 28
      %v3825 = vpop.permute.xlu0 %3824
      %3826 = vrot.lane.b32.xlu0 %v3749, 28
      %v3827 = vpop.permute.xlu0 %3826
      %3828 = vrot.lane.b32.xlu0 %v3750, 28
      %v3829 = vpop.permute.xlu0 %3828
      %3830 = vrot.lane.b32.xlu0 %v3751, 28
      %v3831 = vpop.permute.xlu0 %3830
      %3832 = vrot.lane.b32.xlu0 %v3752, 28
      %v3833 = vpop.permute.xlu0 %3832
      %3834 = vrot.lane.b32.xlu0 %v3753, 28
      %v3835 = vpop.permute.xlu0 %3834
      %3836 = vrot.lane.b32.xlu0 %v3754, 28
      %v3837 = vpop.permute.xlu0 %3836
      %3838 = vrot.lane.b32.xlu0 %v3755, 28
      %v3839 = vpop.permute.xlu0 %3838
      %3840 = vrot.lane.b32.xlu0 %v3756, 28
      %v3841 = vpop.permute.xlu0 %3840
      %3842 = vrot.lane.b32.xlu0 %v3757, 28
      %v3843 = vpop.permute.xlu0 %3842
      %3844 = vrot.lane.b32.xlu0 %v3758, 28
      %v3845 = vpop.permute.xlu0 %3844
      %3846 = vrot.lane.b32.xlu0 %v3759, 28
      %v3847 = vpop.permute.xlu0 %3846
      %3848 = vrot.lane.b32.xlu0 %v3760, 28
      %v3849 = vpop.permute.xlu0 %3848
      %3850 = vrot.lane.b32.xlu0 %v3761, 28
      %v3851 = vpop.permute.xlu0 %3850
      %3852 = vrot.lane.b32.xlu0 %v3762, 28
      %v3853 = vpop.permute.xlu0 %3852
      %3854 = vrot.lane.b32.xlu0 %v3763, 28
      %v3855 = vpop.permute.xlu0 %3854
      %3856 = vrot.lane.b32.xlu0 %v3764, 28
      %v3857 = vpop.permute.xlu0 %3856
      %3858 = vrot.lane.b32.xlu0 %v3765, 28
      %v3859 = vpop.permute.xlu0 %3858
      %3860 = vrot.lane.b32.xlu0 %v3766, 28
      %v3861 = vpop.permute.xlu0 %3860
      %3862 = vrot.lane.b32.xlu0 %v3767, 28
      %v3863 = vpop.permute.xlu0 %3862
      %vm3896 = vcmask 261344
      %3897 = vst.msk [vmem:[#allocation5] sm:$0xff] %vm3896, %v3801
      %3898 = vst.msk [vmem:[#allocation5 + $0x8] sm:$0xff] %vm3896, %v3803
      %3899 = vst.msk [vmem:[#allocation5 + $0x10] sm:$0xff] %vm3896, %v3805
      %3900 = vst.msk [vmem:[#allocation5 + $0x18] sm:$0xff] %vm3896, %v3807
      %3901 = vst.msk [vmem:[#allocation5 + $0x20] sm:$0xff] %vm3896, %v3809
      %3902 = vst.msk [vmem:[#allocation5 + $0x28] sm:$0xff] %vm3896, %v3811
      %3903 = vst.msk [vmem:[#allocation5 + $0x30] sm:$0xff] %vm3896, %v3813
      %3904 = vst.msk [vmem:[#allocation5 + $0x38] sm:$0xff] %vm3896, %v3815
      %3905 = vst.msk [vmem:[#allocation5 + $0x40] sm:$0xff] %vm3896, %v3817
      %3906 = vst.msk [vmem:[#allocation5 + $0x48] sm:$0xff] %vm3896, %v3819
      %3907 = vst.msk [vmem:[#allocation5 + $0x50] sm:$0xff] %vm3896, %v3821
      %3908 = vst.msk [vmem:[#allocation5 + $0x58] sm:$0xff] %vm3896, %v3823
      %3909 = vst.msk [vmem:[#allocation5 + $0x60] sm:$0xff] %vm3896, %v3825
      %3910 = vst.msk [vmem:[#allocation5 + $0x68] sm:$0xff] %vm3896, %v3827
      %3911 = vst.msk [vmem:[#allocation5 + $0x70] sm:$0xff] %vm3896, %v3829
      %3912 = vst.msk [vmem:[#allocation5 + $0x78] sm:$0xff] %vm3896, %v3831
      %3913 = vst.msk [vmem:[#allocation5 + $0x80] sm:$0xff] %vm3896, %v3833
      %3914 = vst.msk [vmem:[#allocation5 + $0x88] sm:$0xff] %vm3896, %v3835
      %3915 = vst.msk [vmem:[#allocation5 + $0x90] sm:$0xff] %vm3896, %v3837
      %3916 = vst.msk [vmem:[#allocation5 + $0x98] sm:$0xff] %vm3896, %v3839
      %3917 = vst.msk [vmem:[#allocation5 + $0xa0] sm:$0xff] %vm3896, %v3841
      %3918 = vst.msk [vmem:[#allocation5 + $0xa8] sm:$0xff] %vm3896, %v3843
      %3919 = vst.msk [vmem:[#allocation5 + $0xb0] sm:$0xff] %vm3896, %v3845
      %3920 = vst.msk [vmem:[#allocation5 + $0xb8] sm:$0xff] %vm3896, %v3847
      %3921 = vst.msk [vmem:[#allocation5 + $0xc0] sm:$0xff] %vm3896, %v3849
      %3922 = vst.msk [vmem:[#allocation5 + $0xc8] sm:$0xff] %vm3896, %v3851
      %3923 = vst.msk [vmem:[#allocation5 + $0xd0] sm:$0xff] %vm3896, %v3853
      %3924 = vst.msk [vmem:[#allocation5 + $0xd8] sm:$0xff] %vm3896, %v3855
      %3925 = vst.msk [vmem:[#allocation5 + $0xe0] sm:$0xff] %vm3896, %v3857
      %3926 = vst.msk [vmem:[#allocation5 + $0xe8] sm:$0xff] %vm3896, %v3859
      %3927 = vst.msk [vmem:[#allocation5 + $0xf0] sm:$0xff] %vm3896, %v3861
      %3928 = vst.msk [vmem:[#allocation5 + $0xf8] sm:$0xff] %vm3896, %v3863
      %v3929 = vld [vmem:[%s3542 + $0x2] sm:$0xff]
      %v3930 = vld [vmem:[%s3542 + $0xa] sm:$0xff]
      %v3931 = vld [vmem:[%s3542 + $0x1a] sm:$0xff]
      %v3932 = vld [vmem:[%s3542 + $0x22] sm:$0xff]
      %v3933 = vld [vmem:[%s3542 + $0x32] sm:$0xff]
      %v3934 = vld [vmem:[%s3542 + $0x3a] sm:$0xff]
      %v3935 = vld [vmem:[%s3542 + $0x4a] sm:$0xff]
      %v3936 = vld [vmem:[%s3542 + $0x52] sm:$0xff]
      %v3937 = vld [vmem:[%s3542 + $0x62] sm:$0xff]
      %v3938 = vld [vmem:[%s3542 + $0x6a] sm:$0xff]
      %v3939 = vld [vmem:[%s3542 + $0x7a] sm:$0xff]
      %v3940 = vld [vmem:[%s3542 + $0x82] sm:$0xff]
      %v3941 = vld [vmem:[%s3542 + $0x92] sm:$0xff]
      %v3942 = vld [vmem:[%s3542 + $0x9a] sm:$0xff]
      %v3943 = vld [vmem:[%s3542 + $0xaa] sm:$0xff]
      %v3944 = vld [vmem:[%s3542 + $0xb2] sm:$0xff]
      %v3945 = vld [vmem:[%s3542 + $0xc2] sm:$0xff]
      %v3946 = vld [vmem:[%s3542 + $0xca] sm:$0xff]
      %v3947 = vld [vmem:[%s3542 + $0xda] sm:$0xff]
      %v3948 = vld [vmem:[%s3542 + $0xe2] sm:$0xff]
      %v3949 = vld [vmem:[%s3542 + $0xf2] sm:$0xff]
      %v3950 = vld [vmem:[%s3542 + $0xfa] sm:$0xff]
      %v3951 = vld [vmem:[%s3542 + $0x10a] sm:$0xff]
      %v3952 = vld [vmem:[%s3542 + $0x112] sm:$0xff]
      %v3953 = vld [vmem:[%s3542 + $0x122] sm:$0xff]
      %v3954 = vld [vmem:[%s3542 + $0x12a] sm:$0xff]
      %v3955 = vld [vmem:[%s3542 + $0x13a] sm:$0xff]
      %v3956 = vld [vmem:[%s3542 + $0x142] sm:$0xff]
      %v3957 = vld [vmem:[%s3542 + $0x152] sm:$0xff]
      %v3958 = vld [vmem:[%s3542 + $0x15a] sm:$0xff]
      %v3959 = vld [vmem:[%s3542 + $0x16a] sm:$0xff]
      %v3960 = vld [vmem:[%s3542 + $0x172] sm:$0xff]
      %3993 = vrot.lane.b32.xlu0 %v3929, 32
      %v3994 = vpop.permute.xlu0 %3993
      %3995 = vrot.lane.b32.xlu0 %v3930, 32
      %v3996 = vpop.permute.xlu0 %3995
      %3997 = vrot.lane.b32.xlu0 %v3931, 32
      %v3998 = vpop.permute.xlu0 %3997
      %3999 = vrot.lane.b32.xlu0 %v3932, 32
      %v4000 = vpop.permute.xlu0 %3999
      %4001 = vrot.lane.b32.xlu0 %v3933, 32
      %v4002 = vpop.permute.xlu0 %4001
      %4003 = vrot.lane.b32.xlu0 %v3934, 32
      %v4004 = vpop.permute.xlu0 %4003
      %4005 = vrot.lane.b32.xlu0 %v3935, 32
      %v4006 = vpop.permute.xlu0 %4005
      %4007 = vrot.lane.b32.xlu0 %v3936, 32
      %v4008 = vpop.permute.xlu0 %4007
      %4009 = vrot.lane.b32.xlu0 %v3937, 32
      %v4010 = vpop.permute.xlu0 %4009
      %4011 = vrot.lane.b32.xlu0 %v3938, 32
      %v4012 = vpop.permute.xlu0 %4011
      %4013 = vrot.lane.b32.xlu0 %v3939, 32
      %v4014 = vpop.permute.xlu0 %4013
      %4015 = vrot.lane.b32.xlu0 %v3940, 32
      %v4016 = vpop.permute.xlu0 %4015
      %4017 = vrot.lane.b32.xlu0 %v3941, 32
      %v4018 = vpop.permute.xlu0 %4017
      %4019 = vrot.lane.b32.xlu0 %v3942, 32
      %v4020 = vpop.permute.xlu0 %4019
      %4021 = vrot.lane.b32.xlu0 %v3943, 32
      %v4022 = vpop.permute.xlu0 %4021
      %4023 = vrot.lane.b32.xlu0 %v3944, 32
      %v4024 = vpop.permute.xlu0 %4023
      %4025 = vrot.lane.b32.xlu0 %v3945, 32
      %v4026 = vpop.permute.xlu0 %4025
      %4027 = vrot.lane.b32.xlu0 %v3946, 32
      %v4028 = vpop.permute.xlu0 %4027
      %4029 = vrot.lane.b32.xlu0 %v3947, 32
      %v4030 = vpop.permute.xlu0 %4029
      %4031 = vrot.lane.b32.xlu0 %v3948, 32
      %v4032 = vpop.permute.xlu0 %4031
      %4033 = vrot.lane.b32.xlu0 %v3949, 32
      %v4034 = vpop.permute.xlu0 %4033
      %4035 = vrot.lane.b32.xlu0 %v3950, 32
      %v4036 = vpop.permute.xlu0 %4035
      %4037 = vrot.lane.b32.xlu0 %v3951, 32
      %v4038 = vpop.permute.xlu0 %4037
      %4039 = vrot.lane.b32.xlu0 %v3952, 32
      %v4040 = vpop.permute.xlu0 %4039
      %4041 = vrot.lane.b32.xlu0 %v3953, 32
      %v4042 = vpop.permute.xlu0 %4041
      %4043 = vrot.lane.b32.xlu0 %v3954, 32
      %v4044 = vpop.permute.xlu0 %4043
      %4045 = vrot.lane.b32.xlu0 %v3955, 32
      %v4046 = vpop.permute.xlu0 %4045
      %4047 = vrot.lane.b32.xlu0 %v3956, 32
      %v4048 = vpop.permute.xlu0 %4047
      %4049 = vrot.lane.b32.xlu0 %v3957, 32
      %v4050 = vpop.permute.xlu0 %4049
      %4051 = vrot.lane.b32.xlu0 %v3958, 32
      %v4052 = vpop.permute.xlu0 %4051
      %4053 = vrot.lane.b32.xlu0 %v3959, 32
      %v4054 = vpop.permute.xlu0 %4053
      %4055 = vrot.lane.b32.xlu0 %v3960, 32
      %v4056 = vpop.permute.xlu0 %4055
      %vm4089 = vcmask 294144
      %4090 = vst.msk [vmem:[#allocation5] sm:$0xff] %vm4089, %v3994
      %4091 = vst.msk [vmem:[#allocation5 + $0x8] sm:$0xff] %vm4089, %v3996
      %4092 = vst.msk [vmem:[#allocation5 + $0x10] sm:$0xff] %vm4089, %v3998
      %4093 = vst.msk [vmem:[#allocation5 + $0x18] sm:$0xff] %vm4089, %v4000
      %4094 = vst.msk [vmem:[#allocation5 + $0x20] sm:$0xff] %vm4089, %v4002
      %4095 = vst.msk [vmem:[#allocation5 + $0x28] sm:$0xff] %vm4089, %v4004
      %4096 = vst.msk [vmem:[#allocation5 + $0x30] sm:$0xff] %vm4089, %v4006
      %4097 = vst.msk [vmem:[#allocation5 + $0x38] sm:$0xff] %vm4089, %v4008
      %4098 = vst.msk [vmem:[#allocation5 + $0x40] sm:$0xff] %vm4089, %v4010
      %4099 = vst.msk [vmem:[#allocation5 + $0x48] sm:$0xff] %vm4089, %v4012
      %4100 = vst.msk [vmem:[#allocation5 + $0x50] sm:$0xff] %vm4089, %v4014
      %4101 = vst.msk [vmem:[#allocation5 + $0x58] sm:$0xff] %vm4089, %v4016
      %4102 = vst.msk [vmem:[#allocation5 + $0x60] sm:$0xff] %vm4089, %v4018
      %4103 = vst.msk [vmem:[#allocation5 + $0x68] sm:$0xff] %vm4089, %v4020
      %4104 = vst.msk [vmem:[#allocation5 + $0x70] sm:$0xff] %vm4089, %v4022
      %4105 = vst.msk [vmem:[#allocation5 + $0x78] sm:$0xff] %vm4089, %v4024
      %4106 = vst.msk [vmem:[#allocation5 + $0x80] sm:$0xff] %vm4089, %v4026
      %4107 = vst.msk [vmem:[#allocation5 + $0x88] sm:$0xff] %vm4089, %v4028
      %4108 = vst.msk [vmem:[#allocation5 + $0x90] sm:$0xff] %vm4089, %v4030
      %4109 = vst.msk [vmem:[#allocation5 + $0x98] sm:$0xff] %vm4089, %v4032
      %4110 = vst.msk [vmem:[#allocation5 + $0xa0] sm:$0xff] %vm4089, %v4034
      %4111 = vst.msk [vmem:[#allocation5 + $0xa8] sm:$0xff] %vm4089, %v4036
      %4112 = vst.msk [vmem:[#allocation5 + $0xb0] sm:$0xff] %vm4089, %v4038
      %4113 = vst.msk [vmem:[#allocation5 + $0xb8] sm:$0xff] %vm4089, %v4040
      %4114 = vst.msk [vmem:[#allocation5 + $0xc0] sm:$0xff] %vm4089, %v4042
      %4115 = vst.msk [vmem:[#allocation5 + $0xc8] sm:$0xff] %vm4089, %v4044
      %4116 = vst.msk [vmem:[#allocation5 + $0xd0] sm:$0xff] %vm4089, %v4046
      %4117 = vst.msk [vmem:[#allocation5 + $0xd8] sm:$0xff] %vm4089, %v4048
      %4118 = vst.msk [vmem:[#allocation5 + $0xe0] sm:$0xff] %vm4089, %v4050
      %4119 = vst.msk [vmem:[#allocation5 + $0xe8] sm:$0xff] %vm4089, %v4052
      %4120 = vst.msk [vmem:[#allocation5 + $0xf0] sm:$0xff] %vm4089, %v4054
      %4121 = vst.msk [vmem:[#allocation5 + $0xf8] sm:$0xff] %vm4089, %v4056
      %v4122 = vld [vmem:[#allocation5] sm:$0xff]
      %v4123 = vld [vmem:[#allocation5 + $0x8] sm:$0xff]
      %v4124 = vld [vmem:[#allocation5 + $0x10] sm:$0xff]
      %v4125 = vld [vmem:[#allocation5 + $0x18] sm:$0xff]
      %v4126 = vld [vmem:[#allocation5 + $0x20] sm:$0xff]
      %v4127 = vld [vmem:[#allocation5 + $0x28] sm:$0xff]
      %v4128 = vld [vmem:[#allocation5 + $0x30] sm:$0xff]
      %v4129 = vld [vmem:[#allocation5 + $0x38] sm:$0xff]
      %v4130 = vld [vmem:[#allocation5 + $0x40] sm:$0xff]
      %v4131 = vld [vmem:[#allocation5 + $0x48] sm:$0xff]
      %v4132 = vld [vmem:[#allocation5 + $0x50] sm:$0xff]
      %v4133 = vld [vmem:[#allocation5 + $0x58] sm:$0xff]
      %v4134 = vld [vmem:[#allocation5 + $0x60] sm:$0xff]
      %v4135 = vld [vmem:[#allocation5 + $0x68] sm:$0xff]
      %v4136 = vld [vmem:[#allocation5 + $0x70] sm:$0xff]
      %v4137 = vld [vmem:[#allocation5 + $0x78] sm:$0xff]
      %v4138 = vld [vmem:[#allocation5 + $0x80] sm:$0xff]
      %v4139 = vld [vmem:[#allocation5 + $0x88] sm:$0xff]
      %v4140 = vld [vmem:[#allocation5 + $0x90] sm:$0xff]
      %v4141 = vld [vmem:[#allocation5 + $0x98] sm:$0xff]
      %v4142 = vld [vmem:[#allocation5 + $0xa0] sm:$0xff]
      %v4143 = vld [vmem:[#allocation5 + $0xa8] sm:$0xff]
      %v4144 = vld [vmem:[#allocation5 + $0xb0] sm:$0xff]
      %v4145 = vld [vmem:[#allocation5 + $0xb8] sm:$0xff]
      %v4146 = vld [vmem:[#allocation5 + $0xc0] sm:$0xff]
      %v4147 = vld [vmem:[#allocation5 + $0xc8] sm:$0xff]
      %v4148 = vld [vmem:[#allocation5 + $0xd0] sm:$0xff]
      %v4149 = vld [vmem:[#allocation5 + $0xd8] sm:$0xff]
      %v4150 = vld [vmem:[#allocation5 + $0xe0] sm:$0xff]
      %v4151 = vld [vmem:[#allocation5 + $0xe8] sm:$0xff]
      %v4152 = vld [vmem:[#allocation5 + $0xf0] sm:$0xff]
      %v4153 = vld [vmem:[#allocation5 + $0xf8] sm:$0xff]
      %v4154 = vld [vmem:[%s3] sm:$0xff]
      %v4155 = vld [vmem:[%s3 + $0x8] sm:$0xff]
      %v4156 = vld [vmem:[%s3 + $0x10] sm:$0xff]
      %v4157 = vld [vmem:[%s3 + $0x18] sm:$0xff]
      %v4158 = vld [vmem:[%s3 + $0x20] sm:$0xf]
      %v4159 = vld [vmem:[%s4] sm:$0x1]
      %v4161 = vperm.slane %v4159, 0
      %vm4163 = vcmask 293888
      %v4165 = vsel %vm4163, %v4122, 0
      %v4168 = vsel %vm4163, %v4123, 0
      %v4171 = vsel %vm4163, %v4124, 0
      %v4174 = vsel %vm4163, %v4125, 0
      %v4177 = vsel %vm4163, %v4126, 0
      %v4180 = vsel %vm4163, %v4127, 0
      %v4183 = vsel %vm4163, %v4128, 0
      %v4186 = vsel %vm4163, %v4129, 0
      %v4189 = vsel %vm4163, %v4130, 0
      %v4192 = vsel %vm4163, %v4131, 0
      %v4195 = vsel %vm4163, %v4132, 0
      %v4198 = vsel %vm4163, %v4133, 0
      %v4201 = vsel %vm4163, %v4134, 0
      %v4204 = vsel %vm4163, %v4135, 0
      %v4207 = vsel %vm4163, %v4136, 0
      %v4210 = vsel %vm4163, %v4137, 0
      %v4213 = vsel %vm4163, %v4138, 0
      %v4216 = vsel %vm4163, %v4139, 0
      %v4219 = vsel %vm4163, %v4140, 0
      %v4222 = vsel %vm4163, %v4141, 0
      %v4225 = vsel %vm4163, %v4142, 0
      %v4228 = vsel %vm4163, %v4143, 0
      %v4231 = vsel %vm4163, %v4144, 0
      %v4234 = vsel %vm4163, %v4145, 0
      %v4237 = vsel %vm4163, %v4146, 0
      %v4240 = vsel %vm4163, %v4147, 0
      %v4243 = vsel %vm4163, %v4148, 0
      %v4246 = vsel %vm4163, %v4149, 0
      %v4249 = vsel %vm4163, %v4150, 0
      %v4252 = vsel %vm4163, %v4151, 0
      %v4255 = vsel %vm4163, %v4152, 0
      %v4258 = vsel %vm4163, %v4153, 0
      %vm4260 = vcmask 1043456
      %v4262 = vsel %vm4260, %v4158, 0
      %4264 = vmatpush.msra.mxu0 0.0
      %4265 = vmatpush.msra.mxu0 0.0
      %4266 = vmatpush.msra.mxu0 0.0
      %4267 = vmatpush.msra.mxu0 0.0
      %4268 = vmatpush.msra.mxu0 0.0
      %4269 = vmatpush.msra.mxu0 0.0
      %4270 = vmatpush.msra.mxu0 0.0
      %4271 = vmatpush.msra.mxu0 0.0
      %4272 = vmatpush.msra.mxu0 0.0
      %4273 = vmatpush.msra.mxu0 0.0
      %4274 = vmatpush.msra.mxu0 0.0
      %4275 = vmatpush.msra.mxu0 %v4262
      %4276 = vmatpush.msra.mxu0 %v4157
      %4277 = vmatpush.msra.mxu0 %v4156
      %4278 = vmatpush.msra.mxu0 %v4155
      %4279 = vmatpush.msra.mxu0 %v4154
      %4280 = vmatmul.f32.gmra.mxu0 %v4165
      %v4281 = vpop.f32.mrf.mxu0
      %v4282 = vadd.f32 %v4161, %v4281
      %4283 = vmatmul.f32.gmra.mxu0 %v4168
      %v4284 = vpop.f32.mrf.mxu0
      %v4285 = vadd.f32 %v4161, %v4284
      %4286 = vmatmul.f32.gmra.mxu0 %v4171
      %v4287 = vpop.f32.mrf.mxu0
      %v4288 = vadd.f32 %v4161, %v4287
      %4289 = vmatmul.f32.gmra.mxu0 %v4174
      %v4290 = vpop.f32.mrf.mxu0
      %v4291 = vadd.f32 %v4161, %v4290
      %4292 = vmatmul.f32.gmra.mxu0 %v4177
      %v4293 = vpop.f32.mrf.mxu0
      %v4294 = vadd.f32 %v4161, %v4293
      %4295 = vmatmul.f32.gmra.mxu0 %v4180
      %v4296 = vpop.f32.mrf.mxu0
      %v4297 = vadd.f32 %v4161, %v4296
      %4298 = vmatmul.f32.gmra.mxu0 %v4183
      %v4299 = vpop.f32.mrf.mxu0
      %v4300 = vadd.f32 %v4161, %v4299
      %4301 = vmatmul.f32.gmra.mxu0 %v4186
      %v4302 = vpop.f32.mrf.mxu0
      %v4303 = vadd.f32 %v4161, %v4302
      %4304 = vmatmul.f32.gmra.mxu0 %v4189
      %v4305 = vpop.f32.mrf.mxu0
      %v4306 = vadd.f32 %v4161, %v4305
      %4307 = vmatmul.f32.gmra.mxu0 %v4192
      %v4308 = vpop.f32.mrf.mxu0
      %v4309 = vadd.f32 %v4161, %v4308
      %4310 = vmatmul.f32.gmra.mxu0 %v4195
      %v4311 = vpop.f32.mrf.mxu0
      %v4312 = vadd.f32 %v4161, %v4311
      %4313 = vmatmul.f32.gmra.mxu0 %v4198
      %v4314 = vpop.f32.mrf.mxu0
      %v4315 = vadd.f32 %v4161, %v4314
      %4316 = vmatmul.f32.gmra.mxu0 %v4201
      %v4317 = vpop.f32.mrf.mxu0
      %v4318 = vadd.f32 %v4161, %v4317
      %4319 = vmatmul.f32.gmra.mxu0 %v4204
      %v4320 = vpop.f32.mrf.mxu0
      %v4321 = vadd.f32 %v4161, %v4320
      %4322 = vmatmul.f32.gmra.mxu0 %v4207
      %v4323 = vpop.f32.mrf.mxu0
      %v4324 = vadd.f32 %v4161, %v4323
      %4325 = vmatmul.f32.gmra.mxu0 %v4210
      %v4326 = vpop.f32.mrf.mxu0
      %v4327 = vadd.f32 %v4161, %v4326
      %4328 = vmatmul.f32.gmra.mxu0 %v4213
      %v4329 = vpop.f32.mrf.mxu0
      %v4330 = vadd.f32 %v4161, %v4329
      %4331 = vmatmul.f32.gmra.mxu0 %v4216
      %v4332 = vpop.f32.mrf.mxu0
      %v4333 = vadd.f32 %v4161, %v4332
      %4334 = vmatmul.f32.gmra.mxu0 %v4219
      %v4335 = vpop.f32.mrf.mxu0
      %v4336 = vadd.f32 %v4161, %v4335
      %4337 = vmatmul.f32.gmra.mxu0 %v4222
      %v4338 = vpop.f32.mrf.mxu0
      %v4339 = vadd.f32 %v4161, %v4338
      %4340 = vmatmul.f32.gmra.mxu0 %v4225
      %v4341 = vpop.f32.mrf.mxu0
      %v4342 = vadd.f32 %v4161, %v4341
      %4343 = vmatmul.f32.gmra.mxu0 %v4228
      %v4344 = vpop.f32.mrf.mxu0
      %v4345 = vadd.f32 %v4161, %v4344
      %4346 = vmatmul.f32.gmra.mxu0 %v4231
      %v4347 = vpop.f32.mrf.mxu0
      %v4348 = vadd.f32 %v4161, %v4347
      %4349 = vmatmul.f32.gmra.mxu0 %v4234
      %v4350 = vpop.f32.mrf.mxu0
      %v4351 = vadd.f32 %v4161, %v4350
      %4352 = vmatmul.f32.gmra.mxu0 %v4237
      %v4353 = vpop.f32.mrf.mxu0
      %v4354 = vadd.f32 %v4161, %v4353
      %4355 = vmatmul.f32.gmra.mxu0 %v4240
      %v4356 = vpop.f32.mrf.mxu0
      %v4357 = vadd.f32 %v4161, %v4356
      %4358 = vmatmul.f32.gmra.mxu0 %v4243
      %v4359 = vpop.f32.mrf.mxu0
      %v4360 = vadd.f32 %v4161, %v4359
      %4361 = vmatmul.f32.gmra.mxu0 %v4246
      %v4362 = vpop.f32.mrf.mxu0
      %v4363 = vadd.f32 %v4161, %v4362
      %4364 = vmatmul.f32.gmra.mxu0 %v4249
      %v4365 = vpop.f32.mrf.mxu0
      %v4366 = vadd.f32 %v4161, %v4365
      %4367 = vmatmul.f32.gmra.mxu0 %v4252
      %v4368 = vpop.f32.mrf.mxu0
      %v4369 = vadd.f32 %v4161, %v4368
      %4370 = vmatmul.f32.gmra.mxu0 %v4255
      %v4371 = vpop.f32.mrf.mxu0
      %v4372 = vadd.f32 %v4161, %v4371
      %4373 = vmatmul.f32.gmra.mxu0 %v4258
      %v4374 = vpop.f32.mrf.mxu0
      %v4375 = vadd.f32 %v4161, %v4374
      %4376 = vdwg.mxu0
      %vm4377 = vcmask 130048
      %v4378 = vsel %vm4377, %v4282, 0.0
      %v4379 = vsel %vm4377, %v4285, 0.0
      %v4380 = vadd.f32 %v4378, %v4379
      %v4381 = vsel %vm4377, %v4288, 0.0
      %v4382 = vadd.f32 %v4380, %v4381
      %v4383 = vsel %vm4377, %v4291, 0.0
      %v4384 = vadd.f32 %v4382, %v4383
      %v4385 = vsel %vm4377, %v4294, 0.0
      %v4386 = vadd.f32 %v4384, %v4385
      %v4387 = vsel %vm4377, %v4297, 0.0
      %v4388 = vadd.f32 %v4386, %v4387
      %v4389 = vsel %vm4377, %v4300, 0.0
      %v4390 = vadd.f32 %v4388, %v4389
      %v4391 = vsel %vm4377, %v4303, 0.0
      %v4392 = vadd.f32 %v4390, %v4391
      %v4393 = vsel %vm4377, %v4306, 0.0
      %v4394 = vadd.f32 %v4392, %v4393
      %v4395 = vsel %vm4377, %v4309, 0.0
      %v4396 = vadd.f32 %v4394, %v4395
      %v4397 = vsel %vm4377, %v4312, 0.0
      %v4398 = vadd.f32 %v4396, %v4397
      %v4399 = vsel %vm4377, %v4315, 0.0
      %v4400 = vadd.f32 %v4398, %v4399
      %v4401 = vsel %vm4377, %v4318, 0.0
      %v4402 = vadd.f32 %v4400, %v4401
      %v4403 = vsel %vm4377, %v4321, 0.0
      %v4404 = vadd.f32 %v4402, %v4403
      %v4405 = vsel %vm4377, %v4324, 0.0
      %v4406 = vadd.f32 %v4404, %v4405
      %v4407 = vsel %vm4377, %v4327, 0.0
      %v4408 = vadd.f32 %v4406, %v4407
      %v4409 = vsel %vm4377, %v4330, 0.0
      %v4410 = vadd.f32 %v4408, %v4409
      %v4411 = vsel %vm4377, %v4333, 0.0
      %v4412 = vadd.f32 %v4410, %v4411
      %v4413 = vsel %vm4377, %v4336, 0.0
      %v4414 = vadd.f32 %v4412, %v4413
      %v4415 = vsel %vm4377, %v4339, 0.0
      %v4416 = vadd.f32 %v4414, %v4415
      %v4417 = vsel %vm4377, %v4342, 0.0
      %v4418 = vadd.f32 %v4416, %v4417
      %v4419 = vsel %vm4377, %v4345, 0.0
      %v4420 = vadd.f32 %v4418, %v4419
      %v4421 = vsel %vm4377, %v4348, 0.0
      %v4422 = vadd.f32 %v4420, %v4421
      %v4423 = vsel %vm4377, %v4351, 0.0
      %v4424 = vadd.f32 %v4422, %v4423
      %v4425 = vsel %vm4377, %v4354, 0.0
      %v4426 = vadd.f32 %v4424, %v4425
      %v4427 = vsel %vm4377, %v4357, 0.0
      %v4428 = vadd.f32 %v4426, %v4427
      %v4429 = vsel %vm4377, %v4360, 0.0
      %v4430 = vadd.f32 %v4428, %v4429
      %v4431 = vsel %vm4377, %v4363, 0.0
      %v4432 = vadd.f32 %v4430, %v4431
      %v4433 = vsel %vm4377, %v4366, 0.0
      %v4434 = vadd.f32 %v4432, %v4433
      %v4435 = vsel %vm4377, %v4369, 0.0
      %v4436 = vadd.f32 %v4434, %v4435
      %v4437 = vsel %vm4377, %v4372, 0.0
      %v4438 = vadd.f32 %v4436, %v4437
      %v4439 = vsel %vm4377, %v4375, 0.0
      %v4440 = vadd.f32 %v4438, %v4439
      %v4441 = vrot.slane %v4440, 4
      %v4442 = vadd.f32 %v4440, %v4441
      %v4443 = vrot.slane %v4442, 2
      %v4444 = vadd.f32 %v4442, %v4443
      %v4445 = vrot.slane %v4444, 1
      %v4446 = vadd.f32 %v4444, %v4445
      %v4447 = vrcp.pop 256.0
      %v4448 = vmul.f32 256.0, %v4447
      %v4449 = vsub.f32 1.0, %v4448
      %v4450 = vmul.f32 %v4447, %v4449
      %v4451 = vadd.f32 %v4447, %v4450
      %vm4452 = vweird.f32 %v4447
      %v4453 = vsel %vm4452, %v4447, %v4451
      %v4454 = vmul.f32 %v4446, %v4453
      %v4455 = vsel %vm4377, %v4282, -inf
      %v4456 = vsel %vm4377, %v4285, -inf
      %v4457 = vsel %vm4377, %v4288, -inf
      %v4458 = vsel %vm4377, %v4291, -inf
      %v4459 = vsel %vm4377, %v4294, -inf
      %v4460 = vmax.f32 %v4455, %v4459
      %v4461 = vsel %vm4377, %v4297, -inf
      %v4462 = vmax.f32 %v4456, %v4461
      %v4463 = vsel %vm4377, %v4300, -inf
      %v4464 = vmax.f32 %v4457, %v4463
      %v4465 = vsel %vm4377, %v4303, -inf
      %v4466 = vmax.f32 %v4458, %v4465
      %v4467 = vsel %vm4377, %v4306, -inf
      %v4468 = vmax.f32 %v4460, %v4467
      %v4469 = vsel %vm4377, %v4309, -inf
      %v4470 = vmax.f32 %v4462, %v4469
      %v4471 = vsel %vm4377, %v4312, -inf
      %v4472 = vmax.f32 %v4464, %v4471
      %v4473 = vsel %vm4377, %v4315, -inf
      %v4474 = vmax.f32 %v4466, %v4473
      %v4475 = vsel %vm4377, %v4318, -inf
      %v4476 = vmax.f32 %v4468, %v4475
      %v4477 = vsel %vm4377, %v4321, -inf
      %v4478 = vmax.f32 %v4470, %v4477
      %v4479 = vsel %vm4377, %v4324, -inf
      %v4480 = vmax.f32 %v4472, %v4479
      %v4481 = vsel %vm4377, %v4327, -inf
      %v4482 = vmax.f32 %v4474, %v4481
      %v4483 = vsel %vm4377, %v4330, -inf
      %v4484 = vmax.f32 %v4476, %v4483
      %v4485 = vsel %vm4377, %v4333, -inf
      %v4486 = vmax.f32 %v4478, %v4485
      %v4487 = vsel %vm4377, %v4336, -inf
      %v4488 = vmax.f32 %v4480, %v4487
      %v4489 = vsel %vm4377, %v4339, -inf
      %v4490 = vmax.f32 %v4482, %v4489
      %v4491 = vsel %vm4377, %v4342, -inf
      %v4492 = vmax.f32 %v4484, %v4491
      %v4493 = vsel %vm4377, %v4345, -inf
      %v4494 = vmax.f32 %v4486, %v4493
      %v4495 = vsel %vm4377, %v4348, -inf
      %v4496 = vmax.f32 %v4488, %v4495
      %v4497 = vsel %vm4377, %v4351, -inf
      %v4498 = vmax.f32 %v4490, %v4497
      %v4499 = vsel %vm4377, %v4354, -inf
      %v4500 = vmax.f32 %v4492, %v4499
      %v4501 = vsel %vm4377, %v4357, -inf
      %v4502 = vmax.f32 %v4494, %v4501
      %v4503 = vsel %vm4377, %v4360, -inf
      %v4504 = vmax.f32 %v4496, %v4503
      %v4505 = vsel %vm4377, %v4363, -inf
      %v4506 = vmax.f32 %v4498, %v4505
      %v4507 = vsel %vm4377, %v4366, -inf
      %v4508 = vmax.f32 %v4500, %v4507
      %v4509 = vsel %vm4377, %v4369, -inf
      %v4510 = vmax.f32 %v4502, %v4509
      %v4511 = vsel %vm4377, %v4372, -inf
      %v4512 = vmax.f32 %v4504, %v4511
      %v4513 = vsel %vm4377, %v4375, -inf
      %v4514 = vmax.f32 %v4506, %v4513
      %v4515 = vmax.f32 %v4508, %v4510
      %v4516 = vmax.f32 %v4512, %v4514
      %v4517 = vmax.f32 %v4515, %v4516
      %v4518 = vrot.slane %v4517, 4
      %v4519 = vmax.f32 %v4517, %v4518
      %v4520 = vrot.slane %v4519, 2
      %v4521 = vmax.f32 %v4519, %v4520
      %v4522 = vrot.slane %v4521, 1
      %v4523 = vmax.f32 %v4521, %v4522
      %v4524 = vld [vmem:[%s5] sm:$0x1]
      %v4525 = vld [vmem:[%s6] sm:$0x1]
      %v4526 = vmul.f32 %v4454, %v4524
      %vm4527 = vcmask 122880
      %v4528 = vsel %vm4527, %v4526, 0.0
      %4529 = vadd.xlane.f32.xlu0 %v4528
      %v4530 = vpop.xlane.xlu0 %4529
      %v4531 = vmax.f32 %v4530, 0.0
      %v4532 = vmul.f32 %v4531, %v4525
      %v4533 = vadd.f32 %v4532, 0.0
      %v4534 = vmul.f32 %v4523, %v4524
      %v4535 = vsel %vm4527, %v4534, 0.0
      %4536 = vadd.xlane.f32.xlu0 %v4535
      %v4537 = vpop.xlane.xlu0 %4536
      %v4538 = vmax.f32 %v4537, 0.0
      %v4539 = vmul.f32 %v4538, %v4525
      %v4540 = vadd.f32 %v4539, 0.0
      %v4541 = vadd.f32 %v4533, %v4540
      %v4542 = vxor.u32 %v4541, 2147483648
      %v4543 = vmul.f32 %v4542, 1.442695
      %v4544 = vpow.pop %v4543
      %v4545 = vadd.f32 %v4544, 1.0
      %v4546 = vrcp.pop %v4545
      %v4547 = vmul.f32 %v4545, %v4546
      %v4548 = vsub.f32 1.0, %v4547
      %v4549 = vmul.f32 %v4546, %v4548
      %v4550 = vadd.f32 %v4546, %v4549
      %vm4551 = vweird.f32 %v4545
      %vm4552 = vweird.f32 %v4546
      %vm4553 = vmor %vm4551, %vm4552
      %v4554 = vsel %vm4553, %v4546, %v4550
      %v4555 = vand.u32 2147483647, %v4545
      %vm4556 = vcmp.eq.f32.partialorder %v4555, 8.507059e+37
      %v4557 = vand.u32 %v4545, 2147483648
      %v4558 = vor.u32 1.1754944e-38, %v4557
      %v4559 = vsel %vm4556, %v4558, %v4554
      %v4560 = vmul.f32 1.0, %v4559
      %v4561 = vperm.slane %v4560, 0
      %v4562 = vmul.f32 %v4282, %v4561
      %v4563 = vmul.f32 %v4285, %v4561
      %v4564 = vmul.f32 %v4288, %v4561
      %v4565 = vmul.f32 %v4291, %v4561
      %v4566 = vmul.f32 %v4294, %v4561
      %v4567 = vmul.f32 %v4297, %v4561
      %v4568 = vmul.f32 %v4300, %v4561
      %v4569 = vmul.f32 %v4303, %v4561
      %v4570 = vmul.f32 %v4306, %v4561
      %v4571 = vmul.f32 %v4309, %v4561
      %v4572 = vmul.f32 %v4312, %v4561
      %v4573 = vmul.f32 %v4315, %v4561
      %v4574 = vmul.f32 %v4318, %v4561
      %v4575 = vmul.f32 %v4321, %v4561
      %v4576 = vmul.f32 %v4324, %v4561
      %v4577 = vmul.f32 %v4327, %v4561
      %v4578 = vmul.f32 %v4330, %v4561
      %v4579 = vmul.f32 %v4333, %v4561
      %v4580 = vmul.f32 %v4336, %v4561
      %v4581 = vmul.f32 %v4339, %v4561
      %v4582 = vmul.f32 %v4342, %v4561
      %v4583 = vmul.f32 %v4345, %v4561
      %v4584 = vmul.f32 %v4348, %v4561
      %v4585 = vmul.f32 %v4351, %v4561
      %v4586 = vmul.f32 %v4354, %v4561
      %v4587 = vmul.f32 %v4357, %v4561
      %v4588 = vmul.f32 %v4360, %v4561
      %v4589 = vmul.f32 %v4363, %v4561
      %v4590 = vmul.f32 %v4366, %v4561
      %v4591 = vmul.f32 %v4369, %v4561
      %v4592 = vmul.f32 %v4372, %v4561
      %v4593 = vmul.f32 %v4375, %v4561
      %v4594 = vsel %vm4377, %v4562, 0.0
      %4595 = vadd.xlane.f32.xlu0 %v4594
      %v4596 = vpop.xlane.xlu0 %4595
      %v4597 = vsel %vm4377, %v4563, 0.0
      %4598 = vadd.xlane.f32.xlu0 %v4597
      %v4599 = vpop.xlane.xlu0 %4598
      %v4600 = vsel %vm4377, %v4564, 0.0
      %4601 = vadd.xlane.f32.xlu0 %v4600
      %v4602 = vpop.xlane.xlu0 %4601
      %v4603 = vsel %vm4377, %v4565, 0.0
      %4604 = vadd.xlane.f32.xlu0 %v4603
      %v4605 = vpop.xlane.xlu0 %4604
      %v4606 = vsel %vm4377, %v4566, 0.0
      %4607 = vadd.xlane.f32.xlu0 %v4606
      %v4608 = vpop.xlane.xlu0 %4607
      %v4609 = vsel %vm4377, %v4567, 0.0
      %4610 = vadd.xlane.f32.xlu0 %v4609
      %v4611 = vpop.xlane.xlu0 %4610
      %v4612 = vsel %vm4377, %v4568, 0.0
      %4613 = vadd.xlane.f32.xlu0 %v4612
      %v4614 = vpop.xlane.xlu0 %4613
      %v4615 = vsel %vm4377, %v4569, 0.0
      %4616 = vadd.xlane.f32.xlu0 %v4615
      %v4617 = vpop.xlane.xlu0 %4616
      %v4618 = vsel %vm4377, %v4570, 0.0
      %4619 = vadd.xlane.f32.xlu0 %v4618
      %v4620 = vpop.xlane.xlu0 %4619
      %v4621 = vsel %vm4377, %v4571, 0.0
      %4622 = vadd.xlane.f32.xlu0 %v4621
      %v4623 = vpop.xlane.xlu0 %4622
      %v4624 = vsel %vm4377, %v4572, 0.0
      %4625 = vadd.xlane.f32.xlu0 %v4624
      %v4626 = vpop.xlane.xlu0 %4625
      %v4627 = vsel %vm4377, %v4573, 0.0
      %4628 = vadd.xlane.f32.xlu0 %v4627
      %v4629 = vpop.xlane.xlu0 %4628
      %v4630 = vsel %vm4377, %v4574, 0.0
      %4631 = vadd.xlane.f32.xlu0 %v4630
      %v4632 = vpop.xlane.xlu0 %4631
      %v4633 = vsel %vm4377, %v4575, 0.0
      %4634 = vadd.xlane.f32.xlu0 %v4633
      %v4635 = vpop.xlane.xlu0 %4634
      %v4636 = vsel %vm4377, %v4576, 0.0
      %4637 = vadd.xlane.f32.xlu0 %v4636
      %v4638 = vpop.xlane.xlu0 %4637
      %v4639 = vsel %vm4377, %v4577, 0.0
      %4640 = vadd.xlane.f32.xlu0 %v4639
      %v4641 = vpop.xlane.xlu0 %4640
      %v4642 = vsel %vm4377, %v4578, 0.0
      %4643 = vadd.xlane.f32.xlu0 %v4642
      %v4644 = vpop.xlane.xlu0 %4643
      %v4645 = vsel %vm4377, %v4579, 0.0
      %4646 = vadd.xlane.f32.xlu0 %v4645
      %v4647 = vpop.xlane.xlu0 %4646
      %v4648 = vsel %vm4377, %v4580, 0.0
      %4649 = vadd.xlane.f32.xlu0 %v4648
      %v4650 = vpop.xlane.xlu0 %4649
      %v4651 = vsel %vm4377, %v4581, 0.0
      %4652 = vadd.xlane.f32.xlu0 %v4651
      %v4653 = vpop.xlane.xlu0 %4652
      %v4654 = vsel %vm4377, %v4582, 0.0
      %4655 = vadd.xlane.f32.xlu0 %v4654
      %v4656 = vpop.xlane.xlu0 %4655
      %v4657 = vsel %vm4377, %v4583, 0.0
      %4658 = vadd.xlane.f32.xlu0 %v4657
      %v4659 = vpop.xlane.xlu0 %4658
      %v4660 = vsel %vm4377, %v4584, 0.0
      %4661 = vadd.xlane.f32.xlu0 %v4660
      %v4662 = vpop.xlane.xlu0 %4661
      %v4663 = vsel %vm4377, %v4585, 0.0
      %4664 = vadd.xlane.f32.xlu0 %v4663
      %v4665 = vpop.xlane.xlu0 %4664
      %v4666 = vsel %vm4377, %v4586, 0.0
      %4667 = vadd.xlane.f32.xlu0 %v4666
      %v4668 = vpop.xlane.xlu0 %4667
      %v4669 = vsel %vm4377, %v4587, 0.0
      %4670 = vadd.xlane.f32.xlu0 %v4669
      %v4671 = vpop.xlane.xlu0 %4670
      %v4672 = vsel %vm4377, %v4588, 0.0
      %4673 = vadd.xlane.f32.xlu0 %v4672
      %v4674 = vpop.xlane.xlu0 %4673
      %v4675 = vsel %vm4377, %v4589, 0.0
      %4676 = vadd.xlane.f32.xlu0 %v4675
      %v4677 = vpop.xlane.xlu0 %4676
      %v4678 = vsel %vm4377, %v4590, 0.0
      %4679 = vadd.xlane.f32.xlu0 %v4678
      %v4680 = vpop.xlane.xlu0 %4679
      %v4681 = vsel %vm4377, %v4591, 0.0
      %4682 = vadd.xlane.f32.xlu0 %v4681
      %v4683 = vpop.xlane.xlu0 %4682
      %v4684 = vsel %vm4377, %v4592, 0.0
      %4685 = vadd.xlane.f32.xlu0 %v4684
      %v4686 = vpop.xlane.xlu0 %4685
      %v4687 = vsel %vm4377, %v4593, 0.0
      %4688 = vadd.xlane.f32.xlu0 %v4687
      %v4689 = vpop.xlane.xlu0 %4688
      %v4690 = vrcp.pop 16.0
      %v4691 = vmul.f32 16.0, %v4690
      %v4692 = vsub.f32 1.0, %v4691
      %v4693 = vmul.f32 %v4690, %v4692
      %v4694 = vadd.f32 %v4690, %v4693
      %vm4695 = vweird.f32 %v4690
      %v4696 = vsel %vm4695, %v4690, %v4694
      %v4697 = vmul.f32 %v4596, %v4696
      %v4698 = vmul.f32 %v4599, %v4696
      %v4699 = vmul.f32 %v4602, %v4696
      %v4700 = vmul.f32 %v4605, %v4696
      %v4701 = vmul.f32 %v4608, %v4696
      %v4702 = vmul.f32 %v4611, %v4696
      %v4703 = vmul.f32 %v4614, %v4696
      %v4704 = vmul.f32 %v4617, %v4696
      %v4705 = vmul.f32 %v4620, %v4696
      %v4706 = vmul.f32 %v4623, %v4696
      %v4707 = vmul.f32 %v4626, %v4696
      %v4708 = vmul.f32 %v4629, %v4696
      %v4709 = vmul.f32 %v4632, %v4696
      %v4710 = vmul.f32 %v4635, %v4696
      %v4711 = vmul.f32 %v4638, %v4696
      %v4712 = vmul.f32 %v4641, %v4696
      %v4713 = vmul.f32 %v4644, %v4696
      %v4714 = vmul.f32 %v4647, %v4696
      %v4715 = vmul.f32 %v4650, %v4696
      %v4716 = vmul.f32 %v4653, %v4696
      %v4717 = vmul.f32 %v4656, %v4696
      %v4718 = vmul.f32 %v4659, %v4696
      %v4719 = vmul.f32 %v4662, %v4696
      %v4720 = vmul.f32 %v4665, %v4696
      %v4721 = vmul.f32 %v4668, %v4696
      %v4722 = vmul.f32 %v4671, %v4696
      %v4723 = vmul.f32 %v4674, %v4696
      %v4724 = vmul.f32 %v4677, %v4696
      %v4725 = vmul.f32 %v4680, %v4696
      %v4726 = vmul.f32 %v4683, %v4696
      %v4727 = vmul.f32 %v4686, %v4696
      %v4728 = vmul.f32 %v4689, %v4696
      %v4729 = vsel %vm4377, %v4562, -inf
      %4730 = vmax.xlane.f32.xlu0 %v4729
      %v4731 = vpop.xlane.xlu0 %4730
      %v4732 = vsel %vm4377, %v4563, -inf
      %4733 = vmax.xlane.f32.xlu0 %v4732
      %v4734 = vpop.xlane.xlu0 %4733
      %v4735 = vsel %vm4377, %v4564, -inf
      %4736 = vmax.xlane.f32.xlu0 %v4735
      %v4737 = vpop.xlane.xlu0 %4736
      %v4738 = vsel %vm4377, %v4565, -inf
      %4739 = vmax.xlane.f32.xlu0 %v4738
      %v4740 = vpop.xlane.xlu0 %4739
      %v4741 = vsel %vm4377, %v4566, -inf
      %4742 = vmax.xlane.f32.xlu0 %v4741
      %v4743 = vpop.xlane.xlu0 %4742
      %v4744 = vsel %vm4377, %v4567, -inf
      %4745 = vmax.xlane.f32.xlu0 %v4744
      %v4746 = vpop.xlane.xlu0 %4745
      %v4747 = vsel %vm4377, %v4568, -inf
      %4748 = vmax.xlane.f32.xlu0 %v4747
      %v4749 = vpop.xlane.xlu0 %4748
      %v4750 = vsel %vm4377, %v4569, -inf
      %4751 = vmax.xlane.f32.xlu0 %v4750
      %v4752 = vpop.xlane.xlu0 %4751
      %v4753 = vsel %vm4377, %v4570, -inf
      %4754 = vmax.xlane.f32.xlu0 %v4753
      %v4755 = vpop.xlane.xlu0 %4754
      %v4756 = vsel %vm4377, %v4571, -inf
      %4757 = vmax.xlane.f32.xlu0 %v4756
      %v4758 = vpop.xlane.xlu0 %4757
      %v4759 = vsel %vm4377, %v4572, -inf
      %4760 = vmax.xlane.f32.xlu0 %v4759
      %v4761 = vpop.xlane.xlu0 %4760
      %v4762 = vsel %vm4377, %v4573, -inf
      %4763 = vmax.xlane.f32.xlu0 %v4762
      %v4764 = vpop.xlane.xlu0 %4763
      %v4765 = vsel %vm4377, %v4574, -inf
      %4766 = vmax.xlane.f32.xlu0 %v4765
      %v4767 = vpop.xlane.xlu0 %4766
      %v4768 = vsel %vm4377, %v4575, -inf
      %4769 = vmax.xlane.f32.xlu0 %v4768
      %v4770 = vpop.xlane.xlu0 %4769
      %v4771 = vsel %vm4377, %v4576, -inf
      %4772 = vmax.xlane.f32.xlu0 %v4771
      %v4773 = vpop.xlane.xlu0 %4772
      %v4774 = vsel %vm4377, %v4577, -inf
      %4775 = vmax.xlane.f32.xlu0 %v4774
      %v4776 = vpop.xlane.xlu0 %4775
      %v4777 = vsel %vm4377, %v4578, -inf
      %4778 = vmax.xlane.f32.xlu0 %v4777
      %v4779 = vpop.xlane.xlu0 %4778
      %v4780 = vsel %vm4377, %v4579, -inf
      %4781 = vmax.xlane.f32.xlu0 %v4780
      %v4782 = vpop.xlane.xlu0 %4781
      %v4783 = vsel %vm4377, %v4580, -inf
      %4784 = vmax.xlane.f32.xlu0 %v4783
      %v4785 = vpop.xlane.xlu0 %4784
      %v4786 = vsel %vm4377, %v4581, -inf
      %4787 = vmax.xlane.f32.xlu0 %v4786
      %v4788 = vpop.xlane.xlu0 %4787
      %v4789 = vsel %vm4377, %v4582, -inf
      %4790 = vmax.xlane.f32.xlu0 %v4789
      %v4791 = vpop.xlane.xlu0 %4790
      %v4792 = vsel %vm4377, %v4583, -inf
      %4793 = vmax.xlane.f32.xlu0 %v4792
      %v4794 = vpop.xlane.xlu0 %4793
      %v4795 = vsel %vm4377, %v4584, -inf
      %4796 = vmax.xlane.f32.xlu0 %v4795
      %v4797 = vpop.xlane.xlu0 %4796
      %v4798 = vsel %vm4377, %v4585, -inf
      %4799 = vmax.xlane.f32.xlu0 %v4798
      %v4800 = vpop.xlane.xlu0 %4799
      %v4801 = vsel %vm4377, %v4586, -inf
      %4802 = vmax.xlane.f32.xlu0 %v4801
      %v4803 = vpop.xlane.xlu0 %4802
      %v4804 = vsel %vm4377, %v4587, -inf
      %4805 = vmax.xlane.f32.xlu0 %v4804
      %v4806 = vpop.xlane.xlu0 %4805
      %v4807 = vsel %vm4377, %v4588, -inf
      %4808 = vmax.xlane.f32.xlu0 %v4807
      %v4809 = vpop.xlane.xlu0 %4808
      %v4810 = vsel %vm4377, %v4589, -inf
      %4811 = vmax.xlane.f32.xlu0 %v4810
      %v4812 = vpop.xlane.xlu0 %4811
      %v4813 = vsel %vm4377, %v4590, -inf
      %4814 = vmax.xlane.f32.xlu0 %v4813
      %v4815 = vpop.xlane.xlu0 %4814
      %v4816 = vsel %vm4377, %v4591, -inf
      %4817 = vmax.xlane.f32.xlu0 %v4816
      %v4818 = vpop.xlane.xlu0 %4817
      %v4819 = vsel %vm4377, %v4592, -inf
      %4820 = vmax.xlane.f32.xlu0 %v4819
      %v4821 = vpop.xlane.xlu0 %4820
      %v4822 = vsel %vm4377, %v4593, -inf
      %4823 = vmax.xlane.f32.xlu0 %v4822
      %v4824 = vpop.xlane.xlu0 %4823
      %v4857 = vlaneseq
      %v4858 = vand.u32 %v4857, 127
      %v4859 = vadd.s32 %v4858, 4294967293
      %v4860 = vperm.slane %v4697, %v4859
      %v4861 = vadd.s32 %v4858, 4294967285
      %v4862 = vperm.slane %v4698, %v4861
      %vm4863 = vcmask 154712
      %v4864 = vsel %vm4863, %v4862, %v4860
      %v4865 = vperm.slane %v4699, %v4859
      %v4866 = vperm.slane %v4700, %v4861
      %v4867 = vsel %vm4863, %v4866, %v4865
      %v4868 = vperm.slane %v4701, %v4859
      %v4869 = vperm.slane %v4702, %v4861
      %v4870 = vsel %vm4863, %v4869, %v4868
      %v4871 = vperm.slane %v4703, %v4859
      %v4872 = vperm.slane %v4704, %v4861
      %v4873 = vsel %vm4863, %v4872, %v4871
      %v4874 = vperm.slane %v4705, %v4859
      %v4875 = vperm.slane %v4706, %v4861
      %v4876 = vsel %vm4863, %v4875, %v4874
      %v4877 = vperm.slane %v4707, %v4859
      %v4878 = vperm.slane %v4708, %v4861
      %v4879 = vsel %vm4863, %v4878, %v4877
      %v4880 = vperm.slane %v4709, %v4859
      %v4881 = vperm.slane %v4710, %v4861
      %v4882 = vsel %vm4863, %v4881, %v4880
      %v4883 = vperm.slane %v4711, %v4859
      %v4884 = vperm.slane %v4712, %v4861
      %v4885 = vsel %vm4863, %v4884, %v4883
      %v4886 = vperm.slane %v4713, %v4859
      %v4887 = vperm.slane %v4714, %v4861
      %v4888 = vsel %vm4863, %v4887, %v4886
      %v4889 = vperm.slane %v4715, %v4859
      %v4890 = vperm.slane %v4716, %v4861
      %v4891 = vsel %vm4863, %v4890, %v4889
      %v4892 = vperm.slane %v4717, %v4859
      %v4893 = vperm.slane %v4718, %v4861
      %v4894 = vsel %vm4863, %v4893, %v4892
      %v4895 = vperm.slane %v4719, %v4859
      %v4896 = vperm.slane %v4720, %v4861
      %v4897 = vsel %vm4863, %v4896, %v4895
      %v4898 = vperm.slane %v4721, %v4859
      %v4899 = vperm.slane %v4722, %v4861
      %v4900 = vsel %vm4863, %v4899, %v4898
      %v4901 = vperm.slane %v4723, %v4859
      %v4902 = vperm.slane %v4724, %v4861
      %v4903 = vsel %vm4863, %v4902, %v4901
      %v4904 = vperm.slane %v4725, %v4859
      %v4905 = vperm.slane %v4726, %v4861
      %v4906 = vsel %vm4863, %v4905, %v4904
      %v4907 = vperm.slane %v4727, %v4859
      %v4908 = vperm.slane %v4728, %v4861
      %v4909 = vsel %vm4863, %v4908, %v4907
      %vm4910 = vcmask 1041409
      %v4911 = vsel %vm4910, %v4867, %v4864
      %vm4912 = vcmask 1042434
      %v4913 = vsel %vm4912, %v4870, %v4911
      %vm4914 = vcmask 1043459
      %v4915 = vsel %vm4914, %v4873, %v4913
      %vm4916 = vcmask 1044484
      %v4917 = vsel %vm4916, %v4876, %v4915
      %vm4918 = vcmask 1045509
      %v4919 = vsel %vm4918, %v4879, %v4917
      %vm4920 = vcmask 1046534
      %v4921 = vsel %vm4920, %v4882, %v4919
      %vm4922 = vcmask 1047559
      %v4923 = vsel %vm4922, %v4885, %v4921
      %v4924 = vsel %vm4910, %v4891, %v4888
      %v4925 = vsel %vm4912, %v4894, %v4924
      %v4926 = vsel %vm4914, %v4897, %v4925
      %v4927 = vsel %vm4916, %v4900, %v4926
      %v4928 = vsel %vm4918, %v4903, %v4927
      %v4929 = vsel %vm4920, %v4906, %v4928
      %v4930 = vsel %vm4922, %v4909, %v4929
      %vm4933 = vcmask 154648
      %4934 = vst.msk [vmem:[#allocation6 + $0x3] sm:$0xff] %vm4933, %v4923
      %4935 = vst.msk [vmem:[#allocation6 + $0xb] sm:$0xff] %vm4933, %v4930
      %vm4937 = vcmask 147480
      %4938 = vst.msk [vmem:[#allocation6] sm:$0x1] %vm4937, %v4873
      %4940 = vst.msk [vmem:[#allocation6 + $0x1] sm:$0x1] %vm4937, %v4870
      %4942 = vst.msk [vmem:[#allocation6 + $0x2] sm:$0x1] %vm4937, %v4867
      %4944 = vst.msk [vmem:[#allocation6 + $0x13] sm:$0x1] %vm4937, %v4906
      %4946 = vst.msk [vmem:[#allocation6 + $0x14] sm:$0x1] %vm4937, %v4903
      %4948 = vst.msk [vmem:[#allocation6 + $0x15] sm:$0x1] %vm4937, %v4900
      %v4949 = vld [vmem:[#allocation6] sm:$0xff]
      %v4950 = vld [vmem:[#allocation6 + $0x8] sm:$0xff]
      %v4951 = vld [vmem:[#allocation6 + $0x10] sm:$0x3f]
      %4955 = vrot.lane.b32.xlu0 %v4949, 122
      %v4956 = vpop.permute.xlu0 %4955
      %4957 = vrot.lane.b32.xlu0 %v4950, 122
      %v4958 = vpop.permute.xlu0 %4957
      %4959 = vrot.lane.b32.xlu0 %v4951, 122
      %v4960 = vpop.permute.xlu0 %4959
      %vm4964 = vcmask 7168
      %4965 = vst.msk [vmem:[#allocation6] sm:$0xff] %vm4964, %v4956
      %4966 = vst.msk [vmem:[#allocation6 + $0x8] sm:$0xff] %vm4964, %v4958
      %vm4967 = vcmask 5120
      %4968 = vst.msk [vmem:[#allocation6 + $0x10] sm:$0x3f] %vm4967, %v4960
      %v4969 = vld [vmem:[#allocation6] sm:$0xff]
      %v4970 = vld [vmem:[#allocation6 + $0x8] sm:$0xff]
      %v4971 = vld [vmem:[#allocation6 + $0x10] sm:$0x3f]
      %4975 = vrot.lane.b32.xlu0 %v4969, 124
      %v4976 = vpop.permute.xlu0 %4975
      %4977 = vrot.lane.b32.xlu0 %v4970, 124
      %v4978 = vpop.permute.xlu0 %4977
      %4979 = vrot.lane.b32.xlu0 %v4971, 124
      %v4980 = vpop.permute.xlu0 %4979
      %vm4984 = vcmask 15368
      %4985 = vst.msk [vmem:[#allocation6] sm:$0xff] %vm4984, %v4976
      %4986 = vst.msk [vmem:[#allocation6 + $0x8] sm:$0xff] %vm4984, %v4978
      %vm4987 = vcmask 13320
      %4988 = vst.msk [vmem:[#allocation6 + $0x10] sm:$0x3f] %vm4987, %v4980
      %v4989 = vld [vmem:[#allocation6] sm:$0xff]
      %v4990 = vld [vmem:[#allocation6 + $0x8] sm:$0xff]
      %v4991 = vld [vmem:[#allocation6 + $0x10] sm:$0x3f]
      %4995 = vrot.lane.b32.xlu0 %v4989, 126
      %v4996 = vpop.permute.xlu0 %4995
      %4997 = vrot.lane.b32.xlu0 %v4990, 126
      %v4998 = vpop.permute.xlu0 %4997
      %4999 = vrot.lane.b32.xlu0 %v4991, 126
      %v5000 = vpop.permute.xlu0 %4999
      %vm5004 = vcmask 23568
      %5005 = vst.msk [vmem:[#allocation6] sm:$0xff] %vm5004, %v4996
      %5006 = vst.msk [vmem:[#allocation6 + $0x8] sm:$0xff] %vm5004, %v4998
      %vm5007 = vcmask 21520
      %5008 = vst.msk [vmem:[#allocation6 + $0x10] sm:$0x3f] %vm5007, %v5000
      %v5009 = vld [vmem:[#allocation6] sm:$0xff]
      %v5010 = vld [vmem:[#allocation6 + $0x8] sm:$0xff]
      %v5011 = vld [vmem:[#allocation6 + $0x10] sm:$0x3f]
      %5015 = vrot.lane.b32.xlu0 %v5009, 2
      %v5016 = vpop.permute.xlu0 %5015
      %5017 = vrot.lane.b32.xlu0 %v5010, 2
      %v5018 = vpop.permute.xlu0 %5017
      %5019 = vrot.lane.b32.xlu0 %v5011, 2
      %v5020 = vpop.permute.xlu0 %5019
      %vm5024 = vcmask 162968
      %5025 = vst.msk [vmem:[#allocation6] sm:$0xff] %vm5024, %v5016
      %5026 = vst.msk [vmem:[#allocation6 + $0x8] sm:$0xff] %vm5024, %v5018
      %vm5027 = vcmask 160920
      %5028 = vst.msk [vmem:[#allocation6 + $0x10] sm:$0x3f] %vm5027, %v5020
      %v5029 = vld [vmem:[#allocation6] sm:$0xff]
      %v5030 = vld [vmem:[#allocation6 + $0x8] sm:$0xff]
      %v5031 = vld [vmem:[#allocation6 + $0x10] sm:$0x3f]
      %5035 = vrot.lane.b32.xlu0 %v5029, 4
      %v5036 = vpop.permute.xlu0 %5035
      %5037 = vrot.lane.b32.xlu0 %v5030, 4
      %v5038 = vpop.permute.xlu0 %5037
      %5039 = vrot.lane.b32.xlu0 %v5031, 4
      %v5040 = vpop.permute.xlu0 %5039
      %vm5044 = vcmask 171168
      %5045 = vst.msk [vmem:[#allocation6] sm:$0xff] %vm5044, %v5036
      %5046 = vst.msk [vmem:[#allocation6 + $0x8] sm:$0xff] %vm5044, %v5038
      %vm5047 = vcmask 169120
      %5048 = vst.msk [vmem:[#allocation6 + $0x10] sm:$0x3f] %vm5047, %v5040
      %v5049 = vld [vmem:[#allocation6] sm:$0xff]
      %v5050 = vld [vmem:[#allocation6 + $0x8] sm:$0xff]
      %v5051 = vld [vmem:[#allocation6 + $0x10] sm:$0x3f]
      %5055 = vrot.lane.b32.xlu0 %v5049, 6
      %v5056 = vpop.permute.xlu0 %5055
      %5057 = vrot.lane.b32.xlu0 %v5050, 6
      %v5058 = vpop.permute.xlu0 %5057
      %5059 = vrot.lane.b32.xlu0 %v5051, 6
      %v5060 = vpop.permute.xlu0 %5059
      %vm5064 = vcmask 179368
      %5065 = vst.msk [vmem:[#allocation6] sm:$0xff] %vm5064, %v5056
      %5066 = vst.msk [vmem:[#allocation6 + $0x8] sm:$0xff] %vm5064, %v5058
      %vm5067 = vcmask 177320
      %5068 = vst.msk [vmem:[#allocation6 + $0x10] sm:$0x3f] %vm5067, %v5060
      %v5101 = vperm.slane %v4731, %v4859
      %v5102 = vperm.slane %v4734, %v4861
      %v5103 = vsel %vm4863, %v5102, %v5101
      %v5104 = vperm.slane %v4737, %v4859
      %v5105 = vperm.slane %v4740, %v4861
      %v5106 = vsel %vm4863, %v5105, %v5104
      %v5107 = vperm.slane %v4743, %v4859
      %v5108 = vperm.slane %v4746, %v4861
      %v5109 = vsel %vm4863, %v5108, %v5107
      %v5110 = vperm.slane %v4749, %v4859
      %v5111 = vperm.slane %v4752, %v4861
      %v5112 = vsel %vm4863, %v5111, %v5110
      %v5113 = vperm.slane %v4755, %v4859
      %v5114 = vperm.slane %v4758, %v4861
      %v5115 = vsel %vm4863, %v5114, %v5113
      %v5116 = vperm.slane %v4761, %v4859
      %v5117 = vperm.slane %v4764, %v4861
      %v5118 = vsel %vm4863, %v5117, %v5116
      %v5119 = vperm.slane %v4767, %v4859
      %v5120 = vperm.slane %v4770, %v4861
      %v5121 = vsel %vm4863, %v5120, %v5119
      %v5122 = vperm.slane %v4773, %v4859
      %v5123 = vperm.slane %v4776, %v4861
      %v5124 = vsel %vm4863, %v5123, %v5122
      %v5125 = vperm.slane %v4779, %v4859
      %v5126 = vperm.slane %v4782, %v4861
      %v5127 = vsel %vm4863, %v5126, %v5125
      %v5128 = vperm.slane %v4785, %v4859
      %v5129 = vperm.slane %v4788, %v4861
      %v5130 = vsel %vm4863, %v5129, %v5128
      %v5131 = vperm.slane %v4791, %v4859
      %v5132 = vperm.slane %v4794, %v4861
      %v5133 = vsel %vm4863, %v5132, %v5131
      %v5134 = vperm.slane %v4797, %v4859
      %v5135 = vperm.slane %v4800, %v4861
      %v5136 = vsel %vm4863, %v5135, %v5134
      %v5137 = vperm.slane %v4803, %v4859
      %v5138 = vperm.slane %v4806, %v4861
      %v5139 = vsel %vm4863, %v5138, %v5137
      %v5140 = vperm.slane %v4809, %v4859
      %v5141 = vperm.slane %v4812, %v4861
      %v5142 = vsel %vm4863, %v5141, %v5140
      %v5143 = vperm.slane %v4815, %v4859
      %v5144 = vperm.slane %v4818, %v4861
      %v5145 = vsel %vm4863, %v5144, %v5143
      %v5146 = vperm.slane %v4821, %v4859
      %v5147 = vperm.slane %v4824, %v4861
      %v5148 = vsel %vm4863, %v5147, %v5146
      %v5149 = vsel %vm4910, %v5106, %v5103
      %v5150 = vsel %vm4912, %v5109, %v5149
      %v5151 = vsel %vm4914, %v5112, %v5150
      %v5152 = vsel %vm4916, %v5115, %v5151
      %v5153 = vsel %vm4918, %v5118, %v5152
      %v5154 = vsel %vm4920, %v5121, %v5153
      %v5155 = vsel %vm4922, %v5124, %v5154
      %v5156 = vsel %vm4910, %v5130, %v5127
      %v5157 = vsel %vm4912, %v5133, %v5156
      %v5158 = vsel %vm4914, %v5136, %v5157
      %v5159 = vsel %vm4916, %v5139, %v5158
      %v5160 = vsel %vm4918, %v5142, %v5159
      %v5161 = vsel %vm4920, %v5145, %v5160
      %v5162 = vsel %vm4922, %v5148, %v5161
      %5165 = vst.msk [vmem:[#allocation7 + $0x3] sm:$0xff] %vm4933, %v5155
      %5166 = vst.msk [vmem:[#allocation7 + $0xb] sm:$0xff] %vm4933, %v5162
      %5168 = vst.msk [vmem:[#allocation7] sm:$0x1] %vm4937, %v5112
      %5170 = vst.msk [vmem:[#allocation7 + $0x1] sm:$0x1] %vm4937, %v5109
      %5172 = vst.msk [vmem:[#allocation7 + $0x2] sm:$0x1] %vm4937, %v5106
      %5174 = vst.msk [vmem:[#allocation7 + $0x13] sm:$0x1] %vm4937, %v5145
      %5176 = vst.msk [vmem:[#allocation7 + $0x14] sm:$0x1] %vm4937, %v5142
      %5178 = vst.msk [vmem:[#allocation7 + $0x15] sm:$0x1] %vm4937, %v5139
      %v5179 = vld [vmem:[#allocation7] sm:$0xff]
      %v5180 = vld [vmem:[#allocation7 + $0x8] sm:$0xff]
      %v5181 = vld [vmem:[#allocation7 + $0x10] sm:$0x3f]
      %5185 = vrot.lane.b32.xlu0 %v5179, 122
      %v5186 = vpop.permute.xlu0 %5185
      %5187 = vrot.lane.b32.xlu0 %v5180, 122
      %v5188 = vpop.permute.xlu0 %5187
      %5189 = vrot.lane.b32.xlu0 %v5181, 122
      %v5190 = vpop.permute.xlu0 %5189
      %5194 = vst.msk [vmem:[#allocation7] sm:$0xff] %vm4964, %v5186
      %5195 = vst.msk [vmem:[#allocation7 + $0x8] sm:$0xff] %vm4964, %v5188
      %5196 = vst.msk [vmem:[#allocation7 + $0x10] sm:$0x3f] %vm4967, %v5190
      %v5197 = vld [vmem:[#allocation7] sm:$0xff]
      %v5198 = vld [vmem:[#allocation7 + $0x8] sm:$0xff]
      %v5199 = vld [vmem:[#allocation7 + $0x10] sm:$0x3f]
      %5203 = vrot.lane.b32.xlu0 %v5197, 124
      %v5204 = vpop.permute.xlu0 %5203
      %5205 = vrot.lane.b32.xlu0 %v5198, 124
      %v5206 = vpop.permute.xlu0 %5205
      %5207 = vrot.lane.b32.xlu0 %v5199, 124
      %v5208 = vpop.permute.xlu0 %5207
      %5212 = vst.msk [vmem:[#allocation7] sm:$0xff] %vm4984, %v5204
      %5213 = vst.msk [vmem:[#allocation7 + $0x8] sm:$0xff] %vm4984, %v5206
      %5214 = vst.msk [vmem:[#allocation7 + $0x10] sm:$0x3f] %vm4987, %v5208
      %v5215 = vld [vmem:[#allocation7] sm:$0xff]
      %v5216 = vld [vmem:[#allocation7 + $0x8] sm:$0xff]
      %v5217 = vld [vmem:[#allocation7 + $0x10] sm:$0x3f]
      %5221 = vrot.lane.b32.xlu0 %v5215, 126
      %v5222 = vpop.permute.xlu0 %5221
      %5223 = vrot.lane.b32.xlu0 %v5216, 126
      %v5224 = vpop.permute.xlu0 %5223
      %5225 = vrot.lane.b32.xlu0 %v5217, 126
      %v5226 = vpop.permute.xlu0 %5225
      %5230 = vst.msk [vmem:[#allocation7] sm:$0xff] %vm5004, %v5222
      %5231 = vst.msk [vmem:[#allocation7 + $0x8] sm:$0xff] %vm5004, %v5224
      %5232 = vst.msk [vmem:[#allocation7 + $0x10] sm:$0x3f] %vm5007, %v5226
      %v5233 = vld [vmem:[#allocation7] sm:$0xff]
      %v5234 = vld [vmem:[#allocation7 + $0x8] sm:$0xff]
      %v5235 = vld [vmem:[#allocation7 + $0x10] sm:$0x3f]
      %5239 = vrot.lane.b32.xlu0 %v5233, 2
      %v5240 = vpop.permute.xlu0 %5239
      %5241 = vrot.lane.b32.xlu0 %v5234, 2
      %v5242 = vpop.permute.xlu0 %5241
      %5243 = vrot.lane.b32.xlu0 %v5235, 2
      %v5244 = vpop.permute.xlu0 %5243
      %5248 = vst.msk [vmem:[#allocation7] sm:$0xff] %vm5024, %v5240
      %5249 = vst.msk [vmem:[#allocation7 + $0x8] sm:$0xff] %vm5024, %v5242
      %5250 = vst.msk [vmem:[#allocation7 + $0x10] sm:$0x3f] %vm5027, %v5244
      %v5251 = vld [vmem:[#allocation7] sm:$0xff]
      %v5252 = vld [vmem:[#allocation7 + $0x8] sm:$0xff]
      %v5253 = vld [vmem:[#allocation7 + $0x10] sm:$0x3f]
      %5257 = vrot.lane.b32.xlu0 %v5251, 4
      %v5258 = vpop.permute.xlu0 %5257
      %5259 = vrot.lane.b32.xlu0 %v5252, 4
      %v5260 = vpop.permute.xlu0 %5259
      %5261 = vrot.lane.b32.xlu0 %v5253, 4
      %v5262 = vpop.permute.xlu0 %5261
      %5266 = vst.msk [vmem:[#allocation7] sm:$0xff] %vm5044, %v5258
      %5267 = vst.msk [vmem:[#allocation7 + $0x8] sm:$0xff] %vm5044, %v5260
      %5268 = vst.msk [vmem:[#allocation7 + $0x10] sm:$0x3f] %vm5047, %v5262
      %v5269 = vld [vmem:[#allocation7] sm:$0xff]
      %v5270 = vld [vmem:[#allocation7 + $0x8] sm:$0xff]
      %v5271 = vld [vmem:[#allocation7 + $0x10] sm:$0x3f]
      %5275 = vrot.lane.b32.xlu0 %v5269, 6
      %v5276 = vpop.permute.xlu0 %5275
      %5277 = vrot.lane.b32.xlu0 %v5270, 6
      %v5278 = vpop.permute.xlu0 %5277
      %5279 = vrot.lane.b32.xlu0 %v5271, 6
      %v5280 = vpop.permute.xlu0 %5279
      %5284 = vst.msk [vmem:[#allocation7] sm:$0xff] %vm5064, %v5276
      %5285 = vst.msk [vmem:[#allocation7 + $0x8] sm:$0xff] %vm5064, %v5278
      %5286 = vst.msk [vmem:[#allocation7 + $0x10] sm:$0x3f] %vm5067, %v5280
      %v5287 = vld [vmem:[#allocation6] sm:$0xff]
      %v5288 = vld [vmem:[#allocation6 + $0x8] sm:$0xff]
      %vm5289 = vcmask 179200
      %5290 = vst.msk [vmem:[#allocation8] sm:$0xff] %vm5289, %v5287
      %5291 = vst.msk [vmem:[#allocation8 + $0x18] sm:$0xff] %vm5289, %v5288
      %v5292 = vld [vmem:[#allocation7] sm:$0xff]
      %v5293 = vld [vmem:[#allocation7 + $0x8] sm:$0xff]
      %5296 = vrot.lane.b32.xlu0 %v5292, 26
      %v5297 = vpop.permute.xlu0 %5296
      %5298 = vrot.lane.b32.xlu0 %v5293, 26
      %v5299 = vpop.permute.xlu0 %5298
      %vm5302 = vcmask 392400
      %5303 = vst.msk [vmem:[#allocation8 + $0x8] sm:$0xff] %vm5302, %v5297
      %5304 = vst.msk [vmem:[#allocation8 + $0x20] sm:$0xff] %vm5302, %v5299
      %v5305 = vld [vmem:[#allocation6 + $0x1] sm:$0xff]
      %v5306 = vld [vmem:[#allocation6 + $0x9] sm:$0xff]
      %5309 = vrot.lane.b32.xlu0 %v5305, 22
      %v5310 = vpop.permute.xlu0 %5309
      %5311 = vrot.lane.b32.xlu0 %v5306, 22
      %v5312 = vpop.permute.xlu0 %5311
      %vm5315 = vcmask 359600
      %5316 = vst.msk [vmem:[#allocation8] sm:$0xff] %vm5315, %v5310
      %5317 = vst.msk [vmem:[#allocation8 + $0x18] sm:$0xff] %vm5315, %v5312
      %v5318 = vld [vmem:[#allocation7 + $0x1] sm:$0xff]
      %v5319 = vld [vmem:[#allocation7 + $0x9] sm:$0xff]
      %5322 = vrot.lane.b32.xlu0 %v5318, 48
      %v5323 = vpop.permute.xlu0 %5322
      %5324 = vrot.lane.b32.xlu0 %v5319, 48
      %v5325 = vpop.permute.xlu0 %5324
      %vm5328 = vcmask 572800
      %5329 = vst.msk [vmem:[#allocation8 + $0x8] sm:$0xff] %vm5328, %v5323
      %5330 = vst.msk [vmem:[#allocation8 + $0x20] sm:$0xff] %vm5328, %v5325
      %v5331 = vld [vmem:[#allocation6 + $0x2] sm:$0xff]
      %v5332 = vld [vmem:[#allocation6 + $0xa] sm:$0xff]
      %5335 = vrot.lane.b32.xlu0 %v5331, 44
      %v5336 = vpop.permute.xlu0 %5335
      %5337 = vrot.lane.b32.xlu0 %v5332, 44
      %v5338 = vpop.permute.xlu0 %5337
      %vm5341 = vcmask 540000
      %5342 = vst.msk [vmem:[#allocation8] sm:$0xff] %vm5341, %v5336
      %5343 = vst.msk [vmem:[#allocation8 + $0x18] sm:$0xff] %vm5341, %v5338
      %v5344 = vld [vmem:[#allocation7 + $0x2] sm:$0xff]
      %v5345 = vld [vmem:[#allocation7 + $0xa] sm:$0xff]
      %5348 = vrot.lane.b32.xlu0 %v5344, 70
      %v5349 = vpop.permute.xlu0 %5348
      %5350 = vrot.lane.b32.xlu0 %v5345, 70
      %v5351 = vpop.permute.xlu0 %5350
      %vm5354 = vcmask 753200
      %5355 = vst.msk [vmem:[#allocation8 + $0x8] sm:$0xff] %vm5354, %v5349
      %5356 = vst.msk [vmem:[#allocation8 + $0x20] sm:$0xff] %vm5354, %v5351
      %v5357 = vld [vmem:[#allocation6 + $0x3] sm:$0xff]
      %v5358 = vld [vmem:[#allocation6 + $0xb] sm:$0xff]
      %5361 = vrot.lane.b32.xlu0 %v5357, 66
      %v5362 = vpop.permute.xlu0 %5361
      %5363 = vrot.lane.b32.xlu0 %v5358, 66
      %v5364 = vpop.permute.xlu0 %5363
      %vm5367 = vcmask 720400
      %5368 = vst.msk [vmem:[#allocation8] sm:$0xff] %vm5367, %v5362
      %5369 = vst.msk [vmem:[#allocation8 + $0x18] sm:$0xff] %vm5367, %v5364
      %v5370 = vld [vmem:[#allocation7 + $0x3] sm:$0xff]
      %v5371 = vld [vmem:[#allocation7 + $0xb] sm:$0xff]
      %5374 = vrot.lane.b32.xlu0 %v5370, 92
      %v5375 = vpop.permute.xlu0 %5374
      %5376 = vrot.lane.b32.xlu0 %v5371, 92
      %v5377 = vpop.permute.xlu0 %5376
      %vm5380 = vcmask 933600
      %5381 = vst.msk [vmem:[#allocation8 + $0x8] sm:$0xff] %vm5380, %v5375
      %5382 = vst.msk [vmem:[#allocation8 + $0x20] sm:$0xff] %vm5380, %v5377
      %v5383 = vld [vmem:[#allocation6 + $0x4] sm:$0xff]
      %v5384 = vld [vmem:[#allocation6 + $0xc] sm:$0xff]
      %5387 = vrot.lane.b32.xlu0 %v5383, 88
      %v5388 = vpop.permute.xlu0 %5387
      %5389 = vrot.lane.b32.xlu0 %v5384, 88
      %v5390 = vpop.permute.xlu0 %5389
      %vm5393 = vcmask 900800
      %5394 = vst.msk [vmem:[#allocation8] sm:$0xff] %vm5393, %v5388
      %5395 = vst.msk [vmem:[#allocation8 + $0x18] sm:$0xff] %vm5393, %v5390
      %v5396 = vld [vmem:[#allocation7 + $0x4] sm:$0xff]
      %v5397 = vld [vmem:[#allocation7 + $0xc] sm:$0xff]
      %5400 = vrot.lane.b32.xlu0 %v5396, 114
      %v5401 = vpop.permute.xlu0 %5400
      %5402 = vrot.lane.b32.xlu0 %v5397, 114
      %v5403 = vpop.permute.xlu0 %5402
      %vm5406 = vcmask 1048464
      %5407 = vst.msk [vmem:[#allocation8 + $0x8] sm:$0xff] %vm5406, %v5401
      %vm5408 = vcmask 64512
      %5409 = vst.msk [vmem:[#allocation8 + $0x10] sm:$0xff] %vm5408, %v5401
      %5410 = vst.msk [vmem:[#allocation8 + $0x20] sm:$0xff] %vm5406, %v5403
      %5411 = vst.msk [vmem:[#allocation8 + $0x28] sm:$0xff] %vm5408, %v5403
      %v5412 = vld [vmem:[#allocation6 + $0x5] sm:$0xff]
      %v5413 = vld [vmem:[#allocation6 + $0xd] sm:$0xff]
      %5416 = vrot.lane.b32.xlu0 %v5412, 110
      %v5417 = vpop.permute.xlu0 %5416
      %5418 = vrot.lane.b32.xlu0 %v5413, 110
      %v5419 = vpop.permute.xlu0 %5418
      %vm5422 = vcmask 1048432
      %5423 = vst.msk [vmem:[#allocation8] sm:$0xff] %vm5422, %v5417
      %5424 = vst.msk [vmem:[#allocation8 + $0x8] sm:$0xff] %vm2402, %v5417
      %5425 = vst.msk [vmem:[#allocation8 + $0x18] sm:$0xff] %vm5422, %v5419
      %5426 = vst.msk [vmem:[#allocation8 + $0x20] sm:$0xff] %vm2402, %v5419
      %v5427 = vld [vmem:[#allocation7 + $0x5] sm:$0xff]
      %v5428 = vld [vmem:[#allocation7 + $0xd] sm:$0xff]
      %5431 = vrot.lane.b32.xlu0 %v5427, 8
      %v5432 = vpop.permute.xlu0 %5431
      %5433 = vrot.lane.b32.xlu0 %v5428, 8
      %v5434 = vpop.permute.xlu0 %5433
      %vm5437 = vcmask 244800
      %5438 = vst.msk [vmem:[#allocation8 + $0x10] sm:$0xff] %vm5437, %v5432
      %5439 = vst.msk [vmem:[#allocation8 + $0x28] sm:$0xff] %vm5437, %v5434
      %v5440 = vld [vmem:[#allocation6 + $0x6] sm:$0xff]
      %v5441 = vld [vmem:[#allocation6 + $0xe] sm:$0xff]
      %5444 = vrot.lane.b32.xlu0 %v5440, 4
      %v5445 = vpop.permute.xlu0 %5444
      %5446 = vrot.lane.b32.xlu0 %v5441, 4
      %v5447 = vpop.permute.xlu0 %5446
      %vm5450 = vcmask 212000
      %5451 = vst.msk [vmem:[#allocation8 + $0x8] sm:$0xff] %vm5450, %v5445
      %5452 = vst.msk [vmem:[#allocation8 + $0x20] sm:$0xff] %vm5450, %v5447
      %v5453 = vld [vmem:[#allocation7 + $0x6] sm:$0xff]
      %v5454 = vld [vmem:[#allocation7 + $0xe] sm:$0xff]
      %5457 = vrot.lane.b32.xlu0 %v5453, 30
      %v5458 = vpop.permute.xlu0 %5457
      %5459 = vrot.lane.b32.xlu0 %v5454, 30
      %v5460 = vpop.permute.xlu0 %5459
      %vm5463 = vcmask 425200
      %5464 = vst.msk [vmem:[#allocation8 + $0x10] sm:$0xff] %vm5463, %v5458
      %5465 = vst.msk [vmem:[#allocation8 + $0x28] sm:$0xff] %vm5463, %v5460
      %v5466 = vld [vmem:[#allocation8] sm:$0xff]
      %v5467 = vld [vmem:[#allocation8 + $0x8] sm:$0xff]
      %v5468 = vld [vmem:[#allocation8 + $0x10] sm:$0xff]
      %v5469 = vld [vmem:[#allocation8 + $0x18] sm:$0xff]
      %v5470 = vld [vmem:[#allocation8 + $0x20] sm:$0xff]
      %v5471 = vld [vmem:[#allocation8 + $0x28] sm:$0xff]
      %v5472 = vld [vmem:[%s7] sm:$0xff]
      %v5473 = vld [vmem:[%s7 + $0x8] sm:$0xff]
      %v5474 = vld [vmem:[%s7 + $0x10] sm:$0xff]
      %v5475 = vld [vmem:[%s7 + $0x18] sm:$0xff]
      %v5476 = vld [vmem:[%s7 + $0x20] sm:$0xff]
      %v5477 = vld [vmem:[%s7 + $0x28] sm:$0xff]
      %v5478 = vld [vmem:[%s7 + $0x30] sm:$0xff]
      %v5479 = vld [vmem:[%s7 + $0x38] sm:$0xff]
      %v5480 = vld [vmem:[%s7 + $0x40] sm:$0xff]
      %v5481 = vld [vmem:[%s7 + $0x48] sm:$0xff]
      %v5482 = vld [vmem:[%s7 + $0x50] sm:$0xff]
      %v5483 = vld [vmem:[%s7 + $0x58] sm:$0xff]
      %v5484 = vld [vmem:[%s7 + $0x60] sm:$0xff]
      %v5485 = vld [vmem:[%s7 + $0x68] sm:$0xff]
      %v5486 = vld [vmem:[%s7 + $0x70] sm:$0xff]
      %v5487 = vld [vmem:[%s7 + $0x78] sm:$0xff]
      %v5488 = vld [vmem:[%s7 + $0x80] sm:$0xff]
      %v5489 = vld [vmem:[%s7 + $0x88] sm:$0xff]
      %v5490 = vld [vmem:[%s7 + $0x90] sm:$0xff]
      %v5491 = vld [vmem:[%s7 + $0x98] sm:$0xff]
      %v5492 = vld [vmem:[%s7 + $0xa0] sm:$0xff]
      %v5493 = vld [vmem:[%s7 + $0xa8] sm:$0xff]
      %v5494 = vld [vmem:[%s7 + $0xb0] sm:$0xff]
      %v5495 = vld [vmem:[%s7 + $0xb8] sm:$0xff]
      %v5496 = vld [vmem:[%s7 + $0xc0] sm:$0xff]
      %v5497 = vld [vmem:[%s7 + $0xc8] sm:$0xff]
      %v5498 = vld [vmem:[%s7 + $0xd0] sm:$0xff]
      %v5499 = vld [vmem:[%s7 + $0xd8] sm:$0xff]
      %v5500 = vld [vmem:[%s7 + $0xe0] sm:$0xff]
      %v5501 = vld [vmem:[%s7 + $0xe8] sm:$0xff]
      %v5502 = vld [vmem:[%s7 + $0xf0] sm:$0xff]
      %v5503 = vld [vmem:[%s7 + $0xf8] sm:$0xff]
      %v5504 = vld [vmem:[%s7 + $0x100] sm:$0xff]
      %v5505 = vld [vmem:[%s7 + $0x108] sm:$0xff]
      %v5506 = vld [vmem:[%s7 + $0x110] sm:$0xff]
      %v5507 = vld [vmem:[%s7 + $0x118] sm:$0xff]
      %v5508 = vld [vmem:[%s7 + $0x120] sm:$0xff]
      %v5509 = vld [vmem:[%s7 + $0x128] sm:$0xff]
      %v5510 = vld [vmem:[%s7 + $0x130] sm:$0xf]
      %vm5511 = vcmask 424960
      %v5513 = vsel %vm5511, %v5468, 0
      %v5516 = vsel %vm5511, %v5471, 0
      %v5519 = vsel %vm4260, %v5510, 0
      %5521 = vmatpush.msra.mxu0 %v5487
      %5522 = vmatpush.msra.mxu0 %v5486
      %5523 = vmatpush.msra.mxu0 %v5485
      %5524 = vmatpush.msra.mxu0 %v5484
      %5525 = vmatpush.msra.mxu0 %v5483
      %5526 = vmatpush.msra.mxu0 %v5482
      %5527 = vmatpush.msra.mxu0 %v5481
      %5528 = vmatpush.msra.mxu0 %v5480
      %5529 = vmatpush.msra.mxu0 %v5479
      %5530 = vmatpush.msra.mxu0 %v5478
      %5531 = vmatpush.msra.mxu0 %v5477
      %5532 = vmatpush.msra.mxu0 %v5476
      %5533 = vmatpush.msra.mxu0 %v5475
      %5534 = vmatpush.msra.mxu0 %v5474
      %5535 = vmatpush.msra.mxu0 %v5473
      %5536 = vmatpush.msra.mxu0 %v5472
      %5537 = vmatmul.f32.gmra.mxu0 %v5466
      %v5538 = vpop.f32.mrf.mxu0
      %v5539 = vadd.f32 0.0, %v5538
      %5540 = vmatmul.f32.gmra.mxu0 %v5469
      %v5541 = vpop.f32.mrf.mxu0
      %v5542 = vadd.f32 0.0, %v5541
      %5543 = vdwg.mxu0
      %5544 = vmatpush.msra.mxu0 %v5503
      %5545 = vmatpush.msra.mxu0 %v5502
      %5546 = vmatpush.msra.mxu0 %v5501
      %5547 = vmatpush.msra.mxu0 %v5500
      %5548 = vmatpush.msra.mxu0 %v5499
      %5549 = vmatpush.msra.mxu0 %v5498
      %5550 = vmatpush.msra.mxu0 %v5497
      %5551 = vmatpush.msra.mxu0 %v5496
      %5552 = vmatpush.msra.mxu0 %v5495
      %5553 = vmatpush.msra.mxu0 %v5494
      %5554 = vmatpush.msra.mxu0 %v5493
      %5555 = vmatpush.msra.mxu0 %v5492
      %5556 = vmatpush.msra.mxu0 %v5491
      %5557 = vmatpush.msra.mxu0 %v5490
      %5558 = vmatpush.msra.mxu0 %v5489
      %5559 = vmatpush.msra.mxu0 %v5488
      %5560 = vmatmul.f32.gmra.mxu0 %v5467
      %v5561 = vpop.f32.mrf.mxu0
      %v5562 = vadd.f32 %v5539, %v5561
      %5563 = vmatmul.f32.gmra.mxu0 %v5470
      %v5564 = vpop.f32.mrf.mxu0
      %v5565 = vadd.f32 %v5542, %v5564
      %5566 = vdwg.mxu0
      %5567 = vmatpush.msra.mxu0 0.0
      %5568 = vmatpush.msra.mxu0 0.0
      %5569 = vmatpush.msra.mxu0 0.0
      %5570 = vmatpush.msra.mxu0 0.0
      %5571 = vmatpush.msra.mxu0 0.0
      %5572 = vmatpush.msra.mxu0 0.0
      %5573 = vmatpush.msra.mxu0 0.0
      %5574 = vmatpush.msra.mxu0 0.0
      %5575 = vmatpush.msra.mxu0 0.0
      %5576 = vmatpush.msra.mxu0 %v5519
      %5577 = vmatpush.msra.mxu0 %v5509
      %5578 = vmatpush.msra.mxu0 %v5508
      %5579 = vmatpush.msra.mxu0 %v5507
      %5580 = vmatpush.msra.mxu0 %v5506
      %5581 = vmatpush.msra.mxu0 %v5505
      %5582 = vmatpush.msra.mxu0 %v5504
      %5583 = vmatmul.f32.gmra.mxu0 %v5513
      %v5584 = vpop.f32.mrf.mxu0
      %v5585 = vadd.f32 %v5562, %v5584
      %5586 = vmatmul.f32.gmra.mxu0 %v5516
      %v5587 = vpop.f32.mrf.mxu0
      %v5588 = vadd.f32 %v5565, %v5587
      %5589 = vdwg.mxu0
      %v5590 = vxor.u32 %v5585, 2147483648
      %v5591 = vxor.u32 %v5588, 2147483648
      %v5592 = vmul.f32 %v5590, 1.442695
      %v5593 = vpow.pop %v5592
      %v5594 = vmul.f32 %v5591, 1.442695
      %v5595 = vpow.pop %v5594
      %v5596 = vadd.f32 %v5593, 1.0
      %v5597 = vadd.f32 %v5595, 1.0
      %v5598 = vrcp.pop %v5596
      %v5599 = vmul.f32 %v5596, %v5598
      %v5600 = vsub.f32 1.0, %v5599
      %v5601 = vmul.f32 %v5598, %v5600
      %v5602 = vadd.f32 %v5598, %v5601
      %vm5603 = vweird.f32 %v5596
      %vm5604 = vweird.f32 %v5598
      %vm5605 = vmor %vm5603, %vm5604
      %v5606 = vsel %vm5605, %v5598, %v5602
      %v5607 = vand.u32 2147483647, %v5596
      %vm5608 = vcmp.eq.f32.partialorder %v5607, 8.507059e+37
      %v5609 = vand.u32 %v5596, 2147483648
      %v5610 = vor.u32 1.1754944e-38, %v5609
      %v5611 = vsel %vm5608, %v5610, %v5606
      %v5612 = vmul.f32 1.0, %v5611
      %v5613 = vrcp.pop %v5597
      %v5614 = vmul.f32 %v5597, %v5613
      %v5615 = vsub.f32 1.0, %v5614
      %v5616 = vmul.f32 %v5613, %v5615
      %v5617 = vadd.f32 %v5613, %v5616
      %vm5618 = vweird.f32 %v5597
      %vm5619 = vweird.f32 %v5613
      %vm5620 = vmor %vm5618, %vm5619
      %v5621 = vsel %vm5620, %v5613, %v5617
      %v5622 = vand.u32 2147483647, %v5597
      %vm5623 = vcmp.eq.f32.partialorder %v5622, 8.507059e+37
      %v5624 = vand.u32 %v5597, 2147483648
      %v5625 = vor.u32 1.1754944e-38, %v5624
      %v5626 = vsel %vm5623, %v5625, %v5621
      %v5627 = vmul.f32 1.0, %v5626
      %v5628 = vperm.slane %v5612, 0
      %v5629 = vlaneseq
      %v5630 = vshrl.u32 %v5629, 7
      %5632 = vset.pattern.permute.xlu0 %v5630
      %5633 = vperm.xlu0 %5632, %v5628
      %v5634 = vpop.permute.xlu0 %5633
      %v5635 = vlaneseq
      %v5636 = vshrl.u32 %v5635, 7
      %v5637 = vadd.s32 %v5636, 8
      %5638 = vset.pattern.permute.xlu0 %v5637
      %5639 = vperm.xlu0 %5638, %v5628
      %v5640 = vpop.permute.xlu0 %5639
      %v5641 = vperm.slane %v5612, 1
      %v5642 = vlaneseq
      %v5643 = vshrl.u32 %v5642, 7
      %5645 = vset.pattern.permute.xlu0 %v5643
      %5646 = vperm.xlu0 %5645, %v5641
      %v5647 = vpop.permute.xlu0 %5646
      %v5648 = vlaneseq
      %v5649 = vshrl.u32 %v5648, 7
      %v5650 = vadd.s32 %v5649, 8
      %5651 = vset.pattern.permute.xlu0 %v5650
      %5652 = vperm.xlu0 %5651, %v5641
      %v5653 = vpop.permute.xlu0 %5652
      %v5654 = vperm.slane %v5612, 2
      %v5655 = vlaneseq
      %v5656 = vshrl.u32 %v5655, 7
      %5658 = vset.pattern.permute.xlu0 %v5656
      %5659 = vperm.xlu0 %5658, %v5654
      %v5660 = vpop.permute.xlu0 %5659
      %v5661 = vlaneseq
      %v5662 = vshrl.u32 %v5661, 7
      %v5663 = vadd.s32 %v5662, 8
      %5664 = vset.pattern.permute.xlu0 %v5663
      %5665 = vperm.xlu0 %5664, %v5654
      %v5666 = vpop.permute.xlu0 %5665
      %v5667 = vperm.slane %v5612, 3
      %v5668 = vlaneseq
      %v5669 = vshrl.u32 %v5668, 7
      %5671 = vset.pattern.permute.xlu0 %v5669
      %5672 = vperm.xlu0 %5671, %v5667
      %v5673 = vpop.permute.xlu0 %5672
      %v5674 = vlaneseq
      %v5675 = vshrl.u32 %v5674, 7
      %v5676 = vadd.s32 %v5675, 8
      %5677 = vset.pattern.permute.xlu0 %v5676
      %5678 = vperm.xlu0 %5677, %v5667
      %v5679 = vpop.permute.xlu0 %5678
      %v5680 = vperm.slane %v5612, 4
      %v5681 = vlaneseq
      %v5682 = vshrl.u32 %v5681, 7
      %5684 = vset.pattern.permute.xlu0 %v5682
      %5685 = vperm.xlu0 %5684, %v5680
      %v5686 = vpop.permute.xlu0 %5685
      %v5687 = vlaneseq
      %v5688 = vshrl.u32 %v5687, 7
      %v5689 = vadd.s32 %v5688, 8
      %5690 = vset.pattern.permute.xlu0 %v5689
      %5691 = vperm.xlu0 %5690, %v5680
      %v5692 = vpop.permute.xlu0 %5691
      %v5693 = vperm.slane %v5612, 5
      %v5694 = vlaneseq
      %v5695 = vshrl.u32 %v5694, 7
      %5697 = vset.pattern.permute.xlu0 %v5695
      %5698 = vperm.xlu0 %5697, %v5693
      %v5699 = vpop.permute.xlu0 %5698
      %v5700 = vlaneseq
      %v5701 = vshrl.u32 %v5700, 7
      %v5702 = vadd.s32 %v5701, 8
      %5703 = vset.pattern.permute.xlu0 %v5702
      %5704 = vperm.xlu0 %5703, %v5693
      %v5705 = vpop.permute.xlu0 %5704
      %v5706 = vperm.slane %v5612, 6
      %v5707 = vlaneseq
      %v5708 = vshrl.u32 %v5707, 7
      %5710 = vset.pattern.permute.xlu0 %v5708
      %5711 = vperm.xlu0 %5710, %v5706
      %v5712 = vpop.permute.xlu0 %5711
      %v5713 = vlaneseq
      %v5714 = vshrl.u32 %v5713, 7
      %v5715 = vadd.s32 %v5714, 8
      %5716 = vset.pattern.permute.xlu0 %v5715
      %5717 = vperm.xlu0 %5716, %v5706
      %v5718 = vpop.permute.xlu0 %5717
      %v5719 = vperm.slane %v5612, 7
      %v5720 = vlaneseq
      %v5721 = vshrl.u32 %v5720, 7
      %5723 = vset.pattern.permute.xlu0 %v5721
      %5724 = vperm.xlu0 %5723, %v5719
      %v5725 = vpop.permute.xlu0 %5724
      %v5726 = vlaneseq
      %v5727 = vshrl.u32 %v5726, 7
      %v5728 = vadd.s32 %v5727, 8
      %5729 = vset.pattern.permute.xlu0 %v5728
      %5730 = vperm.xlu0 %5729, %v5719
      %v5731 = vpop.permute.xlu0 %5730
      %v5732 = vperm.slane %v5627, 0
      %v5733 = vlaneseq
      %v5734 = vshrl.u32 %v5733, 7
      %5736 = vset.pattern.permute.xlu0 %v5734
      %5737 = vperm.xlu0 %5736, %v5732
      %v5738 = vpop.permute.xlu0 %5737
      %v5739 = vlaneseq
      %v5740 = vshrl.u32 %v5739, 7
      %v5741 = vadd.s32 %v5740, 8
      %5742 = vset.pattern.permute.xlu0 %v5741
      %5743 = vperm.xlu0 %5742, %v5732
      %v5744 = vpop.permute.xlu0 %5743
      %v5745 = vperm.slane %v5627, 1
      %v5746 = vlaneseq
      %v5747 = vshrl.u32 %v5746, 7
      %5749 = vset.pattern.permute.xlu0 %v5747
      %5750 = vperm.xlu0 %5749, %v5745
      %v5751 = vpop.permute.xlu0 %5750
      %v5752 = vlaneseq
      %v5753 = vshrl.u32 %v5752, 7
      %v5754 = vadd.s32 %v5753, 8
      %5755 = vset.pattern.permute.xlu0 %v5754
      %5756 = vperm.xlu0 %5755, %v5745
      %v5757 = vpop.permute.xlu0 %5756
      %v5758 = vperm.slane %v5627, 2
      %v5759 = vlaneseq
      %v5760 = vshrl.u32 %v5759, 7
      %5762 = vset.pattern.permute.xlu0 %v5760
      %5763 = vperm.xlu0 %5762, %v5758
      %v5764 = vpop.permute.xlu0 %5763
      %v5765 = vlaneseq
      %v5766 = vshrl.u32 %v5765, 7
      %v5767 = vadd.s32 %v5766, 8
      %5768 = vset.pattern.permute.xlu0 %v5767
      %5769 = vperm.xlu0 %5768, %v5758
      %v5770 = vpop.permute.xlu0 %5769
      %v5771 = vperm.slane %v5627, 3
      %v5772 = vlaneseq
      %v5773 = vshrl.u32 %v5772, 7
      %5775 = vset.pattern.permute.xlu0 %v5773
      %5776 = vperm.xlu0 %5775, %v5771
      %v5777 = vpop.permute.xlu0 %5776
      %v5778 = vlaneseq
      %v5779 = vshrl.u32 %v5778, 7
      %v5780 = vadd.s32 %v5779, 8
      %5781 = vset.pattern.permute.xlu0 %v5780
      %5782 = vperm.xlu0 %5781, %v5771
      %v5783 = vpop.permute.xlu0 %5782
      %v5784 = vperm.slane %v5627, 4
      %v5785 = vlaneseq
      %v5786 = vshrl.u32 %v5785, 7
      %5788 = vset.pattern.permute.xlu0 %v5786
      %5789 = vperm.xlu0 %5788, %v5784
      %v5790 = vpop.permute.xlu0 %5789
      %v5791 = vlaneseq
      %v5792 = vshrl.u32 %v5791, 7
      %v5793 = vadd.s32 %v5792, 8
      %5794 = vset.pattern.permute.xlu0 %v5793
      %5795 = vperm.xlu0 %5794, %v5784
      %v5796 = vpop.permute.xlu0 %5795
      %v5797 = vperm.slane %v5627, 5
      %v5798 = vlaneseq
      %v5799 = vshrl.u32 %v5798, 7
      %5801 = vset.pattern.permute.xlu0 %v5799
      %5802 = vperm.xlu0 %5801, %v5797
      %v5803 = vpop.permute.xlu0 %5802
      %v5804 = vlaneseq
      %v5805 = vshrl.u32 %v5804, 7
      %v5806 = vadd.s32 %v5805, 8
      %5807 = vset.pattern.permute.xlu0 %v5806
      %5808 = vperm.xlu0 %5807, %v5797
      %v5809 = vpop.permute.xlu0 %5808
      %v5810 = vperm.slane %v5627, 6
      %v5811 = vlaneseq
      %v5812 = vshrl.u32 %v5811, 7
      %5814 = vset.pattern.permute.xlu0 %v5812
      %5815 = vperm.xlu0 %5814, %v5810
      %v5816 = vpop.permute.xlu0 %5815
      %v5817 = vlaneseq
      %v5818 = vshrl.u32 %v5817, 7
      %v5819 = vadd.s32 %v5818, 8
      %5820 = vset.pattern.permute.xlu0 %v5819
      %5821 = vperm.xlu0 %5820, %v5810
      %v5822 = vpop.permute.xlu0 %5821
      %v5823 = vperm.slane %v5627, 7
      %v5824 = vlaneseq
      %v5825 = vshrl.u32 %v5824, 7
      %5827 = vset.pattern.permute.xlu0 %v5825
      %5828 = vperm.xlu0 %5827, %v5823
      %v5829 = vpop.permute.xlu0 %5828
      %v5830 = vlaneseq
      %v5831 = vshrl.u32 %v5830, 7
      %v5832 = vadd.s32 %v5831, 8
      %5833 = vset.pattern.permute.xlu0 %v5832
      %5834 = vperm.xlu0 %5833, %v5823
      %v5835 = vpop.permute.xlu0 %5834
      %v5836 = vmul.f32 %v4562, %v5634
      %v5837 = vmul.f32 %v4563, %v5640
      %v5838 = vmul.f32 %v4564, %v5647
      %v5839 = vmul.f32 %v4565, %v5653
      %v5840 = vmul.f32 %v4566, %v5660
      %v5841 = vmul.f32 %v4567, %v5666
      %v5842 = vmul.f32 %v4568, %v5673
      %v5843 = vmul.f32 %v4569, %v5679
      %v5844 = vmul.f32 %v4570, %v5686
      %v5845 = vmul.f32 %v4571, %v5692
      %v5846 = vmul.f32 %v4572, %v5699
      %v5847 = vmul.f32 %v4573, %v5705
      %v5848 = vmul.f32 %v4574, %v5712
      %v5849 = vmul.f32 %v4575, %v5718
      %v5850 = vmul.f32 %v4576, %v5725
      %v5851 = vmul.f32 %v4577, %v5731
      %v5852 = vmul.f32 %v4578, %v5738
      %v5853 = vmul.f32 %v4579, %v5744
      %v5854 = vmul.f32 %v4580, %v5751
      %v5855 = vmul.f32 %v4581, %v5757
      %v5856 = vmul.f32 %v4582, %v5764
      %v5857 = vmul.f32 %v4583, %v5770
      %v5858 = vmul.f32 %v4584, %v5777
      %v5859 = vmul.f32 %v4585, %v5783
      %v5860 = vmul.f32 %v4586, %v5790
      %v5861 = vmul.f32 %v4587, %v5796
      %v5862 = vmul.f32 %v4588, %v5803
      %v5863 = vmul.f32 %v4589, %v5809
      %v5864 = vmul.f32 %v4590, %v5816
      %v5865 = vmul.f32 %v4591, %v5822
      %v5866 = vmul.f32 %v4592, %v5829
      %v5867 = vmul.f32 %v4593, %v5835
      %5868 = vst.msk [vmem:[%s305] sm:$0xff] %vm4377, %v5836
      %5869 = vst.msk [vmem:[%s305 + $0x8] sm:$0xff] %vm4377, %v5837
      %5870 = vst.msk [vmem:[%s305 + $0x10] sm:$0xff] %vm4377, %v5838
      %5871 = vst.msk [vmem:[%s305 + $0x18] sm:$0xff] %vm4377, %v5839
      %5872 = vst.msk [vmem:[%s305 + $0x20] sm:$0xff] %vm4377, %v5840
      %5873 = vst.msk [vmem:[%s305 + $0x28] sm:$0xff] %vm4377, %v5841
      %5874 = vst.msk [vmem:[%s305 + $0x30] sm:$0xff] %vm4377, %v5842
      %5875 = vst.msk [vmem:[%s305 + $0x38] sm:$0xff] %vm4377, %v5843
      %5876 = vst.msk [vmem:[%s305 + $0x40] sm:$0xff] %vm4377, %v5844
      %5877 = vst.msk [vmem:[%s305 + $0x48] sm:$0xff] %vm4377, %v5845
      %5878 = vst.msk [vmem:[%s305 + $0x50] sm:$0xff] %vm4377, %v5846
      %5879 = vst.msk [vmem:[%s305 + $0x58] sm:$0xff] %vm4377, %v5847
      %5880 = vst.msk [vmem:[%s305 + $0x60] sm:$0xff] %vm4377, %v5848
      %5881 = vst.msk [vmem:[%s305 + $0x68] sm:$0xff] %vm4377, %v5849
      %5882 = vst.msk [vmem:[%s305 + $0x70] sm:$0xff] %vm4377, %v5850
      %5883 = vst.msk [vmem:[%s305 + $0x78] sm:$0xff] %vm4377, %v5851
      %5884 = vst.msk [vmem:[%s305 + $0x80] sm:$0xff] %vm4377, %v5852
      %5885 = vst.msk [vmem:[%s305 + $0x88] sm:$0xff] %vm4377, %v5853
      %5886 = vst.msk [vmem:[%s305 + $0x90] sm:$0xff] %vm4377, %v5854
      %5887 = vst.msk [vmem:[%s305 + $0x98] sm:$0xff] %vm4377, %v5855
      %5888 = vst.msk [vmem:[%s305 + $0xa0] sm:$0xff] %vm4377, %v5856
      %5889 = vst.msk [vmem:[%s305 + $0xa8] sm:$0xff] %vm4377, %v5857
      %5890 = vst.msk [vmem:[%s305 + $0xb0] sm:$0xff] %vm4377, %v5858
      %5891 = vst.msk [vmem:[%s305 + $0xb8] sm:$0xff] %vm4377, %v5859
      %5892 = vst.msk [vmem:[%s305 + $0xc0] sm:$0xff] %vm4377, %v5860
      %5893 = vst.msk [vmem:[%s305 + $0xc8] sm:$0xff] %vm4377, %v5861
      %5894 = vst.msk [vmem:[%s305 + $0xd0] sm:$0xff] %vm4377, %v5862
      %5895 = vst.msk [vmem:[%s305 + $0xd8] sm:$0xff] %vm4377, %v5863
      %5896 = vst.msk [vmem:[%s305 + $0xe0] sm:$0xff] %vm4377, %v5864
      %5897 = vst.msk [vmem:[%s305 + $0xe8] sm:$0xff] %vm4377, %v5865
      %5898 = vst.msk [vmem:[%s305 + $0xf0] sm:$0xff] %vm4377, %v5866
      %5899 = vst.msk [vmem:[%s305 + $0xf8] sm:$0xff] %vm4377, %v5867
      %p5900 = scmp.lt.s32.totalorder %s19, 1
      %s5901 = scalar_select %p5900, %s19, 1
      %s5902 = smul.addr %s5901, 32
      %s5903 = smul.addr %s5902, 8
      %s5904 = scalar_lea.vmem %s8, %s5903
      // Predicated region
      $region53: #{ralayer_forward.1} parent=51 // pred_check
        %p5905 = pneg %p210
      $region54: #{ralayer_forward.1} parent=51 // pred_check_branch
        %5907 = sbr.rel (%p5905) target = $region56
      $region55: #{ralayer_forward.1} parent=51 // pred_region
        _
      $region56: #{ralayer_forward.1} parent=51 // pred_fallthru
        _
    $region52: #{ralayer_forward.1} parent=5 // pred_fallthru
      _
    %p5908 = scmp.le.s32.totalorder 2, %s14
    // Predicated region
    $region57: #{ralayer_forward.1} parent=5 // pred_check
      %p5909 = pneg %p5908
    $region58: #{ralayer_forward.1} parent=5 // pred_check_branch
      %5911 = sbr.rel (%p5909) target = $region60
    $region59: #{ralayer_forward.1} parent=5 // pred_region
      %s5912 = ssub.s32 %s14, 2
      // Predicated region
      $region61: #{ralayer_forward.1} parent=59 // pred_check
        %p5913 = pneg %p216
      $region62: #{ralayer_forward.1} parent=59 // pred_check_branch
        %5915 = sbr.rel (%p5913) target = $region64
      $region63: #{ralayer_forward.1} parent=59 // pred_region
        %p5916 = scmp.lt.s32.totalorder %s20, 1
        %s5917 = scalar_select %p5916, %s20, 1
        %s5918 = smul.addr %s5917, 32
        %s5919 = smul.addr %s5918, 8
        %s5920 = scalar_lea.vmem %s8, %s5919
      $region64: #{ralayer_forward.1} parent=59 // pred_fallthru
        _
    $region60: #{ralayer_forward.1} parent=5 // pred_fallthru
      _
  $region6: #{ralayer_forward.1} parent=0 // loop_footer
    %s18 = sadd.s32 1, %s14
  $region7: #{ralayer_forward.1} parent=0 // loop_footer_branch
    %13 = sbr.rel target = $region3
  $region8: #{ralayer_forward.1} parent=0 // loop_exit
    _

</llo_original>
